<compile_context>
chip_gen: v5e
topology: v5e:2x2
jax: 0.10.0
libtpu: 0.0.40
codegen_flags: <defaults>
</compile_context>

<pallas_src>
import functools
import math

import numpy as np

import jax
import jax.numpy as jnp
from jax.experimental import pallas as pl
from jax.experimental.pallas import tpu as pltpu

# ---------------- small configuration consistent with the SAM decoder ----------------
IMG_SIZE = 64            # model.image_encoder.img_size (scaled down)
EMBED_DIM = 32           # prompt_encoder.embed_dim == transformer_dim
NUM_HEADS = 4
MLP_DIM = 64
DEPTH = 2                # TwoWayTransformer depth
NUM_MASK_TOKENS = 4      # num_multimask_outputs + 1
IOU_HIDDEN = 32
EMB_H = EMB_W = 8        # spatial size of image_embeddings
NUM_POINTS = 2
MASK_THRESHOLD = 0.0
STABILITY_OFFSET = 1.0


# ================================ the fused Pallas kernel =============================
def _decoder_kernel(tok_ref, src_ref, pos_ref, slab_ref, masks_ref, iou_ref,
                    *, idx, num_heads, num_mask_tokens, depth):
    """Whole SAM mask decoder for one batch element (grid axis = batch).

      tok_ref  : (T, E)          prompt + output tokens
      src_ref  : (HW, E)         image embedding (+ dense prompt), flattened, feature-last
      pos_ref  : (HW, E)         dense positional encoding, flattened
      slab_ref : (R, 128)        packed weight slab (static offsets in `idx`)
      masks_ref: (NM, 16*HW)     low-res masks, scrambled pixel order (lane-dense)
      iou_ref  : (1, NM)         IoU predictions
    """
    f32 = jnp.float32

    def L(name):
        # lazy weight load: static 8-aligned row slice (full 128 lanes), then a cheap
        # value-level lane slice if the entry is narrower than 128.
        ro, r, co, c = idx[name]
        v = slab_ref[ro:ro + r, :]
        if co == 0 and c == 128:
            return v
        return v[:, co:co + c]

    def lin(x, wname, bname=None, act=None):
        y = jnp.dot(x, L(wname), preferred_element_type=f32)
        if bname is not None:
            y = y + L(bname)
        if act == "relu":
            y = jnp.maximum(y, 0.0)
        return y

    def layer_norm(x, wname, bname, eps=1e-5):
        mu = jnp.mean(x, axis=-1, keepdims=True)
        xc = x - mu
        var = jnp.mean(xc * xc, axis=-1, keepdims=True)
        return xc * jax.lax.rsqrt(var + eps) * L(wname) + L(bname)

    def gelu(x):
        # tanh-approx GELU (tanh lowers to the EUP slot).  torch nn.GELU default is
        # erf-exact; max abs deviation ~1e-3, negligible for mask logits.
        c = 0.7978845608028654
        return 0.5 * x * (1.0 + jnp.tanh(c * (x + 0.044715 * (x * x * x))))

    def softmax(s):
        s = s - jnp.max(s, axis=-1, keepdims=True)
        e = jnp.exp(s)
        return e * pl.reciprocal(jnp.sum(e, axis=-1, keepdims=True), approx=True)

    def attention(p, q_in, k_in, v_in):
        """SAM Attention head: separate q/k/v projections, per-head softmax(QK^T/sqrt(d))V,
        heads lane-concatenated, single output projection."""
        internal = idx[p + "wo"][1]
        dh = internal // num_heads
        scale = 1.0 / math.sqrt(dh)
        qp = lin(q_in, p + "wq", p + "bq")
        kp = lin(k_in, p + "wk", p + "bk")
        vp = lin(v_in, p + "wv", p + "bv")
        heads = []
        for h in range(num_heads):
            sl = slice(h * dh, (h + 1) * dh)
            s = jax.lax.dot_general(qp[:, sl], kp[:, sl], (((1,), (1,)), ((), ())),
                                    preferred_element_type=f32) * scale
            heads.append(jnp.dot(softmax(s), vp[:, sl], preferred_element_type=f32))
        oh = jnp.concatenate(heads, axis=1)                    # (Nq, internal)
        return lin(oh, p + "wo", p + "bo")                     # single merged out-proj

    tokens = tok_ref[...]        # (T, E)
    keys = src_ref[...]          # (HW, E)
    key_pe = pos_ref[...]        # (HW, E)
    NM = num_mask_tokens

    # ------------------------------- TwoWayTransformer --------------------------------
    queries = tokens                                           # query_pe == initial tokens
    for li in range(depth):
        pre = "l%d." % li
        if li == 0:                                            # skip_first_layer_pe
            queries = attention(pre + "sa.", queries, queries, queries)
        else:
            q = queries + tokens
            queries = queries + attention(pre + "sa.", q, q, queries)
        queries = layer_norm(queries, pre + "n1w", pre + "n1b")

        k = keys + key_pe                                      # hoisted, reused by both cross-attns
        q = queries + tokens
        queries = queries + attention(pre + "ct2i.", q, k, keys)
        queries = layer_norm(queries, pre + "n2w", pre + "n2b")

        h = lin(queries, pre + "mw1", pre + "mb1", act="relu")
        h = lin(h, pre + "mw2", pre + "mb2")
        queries = layer_norm(queries + h, pre + "n3w", pre + "n3b")

        q = queries + tokens
        keys = keys + attention(pre + "ci2t.", k, q, queries)
        keys = layer_norm(keys, pre + "n4w", pre + "n4b")

    q = queries + tokens
    k = keys + key_pe
    queries = queries + attention("fin.", q, k, keys)
    queries = layer_norm(queries, "fnw", "fnb")

    # ----------- upscaler: ConvT(2,2) -> LayerNorm2d -> GELU -> ConvT(2,2) -> GELU -----
    # x1 columns are (t1, c1) with t1 = ky*2 + kx (first 2x2 transposed-conv tap).
    x1 = lin(keys, "up1w", "up1b")                             # (HW, 4*C1)
    # LayerNorm2d over c1 per (pixel, t1), done on the whole slab via two tiny matmuls
    m = jnp.dot(x1, L("lnA"), preferred_element_type=f32)      # (HW, 4) per-tap mean
    ex2 = jnp.dot(x1 * x1, L("lnA"), preferred_element_type=f32)
    inv = jax.lax.rsqrt(ex2 - m * m + 1e-6)                    # biased var, eps = 1e-6
    mf = jnp.dot(m, L("lnB"), preferred_element_type=f32)      # broadcast back to (HW, 4*C1)
    invf = jnp.dot(inv, L("lnB"), preferred_element_type=f32)
    xg = gelu((x1 - mf) * invf * L("lnw") + L("lnb"))
    # second ConvT as one block-diagonal matmul: output columns (t1, t2, c2)
    up = gelu(lin(xg, "up2w", "up2b"))                         # (HW, 16*C2)

    # ------------------ hypernetwork MLPs fused into block-diagonal matmuls -----------
    mask_toks = queries[1:1 + NM, :]                           # (NM, E)
    tcat = jnp.concatenate([mask_toks[n:n + 1, :] for n in range(NM)], axis=1)  # (1, NM*E)
    h1 = lin(tcat, "hw1", "hb1", act="relu")
    h2 = lin(h1, "hw2", "hb2", act="relu")
    hrow = lin(h2, "hw3", "hb3")                               # (1, NM*C2) cols (n, c2)
    C2 = idx["hw3"][3] // NM
    hyper = jnp.concatenate([hrow[:, n * C2:(n + 1) * C2] for n in range(NM)], axis=0)  # (NM, C2)

    # -------- lane-dense mask product; column order p = (t1, t2, yx) = (dy,dx,dy2,dx2,y,x)
    n_tt = idx["up2w"][3] // C2                                # 16 tap pairs
    chunks = []
    for tt in range(n_tt):
        ut = up[:, tt * C2:(tt + 1) * C2]                      # (HW, C2)
        chunks.append(jax.lax.dot_general(hyper, ut, (((1,), (1,)), ((), ())),
                                          preferred_element_type=f32))      # (NM, HW)
    masks_ref[...] = jnp.concatenate(chunks, axis=-1)          # (NM, 16*HW) unmasked vst

    # ---------------------------------- IoU head ---------------------------------------
    iou_tok = queries[0:1, :]                                  # (1, E)
    y = lin(iou_tok, "iw1", "ib1", act="relu")
    y = lin(y, "iw2", "ib2", act="relu")
    iou_ref[...] = lin(y, "iw3", "ib3")


def fused_predict_masks(slab, idx, tokens, src_f, pos_f):
    """One pallas_call running the entire mask decoder (grid over batch)."""
    B, T, E = tokens.shape
    HW = src_f.shape[1]
    R = slab.shape[0]
    kernel = functools.partial(_decoder_kernel, idx=idx, num_heads=NUM_HEADS,
                               num_mask_tokens=NUM_MASK_TOKENS, depth=DEPTH)
    masks_flat, iou = pl.pallas_call(
        kernel,
        grid=(B,),
        out_shape=(jax.ShapeDtypeStruct((B, NUM_MASK_TOKENS, 16 * HW), jnp.float32),
                   jax.ShapeDtypeStruct((B, 1, NUM_MASK_TOKENS), jnp.float32)),
        in_specs=[pl.BlockSpec((None, T, E), lambda b: (b, 0, 0)),
                  pl.BlockSpec((None, HW, E), lambda b: (b, 0, 0)),
                  pl.BlockSpec((HW, E), lambda b: (0, 0)),
                  pl.BlockSpec((R, 128), lambda b: (0, 0))],
        out_specs=(pl.BlockSpec((None, NUM_MASK_TOKENS, 16 * HW), lambda b: (b, 0, 0)),
                   pl.BlockSpec((None, 1, NUM_MASK_TOKENS), lambda b: (b, 0, 0))),
        compiler_params=pltpu.CompilerParams(dimension_semantics=("parallel",)),
    )(tokens, src_f, pos_f, slab)
    return masks_flat, iou.reshape(B, NUM_MASK_TOKENS)


# ============================== weight slab packing ====================================
def _pack_entries(entries):
    """First-fit shelf packing of 2-D f32 arrays (cols <= 128) into one (R, 128) slab.
    idx[name] = (row_off, rows, col_off, cols); shelves start on 8-row boundaries so
    every in-kernel row slice is sublane-aligned."""
    aligned = [(n, a) for n, a in entries if a.shape[0] % 8 == 0]
    rest = [(n, a) for n, a in entries if a.shape[0] % 8 != 0]
    idx, shelves, next_row = {}, [], 0           # shelf = [row_off, height, cols_used]
    for name, arr in aligned + rest:
        r, c = arr.shape
        assert c <= 128 and name not in idx, name
        for sh in shelves:
            if sh[1] == r and sh[2] + c <= 128:
                idx[name] = (sh[0], r, sh[2], c)
                sh[2] += c
                break
        else:
            next_row = -(-next_row // 8) * 8
            shelves.append([next_row, r, c])
            idx[name] = (next_row, r, 0, c)
            next_row += r
    total = -(-next_row // 8) * 8
    slab = np.zeros((total, 128), np.float32)
    for name, arr in entries:
        ro, r, co, c = idx[name]
        slab[ro:ro + r, co:co + c] = arr
    return jnp.asarray(slab), idx


def _block_diag(mats):
    mats = [np.asarray(m, np.float32) for m in mats]
    R = sum(m.shape[0] for m in mats)
    C = sum(m.shape[1] for m in mats)
    out = np.zeros((R, C), np.float32)
    r = c = 0
    for m in mats:
        out[r:r + m.shape[0], c:c + m.shape[1]] = m
        r += m.shape[0]
        c += m.shape[1]
    return out


def pack_decoder_params(tf, dec):
    """Host-side: flatten/transform all transformer + decoder weights into one slab."""
    E, NM = EMBED_DIM, NUM_MASK_TOKENS
    C1, C2 = E // 4, E // 8
    ent = []

    def add(name, a):
        a = np.asarray(a, np.float32)
        if a.ndim == 1:
            a = a.reshape(1, -1)
        ent.append((name, a))

    def add_attn(prefix, a):
        for k in ("wq", "wk", "wv", "wo", "bq", "bk", "bv", "bo"):
            add(prefix + k, a[k])

    def convT_flat(w):   # (Cin, Cout, 2, 2) -> (Cin, 4*Cout), col = (ky*2+kx)*Cout + co
        w = np.asarray(w, np.float32)
        cin, cout = w.shape[0], w.shape[1]
        return np.transpose(w, (0, 2, 3, 1)).reshape(cin, 4 * cout)

    for i, lp in enumerate(tf["layers"]):
        p = "l%d." % i
        add_attn(p + "sa.", lp["self_attn"])
        add(p + "n1w", lp["norm1_w"]); add(p + "n1b", lp["norm1_b"])
        add_attn(p + "ct2i.", lp["cross_t2i"])
        add(p + "n2w", lp["norm2_w"]); add(p + "n2b", lp["norm2_b"])
        add(p + "mw1", lp["mlp_w1"]); add(p + "mb1", lp["mlp_b1"])
        add(p + "mw2", lp["mlp_w2"]); add(p + "mb2", lp["mlp_b2"])
        add(p + "n3w", lp["norm3_w"]); add(p + "n3b", lp["norm3_b"])
        add_attn(p + "ci2t.", lp["cross_i2t"])
        add(p + "n4w", lp["norm4_w"]); add(p + "n4b", lp["norm4_b"])
    add_attn("fin.", tf["final_attn"])
    add("fnw", tf["norm_final_w"]); add("fnb", tf["norm_final_b"])

    # upscaler: ConvT(E,C1,2,2) -> LayerNorm2d(C1) -> GELU -> ConvT(C1,C2,2,2) -> GELU
    add("up1w", convT_flat(dec["up1_w"]))
    add("up1b", np.tile(np.asarray(dec["up1_b"], np.float32), 4))
    add("lnA", np.kron(np.eye(4, dtype=np.float32),
                       np.full((C1, 1), 1.0 / C1, np.float32)))          # per-tap mean
    add("lnB", np.kron(np.eye(4, dtype=np.float32),
                       np.ones((1, C1), np.float32)))                    # per-tap broadcast
    add("lnw", np.tile(np.asarray(dec["ln_w"], np.float32), 4))
    add("lnb", np.tile(np.asarray(dec["ln_b"], np.float32), 4))
    w2f = convT_flat(dec["up2_w"])                                       # (C1, 4*C2)
    add("up2w", np.kron(np.eye(4, dtype=np.float32), w2f))               # block-diag per t1
    add("up2b", np.tile(np.asarray(dec["up2_b"], np.float32), 16))

    # hypernetwork MLPs fused block-diagonally over the NM mask tokens
    hy = dec["hyper"]
    add("hw1", _block_diag([h["w1"] for h in hy]))
    add("hb1", np.concatenate([np.asarray(h["b1"], np.float32).reshape(-1) for h in hy]))
    add("hw2", _block_diag([h["w2"] for h in hy]))
    add("hb2", np.concatenate([np.asarray(h["b2"], np.float32).reshape(-1) for h in hy]))
    add("hw3", _block_diag([h["w3"] for h in hy]))
    add("hb3", np.concatenate([np.asarray(h["b3"], np.float32).reshape(-1) for h in hy]))

    add("iw1", dec["iou_w1"]); add("ib1", dec["iou_b1"])
    add("iw2", dec["iou_w2"]); add("ib2", dec["iou_b2"])
    add("iw3", dec["iou_w3"]); add("ib3", dec["iou_b3"])
    return _pack_entries(ent)


# ================================ prompt encoder glue ================================
def pe_encoding(gauss, coords):
    """coords (..., 2) normalized to [0, 1] -> (..., EMBED_DIM)."""
    coords = 2.0 * coords - 1.0
    coords = coords @ gauss
    coords = 2.0 * jnp.pi * coords
    return jnp.concatenate([jnp.sin(coords), jnp.cos(coords)], axis=-1)


def embed_points(pp, point_coords, point_labels):
    coords = (point_coords + 0.5) / IMG_SIZE
    pe = pe_encoding(pp["pe_gauss"], coords)                       # (B, P, E)
    labels = point_labels[..., None]
    pe = pe * (labels != -1).astype(pe.dtype)
    pe = pe + pp["not_a_point"][None, None, :] * (labels == -1).astype(pe.dtype)
    for i in range(4):                                             # num_point_embeddings
        pe = pe + pp["point_embeddings"][i][None, None, :] * (labels == i).astype(pe.dtype)
    return pe


def embed_boxes(pp, boxes):
    boxes = boxes + 0.5
    coords = boxes.reshape(-1, 2, 2) / IMG_SIZE
    ce = pe_encoding(pp["pe_gauss"], coords)                       # (B, 2, E)
    ce = ce.at[:, 0, :].add(pp["point_embeddings"][2])
    ce = ce.at[:, 1, :].add(pp["point_embeddings"][3])
    return ce


def dense_pe(pp, h, w):
    y = (jnp.arange(h, dtype=jnp.float32) + 0.5) / h
    x = (jnp.arange(w, dtype=jnp.float32) + 0.5) / w
    gy, gx = jnp.meshgrid(y, x, indexing="ij")
    coords = jnp.stack([gx, gy], axis=-1)                          # (h, w, 2)
    pe = pe_encoding(pp["pe_gauss"], coords)                       # (h, w, E)
    return pe.transpose(2, 0, 1)[None]                             # (1, E, h, w)


def calculate_stability_score(masks, threshold, offset):
    inter = jnp.sum((masks > (threshold + offset)).astype(jnp.float32), axis=(-1, -2))
    union = jnp.sum((masks > (threshold - offset)).astype(jnp.float32), axis=(-1, -2))
    return inter / jnp.maximum(union, 1.0)      # guard: union == 0 -> score 0, not NaN


# ================================= top level forward ==================================
def sam_coreml_forward(glue, slab, image_embeddings, point_coords, point_labels, boxes,
                       *, idx, point_valid=True, boxes_valid=True,
                       use_stability_score=False, upsample_masks=False):
    # TODO(synk): torch gathers prompt tokens with *runtime* boolean masks (data-dependent
    # output shape); here point_valid / boxes_valid are static Python bools so the whole
    # forward stays jit-able with no device->host sync.
    pp = glue["prompt"]
    B = point_coords.shape[0]

    parts = []
    if point_valid:
        parts.append(embed_points(pp, point_coords, point_labels))
    if boxes_valid:
        parts.append(embed_boxes(pp, boxes))
    sparse = (jnp.concatenate(parts, axis=1) if parts
              else jnp.zeros((B, 0, EMBED_DIM), jnp.float32))

    output_tokens = jnp.concatenate([glue["iou_token"], glue["mask_tokens"]], axis=0)
    output_tokens = jnp.broadcast_to(output_tokens[None], (B,) + output_tokens.shape)
    tokens = jnp.concatenate([output_tokens, sparse], axis=1).astype(jnp.float32)

    dense = pp["no_mask_embed"].reshape(1, -1, 1, 1)
    src = jnp.repeat(image_embeddings.astype(jnp.float32), B, axis=0) + dense
    pos = dense_pe(pp, EMB_H, EMB_W)                               # (1, E, H, W)

    Bc, C, H, W = src.shape
    src_f = src.reshape(Bc, C, H * W).transpose(0, 2, 1)           # (B, HW, E)
    pos_f = pos.reshape(C, H * W).T                                # (HW, E) shared by batch

    masks_flat, iou_pred = fused_predict_masks(slab, idx, tokens, src_f, pos_f)

    # un-scramble the kernel's lane-dense pixel order p = (dy, dx, dy2, dx2, y, x)
    NM = NUM_MASK_TOKENS
    m = masks_flat.reshape(Bc, NM, 2, 2, 2, 2, H, W)
    m = m.transpose(0, 1, 6, 2, 4, 7, 3, 5)                        # (B, NM, y,dy,dy2, x,dx,dx2)
    masks = m.reshape(Bc, NM, 4 * H, 4 * W)

    scores = iou_pred
    if use_stability_score:
        scores = calculate_stability_score(masks, MASK_THRESHOLD, STABILITY_OFFSET)
    if upsample_masks:
        # TODO(synk): a streamed lane-dense Pallas bilinear-upsample kernel would beat
        # XLA resize for the 1024x1024 output; left as jax.image.resize (cold path).
        masks = jax.image.resize(masks, (masks.shape[0], masks.shape[1], 1024, 1024),
                                 method="bilinear")
    return scores, masks


# ================================= parameter init =====================================
def init_params(key):
    kg = iter(jax.random.split(key, 512))

    def nrm(shape, scale=0.05):
        return scale * jax.random.normal(next(kg), shape, dtype=jnp.float32)

    def zeros(shape):
        return jnp.zeros(shape, jnp.float32)

    def ones(shape):
        return jnp.ones(shape, jnp.float32)

    def attn_p(dim, internal):
        return dict(wq=nrm((dim, internal)), bq=zeros((internal,)),
                    wk=nrm((dim, internal)), bk=zeros((internal,)),
                    wv=nrm((dim, internal)), bv=zeros((internal,)),
                    wo=nrm((internal, dim)), bo=zeros((dim,)))

    E = EMBED_DIM
    layers = []
    for _ in range(DEPTH):
        layers.append(dict(
            self_attn=attn_p(E, E),
            norm1_w=ones((E,)), norm1_b=zeros((E,)),
            cross_t2i=attn_p(E, E // 2),
            norm2_w=ones((E,)), norm2_b=zeros((E,)),
            mlp_w1=nrm((E, MLP_DIM)), mlp_b1=zeros((MLP_DIM,)),
            mlp_w2=nrm((MLP_DIM, E)), mlp_b2=zeros((E,)),
            norm3_w=ones((E,)), norm3_b=zeros((E,)),
            cross_i2t=attn_p(E, E // 2),
            norm4_w=ones((E,)), norm4_b=zeros((E,)),
        ))
    transformer = dict(layers=layers,
                       final_attn=attn_p(E, E // 2),
                       norm_final_w=ones((E,)), norm_final_b=zeros((E,)))

    prompt = dict(
        pe_gauss=jax.random.normal(next(kg), (2, E // 2), dtype=jnp.float32),
        point_embeddings=nrm((4, E)),
        not_a_point=nrm((E,)),
        no_mask_embed=nrm((E,)),
    )

    decoder = dict(
        iou_token=nrm((1, E)),
        mask_tokens=nrm((NUM_MASK_TOKENS, E)),
        up1_w=nrm((E, E // 4, 2, 2)), up1_b=zeros((E // 4,)),
        ln_w=ones((E // 4,)), ln_b=zeros((E // 4,)),
        up2_w=nrm((E // 4, E // 8, 2, 2)), up2_b=zeros((E // 8,)),
        hyper=[dict(w1=nrm((E, E)), b1=zeros((E,)),
                    w2=nrm((E, E)), b2=zeros((E,)),
                    w3=nrm((E, E // 8)), b3=zeros((E // 8,)))
               for _ in range(NUM_MASK_TOKENS)],
        iou_w1=nrm((E, IOU_HIDDEN)), iou_b1=zeros((IOU_HIDDEN,)),
        iou_w2=nrm((IOU_HIDDEN, IOU_HIDDEN)), iou_b2=zeros((IOU_HIDDEN,)),
        iou_w3=nrm((IOU_HIDDEN, NUM_MASK_TOKENS)), iou_b3=zeros((NUM_MASK_TOKENS,)),
    )
    return dict(prompt=prompt, transformer=transformer, decoder=decoder)


# ======================================= main =========================================
if __name__ == "__main__":
    root = jax.random.PRNGKey(0)
    kp, k1, k2, k3 = jax.random.split(root, 4)
    params = init_params(kp)

    # one-time host-side packing of all decoder weights into a single VMEM slab
    slab, idx = pack_decoder_params(params["transformer"], params["decoder"])
    glue = dict(prompt=params["prompt"],
                iou_token=params["decoder"]["iou_token"],
                mask_tokens=params["decoder"]["mask_tokens"])

    image_embeddings = jax.random.normal(k1, (1, EMBED_DIM, EMB_H, EMB_W), dtype=jnp.float32)
    point_coords = jax.random.uniform(k2, (1, NUM_POINTS, 2), minval=0.0, maxval=float(IMG_SIZE))
    point_labels = jnp.array([[1.0, 0.0]], dtype=jnp.float32)
    boxes = jax.random.uniform(k3, (1, 4), minval=0.0, maxval=float(IMG_SIZE))

    fwd = jax.jit(functools.partial(sam_coreml_forward, idx=idx,
                                    point_valid=True, boxes_valid=True,
                                    use_stability_score=False, upsample_masks=False))
    scores, masks = fwd(glue, slab, image_embeddings, point_coords, point_labels, boxes)
    jax.block_until_ready((scores, masks))

    assert scores.shape == (1, NUM_MASK_TOKENS)
    assert masks.shape == (1, NUM_MASK_TOKENS, 4 * EMB_H, 4 * EMB_W)
    assert bool(jnp.all(jnp.isfinite(scores))) and bool(jnp.all(jnp.isfinite(masks)))
    print("KERNEL_OK")
</pallas_src>

<mosaic_0001>
module attributes {stable_mosaic.version = 11 : i64} {
  func.func @_decoder_kernel(%arg0: i32, %arg1: memref<1x9x32xf32, #tpu.memory_space<vmem>>, %arg2: memref<1x64x32xf32, #tpu.memory_space<vmem>>, %arg3: memref<64x32xf32, #tpu.memory_space<vmem>>, %arg4: memref<840x128xf32, #tpu.memory_space<vmem>>, %arg5: memref<1x4x1024xf32, #tpu.memory_space<vmem>>, %arg6: memref<1x1x4xf32, #tpu.memory_space<vmem>>) attributes {dimension_semantics = [#tpu.dimension_semantics<parallel>], iteration_bounds = array<i64: 1>, scalar_prefetch = 0 : i64, scratch_operands = 0 : i64, tpu.core_type = #tpu.core_type<tc>, window_params = [{transform_indices = @transform_0, window_bounds = array<i64: 1, 9, 32>}, {transform_indices = @transform_1, window_bounds = array<i64: 1, 64, 32>}, {pipeline_mode = #tpu.pipeline_mode<synchronous>, transform_indices = @transform_2, window_bounds = array<i64: 64, 32>}, {pipeline_mode = #tpu.pipeline_mode<synchronous>, transform_indices = @transform_3, window_bounds = array<i64: 840, 128>}, {transform_indices = @transform_4, window_bounds = array<i64: 1, 4, 1024>}, {transform_indices = @transform_5, window_bounds = array<i64: 1, 1, 4>}]} {
    %c0 = arith.constant 0 : index
    %c0_0 = arith.constant 0 : index
    %c0_1 = arith.constant 0 : index
    %0 = vector.load %arg1[%c0, %c0_0, %c0_1] : memref<1x9x32xf32, #tpu.memory_space<vmem>>, vector<1x9x32xf32>
    %1 = vector.shape_cast %0 : vector<1x9x32xf32> to vector<9x32xf32>
    %c0_2 = arith.constant 0 : index
    %c0_3 = arith.constant 0 : index
    %c0_4 = arith.constant 0 : index
    %2 = vector.load %arg2[%c0_2, %c0_3, %c0_4] : memref<1x64x32xf32, #tpu.memory_space<vmem>>, vector<1x64x32xf32>
    %3 = vector.shape_cast %2 : vector<1x64x32xf32> to vector<64x32xf32>
    %c0_5 = arith.constant 0 : index
    %c0_6 = arith.constant 0 : index
    %4 = vector.load %arg3[%c0_5, %c0_6] : memref<64x32xf32, #tpu.memory_space<vmem>>, vector<64x32xf32>
    %c0_7 = arith.constant 0 : index
    %c0_8 = arith.constant 0 : index
    %5 = vector.load %arg4[%c0_7, %c0_8] : memref<840x128xf32, #tpu.memory_space<vmem>>, vector<32x128xf32>
    %6 = vector.extract_strided_slice %5 {offsets = [0, 0], sizes = [32, 32], strides = [1, 1]} : vector<32x128xf32> to vector<32x32xf32>
    %cst = arith.constant dense<0.000000e+00> : vector<9x32xf32>
    %7 = tpu.matmul %1, %6, %cst {dimension_numbers = #tpu.dot_dimension_numbers<[1], [0], [0], [1], [0, 0, 1, 1], [], []>} : vector<9x32xf32>, vector<32x32xf32>, vector<9x32xf32> -> vector<9x32xf32>
    %c704 = arith.constant 704 : index
    %c0_9 = arith.constant 0 : index
    %8 = vector.load %arg4[%c704, %c0_9] : memref<840x128xf32, #tpu.memory_space<vmem>>, vector<1x128xf32>
    %9 = vector.extract_strided_slice %8 {offsets = [0, 0], sizes = [1, 32], strides = [1, 1]} : vector<1x128xf32> to vector<1x32xf32>
    %10 = vector.broadcast %9 : vector<1x32xf32> to vector<9x32xf32>
    %11 = arith.addf %7, %10 : vector<9x32xf32>
    %c0_10 = arith.constant 0 : index
    %c0_11 = arith.constant 0 : index
    %12 = vector.load %arg4[%c0_10, %c0_11] : memref<840x128xf32, #tpu.memory_space<vmem>>, vector<32x128xf32>
    %13 = vector.extract_strided_slice %12 {offsets = [0, 32], sizes = [32, 32], strides = [1, 1]} : vector<32x128xf32> to vector<32x32xf32>
    %cst_12 = arith.constant dense<0.000000e+00> : vector<9x32xf32>
    %14 = tpu.matmul %1, %13, %cst_12 {dimension_numbers = #tpu.dot_dimension_numbers<[1], [0], [0], [1], [0, 0, 1, 1], [], []>} : vector<9x32xf32>, vector<32x32xf32>, vector<9x32xf32> -> vector<9x32xf32>
    %c704_13 = arith.constant 704 : index
    %c0_14 = arith.constant 0 : index
    %15 = vector.load %arg4[%c704_13, %c0_14] : memref<840x128xf32, #tpu.memory_space<vmem>>, vector<1x128xf32>
    %16 = vector.extract_strided_slice %15 {offsets = [0, 32], sizes = [1, 32], strides = [1, 1]} : vector<1x128xf32> to vector<1x32xf32>
    %17 = vector.broadcast %16 : vector<1x32xf32> to vector<9x32xf32>
    %18 = arith.addf %14, %17 : vector<9x32xf32>
    %c0_15 = arith.constant 0 : index
    %c0_16 = arith.constant 0 : index
    %19 = vector.load %arg4[%c0_15, %c0_16] : memref<840x128xf32, #tpu.memory_space<vmem>>, vector<32x128xf32>
    %20 = vector.extract_strided_slice %19 {offsets = [0, 64], sizes = [32, 32], strides = [1, 1]} : vector<32x128xf32> to vector<32x32xf32>
    %cst_17 = arith.constant dense<0.000000e+00> : vector<9x32xf32>
    %21 = tpu.matmul %1, %20, %cst_17 {dimension_numbers = #tpu.dot_dimension_numbers<[1], [0], [0], [1], [0, 0, 1, 1], [], []>} : vector<9x32xf32>, vector<32x32xf32>, vector<9x32xf32> -> vector<9x32xf32>
    %c704_18 = arith.constant 704 : index
    %c0_19 = arith.constant 0 : index
    %22 = vector.load %arg4[%c704_18, %c0_19] : memref<840x128xf32, #tpu.memory_space<vmem>>, vector<1x128xf32>
    %23 = vector.extract_strided_slice %22 {offsets = [0, 64], sizes = [1, 32], strides = [1, 1]} : vector<1x128xf32> to vector<1x32xf32>
    %24 = vector.broadcast %23 : vector<1x32xf32> to vector<9x32xf32>
    %25 = arith.addf %21, %24 : vector<9x32xf32>
    %26 = vector.extract_strided_slice %11 {offsets = [0, 0], sizes = [9, 8], strides = [1, 1]} : vector<9x32xf32> to vector<9x8xf32>
    %27 = vector.extract_strided_slice %18 {offsets = [0, 0], sizes = [9, 8], strides = [1, 1]} : vector<9x32xf32> to vector<9x8xf32>
    %cst_20 = arith.constant dense<0.000000e+00> : vector<9x9xf32>
    %28 = tpu.matmul %26, %27, %cst_20 {dimension_numbers = #tpu.dot_dimension_numbers<[1], [1], [0], [0], [0, 0, 1, 0], [], []>} : vector<9x8xf32>, vector<9x8xf32>, vector<9x9xf32> -> vector<9x9xf32>
    %cst_21 = arith.constant 0.353553385 : f32
    %29 = vector.broadcast %cst_21 : f32 to vector<9x9xf32>
    %30 = arith.mulf %28, %29 : vector<9x9xf32>
    %cst_22 = arith.constant dense<0xFF800000> : vector<9xf32>
    %31 = vector.multi_reduction <maximumf>, %30, %cst_22 [1] : vector<9x9xf32> to vector<9xf32>
    %32 = vector.shape_cast %31 : vector<9xf32> to vector<9x1xf32>
    %33 = vector.broadcast %32 : vector<9x1xf32> to vector<9x9xf32>
    %34 = arith.subf %30, %33 : vector<9x9xf32>
    %35 = math.exp %34 : vector<9x9xf32>
    %cst_23 = arith.constant dense<0.000000e+00> : vector<9xf32>
    %36 = vector.multi_reduction <add>, %35, %cst_23 [1] : vector<9x9xf32> to vector<9xf32>
    %37 = vector.shape_cast %36 : vector<9xf32> to vector<9x1xf32>
    %38 = tpu.reciprocal %37 {approx = true} : vector<9x1xf32> -> vector<9x1xf32>
    %39 = vector.broadcast %38 : vector<9x1xf32> to vector<9x9xf32>
    %40 = arith.mulf %35, %39 : vector<9x9xf32>
    %41 = vector.extract_strided_slice %25 {offsets = [0, 0], sizes = [9, 8], strides = [1, 1]} : vector<9x32xf32> to vector<9x8xf32>
    %cst_24 = arith.constant dense<0.000000e+00> : vector<9x8xf32>
    %42 = tpu.matmul %40, %41, %cst_24 {dimension_numbers = #tpu.dot_dimension_numbers<[1], [0], [0], [1], [0, 0, 1, 1], [], []>} : vector<9x9xf32>, vector<9x8xf32>, vector<9x8xf32> -> vector<9x8xf32>
    %43 = vector.extract_strided_slice %11 {offsets = [0, 8], sizes = [9, 8], strides = [1, 1]} : vector<9x32xf32> to vector<9x8xf32>
    %44 = vector.extract_strided_slice %18 {offsets = [0, 8], sizes = [9, 8], strides = [1, 1]} : vector<9x32xf32> to vector<9x8xf32>
    %cst_25 = arith.constant dense<0.000000e+00> : vector<9x9xf32>
    %45 = tpu.matmul %43, %44, %cst_25 {dimension_numbers = #tpu.dot_dimension_numbers<[1], [1], [0], [0], [0, 0, 1, 0], [], []>} : vector<9x8xf32>, vector<9x8xf32>, vector<9x9xf32> -> vector<9x9xf32>
    %cst_26 = arith.constant 0.353553385 : f32
    %46 = vector.broadcast %cst_26 : f32 to vector<9x9xf32>
    %47 = arith.mulf %45, %46 : vector<9x9xf32>
    %cst_27 = arith.constant dense<0xFF800000> : vector<9xf32>
    %48 = vector.multi_reduction <maximumf>, %47, %cst_27 [1] : vector<9x9xf32> to vector<9xf32>
    %49 = vector.shape_cast %48 : vector<9xf32> to vector<9x1xf32>
    %50 = vector.broadcast %49 : vector<9x1xf32> to vector<9x9xf32>
    %51 = arith.subf %47, %50 : vector<9x9xf32>
    %52 = math.exp %51 : vector<9x9xf32>
    %cst_28 = arith.constant dense<0.000000e+00> : vector<9xf32>
    %53 = vector.multi_reduction <add>, %52, %cst_28 [1] : vector<9x9xf32> to vector<9xf32>
    %54 = vector.shape_cast %53 : vector<9xf32> to vector<9x1xf32>
    %55 = tpu.reciprocal %54 {approx = true} : vector<9x1xf32> -> vector<9x1xf32>
    %56 = vector.broadcast %55 : vector<9x1xf32> to vector<9x9xf32>
    %57 = arith.mulf %52, %56 : vector<9x9xf32>
    %58 = vector.extract_strided_slice %25 {offsets = [0, 8], sizes = [9, 8], strides = [1, 1]} : vector<9x32xf32> to vector<9x8xf32>
    %cst_29 = arith.constant dense<0.000000e+00> : vector<9x8xf32>
    %59 = tpu.matmul %57, %58, %cst_29 {dimension_numbers = #tpu.dot_dimension_numbers<[1], [0], [0], [1], [0, 0, 1, 1], [], []>} : vector<9x9xf32>, vector<9x8xf32>, vector<9x8xf32> -> vector<9x8xf32>
    %60 = vector.extract_strided_slice %11 {offsets = [0, 16], sizes = [9, 8], strides = [1, 1]} : vector<9x32xf32> to vector<9x8xf32>
    %61 = vector.extract_strided_slice %18 {offsets = [0, 16], sizes = [9, 8], strides = [1, 1]} : vector<9x32xf32> to vector<9x8xf32>
    %cst_30 = arith.constant dense<0.000000e+00> : vector<9x9xf32>
    %62 = tpu.matmul %60, %61, %cst_30 {dimension_numbers = #tpu.dot_dimension_numbers<[1], [1], [0], [0], [0, 0, 1, 0], [], []>} : vector<9x8xf32>, vector<9x8xf32>, vector<9x9xf32> -> vector<9x9xf32>
    %cst_31 = arith.constant 0.353553385 : f32
    %63 = vector.broadcast %cst_31 : f32 to vector<9x9xf32>
    %64 = arith.mulf %62, %63 : vector<9x9xf32>
    %cst_32 = arith.constant dense<0xFF800000> : vector<9xf32>
    %65 = vector.multi_reduction <maximumf>, %64, %cst_32 [1] : vector<9x9xf32> to vector<9xf32>
    %66 = vector.shape_cast %65 : vector<9xf32> to vector<9x1xf32>
    %67 = vector.broadcast %66 : vector<9x1xf32> to vector<9x9xf32>
    %68 = arith.subf %64, %67 : vector<9x9xf32>
    %69 = math.exp %68 : vector<9x9xf32>
    %cst_33 = arith.constant dense<0.000000e+00> : vector<9xf32>
    %70 = vector.multi_reduction <add>, %69, %cst_33 [1] : vector<9x9xf32> to vector<9xf32>
    %71 = vector.shape_cast %70 : vector<9xf32> to vector<9x1xf32>
    %72 = tpu.reciprocal %71 {approx = true} : vector<9x1xf32> -> vector<9x1xf32>
    %73 = vector.broadcast %72 : vector<9x1xf32> to vector<9x9xf32>
    %74 = arith.mulf %69, %73 : vector<9x9xf32>
    %75 = vector.extract_strided_slice %25 {offsets = [0, 16], sizes = [9, 8], strides = [1, 1]} : vector<9x32xf32> to vector<9x8xf32>
    %cst_34 = arith.constant dense<0.000000e+00> : vector<9x8xf32>
    %76 = tpu.matmul %74, %75, %cst_34 {dimension_numbers = #tpu.dot_dimension_numbers<[1], [0], [0], [1], [0, 0, 1, 1], [], []>} : vector<9x9xf32>, vector<9x8xf32>, vector<9x8xf32> -> vector<9x8xf32>
    %77 = vector.extract_strided_slice %11 {offsets = [0, 24], sizes = [9, 8], strides = [1, 1]} : vector<9x32xf32> to vector<9x8xf32>
    %78 = vector.extract_strided_slice %18 {offsets = [0, 24], sizes = [9, 8], strides = [1, 1]} : vector<9x32xf32> to vector<9x8xf32>
    %cst_35 = arith.constant dense<0.000000e+00> : vector<9x9xf32>
    %79 = tpu.matmul %77, %78, %cst_35 {dimension_numbers = #tpu.dot_dimension_numbers<[1], [1], [0], [0], [0, 0, 1, 0], [], []>} : vector<9x8xf32>, vector<9x8xf32>, vector<9x9xf32> -> vector<9x9xf32>
    %cst_36 = arith.constant 0.353553385 : f32
    %80 = vector.broadcast %cst_36 : f32 to vector<9x9xf32>
    %81 = arith.mulf %79, %80 : vector<9x9xf32>
    %cst_37 = arith.constant dense<0xFF800000> : vector<9xf32>
    %82 = vector.multi_reduction <maximumf>, %81, %cst_37 [1] : vector<9x9xf32> to vector<9xf32>
    %83 = vector.shape_cast %82 : vector<9xf32> to vector<9x1xf32>
    %84 = vector.broadcast %83 : vector<9x1xf32> to vector<9x9xf32>
    %85 = arith.subf %81, %84 : vector<9x9xf32>
    %86 = math.exp %85 : vector<9x9xf32>
    %cst_38 = arith.constant dense<0.000000e+00> : vector<9xf32>
    %87 = vector.multi_reduction <add>, %86, %cst_38 [1] : vector<9x9xf32> to vector<9xf32>
    %88 = vector.shape_cast %87 : vector<9xf32> to vector<9x1xf32>
    %89 = tpu.reciprocal %88 {approx = true} : vector<9x1xf32> -> vector<9x1xf32>
    %90 = vector.broadcast %89 : vector<9x1xf32> to vector<9x9xf32>
    %91 = arith.mulf %86, %90 : vector<9x9xf32>
    %92 = vector.extract_strided_slice %25 {offsets = [0, 24], sizes = [9, 8], strides = [1, 1]} : vector<9x32xf32> to vector<9x8xf32>
    %cst_39 = arith.constant dense<0.000000e+00> : vector<9x8xf32>
    %93 = tpu.matmul %91, %92, %cst_39 {dimension_numbers = #tpu.dot_dimension_numbers<[1], [0], [0], [1], [0, 0, 1, 1], [], []>} : vector<9x9xf32>, vector<9x8xf32>, vector<9x8xf32> -> vector<9x8xf32>
    %94 = tpu.concatenate %42, %59, %76, %93 in 1 : vector<9x8xf32>, vector<9x8xf32>, vector<9x8xf32>, vector<9x8xf32> -> vector<9x32xf32>
    %c0_40 = arith.constant 0 : index
    %c0_41 = arith.constant 0 : index
    %95 = vector.load %arg4[%c0_40, %c0_41] : memref<840x128xf32, #tpu.memory_space<vmem>>, vector<32x128xf32>
    %96 = vector.extract_strided_slice %95 {offsets = [0, 96], sizes = [32, 32], strides = [1, 1]} : vector<32x128xf32> to vector<32x32xf32>
    %cst_42 = arith.constant dense<0.000000e+00> : vector<9x32xf32>
    %97 = tpu.matmul %94, %96, %cst_42 {dimension_numbers = #tpu.dot_dimension_numbers<[1], [0], [0], [1], [0, 0, 1, 1], [], []>} : vector<9x32xf32>, vector<32x32xf32>, vector<9x32xf32> -> vector<9x32xf32>
    %c704_43 = arith.constant 704 : index
    %c0_44 = arith.constant 0 : index
    %98 = vector.load %arg4[%c704_43, %c0_44] : memref<840x128xf32, #tpu.memory_space<vmem>>, vector<1x128xf32>
    %99 = vector.extract_strided_slice %98 {offsets = [0, 96], sizes = [1, 32], strides = [1, 1]} : vector<1x128xf32> to vector<1x32xf32>
    %100 = vector.broadcast %99 : vector<1x32xf32> to vector<9x32xf32>
    %101 = arith.addf %97, %100 : vector<9x32xf32>
    %cst_45 = arith.constant dense<0.000000e+00> : vector<9xf32>
    %102 = vector.multi_reduction <add>, %101, %cst_45 [1] : vector<9x32xf32> to vector<9xf32>
    %103 = vector.shape_cast %102 : vector<9xf32> to vector<9x1xf32>
    %cst_46 = arith.constant 3.200000e+01 : f32
    %104 = vector.broadcast %cst_46 : f32 to vector<9x1xf32>
    %105 = arith.divf %103, %104 : vector<9x1xf32>
    %106 = vector.broadcast %105 : vector<9x1xf32> to vector<9x32xf32>
    %107 = arith.subf %101, %106 : vector<9x32xf32>
    %108 = arith.mulf %107, %107 : vector<9x32xf32>
    %cst_47 = arith.constant dense<0.000000e+00> : vector<9xf32>
    %109 = vector.multi_reduction <add>, %108, %cst_47 [1] : vector<9x32xf32> to vector<9xf32>
    %110 = vector.shape_cast %109 : vector<9xf32> to vector<9x1xf32>
    %cst_48 = arith.constant 3.200000e+01 : f32
    %111 = vector.broadcast %cst_48 : f32 to vector<9x1xf32>
    %112 = arith.divf %110, %111 : vector<9x1xf32>
    %cst_49 = arith.constant 9.99999974E-6 : f32
    %113 = vector.broadcast %cst_49 : f32 to vector<9x1xf32>
    %114 = arith.addf %112, %113 : vector<9x1xf32>
    %115 = math.rsqrt %114 : vector<9x1xf32>
    %116 = vector.broadcast %115 : vector<9x1xf32> to vector<9x32xf32>
    %117 = arith.mulf %107, %116 : vector<9x32xf32>
    %c712 = arith.constant 712 : index
    %c0_50 = arith.constant 0 : index
    %118 = vector.load %arg4[%c712, %c0_50] : memref<840x128xf32, #tpu.memory_space<vmem>>, vector<1x128xf32>
    %119 = vector.extract_strided_slice %118 {offsets = [0, 0], sizes = [1, 32], strides = [1, 1]} : vector<1x128xf32> to vector<1x32xf32>
    %120 = vector.broadcast %119 : vector<1x32xf32> to vector<9x32xf32>
    %121 = arith.mulf %117, %120 : vector<9x32xf32>
    %c712_51 = arith.constant 712 : index
    %c0_52 = arith.constant 0 : index
    %122 = vector.load %arg4[%c712_51, %c0_52] : memref<840x128xf32, #tpu.memory_space<vmem>>, vector<1x128xf32>
    %123 = vector.extract_strided_slice %122 {offsets = [0, 32], sizes = [1, 32], strides = [1, 1]} : vector<1x128xf32> to vector<1x32xf32>
    %124 = vector.broadcast %123 : vector<1x32xf32> to vector<9x32xf32>
    %125 = arith.addf %121, %124 : vector<9x32xf32>
    %126 = arith.addf %3, %4 : vector<64x32xf32>
    %127 = arith.addf %125, %1 : vector<9x32xf32>
    %c32 = arith.constant 32 : index
    %c0_53 = arith.constant 0 : index
    %128 = vector.load %arg4[%c32, %c0_53] : memref<840x128xf32, #tpu.memory_space<vmem>>, vector<32x128xf32>
    %129 = vector.extract_strided_slice %128 {offsets = [0, 0], sizes = [32, 16], strides = [1, 1]} : vector<32x128xf32> to vector<32x16xf32>
    %cst_54 = arith.constant dense<0.000000e+00> : vector<9x16xf32>
    %130 = tpu.matmul %127, %129, %cst_54 {dimension_numbers = #tpu.dot_dimension_numbers<[1], [0], [0], [1], [0, 0, 1, 1], [], []>} : vector<9x32xf32>, vector<32x16xf32>, vector<9x16xf32> -> vector<9x16xf32>
    %c712_55 = arith.constant 712 : index
    %c0_56 = arith.constant 0 : index
    %131 = vector.load %arg4[%c712_55, %c0_56] : memref<840x128xf32, #tpu.memory_space<vmem>>, vector<1x128xf32>
    %132 = vector.extract_strided_slice %131 {offsets = [0, 64], sizes = [1, 16], strides = [1, 1]} : vector<1x128xf32> to vector<1x16xf32>
    %133 = vector.broadcast %132 : vector<1x16xf32> to vector<9x16xf32>
    %134 = arith.addf %130, %133 : vector<9x16xf32>
    %c32_57 = arith.constant 32 : index
    %c0_58 = arith.constant 0 : index
    %135 = vector.load %arg4[%c32_57, %c0_58] : memref<840x128xf32, #tpu.memory_space<vmem>>, vector<32x128xf32>
    %136 = vector.extract_strided_slice %135 {offsets = [0, 16], sizes = [32, 16], strides = [1, 1]} : vector<32x128xf32> to vector<32x16xf32>
    %cst_59 = arith.constant dense<0.000000e+00> : vector<64x16xf32>
    %137 = tpu.matmul %126, %136, %cst_59 {dimension_numbers = #tpu.dot_dimension_numbers<[1], [0], [0], [1], [0, 0, 1, 1], [], []>} : vector<64x32xf32>, vector<32x16xf32>, vector<64x16xf32> -> vector<64x16xf32>
    %c712_60 = arith.constant 712 : index
    %c0_61 = arith.constant 0 : index
    %138 = vector.load %arg4[%c712_60, %c0_61] : memref<840x128xf32, #tpu.memory_space<vmem>>, vector<1x128xf32>
    %139 = vector.extract_strided_slice %138 {offsets = [0, 80], sizes = [1, 16], strides = [1, 1]} : vector<1x128xf32> to vector<1x16xf32>
    %140 = vector.broadcast %139 : vector<1x16xf32> to vector<64x16xf32>
    %141 = arith.addf %137, %140 : vector<64x16xf32>
    %c32_62 = arith.constant 32 : index
    %c0_63 = arith.constant 0 : index
    %142 = vector.load %arg4[%c32_62, %c0_63] : memref<840x128xf32, #tpu.memory_space<vmem>>, vector<32x128xf32>
    %143 = vector.extract_strided_slice %142 {offsets = [0, 32], sizes = [32, 16], strides = [1, 1]} : vector<32x128xf32> to vector<32x16xf32>
    %cst_64 = arith.constant dense<0.000000e+00> : vector<64x16xf32>
    %144 = tpu.matmul %3, %143, %cst_64 {dimension_numbers = #tpu.dot_dimension_numbers<[1], [0], [0], [1], [0, 0, 1, 1], [], []>} : vector<64x32xf32>, vector<32x16xf32>, vector<64x16xf32> -> vector<64x16xf32>
    %c712_65 = arith.constant 712 : index
    %c0_66 = arith.constant 0 : index
    %145 = vector.load %arg4[%c712_65, %c0_66] : memref<840x128xf32, #tpu.memory_space<vmem>>, vector<1x128xf32>
    %146 = vector.extract_strided_slice %145 {offsets = [0, 96], sizes = [1, 16], strides = [1, 1]} : vector<1x128xf32> to vector<1x16xf32>
    %147 = vector.broadcast %146 : vector<1x16xf32> to vector<64x16xf32>
    %148 = arith.addf %144, %147 : vector<64x16xf32>
    %149 = vector.extract_strided_slice %134 {offsets = [0, 0], sizes = [9, 4], strides = [1, 1]} : vector<9x16xf32> to vector<9x4xf32>
    %150 = vector.extract_strided_slice %141 {offsets = [0, 0], sizes = [64, 4], strides = [1, 1]} : vector<64x16xf32> to vector<64x4xf32>
    %cst_67 = arith.constant dense<0.000000e+00> : vector<9x64xf32>
    %151 = tpu.matmul %149, %150, %cst_67 {dimension_numbers = #tpu.dot_dimension_numbers<[1], [1], [0], [0], [0, 0, 1, 0], [], []>} : vector<9x4xf32>, vector<64x4xf32>, vector<9x64xf32> -> vector<9x64xf32>
    %cst_68 = arith.constant 5.000000e-01 : f32
    %152 = vector.broadcast %cst_68 : f32 to vector<9x64xf32>
    %153 = arith.mulf %151, %152 : vector<9x64xf32>
    %cst_69 = arith.constant dense<0xFF800000> : vector<9xf32>
    %154 = vector.multi_reduction <maximumf>, %153, %cst_69 [1] : vector<9x64xf32> to vector<9xf32>
    %155 = vector.shape_cast %154 : vector<9xf32> to vector<9x1xf32>
    %156 = vector.broadcast %155 : vector<9x1xf32> to vector<9x64xf32>
    %157 = arith.subf %153, %156 : vector<9x64xf32>
    %158 = math.exp %157 : vector<9x64xf32>
    %cst_70 = arith.constant dense<0.000000e+00> : vector<9xf32>
    %159 = vector.multi_reduction <add>, %158, %cst_70 [1] : vector<9x64xf32> to vector<9xf32>
    %160 = vector.shape_cast %159 : vector<9xf32> to vector<9x1xf32>
    %161 = tpu.reciprocal %160 {approx = true} : vector<9x1xf32> -> vector<9x1xf32>
    %162 = vector.broadcast %161 : vector<9x1xf32> to vector<9x64xf32>
    %163 = arith.mulf %158, %162 : vector<9x64xf32>
    %164 = vector.extract_strided_slice %148 {offsets = [0, 0], sizes = [64, 4], strides = [1, 1]} : vector<64x16xf32> to vector<64x4xf32>
    %cst_71 = arith.constant dense<0.000000e+00> : vector<9x4xf32>
    %165 = tpu.matmul %163, %164, %cst_71 {dimension_numbers = #tpu.dot_dimension_numbers<[1], [0], [0], [1], [0, 0, 1, 1], [], []>} : vector<9x64xf32>, vector<64x4xf32>, vector<9x4xf32> -> vector<9x4xf32>
    %166 = vector.extract_strided_slice %134 {offsets = [0, 4], sizes = [9, 4], strides = [1, 1]} : vector<9x16xf32> to vector<9x4xf32>
    %167 = vector.extract_strided_slice %141 {offsets = [0, 4], sizes = [64, 4], strides = [1, 1]} : vector<64x16xf32> to vector<64x4xf32>
    %cst_72 = arith.constant dense<0.000000e+00> : vector<9x64xf32>
    %168 = tpu.matmul %166, %167, %cst_72 {dimension_numbers = #tpu.dot_dimension_numbers<[1], [1], [0], [0], [0, 0, 1, 0], [], []>} : vector<9x4xf32>, vector<64x4xf32>, vector<9x64xf32> -> vector<9x64xf32>
    %cst_73 = arith.constant 5.000000e-01 : f32
    %169 = vector.broadcast %cst_73 : f32 to vector<9x64xf32>
    %170 = arith.mulf %168, %169 : vector<9x64xf32>
    %cst_74 = arith.constant dense<0xFF800000> : vector<9xf32>
    %171 = vector.multi_reduction <maximumf>, %170, %cst_74 [1] : vector<9x64xf32> to vector<9xf32>
    %172 = vector.shape_cast %171 : vector<9xf32> to vector<9x1xf32>
    %173 = vector.broadcast %172 : vector<9x1xf32> to vector<9x64xf32>
    %174 = arith.subf %170, %173 : vector<9x64xf32>
    %175 = math.exp %174 : vector<9x64xf32>
    %cst_75 = arith.constant dense<0.000000e+00> : vector<9xf32>
    %176 = vector.multi_reduction <add>, %175, %cst_75 [1] : vector<9x64xf32> to vector<9xf32>
    %177 = vector.shape_cast %176 : vector<9xf32> to vector<9x1xf32>
    %178 = tpu.reciprocal %177 {approx = true} : vector<9x1xf32> -> vector<9x1xf32>
    %179 = vector.broadcast %178 : vector<9x1xf32> to vector<9x64xf32>
    %180 = arith.mulf %175, %179 : vector<9x64xf32>
    %181 = vector.extract_strided_slice %148 {offsets = [0, 4], sizes = [64, 4], strides = [1, 1]} : vector<64x16xf32> to vector<64x4xf32>
    %cst_76 = arith.constant dense<0.000000e+00> : vector<9x4xf32>
    %182 = tpu.matmul %180, %181, %cst_76 {dimension_numbers = #tpu.dot_dimension_numbers<[1], [0], [0], [1], [0, 0, 1, 1], [], []>} : vector<9x64xf32>, vector<64x4xf32>, vector<9x4xf32> -> vector<9x4xf32>
    %183 = vector.extract_strided_slice %134 {offsets = [0, 8], sizes = [9, 4], strides = [1, 1]} : vector<9x16xf32> to vector<9x4xf32>
    %184 = vector.extract_strided_slice %141 {offsets = [0, 8], sizes = [64, 4], strides = [1, 1]} : vector<64x16xf32> to vector<64x4xf32>
    %cst_77 = arith.constant dense<0.000000e+00> : vector<9x64xf32>
    %185 = tpu.matmul %183, %184, %cst_77 {dimension_numbers = #tpu.dot_dimension_numbers<[1], [1], [0], [0], [0, 0, 1, 0], [], []>} : vector<9x4xf32>, vector<64x4xf32>, vector<9x64xf32> -> vector<9x64xf32>
    %cst_78 = arith.constant 5.000000e-01 : f32
    %186 = vector.broadcast %cst_78 : f32 to vector<9x64xf32>
    %187 = arith.mulf %185, %186 : vector<9x64xf32>
    %cst_79 = arith.constant dense<0xFF800000> : vector<9xf32>
    %188 = vector.multi_reduction <maximumf>, %187, %cst_79 [1] : vector<9x64xf32> to vector<9xf32>
    %189 = vector.shape_cast %188 : vector<9xf32> to vector<9x1xf32>
    %190 = vector.broadcast %189 : vector<9x1xf32> to vector<9x64xf32>
    %191 = arith.subf %187, %190 : vector<9x64xf32>
    %192 = math.exp %191 : vector<9x64xf32>
    %cst_80 = arith.constant dense<0.000000e+00> : vector<9xf32>
    %193 = vector.multi_reduction <add>, %192, %cst_80 [1] : vector<9x64xf32> to vector<9xf32>
    %194 = vector.shape_cast %193 : vector<9xf32> to vector<9x1xf32>
    %195 = tpu.reciprocal %194 {approx = true} : vector<9x1xf32> -> vector<9x1xf32>
    %196 = vector.broadcast %195 : vector<9x1xf32> to vector<9x64xf32>
    %197 = arith.mulf %192, %196 : vector<9x64xf32>
    %198 = vector.extract_strided_slice %148 {offsets = [0, 8], sizes = [64, 4], strides = [1, 1]} : vector<64x16xf32> to vector<64x4xf32>
    %cst_81 = arith.constant dense<0.000000e+00> : vector<9x4xf32>
    %199 = tpu.matmul %197, %198, %cst_81 {dimension_numbers = #tpu.dot_dimension_numbers<[1], [0], [0], [1], [0, 0, 1, 1], [], []>} : vector<9x64xf32>, vector<64x4xf32>, vector<9x4xf32> -> vector<9x4xf32>
    %200 = vector.extract_strided_slice %134 {offsets = [0, 12], sizes = [9, 4], strides = [1, 1]} : vector<9x16xf32> to vector<9x4xf32>
    %201 = vector.extract_strided_slice %141 {offsets = [0, 12], sizes = [64, 4], strides = [1, 1]} : vector<64x16xf32> to vector<64x4xf32>
    %cst_82 = arith.constant dense<0.000000e+00> : vector<9x64xf32>
    %202 = tpu.matmul %200, %201, %cst_82 {dimension_numbers = #tpu.dot_dimension_numbers<[1], [1], [0], [0], [0, 0, 1, 0], [], []>} : vector<9x4xf32>, vector<64x4xf32>, vector<9x64xf32> -> vector<9x64xf32>
    %cst_83 = arith.constant 5.000000e-01 : f32
    %203 = vector.broadcast %cst_83 : f32 to vector<9x64xf32>
    %204 = arith.mulf %202, %203 : vector<9x64xf32>
    %cst_84 = arith.constant dense<0xFF800000> : vector<9xf32>
    %205 = vector.multi_reduction <maximumf>, %204, %cst_84 [1] : vector<9x64xf32> to vector<9xf32>
    %206 = vector.shape_cast %205 : vector<9xf32> to vector<9x1xf32>
    %207 = vector.broadcast %206 : vector<9x1xf32> to vector<9x64xf32>
    %208 = arith.subf %204, %207 : vector<9x64xf32>
    %209 = math.exp %208 : vector<9x64xf32>
    %cst_85 = arith.constant dense<0.000000e+00> : vector<9xf32>
    %210 = vector.multi_reduction <add>, %209, %cst_85 [1] : vector<9x64xf32> to vector<9xf32>
    %211 = vector.shape_cast %210 : vector<9xf32> to vector<9x1xf32>
    %212 = tpu.reciprocal %211 {approx = true} : vector<9x1xf32> -> vector<9x1xf32>
    %213 = vector.broadcast %212 : vector<9x1xf32> to vector<9x64xf32>
    %214 = arith.mulf %209, %213 : vector<9x64xf32>
    %215 = vector.extract_strided_slice %148 {offsets = [0, 12], sizes = [64, 4], strides = [1, 1]} : vector<64x16xf32> to vector<64x4xf32>
    %cst_86 = arith.constant dense<0.000000e+00> : vector<9x4xf32>
    %216 = tpu.matmul %214, %215, %cst_86 {dimension_numbers = #tpu.dot_dimension_numbers<[1], [0], [0], [1], [0, 0, 1, 1], [], []>} : vector<9x64xf32>, vector<64x4xf32>, vector<9x4xf32> -> vector<9x4xf32>
    %217 = tpu.concatenate %165, %182, %199, %216 in 1 : vector<9x4xf32>, vector<9x4xf32>, vector<9x4xf32>, vector<9x4xf32> -> vector<9x16xf32>
    %c64 = arith.constant 64 : index
    %c0_87 = arith.constant 0 : index
    %218 = vector.load %arg4[%c64, %c0_87] : memref<840x128xf32, #tpu.memory_space<vmem>>, vector<16x128xf32>
    %219 = vector.extract_strided_slice %218 {offsets = [0, 0], sizes = [16, 32], strides = [1, 1]} : vector<16x128xf32> to vector<16x32xf32>
    %cst_88 = arith.constant dense<0.000000e+00> : vector<9x32xf32>
    %220 = tpu.matmul %217, %219, %cst_88 {dimension_numbers = #tpu.dot_dimension_numbers<[1], [0], [0], [1], [0, 0, 1, 1], [], []>} : vector<9x16xf32>, vector<16x32xf32>, vector<9x32xf32> -> vector<9x32xf32>
    %c720 = arith.constant 720 : index
    %c0_89 = arith.constant 0 : index
    %221 = vector.load %arg4[%c720, %c0_89] : memref<840x128xf32, #tpu.memory_space<vmem>>, vector<1x128xf32>
    %222 = vector.extract_strided_slice %221 {offsets = [0, 0], sizes = [1, 32], strides = [1, 1]} : vector<1x128xf32> to vector<1x32xf32>
    %223 = vector.broadcast %222 : vector<1x32xf32> to vector<9x32xf32>
    %224 = arith.addf %220, %223 : vector<9x32xf32>
    %225 = arith.addf %125, %224 : vector<9x32xf32>
    %cst_90 = arith.constant dense<0.000000e+00> : vector<9xf32>
    %226 = vector.multi_reduction <add>, %225, %cst_90 [1] : vector<9x32xf32> to vector<9xf32>
    %227 = vector.shape_cast %226 : vector<9xf32> to vector<9x1xf32>
    %cst_91 = arith.constant 3.200000e+01 : f32
    %228 = vector.broadcast %cst_91 : f32 to vector<9x1xf32>
    %229 = arith.divf %227, %228 : vector<9x1xf32>
    %230 = vector.broadcast %229 : vector<9x1xf32> to vector<9x32xf32>
    %231 = arith.subf %225, %230 : vector<9x32xf32>
    %232 = arith.mulf %231, %231 : vector<9x32xf32>
    %cst_92 = arith.constant dense<0.000000e+00> : vector<9xf32>
    %233 = vector.multi_reduction <add>, %232, %cst_92 [1] : vector<9x32xf32> to vector<9xf32>
    %234 = vector.shape_cast %233 : vector<9xf32> to vector<9x1xf32>
    %cst_93 = arith.constant 3.200000e+01 : f32
    %235 = vector.broadcast %cst_93 : f32 to vector<9x1xf32>
    %236 = arith.divf %234, %235 : vector<9x1xf32>
    %cst_94 = arith.constant 9.99999974E-6 : f32
    %237 = vector.broadcast %cst_94 : f32 to vector<9x1xf32>
    %238 = arith.addf %236, %237 : vector<9x1xf32>
    %239 = math.rsqrt %238 : vector<9x1xf32>
    %240 = vector.broadcast %239 : vector<9x1xf32> to vector<9x32xf32>
    %241 = arith.mulf %231, %240 : vector<9x32xf32>
    %c720_95 = arith.constant 720 : index
    %c0_96 = arith.constant 0 : index
    %242 = vector.load %arg4[%c720_95, %c0_96] : memref<840x128xf32, #tpu.memory_space<vmem>>, vector<1x128xf32>
    %243 = vector.extract_strided_slice %242 {offsets = [0, 32], sizes = [1, 32], strides = [1, 1]} : vector<1x128xf32> to vector<1x32xf32>
    %244 = vector.broadcast %243 : vector<1x32xf32> to vector<9x32xf32>
    %245 = arith.mulf %241, %244 : vector<9x32xf32>
    %c720_97 = arith.constant 720 : index
    %c0_98 = arith.constant 0 : index
    %246 = vector.load %arg4[%c720_97, %c0_98] : memref<840x128xf32, #tpu.memory_space<vmem>>, vector<1x128xf32>
    %247 = vector.extract_strided_slice %246 {offsets = [0, 64], sizes = [1, 32], strides = [1, 1]} : vector<1x128xf32> to vector<1x32xf32>
    %248 = vector.broadcast %247 : vector<1x32xf32> to vector<9x32xf32>
    %249 = arith.addf %245, %248 : vector<9x32xf32>
    %c32_99 = arith.constant 32 : index
    %c0_100 = arith.constant 0 : index
    %250 = vector.load %arg4[%c32_99, %c0_100] : memref<840x128xf32, #tpu.memory_space<vmem>>, vector<32x128xf32>
    %251 = vector.extract_strided_slice %250 {offsets = [0, 48], sizes = [32, 64], strides = [1, 1]} : vector<32x128xf32> to vector<32x64xf32>
    %cst_101 = arith.constant dense<0.000000e+00> : vector<9x64xf32>
    %252 = tpu.matmul %249, %251, %cst_101 {dimension_numbers = #tpu.dot_dimension_numbers<[1], [0], [0], [1], [0, 0, 1, 1], [], []>} : vector<9x32xf32>, vector<32x64xf32>, vector<9x64xf32> -> vector<9x64xf32>
    %c728 = arith.constant 728 : index
    %c0_102 = arith.constant 0 : index
    %253 = vector.load %arg4[%c728, %c0_102] : memref<840x128xf32, #tpu.memory_space<vmem>>, vector<1x128xf32>
    %254 = vector.extract_strided_slice %253 {offsets = [0, 0], sizes = [1, 64], strides = [1, 1]} : vector<1x128xf32> to vector<1x64xf32>
    %255 = vector.broadcast %254 : vector<1x64xf32> to vector<9x64xf32>
    %256 = arith.addf %252, %255 : vector<9x64xf32>
    %cst_103 = arith.constant 0.000000e+00 : f32
    %257 = vector.broadcast %cst_103 : f32 to vector<9x64xf32>
    %258 = arith.maximumf %256, %257 : vector<9x64xf32>
    %c80 = arith.constant 80 : index
    %c0_104 = arith.constant 0 : index
    %259 = vector.load %arg4[%c80, %c0_104] : memref<840x128xf32, #tpu.memory_space<vmem>>, vector<64x128xf32>
    %260 = vector.extract_strided_slice %259 {offsets = [0, 0], sizes = [64, 32], strides = [1, 1]} : vector<64x128xf32> to vector<64x32xf32>
    %cst_105 = arith.constant dense<0.000000e+00> : vector<9x32xf32>
    %261 = tpu.matmul %258, %260, %cst_105 {dimension_numbers = #tpu.dot_dimension_numbers<[1], [0], [0], [1], [0, 0, 1, 1], [], []>} : vector<9x64xf32>, vector<64x32xf32>, vector<9x32xf32> -> vector<9x32xf32>
    %c720_106 = arith.constant 720 : index
    %c0_107 = arith.constant 0 : index
    %262 = vector.load %arg4[%c720_106, %c0_107] : memref<840x128xf32, #tpu.memory_space<vmem>>, vector<1x128xf32>
    %263 = vector.extract_strided_slice %262 {offsets = [0, 96], sizes = [1, 32], strides = [1, 1]} : vector<1x128xf32> to vector<1x32xf32>
    %264 = vector.broadcast %263 : vector<1x32xf32> to vector<9x32xf32>
    %265 = arith.addf %261, %264 : vector<9x32xf32>
    %266 = arith.addf %249, %265 : vector<9x32xf32>
    %cst_108 = arith.constant dense<0.000000e+00> : vector<9xf32>
    %267 = vector.multi_reduction <add>, %266, %cst_108 [1] : vector<9x32xf32> to vector<9xf32>
    %268 = vector.shape_cast %267 : vector<9xf32> to vector<9x1xf32>
    %cst_109 = arith.constant 3.200000e+01 : f32
    %269 = vector.broadcast %cst_109 : f32 to vector<9x1xf32>
    %270 = arith.divf %268, %269 : vector<9x1xf32>
    %271 = vector.broadcast %270 : vector<9x1xf32> to vector<9x32xf32>
    %272 = arith.subf %266, %271 : vector<9x32xf32>
    %273 = arith.mulf %272, %272 : vector<9x32xf32>
    %cst_110 = arith.constant dense<0.000000e+00> : vector<9xf32>
    %274 = vector.multi_reduction <add>, %273, %cst_110 [1] : vector<9x32xf32> to vector<9xf32>
    %275 = vector.shape_cast %274 : vector<9xf32> to vector<9x1xf32>
    %cst_111 = arith.constant 3.200000e+01 : f32
    %276 = vector.broadcast %cst_111 : f32 to vector<9x1xf32>
    %277 = arith.divf %275, %276 : vector<9x1xf32>
    %cst_112 = arith.constant 9.99999974E-6 : f32
    %278 = vector.broadcast %cst_112 : f32 to vector<9x1xf32>
    %279 = arith.addf %277, %278 : vector<9x1xf32>
    %280 = math.rsqrt %279 : vector<9x1xf32>
    %281 = vector.broadcast %280 : vector<9x1xf32> to vector<9x32xf32>
    %282 = arith.mulf %272, %281 : vector<9x32xf32>
    %c728_113 = arith.constant 728 : index
    %c0_114 = arith.constant 0 : index
    %283 = vector.load %arg4[%c728_113, %c0_114] : memref<840x128xf32, #tpu.memory_space<vmem>>, vector<1x128xf32>
    %284 = vector.extract_strided_slice %283 {offsets = [0, 64], sizes = [1, 32], strides = [1, 1]} : vector<1x128xf32> to vector<1x32xf32>
    %285 = vector.broadcast %284 : vector<1x32xf32> to vector<9x32xf32>
    %286 = arith.mulf %282, %285 : vector<9x32xf32>
    %c728_115 = arith.constant 728 : index
    %c0_116 = arith.constant 0 : index
    %287 = vector.load %arg4[%c728_115, %c0_116] : memref<840x128xf32, #tpu.memory_space<vmem>>, vector<1x128xf32>
    %288 = vector.extract_strided_slice %287 {offsets = [0, 96], sizes = [1, 32], strides = [1, 1]} : vector<1x128xf32> to vector<1x32xf32>
    %289 = vector.broadcast %288 : vector<1x32xf32> to vector<9x32xf32>
    %290 = arith.addf %286, %289 : vector<9x32xf32>
    %291 = arith.addf %290, %1 : vector<9x32xf32>
    %c32_117 = arith.constant 32 : index
    %c0_118 = arith.constant 0 : index
    %292 = vector.load %arg4[%c32_117, %c0_118] : memref<840x128xf32, #tpu.memory_space<vmem>>, vector<32x128xf32>
    %293 = vector.extract_strided_slice %292 {offsets = [0, 112], sizes = [32, 16], strides = [1, 1]} : vector<32x128xf32> to vector<32x16xf32>
    %cst_119 = arith.constant dense<0.000000e+00> : vector<64x16xf32>
    %294 = tpu.matmul %126, %293, %cst_119 {dimension_numbers = #tpu.dot_dimension_numbers<[1], [0], [0], [1], [0, 0, 1, 1], [], []>} : vector<64x32xf32>, vector<32x16xf32>, vector<64x16xf32> -> vector<64x16xf32>
    %c712_120 = arith.constant 712 : index
    %c0_121 = arith.constant 0 : index
    %295 = vector.load %arg4[%c712_120, %c0_121] : memref<840x128xf32, #tpu.memory_space<vmem>>, vector<1x128xf32>
    %296 = vector.extract_strided_slice %295 {offsets = [0, 112], sizes = [1, 16], strides = [1, 1]} : vector<1x128xf32> to vector<1x16xf32>
    %297 = vector.broadcast %296 : vector<1x16xf32> to vector<64x16xf32>
    %298 = arith.addf %294, %297 : vector<64x16xf32>
    %c144 = arith.constant 144 : index
    %c0_122 = arith.constant 0 : index
    %299 = vector.load %arg4[%c144, %c0_122] : memref<840x128xf32, #tpu.memory_space<vmem>>, vector<32x128xf32>
    %300 = vector.extract_strided_slice %299 {offsets = [0, 0], sizes = [32, 16], strides = [1, 1]} : vector<32x128xf32> to vector<32x16xf32>
    %cst_123 = arith.constant dense<0.000000e+00> : vector<9x16xf32>
    %301 = tpu.matmul %291, %300, %cst_123 {dimension_numbers = #tpu.dot_dimension_numbers<[1], [0], [0], [1], [0, 0, 1, 1], [], []>} : vector<9x32xf32>, vector<32x16xf32>, vector<9x16xf32> -> vector<9x16xf32>
    %c736 = arith.constant 736 : index
    %c0_124 = arith.constant 0 : index
    %302 = vector.load %arg4[%c736, %c0_124] : memref<840x128xf32, #tpu.memory_space<vmem>>, vector<1x128xf32>
    %303 = vector.extract_strided_slice %302 {offsets = [0, 0], sizes = [1, 16], strides = [1, 1]} : vector<1x128xf32> to vector<1x16xf32>
    %304 = vector.broadcast %303 : vector<1x16xf32> to vector<9x16xf32>
    %305 = arith.addf %301, %304 : vector<9x16xf32>
    %c144_125 = arith.constant 144 : index
    %c0_126 = arith.constant 0 : index
    %306 = vector.load %arg4[%c144_125, %c0_126] : memref<840x128xf32, #tpu.memory_space<vmem>>, vector<32x128xf32>
    %307 = vector.extract_strided_slice %306 {offsets = [0, 16], sizes = [32, 16], strides = [1, 1]} : vector<32x128xf32> to vector<32x16xf32>
    %cst_127 = arith.constant dense<0.000000e+00> : vector<9x16xf32>
    %308 = tpu.matmul %290, %307, %cst_127 {dimension_numbers = #tpu.dot_dimension_numbers<[1], [0], [0], [1], [0, 0, 1, 1], [], []>} : vector<9x32xf32>, vector<32x16xf32>, vector<9x16xf32> -> vector<9x16xf32>
    %c736_128 = arith.constant 736 : index
    %c0_129 = arith.constant 0 : index
    %309 = vector.load %arg4[%c736_128, %c0_129] : memref<840x128xf32, #tpu.memory_space<vmem>>, vector<1x128xf32>
    %310 = vector.extract_strided_slice %309 {offsets = [0, 16], sizes = [1, 16], strides = [1, 1]} : vector<1x128xf32> to vector<1x16xf32>
    %311 = vector.broadcast %310 : vector<1x16xf32> to vector<9x16xf32>
    %312 = arith.addf %308, %311 : vector<9x16xf32>
    %313 = vector.extract_strided_slice %298 {offsets = [0, 0], sizes = [64, 4], strides = [1, 1]} : vector<64x16xf32> to vector<64x4xf32>
    %314 = vector.extract_strided_slice %305 {offsets = [0, 0], sizes = [9, 4], strides = [1, 1]} : vector<9x16xf32> to vector<9x4xf32>
    %cst_130 = arith.constant dense<0.000000e+00> : vector<64x9xf32>
    %315 = tpu.matmul %313, %314, %cst_130 {dimension_numbers = #tpu.dot_dimension_numbers<[1], [1], [0], [0], [0, 0, 1, 0], [], []>} : vector<64x4xf32>, vector<9x4xf32>, vector<64x9xf32> -> vector<64x9xf32>
    %cst_131 = arith.constant 5.000000e-01 : f32
    %316 = vector.broadcast %cst_131 : f32 to vector<64x9xf32>
    %317 = arith.mulf %315, %316 : vector<64x9xf32>
    %cst_132 = arith.constant dense<0xFF800000> : vector<64xf32>
    %318 = vector.multi_reduction <maximumf>, %317, %cst_132 [1] : vector<64x9xf32> to vector<64xf32>
    %319 = vector.shape_cast %318 : vector<64xf32> to vector<64x1xf32>
    %320 = vector.broadcast %319 : vector<64x1xf32> to vector<64x9xf32>
    %321 = arith.subf %317, %320 : vector<64x9xf32>
    %322 = math.exp %321 : vector<64x9xf32>
    %cst_133 = arith.constant dense<0.000000e+00> : vector<64xf32>
    %323 = vector.multi_reduction <add>, %322, %cst_133 [1] : vector<64x9xf32> to vector<64xf32>
    %324 = vector.shape_cast %323 : vector<64xf32> to vector<64x1xf32>
    %325 = tpu.reciprocal %324 {approx = true} : vector<64x1xf32> -> vector<64x1xf32>
    %326 = vector.broadcast %325 : vector<64x1xf32> to vector<64x9xf32>
    %327 = arith.mulf %322, %326 : vector<64x9xf32>
    %328 = vector.extract_strided_slice %312 {offsets = [0, 0], sizes = [9, 4], strides = [1, 1]} : vector<9x16xf32> to vector<9x4xf32>
    %cst_134 = arith.constant dense<0.000000e+00> : vector<64x4xf32>
    %329 = tpu.matmul %327, %328, %cst_134 {dimension_numbers = #tpu.dot_dimension_numbers<[1], [0], [0], [1], [0, 0, 1, 1], [], []>} : vector<64x9xf32>, vector<9x4xf32>, vector<64x4xf32> -> vector<64x4xf32>
    %330 = vector.extract_strided_slice %298 {offsets = [0, 4], sizes = [64, 4], strides = [1, 1]} : vector<64x16xf32> to vector<64x4xf32>
    %331 = vector.extract_strided_slice %305 {offsets = [0, 4], sizes = [9, 4], strides = [1, 1]} : vector<9x16xf32> to vector<9x4xf32>
    %cst_135 = arith.constant dense<0.000000e+00> : vector<64x9xf32>
    %332 = tpu.matmul %330, %331, %cst_135 {dimension_numbers = #tpu.dot_dimension_numbers<[1], [1], [0], [0], [0, 0, 1, 0], [], []>} : vector<64x4xf32>, vector<9x4xf32>, vector<64x9xf32> -> vector<64x9xf32>
    %cst_136 = arith.constant 5.000000e-01 : f32
    %333 = vector.broadcast %cst_136 : f32 to vector<64x9xf32>
    %334 = arith.mulf %332, %333 : vector<64x9xf32>
    %cst_137 = arith.constant dense<0xFF800000> : vector<64xf32>
    %335 = vector.multi_reduction <maximumf>, %334, %cst_137 [1] : vector<64x9xf32> to vector<64xf32>
    %336 = vector.shape_cast %335 : vector<64xf32> to vector<64x1xf32>
    %337 = vector.broadcast %336 : vector<64x1xf32> to vector<64x9xf32>
    %338 = arith.subf %334, %337 : vector<64x9xf32>
    %339 = math.exp %338 : vector<64x9xf32>
    %cst_138 = arith.constant dense<0.000000e+00> : vector<64xf32>
    %340 = vector.multi_reduction <add>, %339, %cst_138 [1] : vector<64x9xf32> to vector<64xf32>
    %341 = vector.shape_cast %340 : vector<64xf32> to vector<64x1xf32>
    %342 = tpu.reciprocal %341 {approx = true} : vector<64x1xf32> -> vector<64x1xf32>
    %343 = vector.broadcast %342 : vector<64x1xf32> to vector<64x9xf32>
    %344 = arith.mulf %339, %343 : vector<64x9xf32>
    %345 = vector.extract_strided_slice %312 {offsets = [0, 4], sizes = [9, 4], strides = [1, 1]} : vector<9x16xf32> to vector<9x4xf32>
    %cst_139 = arith.constant dense<0.000000e+00> : vector<64x4xf32>
    %346 = tpu.matmul %344, %345, %cst_139 {dimension_numbers = #tpu.dot_dimension_numbers<[1], [0], [0], [1], [0, 0, 1, 1], [], []>} : vector<64x9xf32>, vector<9x4xf32>, vector<64x4xf32> -> vector<64x4xf32>
    %347 = vector.extract_strided_slice %298 {offsets = [0, 8], sizes = [64, 4], strides = [1, 1]} : vector<64x16xf32> to vector<64x4xf32>
    %348 = vector.extract_strided_slice %305 {offsets = [0, 8], sizes = [9, 4], strides = [1, 1]} : vector<9x16xf32> to vector<9x4xf32>
    %cst_140 = arith.constant dense<0.000000e+00> : vector<64x9xf32>
    %349 = tpu.matmul %347, %348, %cst_140 {dimension_numbers = #tpu.dot_dimension_numbers<[1], [1], [0], [0], [0, 0, 1, 0], [], []>} : vector<64x4xf32>, vector<9x4xf32>, vector<64x9xf32> -> vector<64x9xf32>
    %cst_141 = arith.constant 5.000000e-01 : f32
    %350 = vector.broadcast %cst_141 : f32 to vector<64x9xf32>
    %351 = arith.mulf %349, %350 : vector<64x9xf32>
    %cst_142 = arith.constant dense<0xFF800000> : vector<64xf32>
    %352 = vector.multi_reduction <maximumf>, %351, %cst_142 [1] : vector<64x9xf32> to vector<64xf32>
    %353 = vector.shape_cast %352 : vector<64xf32> to vector<64x1xf32>
    %354 = vector.broadcast %353 : vector<64x1xf32> to vector<64x9xf32>
    %355 = arith.subf %351, %354 : vector<64x9xf32>
    %356 = math.exp %355 : vector<64x9xf32>
    %cst_143 = arith.constant dense<0.000000e+00> : vector<64xf32>
    %357 = vector.multi_reduction <add>, %356, %cst_143 [1] : vector<64x9xf32> to vector<64xf32>
    %358 = vector.shape_cast %357 : vector<64xf32> to vector<64x1xf32>
    %359 = tpu.reciprocal %358 {approx = true} : vector<64x1xf32> -> vector<64x1xf32>
    %360 = vector.broadcast %359 : vector<64x1xf32> to vector<64x9xf32>
    %361 = arith.mulf %356, %360 : vector<64x9xf32>
    %362 = vector.extract_strided_slice %312 {offsets = [0, 8], sizes = [9, 4], strides = [1, 1]} : vector<9x16xf32> to vector<9x4xf32>
    %cst_144 = arith.constant dense<0.000000e+00> : vector<64x4xf32>
    %363 = tpu.matmul %361, %362, %cst_144 {dimension_numbers = #tpu.dot_dimension_numbers<[1], [0], [0], [1], [0, 0, 1, 1], [], []>} : vector<64x9xf32>, vector<9x4xf32>, vector<64x4xf32> -> vector<64x4xf32>
    %364 = vector.extract_strided_slice %298 {offsets = [0, 12], sizes = [64, 4], strides = [1, 1]} : vector<64x16xf32> to vector<64x4xf32>
    %365 = vector.extract_strided_slice %305 {offsets = [0, 12], sizes = [9, 4], strides = [1, 1]} : vector<9x16xf32> to vector<9x4xf32>
    %cst_145 = arith.constant dense<0.000000e+00> : vector<64x9xf32>
    %366 = tpu.matmul %364, %365, %cst_145 {dimension_numbers = #tpu.dot_dimension_numbers<[1], [1], [0], [0], [0, 0, 1, 0], [], []>} : vector<64x4xf32>, vector<9x4xf32>, vector<64x9xf32> -> vector<64x9xf32>
    %cst_146 = arith.constant 5.000000e-01 : f32
    %367 = vector.broadcast %cst_146 : f32 to vector<64x9xf32>
    %368 = arith.mulf %366, %367 : vector<64x9xf32>
    %cst_147 = arith.constant dense<0xFF800000> : vector<64xf32>
    %369 = vector.multi_reduction <maximumf>, %368, %cst_147 [1] : vector<64x9xf32> to vector<64xf32>
    %370 = vector.shape_cast %369 : vector<64xf32> to vector<64x1xf32>
    %371 = vector.broadcast %370 : vector<64x1xf32> to vector<64x9xf32>
    %372 = arith.subf %368, %371 : vector<64x9xf32>
    %373 = math.exp %372 : vector<64x9xf32>
    %cst_148 = arith.constant dense<0.000000e+00> : vector<64xf32>
    %374 = vector.multi_reduction <add>, %373, %cst_148 [1] : vector<64x9xf32> to vector<64xf32>
    %375 = vector.shape_cast %374 : vector<64xf32> to vector<64x1xf32>
    %376 = tpu.reciprocal %375 {approx = true} : vector<64x1xf32> -> vector<64x1xf32>
    %377 = vector.broadcast %376 : vector<64x1xf32> to vector<64x9xf32>
    %378 = arith.mulf %373, %377 : vector<64x9xf32>
    %379 = vector.extract_strided_slice %312 {offsets = [0, 12], sizes = [9, 4], strides = [1, 1]} : vector<9x16xf32> to vector<9x4xf32>
    %cst_149 = arith.constant dense<0.000000e+00> : vector<64x4xf32>
    %380 = tpu.matmul %378, %379, %cst_149 {dimension_numbers = #tpu.dot_dimension_numbers<[1], [0], [0], [1], [0, 0, 1, 1], [], []>} : vector<64x9xf32>, vector<9x4xf32>, vector<64x4xf32> -> vector<64x4xf32>
    %381 = tpu.concatenate %329, %346, %363, %380 in 1 : vector<64x4xf32>, vector<64x4xf32>, vector<64x4xf32>, vector<64x4xf32> -> vector<64x16xf32>
    %c64_150 = arith.constant 64 : index
    %c0_151 = arith.constant 0 : index
    %382 = vector.load %arg4[%c64_150, %c0_151] : memref<840x128xf32, #tpu.memory_space<vmem>>, vector<16x128xf32>
    %383 = vector.extract_strided_slice %382 {offsets = [0, 32], sizes = [16, 32], strides = [1, 1]} : vector<16x128xf32> to vector<16x32xf32>
    %cst_152 = arith.constant dense<0.000000e+00> : vector<64x32xf32>
    %384 = tpu.matmul %381, %383, %cst_152 {dimension_numbers = #tpu.dot_dimension_numbers<[1], [0], [0], [1], [0, 0, 1, 1], [], []>} : vector<64x16xf32>, vector<16x32xf32>, vector<64x32xf32> -> vector<64x32xf32>
    %c736_153 = arith.constant 736 : index
    %c0_154 = arith.constant 0 : index
    %385 = vector.load %arg4[%c736_153, %c0_154] : memref<840x128xf32, #tpu.memory_space<vmem>>, vector<1x128xf32>
    %386 = vector.extract_strided_slice %385 {offsets = [0, 32], sizes = [1, 32], strides = [1, 1]} : vector<1x128xf32> to vector<1x32xf32>
    %387 = vector.broadcast %386 : vector<1x32xf32> to vector<64x32xf32>
    %388 = arith.addf %384, %387 : vector<64x32xf32>
    %389 = arith.addf %3, %388 : vector<64x32xf32>
    %cst_155 = arith.constant dense<0.000000e+00> : vector<64xf32>
    %390 = vector.multi_reduction <add>, %389, %cst_155 [1] : vector<64x32xf32> to vector<64xf32>
    %391 = vector.shape_cast %390 : vector<64xf32> to vector<64x1xf32>
    %cst_156 = arith.constant 3.200000e+01 : f32
    %392 = vector.broadcast %cst_156 : f32 to vector<64x1xf32>
    %393 = arith.divf %391, %392 : vector<64x1xf32>
    %394 = vector.broadcast %393 : vector<64x1xf32> to vector<64x32xf32>
    %395 = arith.subf %389, %394 : vector<64x32xf32>
    %396 = arith.mulf %395, %395 : vector<64x32xf32>
    %cst_157 = arith.constant dense<0.000000e+00> : vector<64xf32>
    %397 = vector.multi_reduction <add>, %396, %cst_157 [1] : vector<64x32xf32> to vector<64xf32>
    %398 = vector.shape_cast %397 : vector<64xf32> to vector<64x1xf32>
    %cst_158 = arith.constant 3.200000e+01 : f32
    %399 = vector.broadcast %cst_158 : f32 to vector<64x1xf32>
    %400 = arith.divf %398, %399 : vector<64x1xf32>
    %cst_159 = arith.constant 9.99999974E-6 : f32
    %401 = vector.broadcast %cst_159 : f32 to vector<64x1xf32>
    %402 = arith.addf %400, %401 : vector<64x1xf32>
    %403 = math.rsqrt %402 : vector<64x1xf32>
    %404 = vector.broadcast %403 : vector<64x1xf32> to vector<64x32xf32>
    %405 = arith.mulf %395, %404 : vector<64x32xf32>
    %c736_160 = arith.constant 736 : index
    %c0_161 = arith.constant 0 : index
    %406 = vector.load %arg4[%c736_160, %c0_161] : memref<840x128xf32, #tpu.memory_space<vmem>>, vector<1x128xf32>
    %407 = vector.extract_strided_slice %406 {offsets = [0, 64], sizes = [1, 32], strides = [1, 1]} : vector<1x128xf32> to vector<1x32xf32>
    %408 = vector.broadcast %407 : vector<1x32xf32> to vector<64x32xf32>
    %409 = arith.mulf %405, %408 : vector<64x32xf32>
    %c736_162 = arith.constant 736 : index
    %c0_163 = arith.constant 0 : index
    %410 = vector.load %arg4[%c736_162, %c0_163] : memref<840x128xf32, #tpu.memory_space<vmem>>, vector<1x128xf32>
    %411 = vector.extract_strided_slice %410 {offsets = [0, 96], sizes = [1, 32], strides = [1, 1]} : vector<1x128xf32> to vector<1x32xf32>
    %412 = vector.broadcast %411 : vector<1x32xf32> to vector<64x32xf32>
    %413 = arith.addf %409, %412 : vector<64x32xf32>
    %414 = arith.addf %290, %1 : vector<9x32xf32>
    %c144_164 = arith.constant 144 : index
    %c0_165 = arith.constant 0 : index
    %415 = vector.load %arg4[%c144_164, %c0_165] : memref<840x128xf32, #tpu.memory_space<vmem>>, vector<32x128xf32>
    %416 = vector.extract_strided_slice %415 {offsets = [0, 32], sizes = [32, 32], strides = [1, 1]} : vector<32x128xf32> to vector<32x32xf32>
    %cst_166 = arith.constant dense<0.000000e+00> : vector<9x32xf32>
    %417 = tpu.matmul %414, %416, %cst_166 {dimension_numbers = #tpu.dot_dimension_numbers<[1], [0], [0], [1], [0, 0, 1, 1], [], []>} : vector<9x32xf32>, vector<32x32xf32>, vector<9x32xf32> -> vector<9x32xf32>
    %c744 = arith.constant 744 : index
    %c0_167 = arith.constant 0 : index
    %418 = vector.load %arg4[%c744, %c0_167] : memref<840x128xf32, #tpu.memory_space<vmem>>, vector<1x128xf32>
    %419 = vector.extract_strided_slice %418 {offsets = [0, 0], sizes = [1, 32], strides = [1, 1]} : vector<1x128xf32> to vector<1x32xf32>
    %420 = vector.broadcast %419 : vector<1x32xf32> to vector<9x32xf32>
    %421 = arith.addf %417, %420 : vector<9x32xf32>
    %c144_168 = arith.constant 144 : index
    %c0_169 = arith.constant 0 : index
    %422 = vector.load %arg4[%c144_168, %c0_169] : memref<840x128xf32, #tpu.memory_space<vmem>>, vector<32x128xf32>
    %423 = vector.extract_strided_slice %422 {offsets = [0, 64], sizes = [32, 32], strides = [1, 1]} : vector<32x128xf32> to vector<32x32xf32>
    %cst_170 = arith.constant dense<0.000000e+00> : vector<9x32xf32>
    %424 = tpu.matmul %414, %423, %cst_170 {dimension_numbers = #tpu.dot_dimension_numbers<[1], [0], [0], [1], [0, 0, 1, 1], [], []>} : vector<9x32xf32>, vector<32x32xf32>, vector<9x32xf32> -> vector<9x32xf32>
    %c744_171 = arith.constant 744 : index
    %c0_172 = arith.constant 0 : index
    %425 = vector.load %arg4[%c744_171, %c0_172] : memref<840x128xf32, #tpu.memory_space<vmem>>, vector<1x128xf32>
    %426 = vector.extract_strided_slice %425 {offsets = [0, 32], sizes = [1, 32], strides = [1, 1]} : vector<1x128xf32> to vector<1x32xf32>
    %427 = vector.broadcast %426 : vector<1x32xf32> to vector<9x32xf32>
    %428 = arith.addf %424, %427 : vector<9x32xf32>
    %c144_173 = arith.constant 144 : index
    %c0_174 = arith.constant 0 : index
    %429 = vector.load %arg4[%c144_173, %c0_174] : memref<840x128xf32, #tpu.memory_space<vmem>>, vector<32x128xf32>
    %430 = vector.extract_strided_slice %429 {offsets = [0, 96], sizes = [32, 32], strides = [1, 1]} : vector<32x128xf32> to vector<32x32xf32>
    %cst_175 = arith.constant dense<0.000000e+00> : vector<9x32xf32>
    %431 = tpu.matmul %290, %430, %cst_175 {dimension_numbers = #tpu.dot_dimension_numbers<[1], [0], [0], [1], [0, 0, 1, 1], [], []>} : vector<9x32xf32>, vector<32x32xf32>, vector<9x32xf32> -> vector<9x32xf32>
    %c744_176 = arith.constant 744 : index
    %c0_177 = arith.constant 0 : index
    %432 = vector.load %arg4[%c744_176, %c0_177] : memref<840x128xf32, #tpu.memory_space<vmem>>, vector<1x128xf32>
    %433 = vector.extract_strided_slice %432 {offsets = [0, 64], sizes = [1, 32], strides = [1, 1]} : vector<1x128xf32> to vector<1x32xf32>
    %434 = vector.broadcast %433 : vector<1x32xf32> to vector<9x32xf32>
    %435 = arith.addf %431, %434 : vector<9x32xf32>
    %436 = vector.extract_strided_slice %421 {offsets = [0, 0], sizes = [9, 8], strides = [1, 1]} : vector<9x32xf32> to vector<9x8xf32>
    %437 = vector.extract_strided_slice %428 {offsets = [0, 0], sizes = [9, 8], strides = [1, 1]} : vector<9x32xf32> to vector<9x8xf32>
    %cst_178 = arith.constant dense<0.000000e+00> : vector<9x9xf32>
    %438 = tpu.matmul %436, %437, %cst_178 {dimension_numbers = #tpu.dot_dimension_numbers<[1], [1], [0], [0], [0, 0, 1, 0], [], []>} : vector<9x8xf32>, vector<9x8xf32>, vector<9x9xf32> -> vector<9x9xf32>
    %cst_179 = arith.constant 0.353553385 : f32
    %439 = vector.broadcast %cst_179 : f32 to vector<9x9xf32>
    %440 = arith.mulf %438, %439 : vector<9x9xf32>
    %cst_180 = arith.constant dense<0xFF800000> : vector<9xf32>
    %441 = vector.multi_reduction <maximumf>, %440, %cst_180 [1] : vector<9x9xf32> to vector<9xf32>
    %442 = vector.shape_cast %441 : vector<9xf32> to vector<9x1xf32>
    %443 = vector.broadcast %442 : vector<9x1xf32> to vector<9x9xf32>
    %444 = arith.subf %440, %443 : vector<9x9xf32>
    %445 = math.exp %444 : vector<9x9xf32>
    %cst_181 = arith.constant dense<0.000000e+00> : vector<9xf32>
    %446 = vector.multi_reduction <add>, %445, %cst_181 [1] : vector<9x9xf32> to vector<9xf32>
    %447 = vector.shape_cast %446 : vector<9xf32> to vector<9x1xf32>
    %448 = tpu.reciprocal %447 {approx = true} : vector<9x1xf32> -> vector<9x1xf32>
    %449 = vector.broadcast %448 : vector<9x1xf32> to vector<9x9xf32>
    %450 = arith.mulf %445, %449 : vector<9x9xf32>
    %451 = vector.extract_strided_slice %435 {offsets = [0, 0], sizes = [9, 8], strides = [1, 1]} : vector<9x32xf32> to vector<9x8xf32>
    %cst_182 = arith.constant dense<0.000000e+00> : vector<9x8xf32>
    %452 = tpu.matmul %450, %451, %cst_182 {dimension_numbers = #tpu.dot_dimension_numbers<[1], [0], [0], [1], [0, 0, 1, 1], [], []>} : vector<9x9xf32>, vector<9x8xf32>, vector<9x8xf32> -> vector<9x8xf32>
    %453 = vector.extract_strided_slice %421 {offsets = [0, 8], sizes = [9, 8], strides = [1, 1]} : vector<9x32xf32> to vector<9x8xf32>
    %454 = vector.extract_strided_slice %428 {offsets = [0, 8], sizes = [9, 8], strides = [1, 1]} : vector<9x32xf32> to vector<9x8xf32>
    %cst_183 = arith.constant dense<0.000000e+00> : vector<9x9xf32>
    %455 = tpu.matmul %453, %454, %cst_183 {dimension_numbers = #tpu.dot_dimension_numbers<[1], [1], [0], [0], [0, 0, 1, 0], [], []>} : vector<9x8xf32>, vector<9x8xf32>, vector<9x9xf32> -> vector<9x9xf32>
    %cst_184 = arith.constant 0.353553385 : f32
    %456 = vector.broadcast %cst_184 : f32 to vector<9x9xf32>
    %457 = arith.mulf %455, %456 : vector<9x9xf32>
    %cst_185 = arith.constant dense<0xFF800000> : vector<9xf32>
    %458 = vector.multi_reduction <maximumf>, %457, %cst_185 [1] : vector<9x9xf32> to vector<9xf32>
    %459 = vector.shape_cast %458 : vector<9xf32> to vector<9x1xf32>
    %460 = vector.broadcast %459 : vector<9x1xf32> to vector<9x9xf32>
    %461 = arith.subf %457, %460 : vector<9x9xf32>
    %462 = math.exp %461 : vector<9x9xf32>
    %cst_186 = arith.constant dense<0.000000e+00> : vector<9xf32>
    %463 = vector.multi_reduction <add>, %462, %cst_186 [1] : vector<9x9xf32> to vector<9xf32>
    %464 = vector.shape_cast %463 : vector<9xf32> to vector<9x1xf32>
    %465 = tpu.reciprocal %464 {approx = true} : vector<9x1xf32> -> vector<9x1xf32>
    %466 = vector.broadcast %465 : vector<9x1xf32> to vector<9x9xf32>
    %467 = arith.mulf %462, %466 : vector<9x9xf32>
    %468 = vector.extract_strided_slice %435 {offsets = [0, 8], sizes = [9, 8], strides = [1, 1]} : vector<9x32xf32> to vector<9x8xf32>
    %cst_187 = arith.constant dense<0.000000e+00> : vector<9x8xf32>
    %469 = tpu.matmul %467, %468, %cst_187 {dimension_numbers = #tpu.dot_dimension_numbers<[1], [0], [0], [1], [0, 0, 1, 1], [], []>} : vector<9x9xf32>, vector<9x8xf32>, vector<9x8xf32> -> vector<9x8xf32>
    %470 = vector.extract_strided_slice %421 {offsets = [0, 16], sizes = [9, 8], strides = [1, 1]} : vector<9x32xf32> to vector<9x8xf32>
    %471 = vector.extract_strided_slice %428 {offsets = [0, 16], sizes = [9, 8], strides = [1, 1]} : vector<9x32xf32> to vector<9x8xf32>
    %cst_188 = arith.constant dense<0.000000e+00> : vector<9x9xf32>
    %472 = tpu.matmul %470, %471, %cst_188 {dimension_numbers = #tpu.dot_dimension_numbers<[1], [1], [0], [0], [0, 0, 1, 0], [], []>} : vector<9x8xf32>, vector<9x8xf32>, vector<9x9xf32> -> vector<9x9xf32>
    %cst_189 = arith.constant 0.353553385 : f32
    %473 = vector.broadcast %cst_189 : f32 to vector<9x9xf32>
    %474 = arith.mulf %472, %473 : vector<9x9xf32>
    %cst_190 = arith.constant dense<0xFF800000> : vector<9xf32>
    %475 = vector.multi_reduction <maximumf>, %474, %cst_190 [1] : vector<9x9xf32> to vector<9xf32>
    %476 = vector.shape_cast %475 : vector<9xf32> to vector<9x1xf32>
    %477 = vector.broadcast %476 : vector<9x1xf32> to vector<9x9xf32>
    %478 = arith.subf %474, %477 : vector<9x9xf32>
    %479 = math.exp %478 : vector<9x9xf32>
    %cst_191 = arith.constant dense<0.000000e+00> : vector<9xf32>
    %480 = vector.multi_reduction <add>, %479, %cst_191 [1] : vector<9x9xf32> to vector<9xf32>
    %481 = vector.shape_cast %480 : vector<9xf32> to vector<9x1xf32>
    %482 = tpu.reciprocal %481 {approx = true} : vector<9x1xf32> -> vector<9x1xf32>
    %483 = vector.broadcast %482 : vector<9x1xf32> to vector<9x9xf32>
    %484 = arith.mulf %479, %483 : vector<9x9xf32>
    %485 = vector.extract_strided_slice %435 {offsets = [0, 16], sizes = [9, 8], strides = [1, 1]} : vector<9x32xf32> to vector<9x8xf32>
    %cst_192 = arith.constant dense<0.000000e+00> : vector<9x8xf32>
    %486 = tpu.matmul %484, %485, %cst_192 {dimension_numbers = #tpu.dot_dimension_numbers<[1], [0], [0], [1], [0, 0, 1, 1], [], []>} : vector<9x9xf32>, vector<9x8xf32>, vector<9x8xf32> -> vector<9x8xf32>
    %487 = vector.extract_strided_slice %421 {offsets = [0, 24], sizes = [9, 8], strides = [1, 1]} : vector<9x32xf32> to vector<9x8xf32>
    %488 = vector.extract_strided_slice %428 {offsets = [0, 24], sizes = [9, 8], strides = [1, 1]} : vector<9x32xf32> to vector<9x8xf32>
    %cst_193 = arith.constant dense<0.000000e+00> : vector<9x9xf32>
    %489 = tpu.matmul %487, %488, %cst_193 {dimension_numbers = #tpu.dot_dimension_numbers<[1], [1], [0], [0], [0, 0, 1, 0], [], []>} : vector<9x8xf32>, vector<9x8xf32>, vector<9x9xf32> -> vector<9x9xf32>
    %cst_194 = arith.constant 0.353553385 : f32
    %490 = vector.broadcast %cst_194 : f32 to vector<9x9xf32>
    %491 = arith.mulf %489, %490 : vector<9x9xf32>
    %cst_195 = arith.constant dense<0xFF800000> : vector<9xf32>
    %492 = vector.multi_reduction <maximumf>, %491, %cst_195 [1] : vector<9x9xf32> to vector<9xf32>
    %493 = vector.shape_cast %492 : vector<9xf32> to vector<9x1xf32>
    %494 = vector.broadcast %493 : vector<9x1xf32> to vector<9x9xf32>
    %495 = arith.subf %491, %494 : vector<9x9xf32>
    %496 = math.exp %495 : vector<9x9xf32>
    %cst_196 = arith.constant dense<0.000000e+00> : vector<9xf32>
    %497 = vector.multi_reduction <add>, %496, %cst_196 [1] : vector<9x9xf32> to vector<9xf32>
    %498 = vector.shape_cast %497 : vector<9xf32> to vector<9x1xf32>
    %499 = tpu.reciprocal %498 {approx = true} : vector<9x1xf32> -> vector<9x1xf32>
    %500 = vector.broadcast %499 : vector<9x1xf32> to vector<9x9xf32>
    %501 = arith.mulf %496, %500 : vector<9x9xf32>
    %502 = vector.extract_strided_slice %435 {offsets = [0, 24], sizes = [9, 8], strides = [1, 1]} : vector<9x32xf32> to vector<9x8xf32>
    %cst_197 = arith.constant dense<0.000000e+00> : vector<9x8xf32>
    %503 = tpu.matmul %501, %502, %cst_197 {dimension_numbers = #tpu.dot_dimension_numbers<[1], [0], [0], [1], [0, 0, 1, 1], [], []>} : vector<9x9xf32>, vector<9x8xf32>, vector<9x8xf32> -> vector<9x8xf32>
    %504 = tpu.concatenate %452, %469, %486, %503 in 1 : vector<9x8xf32>, vector<9x8xf32>, vector<9x8xf32>, vector<9x8xf32> -> vector<9x32xf32>
    %c176 = arith.constant 176 : index
    %c0_198 = arith.constant 0 : index
    %505 = vector.load %arg4[%c176, %c0_198] : memref<840x128xf32, #tpu.memory_space<vmem>>, vector<32x128xf32>
    %506 = vector.extract_strided_slice %505 {offsets = [0, 0], sizes = [32, 32], strides = [1, 1]} : vector<32x128xf32> to vector<32x32xf32>
    %cst_199 = arith.constant dense<0.000000e+00> : vector<9x32xf32>
    %507 = tpu.matmul %504, %506, %cst_199 {dimension_numbers = #tpu.dot_dimension_numbers<[1], [0], [0], [1], [0, 0, 1, 1], [], []>} : vector<9x32xf32>, vector<32x32xf32>, vector<9x32xf32> -> vector<9x32xf32>
    %c744_200 = arith.constant 744 : index
    %c0_201 = arith.constant 0 : index
    %508 = vector.load %arg4[%c744_200, %c0_201] : memref<840x128xf32, #tpu.memory_space<vmem>>, vector<1x128xf32>
    %509 = vector.extract_strided_slice %508 {offsets = [0, 96], sizes = [1, 32], strides = [1, 1]} : vector<1x128xf32> to vector<1x32xf32>
    %510 = vector.broadcast %509 : vector<1x32xf32> to vector<9x32xf32>
    %511 = arith.addf %507, %510 : vector<9x32xf32>
    %512 = arith.addf %290, %511 : vector<9x32xf32>
    %cst_202 = arith.constant dense<0.000000e+00> : vector<9xf32>
    %513 = vector.multi_reduction <add>, %512, %cst_202 [1] : vector<9x32xf32> to vector<9xf32>
    %514 = vector.shape_cast %513 : vector<9xf32> to vector<9x1xf32>
    %cst_203 = arith.constant 3.200000e+01 : f32
    %515 = vector.broadcast %cst_203 : f32 to vector<9x1xf32>
    %516 = arith.divf %514, %515 : vector<9x1xf32>
    %517 = vector.broadcast %516 : vector<9x1xf32> to vector<9x32xf32>
    %518 = arith.subf %512, %517 : vector<9x32xf32>
    %519 = arith.mulf %518, %518 : vector<9x32xf32>
    %cst_204 = arith.constant dense<0.000000e+00> : vector<9xf32>
    %520 = vector.multi_reduction <add>, %519, %cst_204 [1] : vector<9x32xf32> to vector<9xf32>
    %521 = vector.shape_cast %520 : vector<9xf32> to vector<9x1xf32>
    %cst_205 = arith.constant 3.200000e+01 : f32
    %522 = vector.broadcast %cst_205 : f32 to vector<9x1xf32>
    %523 = arith.divf %521, %522 : vector<9x1xf32>
    %cst_206 = arith.constant 9.99999974E-6 : f32
    %524 = vector.broadcast %cst_206 : f32 to vector<9x1xf32>
    %525 = arith.addf %523, %524 : vector<9x1xf32>
    %526 = math.rsqrt %525 : vector<9x1xf32>
    %527 = vector.broadcast %526 : vector<9x1xf32> to vector<9x32xf32>
    %528 = arith.mulf %518, %527 : vector<9x32xf32>
    %c752 = arith.constant 752 : index
    %c0_207 = arith.constant 0 : index
    %529 = vector.load %arg4[%c752, %c0_207] : memref<840x128xf32, #tpu.memory_space<vmem>>, vector<1x128xf32>
    %530 = vector.extract_strided_slice %529 {offsets = [0, 0], sizes = [1, 32], strides = [1, 1]} : vector<1x128xf32> to vector<1x32xf32>
    %531 = vector.broadcast %530 : vector<1x32xf32> to vector<9x32xf32>
    %532 = arith.mulf %528, %531 : vector<9x32xf32>
    %c752_208 = arith.constant 752 : index
    %c0_209 = arith.constant 0 : index
    %533 = vector.load %arg4[%c752_208, %c0_209] : memref<840x128xf32, #tpu.memory_space<vmem>>, vector<1x128xf32>
    %534 = vector.extract_strided_slice %533 {offsets = [0, 32], sizes = [1, 32], strides = [1, 1]} : vector<1x128xf32> to vector<1x32xf32>
    %535 = vector.broadcast %534 : vector<1x32xf32> to vector<9x32xf32>
    %536 = arith.addf %532, %535 : vector<9x32xf32>
    %537 = arith.addf %413, %4 : vector<64x32xf32>
    %538 = arith.addf %536, %1 : vector<9x32xf32>
    %c176_210 = arith.constant 176 : index
    %c0_211 = arith.constant 0 : index
    %539 = vector.load %arg4[%c176_210, %c0_211] : memref<840x128xf32, #tpu.memory_space<vmem>>, vector<32x128xf32>
    %540 = vector.extract_strided_slice %539 {offsets = [0, 32], sizes = [32, 16], strides = [1, 1]} : vector<32x128xf32> to vector<32x16xf32>
    %cst_212 = arith.constant dense<0.000000e+00> : vector<9x16xf32>
    %541 = tpu.matmul %538, %540, %cst_212 {dimension_numbers = #tpu.dot_dimension_numbers<[1], [0], [0], [1], [0, 0, 1, 1], [], []>} : vector<9x32xf32>, vector<32x16xf32>, vector<9x16xf32> -> vector<9x16xf32>
    %c752_213 = arith.constant 752 : index
    %c0_214 = arith.constant 0 : index
    %542 = vector.load %arg4[%c752_213, %c0_214] : memref<840x128xf32, #tpu.memory_space<vmem>>, vector<1x128xf32>
    %543 = vector.extract_strided_slice %542 {offsets = [0, 64], sizes = [1, 16], strides = [1, 1]} : vector<1x128xf32> to vector<1x16xf32>
    %544 = vector.broadcast %543 : vector<1x16xf32> to vector<9x16xf32>
    %545 = arith.addf %541, %544 : vector<9x16xf32>
    %c176_215 = arith.constant 176 : index
    %c0_216 = arith.constant 0 : index
    %546 = vector.load %arg4[%c176_215, %c0_216] : memref<840x128xf32, #tpu.memory_space<vmem>>, vector<32x128xf32>
    %547 = vector.extract_strided_slice %546 {offsets = [0, 48], sizes = [32, 16], strides = [1, 1]} : vector<32x128xf32> to vector<32x16xf32>
    %cst_217 = arith.constant dense<0.000000e+00> : vector<64x16xf32>
    %548 = tpu.matmul %537, %547, %cst_217 {dimension_numbers = #tpu.dot_dimension_numbers<[1], [0], [0], [1], [0, 0, 1, 1], [], []>} : vector<64x32xf32>, vector<32x16xf32>, vector<64x16xf32> -> vector<64x16xf32>
    %c752_218 = arith.constant 752 : index
    %c0_219 = arith.constant 0 : index
    %549 = vector.load %arg4[%c752_218, %c0_219] : memref<840x128xf32, #tpu.memory_space<vmem>>, vector<1x128xf32>
    %550 = vector.extract_strided_slice %549 {offsets = [0, 80], sizes = [1, 16], strides = [1, 1]} : vector<1x128xf32> to vector<1x16xf32>
    %551 = vector.broadcast %550 : vector<1x16xf32> to vector<64x16xf32>
    %552 = arith.addf %548, %551 : vector<64x16xf32>
    %c176_220 = arith.constant 176 : index
    %c0_221 = arith.constant 0 : index
    %553 = vector.load %arg4[%c176_220, %c0_221] : memref<840x128xf32, #tpu.memory_space<vmem>>, vector<32x128xf32>
    %554 = vector.extract_strided_slice %553 {offsets = [0, 64], sizes = [32, 16], strides = [1, 1]} : vector<32x128xf32> to vector<32x16xf32>
    %cst_222 = arith.constant dense<0.000000e+00> : vector<64x16xf32>
    %555 = tpu.matmul %413, %554, %cst_222 {dimension_numbers = #tpu.dot_dimension_numbers<[1], [0], [0], [1], [0, 0, 1, 1], [], []>} : vector<64x32xf32>, vector<32x16xf32>, vector<64x16xf32> -> vector<64x16xf32>
    %c752_223 = arith.constant 752 : index
    %c0_224 = arith.constant 0 : index
    %556 = vector.load %arg4[%c752_223, %c0_224] : memref<840x128xf32, #tpu.memory_space<vmem>>, vector<1x128xf32>
    %557 = vector.extract_strided_slice %556 {offsets = [0, 96], sizes = [1, 16], strides = [1, 1]} : vector<1x128xf32> to vector<1x16xf32>
    %558 = vector.broadcast %557 : vector<1x16xf32> to vector<64x16xf32>
    %559 = arith.addf %555, %558 : vector<64x16xf32>
    %560 = vector.extract_strided_slice %545 {offsets = [0, 0], sizes = [9, 4], strides = [1, 1]} : vector<9x16xf32> to vector<9x4xf32>
    %561 = vector.extract_strided_slice %552 {offsets = [0, 0], sizes = [64, 4], strides = [1, 1]} : vector<64x16xf32> to vector<64x4xf32>
    %cst_225 = arith.constant dense<0.000000e+00> : vector<9x64xf32>
    %562 = tpu.matmul %560, %561, %cst_225 {dimension_numbers = #tpu.dot_dimension_numbers<[1], [1], [0], [0], [0, 0, 1, 0], [], []>} : vector<9x4xf32>, vector<64x4xf32>, vector<9x64xf32> -> vector<9x64xf32>
    %cst_226 = arith.constant 5.000000e-01 : f32
    %563 = vector.broadcast %cst_226 : f32 to vector<9x64xf32>
    %564 = arith.mulf %562, %563 : vector<9x64xf32>
    %cst_227 = arith.constant dense<0xFF800000> : vector<9xf32>
    %565 = vector.multi_reduction <maximumf>, %564, %cst_227 [1] : vector<9x64xf32> to vector<9xf32>
    %566 = vector.shape_cast %565 : vector<9xf32> to vector<9x1xf32>
    %567 = vector.broadcast %566 : vector<9x1xf32> to vector<9x64xf32>
    %568 = arith.subf %564, %567 : vector<9x64xf32>
    %569 = math.exp %568 : vector<9x64xf32>
    %cst_228 = arith.constant dense<0.000000e+00> : vector<9xf32>
    %570 = vector.multi_reduction <add>, %569, %cst_228 [1] : vector<9x64xf32> to vector<9xf32>
    %571 = vector.shape_cast %570 : vector<9xf32> to vector<9x1xf32>
    %572 = tpu.reciprocal %571 {approx = true} : vector<9x1xf32> -> vector<9x1xf32>
    %573 = vector.broadcast %572 : vector<9x1xf32> to vector<9x64xf32>
    %574 = arith.mulf %569, %573 : vector<9x64xf32>
    %575 = vector.extract_strided_slice %559 {offsets = [0, 0], sizes = [64, 4], strides = [1, 1]} : vector<64x16xf32> to vector<64x4xf32>
    %cst_229 = arith.constant dense<0.000000e+00> : vector<9x4xf32>
    %576 = tpu.matmul %574, %575, %cst_229 {dimension_numbers = #tpu.dot_dimension_numbers<[1], [0], [0], [1], [0, 0, 1, 1], [], []>} : vector<9x64xf32>, vector<64x4xf32>, vector<9x4xf32> -> vector<9x4xf32>
    %577 = vector.extract_strided_slice %545 {offsets = [0, 4], sizes = [9, 4], strides = [1, 1]} : vector<9x16xf32> to vector<9x4xf32>
    %578 = vector.extract_strided_slice %552 {offsets = [0, 4], sizes = [64, 4], strides = [1, 1]} : vector<64x16xf32> to vector<64x4xf32>
    %cst_230 = arith.constant dense<0.000000e+00> : vector<9x64xf32>
    %579 = tpu.matmul %577, %578, %cst_230 {dimension_numbers = #tpu.dot_dimension_numbers<[1], [1], [0], [0], [0, 0, 1, 0], [], []>} : vector<9x4xf32>, vector<64x4xf32>, vector<9x64xf32> -> vector<9x64xf32>
    %cst_231 = arith.constant 5.000000e-01 : f32
    %580 = vector.broadcast %cst_231 : f32 to vector<9x64xf32>
    %581 = arith.mulf %579, %580 : vector<9x64xf32>
    %cst_232 = arith.constant dense<0xFF800000> : vector<9xf32>
    %582 = vector.multi_reduction <maximumf>, %581, %cst_232 [1] : vector<9x64xf32> to vector<9xf32>
    %583 = vector.shape_cast %582 : vector<9xf32> to vector<9x1xf32>
    %584 = vector.broadcast %583 : vector<9x1xf32> to vector<9x64xf32>
    %585 = arith.subf %581, %584 : vector<9x64xf32>
    %586 = math.exp %585 : vector<9x64xf32>
    %cst_233 = arith.constant dense<0.000000e+00> : vector<9xf32>
    %587 = vector.multi_reduction <add>, %586, %cst_233 [1] : vector<9x64xf32> to vector<9xf32>
    %588 = vector.shape_cast %587 : vector<9xf32> to vector<9x1xf32>
    %589 = tpu.reciprocal %588 {approx = true} : vector<9x1xf32> -> vector<9x1xf32>
    %590 = vector.broadcast %589 : vector<9x1xf32> to vector<9x64xf32>
    %591 = arith.mulf %586, %590 : vector<9x64xf32>
    %592 = vector.extract_strided_slice %559 {offsets = [0, 4], sizes = [64, 4], strides = [1, 1]} : vector<64x16xf32> to vector<64x4xf32>
    %cst_234 = arith.constant dense<0.000000e+00> : vector<9x4xf32>
    %593 = tpu.matmul %591, %592, %cst_234 {dimension_numbers = #tpu.dot_dimension_numbers<[1], [0], [0], [1], [0, 0, 1, 1], [], []>} : vector<9x64xf32>, vector<64x4xf32>, vector<9x4xf32> -> vector<9x4xf32>
    %594 = vector.extract_strided_slice %545 {offsets = [0, 8], sizes = [9, 4], strides = [1, 1]} : vector<9x16xf32> to vector<9x4xf32>
    %595 = vector.extract_strided_slice %552 {offsets = [0, 8], sizes = [64, 4], strides = [1, 1]} : vector<64x16xf32> to vector<64x4xf32>
    %cst_235 = arith.constant dense<0.000000e+00> : vector<9x64xf32>
    %596 = tpu.matmul %594, %595, %cst_235 {dimension_numbers = #tpu.dot_dimension_numbers<[1], [1], [0], [0], [0, 0, 1, 0], [], []>} : vector<9x4xf32>, vector<64x4xf32>, vector<9x64xf32> -> vector<9x64xf32>
    %cst_236 = arith.constant 5.000000e-01 : f32
    %597 = vector.broadcast %cst_236 : f32 to vector<9x64xf32>
    %598 = arith.mulf %596, %597 : vector<9x64xf32>
    %cst_237 = arith.constant dense<0xFF800000> : vector<9xf32>
    %599 = vector.multi_reduction <maximumf>, %598, %cst_237 [1] : vector<9x64xf32> to vector<9xf32>
    %600 = vector.shape_cast %599 : vector<9xf32> to vector<9x1xf32>
    %601 = vector.broadcast %600 : vector<9x1xf32> to vector<9x64xf32>
    %602 = arith.subf %598, %601 : vector<9x64xf32>
    %603 = math.exp %602 : vector<9x64xf32>
    %cst_238 = arith.constant dense<0.000000e+00> : vector<9xf32>
    %604 = vector.multi_reduction <add>, %603, %cst_238 [1] : vector<9x64xf32> to vector<9xf32>
    %605 = vector.shape_cast %604 : vector<9xf32> to vector<9x1xf32>
    %606 = tpu.reciprocal %605 {approx = true} : vector<9x1xf32> -> vector<9x1xf32>
    %607 = vector.broadcast %606 : vector<9x1xf32> to vector<9x64xf32>
    %608 = arith.mulf %603, %607 : vector<9x64xf32>
    %609 = vector.extract_strided_slice %559 {offsets = [0, 8], sizes = [64, 4], strides = [1, 1]} : vector<64x16xf32> to vector<64x4xf32>
    %cst_239 = arith.constant dense<0.000000e+00> : vector<9x4xf32>
    %610 = tpu.matmul %608, %609, %cst_239 {dimension_numbers = #tpu.dot_dimension_numbers<[1], [0], [0], [1], [0, 0, 1, 1], [], []>} : vector<9x64xf32>, vector<64x4xf32>, vector<9x4xf32> -> vector<9x4xf32>
    %611 = vector.extract_strided_slice %545 {offsets = [0, 12], sizes = [9, 4], strides = [1, 1]} : vector<9x16xf32> to vector<9x4xf32>
    %612 = vector.extract_strided_slice %552 {offsets = [0, 12], sizes = [64, 4], strides = [1, 1]} : vector<64x16xf32> to vector<64x4xf32>
    %cst_240 = arith.constant dense<0.000000e+00> : vector<9x64xf32>
    %613 = tpu.matmul %611, %612, %cst_240 {dimension_numbers = #tpu.dot_dimension_numbers<[1], [1], [0], [0], [0, 0, 1, 0], [], []>} : vector<9x4xf32>, vector<64x4xf32>, vector<9x64xf32> -> vector<9x64xf32>
    %cst_241 = arith.constant 5.000000e-01 : f32
    %614 = vector.broadcast %cst_241 : f32 to vector<9x64xf32>
    %615 = arith.mulf %613, %614 : vector<9x64xf32>
    %cst_242 = arith.constant dense<0xFF800000> : vector<9xf32>
    %616 = vector.multi_reduction <maximumf>, %615, %cst_242 [1] : vector<9x64xf32> to vector<9xf32>
    %617 = vector.shape_cast %616 : vector<9xf32> to vector<9x1xf32>
    %618 = vector.broadcast %617 : vector<9x1xf32> to vector<9x64xf32>
    %619 = arith.subf %615, %618 : vector<9x64xf32>
    %620 = math.exp %619 : vector<9x64xf32>
    %cst_243 = arith.constant dense<0.000000e+00> : vector<9xf32>
    %621 = vector.multi_reduction <add>, %620, %cst_243 [1] : vector<9x64xf32> to vector<9xf32>
    %622 = vector.shape_cast %621 : vector<9xf32> to vector<9x1xf32>
    %623 = tpu.reciprocal %622 {approx = true} : vector<9x1xf32> -> vector<9x1xf32>
    %624 = vector.broadcast %623 : vector<9x1xf32> to vector<9x64xf32>
    %625 = arith.mulf %620, %624 : vector<9x64xf32>
    %626 = vector.extract_strided_slice %559 {offsets = [0, 12], sizes = [64, 4], strides = [1, 1]} : vector<64x16xf32> to vector<64x4xf32>
    %cst_244 = arith.constant dense<0.000000e+00> : vector<9x4xf32>
    %627 = tpu.matmul %625, %626, %cst_244 {dimension_numbers = #tpu.dot_dimension_numbers<[1], [0], [0], [1], [0, 0, 1, 1], [], []>} : vector<9x64xf32>, vector<64x4xf32>, vector<9x4xf32> -> vector<9x4xf32>
    %628 = tpu.concatenate %576, %593, %610, %627 in 1 : vector<9x4xf32>, vector<9x4xf32>, vector<9x4xf32>, vector<9x4xf32> -> vector<9x16xf32>
    %c64_245 = arith.constant 64 : index
    %c0_246 = arith.constant 0 : index
    %629 = vector.load %arg4[%c64_245, %c0_246] : memref<840x128xf32, #tpu.memory_space<vmem>>, vector<16x128xf32>
    %630 = vector.extract_strided_slice %629 {offsets = [0, 64], sizes = [16, 32], strides = [1, 1]} : vector<16x128xf32> to vector<16x32xf32>
    %cst_247 = arith.constant dense<0.000000e+00> : vector<9x32xf32>
    %631 = tpu.matmul %628, %630, %cst_247 {dimension_numbers = #tpu.dot_dimension_numbers<[1], [0], [0], [1], [0, 0, 1, 1], [], []>} : vector<9x16xf32>, vector<16x32xf32>, vector<9x32xf32> -> vector<9x32xf32>
    %c760 = arith.constant 760 : index
    %c0_248 = arith.constant 0 : index
    %632 = vector.load %arg4[%c760, %c0_248] : memref<840x128xf32, #tpu.memory_space<vmem>>, vector<1x128xf32>
    %633 = vector.extract_strided_slice %632 {offsets = [0, 0], sizes = [1, 32], strides = [1, 1]} : vector<1x128xf32> to vector<1x32xf32>
    %634 = vector.broadcast %633 : vector<1x32xf32> to vector<9x32xf32>
    %635 = arith.addf %631, %634 : vector<9x32xf32>
    %636 = arith.addf %536, %635 : vector<9x32xf32>
    %cst_249 = arith.constant dense<0.000000e+00> : vector<9xf32>
    %637 = vector.multi_reduction <add>, %636, %cst_249 [1] : vector<9x32xf32> to vector<9xf32>
    %638 = vector.shape_cast %637 : vector<9xf32> to vector<9x1xf32>
    %cst_250 = arith.constant 3.200000e+01 : f32
    %639 = vector.broadcast %cst_250 : f32 to vector<9x1xf32>
    %640 = arith.divf %638, %639 : vector<9x1xf32>
    %641 = vector.broadcast %640 : vector<9x1xf32> to vector<9x32xf32>
    %642 = arith.subf %636, %641 : vector<9x32xf32>
    %643 = arith.mulf %642, %642 : vector<9x32xf32>
    %cst_251 = arith.constant dense<0.000000e+00> : vector<9xf32>
    %644 = vector.multi_reduction <add>, %643, %cst_251 [1] : vector<9x32xf32> to vector<9xf32>
    %645 = vector.shape_cast %644 : vector<9xf32> to vector<9x1xf32>
    %cst_252 = arith.constant 3.200000e+01 : f32
    %646 = vector.broadcast %cst_252 : f32 to vector<9x1xf32>
    %647 = arith.divf %645, %646 : vector<9x1xf32>
    %cst_253 = arith.constant 9.99999974E-6 : f32
    %648 = vector.broadcast %cst_253 : f32 to vector<9x1xf32>
    %649 = arith.addf %647, %648 : vector<9x1xf32>
    %650 = math.rsqrt %649 : vector<9x1xf32>
    %651 = vector.broadcast %650 : vector<9x1xf32> to vector<9x32xf32>
    %652 = arith.mulf %642, %651 : vector<9x32xf32>
    %c760_254 = arith.constant 760 : index
    %c0_255 = arith.constant 0 : index
    %653 = vector.load %arg4[%c760_254, %c0_255] : memref<840x128xf32, #tpu.memory_space<vmem>>, vector<1x128xf32>
    %654 = vector.extract_strided_slice %653 {offsets = [0, 32], sizes = [1, 32], strides = [1, 1]} : vector<1x128xf32> to vector<1x32xf32>
    %655 = vector.broadcast %654 : vector<1x32xf32> to vector<9x32xf32>
    %656 = arith.mulf %652, %655 : vector<9x32xf32>
    %c760_256 = arith.constant 760 : index
    %c0_257 = arith.constant 0 : index
    %657 = vector.load %arg4[%c760_256, %c0_257] : memref<840x128xf32, #tpu.memory_space<vmem>>, vector<1x128xf32>
    %658 = vector.extract_strided_slice %657 {offsets = [0, 64], sizes = [1, 32], strides = [1, 1]} : vector<1x128xf32> to vector<1x32xf32>
    %659 = vector.broadcast %658 : vector<1x32xf32> to vector<9x32xf32>
    %660 = arith.addf %656, %659 : vector<9x32xf32>
    %c208 = arith.constant 208 : index
    %c0_258 = arith.constant 0 : index
    %661 = vector.load %arg4[%c208, %c0_258] : memref<840x128xf32, #tpu.memory_space<vmem>>, vector<32x128xf32>
    %662 = vector.extract_strided_slice %661 {offsets = [0, 0], sizes = [32, 64], strides = [1, 1]} : vector<32x128xf32> to vector<32x64xf32>
    %cst_259 = arith.constant dense<0.000000e+00> : vector<9x64xf32>
    %663 = tpu.matmul %660, %662, %cst_259 {dimension_numbers = #tpu.dot_dimension_numbers<[1], [0], [0], [1], [0, 0, 1, 1], [], []>} : vector<9x32xf32>, vector<32x64xf32>, vector<9x64xf32> -> vector<9x64xf32>
    %c768 = arith.constant 768 : index
    %c0_260 = arith.constant 0 : index
    %664 = vector.load %arg4[%c768, %c0_260] : memref<840x128xf32, #tpu.memory_space<vmem>>, vector<1x128xf32>
    %665 = vector.extract_strided_slice %664 {offsets = [0, 0], sizes = [1, 64], strides = [1, 1]} : vector<1x128xf32> to vector<1x64xf32>
    %666 = vector.broadcast %665 : vector<1x64xf32> to vector<9x64xf32>
    %667 = arith.addf %663, %666 : vector<9x64xf32>
    %cst_261 = arith.constant 0.000000e+00 : f32
    %668 = vector.broadcast %cst_261 : f32 to vector<9x64xf32>
    %669 = arith.maximumf %667, %668 : vector<9x64xf32>
    %c80_262 = arith.constant 80 : index
    %c0_263 = arith.constant 0 : index
    %670 = vector.load %arg4[%c80_262, %c0_263] : memref<840x128xf32, #tpu.memory_space<vmem>>, vector<64x128xf32>
    %671 = vector.extract_strided_slice %670 {offsets = [0, 32], sizes = [64, 32], strides = [1, 1]} : vector<64x128xf32> to vector<64x32xf32>
    %cst_264 = arith.constant dense<0.000000e+00> : vector<9x32xf32>
    %672 = tpu.matmul %669, %671, %cst_264 {dimension_numbers = #tpu.dot_dimension_numbers<[1], [0], [0], [1], [0, 0, 1, 1], [], []>} : vector<9x64xf32>, vector<64x32xf32>, vector<9x32xf32> -> vector<9x32xf32>
    %c760_265 = arith.constant 760 : index
    %c0_266 = arith.constant 0 : index
    %673 = vector.load %arg4[%c760_265, %c0_266] : memref<840x128xf32, #tpu.memory_space<vmem>>, vector<1x128xf32>
    %674 = vector.extract_strided_slice %673 {offsets = [0, 96], sizes = [1, 32], strides = [1, 1]} : vector<1x128xf32> to vector<1x32xf32>
    %675 = vector.broadcast %674 : vector<1x32xf32> to vector<9x32xf32>
    %676 = arith.addf %672, %675 : vector<9x32xf32>
    %677 = arith.addf %660, %676 : vector<9x32xf32>
    %cst_267 = arith.constant dense<0.000000e+00> : vector<9xf32>
    %678 = vector.multi_reduction <add>, %677, %cst_267 [1] : vector<9x32xf32> to vector<9xf32>
    %679 = vector.shape_cast %678 : vector<9xf32> to vector<9x1xf32>
    %cst_268 = arith.constant 3.200000e+01 : f32
    %680 = vector.broadcast %cst_268 : f32 to vector<9x1xf32>
    %681 = arith.divf %679, %680 : vector<9x1xf32>
    %682 = vector.broadcast %681 : vector<9x1xf32> to vector<9x32xf32>
    %683 = arith.subf %677, %682 : vector<9x32xf32>
    %684 = arith.mulf %683, %683 : vector<9x32xf32>
    %cst_269 = arith.constant dense<0.000000e+00> : vector<9xf32>
    %685 = vector.multi_reduction <add>, %684, %cst_269 [1] : vector<9x32xf32> to vector<9xf32>
    %686 = vector.shape_cast %685 : vector<9xf32> to vector<9x1xf32>
    %cst_270 = arith.constant 3.200000e+01 : f32
    %687 = vector.broadcast %cst_270 : f32 to vector<9x1xf32>
    %688 = arith.divf %686, %687 : vector<9x1xf32>
    %cst_271 = arith.constant 9.99999974E-6 : f32
    %689 = vector.broadcast %cst_271 : f32 to vector<9x1xf32>
    %690 = arith.addf %688, %689 : vector<9x1xf32>
    %691 = math.rsqrt %690 : vector<9x1xf32>
    %692 = vector.broadcast %691 : vector<9x1xf32> to vector<9x32xf32>
    %693 = arith.mulf %683, %692 : vector<9x32xf32>
    %c768_272 = arith.constant 768 : index
    %c0_273 = arith.constant 0 : index
    %694 = vector.load %arg4[%c768_272, %c0_273] : memref<840x128xf32, #tpu.memory_space<vmem>>, vector<1x128xf32>
    %695 = vector.extract_strided_slice %694 {offsets = [0, 64], sizes = [1, 32], strides = [1, 1]} : vector<1x128xf32> to vector<1x32xf32>
    %696 = vector.broadcast %695 : vector<1x32xf32> to vector<9x32xf32>
    %697 = arith.mulf %693, %696 : vector<9x32xf32>
    %c768_274 = arith.constant 768 : index
    %c0_275 = arith.constant 0 : index
    %698 = vector.load %arg4[%c768_274, %c0_275] : memref<840x128xf32, #tpu.memory_space<vmem>>, vector<1x128xf32>
    %699 = vector.extract_strided_slice %698 {offsets = [0, 96], sizes = [1, 32], strides = [1, 1]} : vector<1x128xf32> to vector<1x32xf32>
    %700 = vector.broadcast %699 : vector<1x32xf32> to vector<9x32xf32>
    %701 = arith.addf %697, %700 : vector<9x32xf32>
    %702 = arith.addf %701, %1 : vector<9x32xf32>
    %c176_276 = arith.constant 176 : index
    %c0_277 = arith.constant 0 : index
    %703 = vector.load %arg4[%c176_276, %c0_277] : memref<840x128xf32, #tpu.memory_space<vmem>>, vector<32x128xf32>
    %704 = vector.extract_strided_slice %703 {offsets = [0, 80], sizes = [32, 16], strides = [1, 1]} : vector<32x128xf32> to vector<32x16xf32>
    %cst_278 = arith.constant dense<0.000000e+00> : vector<64x16xf32>
    %705 = tpu.matmul %537, %704, %cst_278 {dimension_numbers = #tpu.dot_dimension_numbers<[1], [0], [0], [1], [0, 0, 1, 1], [], []>} : vector<64x32xf32>, vector<32x16xf32>, vector<64x16xf32> -> vector<64x16xf32>
    %c752_279 = arith.constant 752 : index
    %c0_280 = arith.constant 0 : index
    %706 = vector.load %arg4[%c752_279, %c0_280] : memref<840x128xf32, #tpu.memory_space<vmem>>, vector<1x128xf32>
    %707 = vector.extract_strided_slice %706 {offsets = [0, 112], sizes = [1, 16], strides = [1, 1]} : vector<1x128xf32> to vector<1x16xf32>
    %708 = vector.broadcast %707 : vector<1x16xf32> to vector<64x16xf32>
    %709 = arith.addf %705, %708 : vector<64x16xf32>
    %c176_281 = arith.constant 176 : index
    %c0_282 = arith.constant 0 : index
    %710 = vector.load %arg4[%c176_281, %c0_282] : memref<840x128xf32, #tpu.memory_space<vmem>>, vector<32x128xf32>
    %711 = vector.extract_strided_slice %710 {offsets = [0, 96], sizes = [32, 16], strides = [1, 1]} : vector<32x128xf32> to vector<32x16xf32>
    %cst_283 = arith.constant dense<0.000000e+00> : vector<9x16xf32>
    %712 = tpu.matmul %702, %711, %cst_283 {dimension_numbers = #tpu.dot_dimension_numbers<[1], [0], [0], [1], [0, 0, 1, 1], [], []>} : vector<9x32xf32>, vector<32x16xf32>, vector<9x16xf32> -> vector<9x16xf32>
    %c776 = arith.constant 776 : index
    %c0_284 = arith.constant 0 : index
    %713 = vector.load %arg4[%c776, %c0_284] : memref<840x128xf32, #tpu.memory_space<vmem>>, vector<1x128xf32>
    %714 = vector.extract_strided_slice %713 {offsets = [0, 0], sizes = [1, 16], strides = [1, 1]} : vector<1x128xf32> to vector<1x16xf32>
    %715 = vector.broadcast %714 : vector<1x16xf32> to vector<9x16xf32>
    %716 = arith.addf %712, %715 : vector<9x16xf32>
    %c176_285 = arith.constant 176 : index
    %c0_286 = arith.constant 0 : index
    %717 = vector.load %arg4[%c176_285, %c0_286] : memref<840x128xf32, #tpu.memory_space<vmem>>, vector<32x128xf32>
    %718 = vector.extract_strided_slice %717 {offsets = [0, 112], sizes = [32, 16], strides = [1, 1]} : vector<32x128xf32> to vector<32x16xf32>
    %cst_287 = arith.constant dense<0.000000e+00> : vector<9x16xf32>
    %719 = tpu.matmul %701, %718, %cst_287 {dimension_numbers = #tpu.dot_dimension_numbers<[1], [0], [0], [1], [0, 0, 1, 1], [], []>} : vector<9x32xf32>, vector<32x16xf32>, vector<9x16xf32> -> vector<9x16xf32>
    %c776_288 = arith.constant 776 : index
    %c0_289 = arith.constant 0 : index
    %720 = vector.load %arg4[%c776_288, %c0_289] : memref<840x128xf32, #tpu.memory_space<vmem>>, vector<1x128xf32>
    %721 = vector.extract_strided_slice %720 {offsets = [0, 16], sizes = [1, 16], strides = [1, 1]} : vector<1x128xf32> to vector<1x16xf32>
    %722 = vector.broadcast %721 : vector<1x16xf32> to vector<9x16xf32>
    %723 = arith.addf %719, %722 : vector<9x16xf32>
    %724 = vector.extract_strided_slice %709 {offsets = [0, 0], sizes = [64, 4], strides = [1, 1]} : vector<64x16xf32> to vector<64x4xf32>
    %725 = vector.extract_strided_slice %716 {offsets = [0, 0], sizes = [9, 4], strides = [1, 1]} : vector<9x16xf32> to vector<9x4xf32>
    %cst_290 = arith.constant dense<0.000000e+00> : vector<64x9xf32>
    %726 = tpu.matmul %724, %725, %cst_290 {dimension_numbers = #tpu.dot_dimension_numbers<[1], [1], [0], [0], [0, 0, 1, 0], [], []>} : vector<64x4xf32>, vector<9x4xf32>, vector<64x9xf32> -> vector<64x9xf32>
    %cst_291 = arith.constant 5.000000e-01 : f32
    %727 = vector.broadcast %cst_291 : f32 to vector<64x9xf32>
    %728 = arith.mulf %726, %727 : vector<64x9xf32>
    %cst_292 = arith.constant dense<0xFF800000> : vector<64xf32>
    %729 = vector.multi_reduction <maximumf>, %728, %cst_292 [1] : vector<64x9xf32> to vector<64xf32>
    %730 = vector.shape_cast %729 : vector<64xf32> to vector<64x1xf32>
    %731 = vector.broadcast %730 : vector<64x1xf32> to vector<64x9xf32>
    %732 = arith.subf %728, %731 : vector<64x9xf32>
    %733 = math.exp %732 : vector<64x9xf32>
    %cst_293 = arith.constant dense<0.000000e+00> : vector<64xf32>
    %734 = vector.multi_reduction <add>, %733, %cst_293 [1] : vector<64x9xf32> to vector<64xf32>
    %735 = vector.shape_cast %734 : vector<64xf32> to vector<64x1xf32>
    %736 = tpu.reciprocal %735 {approx = true} : vector<64x1xf32> -> vector<64x1xf32>
    %737 = vector.broadcast %736 : vector<64x1xf32> to vector<64x9xf32>
    %738 = arith.mulf %733, %737 : vector<64x9xf32>
    %739 = vector.extract_strided_slice %723 {offsets = [0, 0], sizes = [9, 4], strides = [1, 1]} : vector<9x16xf32> to vector<9x4xf32>
    %cst_294 = arith.constant dense<0.000000e+00> : vector<64x4xf32>
    %740 = tpu.matmul %738, %739, %cst_294 {dimension_numbers = #tpu.dot_dimension_numbers<[1], [0], [0], [1], [0, 0, 1, 1], [], []>} : vector<64x9xf32>, vector<9x4xf32>, vector<64x4xf32> -> vector<64x4xf32>
    %741 = vector.extract_strided_slice %709 {offsets = [0, 4], sizes = [64, 4], strides = [1, 1]} : vector<64x16xf32> to vector<64x4xf32>
    %742 = vector.extract_strided_slice %716 {offsets = [0, 4], sizes = [9, 4], strides = [1, 1]} : vector<9x16xf32> to vector<9x4xf32>
    %cst_295 = arith.constant dense<0.000000e+00> : vector<64x9xf32>
    %743 = tpu.matmul %741, %742, %cst_295 {dimension_numbers = #tpu.dot_dimension_numbers<[1], [1], [0], [0], [0, 0, 1, 0], [], []>} : vector<64x4xf32>, vector<9x4xf32>, vector<64x9xf32> -> vector<64x9xf32>
    %cst_296 = arith.constant 5.000000e-01 : f32
    %744 = vector.broadcast %cst_296 : f32 to vector<64x9xf32>
    %745 = arith.mulf %743, %744 : vector<64x9xf32>
    %cst_297 = arith.constant dense<0xFF800000> : vector<64xf32>
    %746 = vector.multi_reduction <maximumf>, %745, %cst_297 [1] : vector<64x9xf32> to vector<64xf32>
    %747 = vector.shape_cast %746 : vector<64xf32> to vector<64x1xf32>
    %748 = vector.broadcast %747 : vector<64x1xf32> to vector<64x9xf32>
    %749 = arith.subf %745, %748 : vector<64x9xf32>
    %750 = math.exp %749 : vector<64x9xf32>
    %cst_298 = arith.constant dense<0.000000e+00> : vector<64xf32>
    %751 = vector.multi_reduction <add>, %750, %cst_298 [1] : vector<64x9xf32> to vector<64xf32>
    %752 = vector.shape_cast %751 : vector<64xf32> to vector<64x1xf32>
    %753 = tpu.reciprocal %752 {approx = true} : vector<64x1xf32> -> vector<64x1xf32>
    %754 = vector.broadcast %753 : vector<64x1xf32> to vector<64x9xf32>
    %755 = arith.mulf %750, %754 : vector<64x9xf32>
    %756 = vector.extract_strided_slice %723 {offsets = [0, 4], sizes = [9, 4], strides = [1, 1]} : vector<9x16xf32> to vector<9x4xf32>
    %cst_299 = arith.constant dense<0.000000e+00> : vector<64x4xf32>
    %757 = tpu.matmul %755, %756, %cst_299 {dimension_numbers = #tpu.dot_dimension_numbers<[1], [0], [0], [1], [0, 0, 1, 1], [], []>} : vector<64x9xf32>, vector<9x4xf32>, vector<64x4xf32> -> vector<64x4xf32>
    %758 = vector.extract_strided_slice %709 {offsets = [0, 8], sizes = [64, 4], strides = [1, 1]} : vector<64x16xf32> to vector<64x4xf32>
    %759 = vector.extract_strided_slice %716 {offsets = [0, 8], sizes = [9, 4], strides = [1, 1]} : vector<9x16xf32> to vector<9x4xf32>
    %cst_300 = arith.constant dense<0.000000e+00> : vector<64x9xf32>
    %760 = tpu.matmul %758, %759, %cst_300 {dimension_numbers = #tpu.dot_dimension_numbers<[1], [1], [0], [0], [0, 0, 1, 0], [], []>} : vector<64x4xf32>, vector<9x4xf32>, vector<64x9xf32> -> vector<64x9xf32>
    %cst_301 = arith.constant 5.000000e-01 : f32
    %761 = vector.broadcast %cst_301 : f32 to vector<64x9xf32>
    %762 = arith.mulf %760, %761 : vector<64x9xf32>
    %cst_302 = arith.constant dense<0xFF800000> : vector<64xf32>
    %763 = vector.multi_reduction <maximumf>, %762, %cst_302 [1] : vector<64x9xf32> to vector<64xf32>
    %764 = vector.shape_cast %763 : vector<64xf32> to vector<64x1xf32>
    %765 = vector.broadcast %764 : vector<64x1xf32> to vector<64x9xf32>
    %766 = arith.subf %762, %765 : vector<64x9xf32>
    %767 = math.exp %766 : vector<64x9xf32>
    %cst_303 = arith.constant dense<0.000000e+00> : vector<64xf32>
    %768 = vector.multi_reduction <add>, %767, %cst_303 [1] : vector<64x9xf32> to vector<64xf32>
    %769 = vector.shape_cast %768 : vector<64xf32> to vector<64x1xf32>
    %770 = tpu.reciprocal %769 {approx = true} : vector<64x1xf32> -> vector<64x1xf32>
    %771 = vector.broadcast %770 : vector<64x1xf32> to vector<64x9xf32>
    %772 = arith.mulf %767, %771 : vector<64x9xf32>
    %773 = vector.extract_strided_slice %723 {offsets = [0, 8], sizes = [9, 4], strides = [1, 1]} : vector<9x16xf32> to vector<9x4xf32>
    %cst_304 = arith.constant dense<0.000000e+00> : vector<64x4xf32>
    %774 = tpu.matmul %772, %773, %cst_304 {dimension_numbers = #tpu.dot_dimension_numbers<[1], [0], [0], [1], [0, 0, 1, 1], [], []>} : vector<64x9xf32>, vector<9x4xf32>, vector<64x4xf32> -> vector<64x4xf32>
    %775 = vector.extract_strided_slice %709 {offsets = [0, 12], sizes = [64, 4], strides = [1, 1]} : vector<64x16xf32> to vector<64x4xf32>
    %776 = vector.extract_strided_slice %716 {offsets = [0, 12], sizes = [9, 4], strides = [1, 1]} : vector<9x16xf32> to vector<9x4xf32>
    %cst_305 = arith.constant dense<0.000000e+00> : vector<64x9xf32>
    %777 = tpu.matmul %775, %776, %cst_305 {dimension_numbers = #tpu.dot_dimension_numbers<[1], [1], [0], [0], [0, 0, 1, 0], [], []>} : vector<64x4xf32>, vector<9x4xf32>, vector<64x9xf32> -> vector<64x9xf32>
    %cst_306 = arith.constant 5.000000e-01 : f32
    %778 = vector.broadcast %cst_306 : f32 to vector<64x9xf32>
    %779 = arith.mulf %777, %778 : vector<64x9xf32>
    %cst_307 = arith.constant dense<0xFF800000> : vector<64xf32>
    %780 = vector.multi_reduction <maximumf>, %779, %cst_307 [1] : vector<64x9xf32> to vector<64xf32>
    %781 = vector.shape_cast %780 : vector<64xf32> to vector<64x1xf32>
    %782 = vector.broadcast %781 : vector<64x1xf32> to vector<64x9xf32>
    %783 = arith.subf %779, %782 : vector<64x9xf32>
    %784 = math.exp %783 : vector<64x9xf32>
    %cst_308 = arith.constant dense<0.000000e+00> : vector<64xf32>
    %785 = vector.multi_reduction <add>, %784, %cst_308 [1] : vector<64x9xf32> to vector<64xf32>
    %786 = vector.shape_cast %785 : vector<64xf32> to vector<64x1xf32>
    %787 = tpu.reciprocal %786 {approx = true} : vector<64x1xf32> -> vector<64x1xf32>
    %788 = vector.broadcast %787 : vector<64x1xf32> to vector<64x9xf32>
    %789 = arith.mulf %784, %788 : vector<64x9xf32>
    %790 = vector.extract_strided_slice %723 {offsets = [0, 12], sizes = [9, 4], strides = [1, 1]} : vector<9x16xf32> to vector<9x4xf32>
    %cst_309 = arith.constant dense<0.000000e+00> : vector<64x4xf32>
    %791 = tpu.matmul %789, %790, %cst_309 {dimension_numbers = #tpu.dot_dimension_numbers<[1], [0], [0], [1], [0, 0, 1, 1], [], []>} : vector<64x9xf32>, vector<9x4xf32>, vector<64x4xf32> -> vector<64x4xf32>
    %792 = tpu.concatenate %740, %757, %774, %791 in 1 : vector<64x4xf32>, vector<64x4xf32>, vector<64x4xf32>, vector<64x4xf32> -> vector<64x16xf32>
    %c64_310 = arith.constant 64 : index
    %c0_311 = arith.constant 0 : index
    %793 = vector.load %arg4[%c64_310, %c0_311] : memref<840x128xf32, #tpu.memory_space<vmem>>, vector<16x128xf32>
    %794 = vector.extract_strided_slice %793 {offsets = [0, 96], sizes = [16, 32], strides = [1, 1]} : vector<16x128xf32> to vector<16x32xf32>
    %cst_312 = arith.constant dense<0.000000e+00> : vector<64x32xf32>
    %795 = tpu.matmul %792, %794, %cst_312 {dimension_numbers = #tpu.dot_dimension_numbers<[1], [0], [0], [1], [0, 0, 1, 1], [], []>} : vector<64x16xf32>, vector<16x32xf32>, vector<64x32xf32> -> vector<64x32xf32>
    %c776_313 = arith.constant 776 : index
    %c0_314 = arith.constant 0 : index
    %796 = vector.load %arg4[%c776_313, %c0_314] : memref<840x128xf32, #tpu.memory_space<vmem>>, vector<1x128xf32>
    %797 = vector.extract_strided_slice %796 {offsets = [0, 32], sizes = [1, 32], strides = [1, 1]} : vector<1x128xf32> to vector<1x32xf32>
    %798 = vector.broadcast %797 : vector<1x32xf32> to vector<64x32xf32>
    %799 = arith.addf %795, %798 : vector<64x32xf32>
    %800 = arith.addf %413, %799 : vector<64x32xf32>
    %cst_315 = arith.constant dense<0.000000e+00> : vector<64xf32>
    %801 = vector.multi_reduction <add>, %800, %cst_315 [1] : vector<64x32xf32> to vector<64xf32>
    %802 = vector.shape_cast %801 : vector<64xf32> to vector<64x1xf32>
    %cst_316 = arith.constant 3.200000e+01 : f32
    %803 = vector.broadcast %cst_316 : f32 to vector<64x1xf32>
    %804 = arith.divf %802, %803 : vector<64x1xf32>
    %805 = vector.broadcast %804 : vector<64x1xf32> to vector<64x32xf32>
    %806 = arith.subf %800, %805 : vector<64x32xf32>
    %807 = arith.mulf %806, %806 : vector<64x32xf32>
    %cst_317 = arith.constant dense<0.000000e+00> : vector<64xf32>
    %808 = vector.multi_reduction <add>, %807, %cst_317 [1] : vector<64x32xf32> to vector<64xf32>
    %809 = vector.shape_cast %808 : vector<64xf32> to vector<64x1xf32>
    %cst_318 = arith.constant 3.200000e+01 : f32
    %810 = vector.broadcast %cst_318 : f32 to vector<64x1xf32>
    %811 = arith.divf %809, %810 : vector<64x1xf32>
    %cst_319 = arith.constant 9.99999974E-6 : f32
    %812 = vector.broadcast %cst_319 : f32 to vector<64x1xf32>
    %813 = arith.addf %811, %812 : vector<64x1xf32>
    %814 = math.rsqrt %813 : vector<64x1xf32>
    %815 = vector.broadcast %814 : vector<64x1xf32> to vector<64x32xf32>
    %816 = arith.mulf %806, %815 : vector<64x32xf32>
    %c776_320 = arith.constant 776 : index
    %c0_321 = arith.constant 0 : index
    %817 = vector.load %arg4[%c776_320, %c0_321] : memref<840x128xf32, #tpu.memory_space<vmem>>, vector<1x128xf32>
    %818 = vector.extract_strided_slice %817 {offsets = [0, 64], sizes = [1, 32], strides = [1, 1]} : vector<1x128xf32> to vector<1x32xf32>
    %819 = vector.broadcast %818 : vector<1x32xf32> to vector<64x32xf32>
    %820 = arith.mulf %816, %819 : vector<64x32xf32>
    %c776_322 = arith.constant 776 : index
    %c0_323 = arith.constant 0 : index
    %821 = vector.load %arg4[%c776_322, %c0_323] : memref<840x128xf32, #tpu.memory_space<vmem>>, vector<1x128xf32>
    %822 = vector.extract_strided_slice %821 {offsets = [0, 96], sizes = [1, 32], strides = [1, 1]} : vector<1x128xf32> to vector<1x32xf32>
    %823 = vector.broadcast %822 : vector<1x32xf32> to vector<64x32xf32>
    %824 = arith.addf %820, %823 : vector<64x32xf32>
    %825 = arith.addf %701, %1 : vector<9x32xf32>
    %826 = arith.addf %824, %4 : vector<64x32xf32>
    %c208_324 = arith.constant 208 : index
    %c0_325 = arith.constant 0 : index
    %827 = vector.load %arg4[%c208_324, %c0_325] : memref<840x128xf32, #tpu.memory_space<vmem>>, vector<32x128xf32>
    %828 = vector.extract_strided_slice %827 {offsets = [0, 64], sizes = [32, 16], strides = [1, 1]} : vector<32x128xf32> to vector<32x16xf32>
    %cst_326 = arith.constant dense<0.000000e+00> : vector<9x16xf32>
    %829 = tpu.matmul %825, %828, %cst_326 {dimension_numbers = #tpu.dot_dimension_numbers<[1], [0], [0], [1], [0, 0, 1, 1], [], []>} : vector<9x32xf32>, vector<32x16xf32>, vector<9x16xf32> -> vector<9x16xf32>
    %c784 = arith.constant 784 : index
    %c0_327 = arith.constant 0 : index
    %830 = vector.load %arg4[%c784, %c0_327] : memref<840x128xf32, #tpu.memory_space<vmem>>, vector<1x128xf32>
    %831 = vector.extract_strided_slice %830 {offsets = [0, 0], sizes = [1, 16], strides = [1, 1]} : vector<1x128xf32> to vector<1x16xf32>
    %832 = vector.broadcast %831 : vector<1x16xf32> to vector<9x16xf32>
    %833 = arith.addf %829, %832 : vector<9x16xf32>
    %c208_328 = arith.constant 208 : index
    %c0_329 = arith.constant 0 : index
    %834 = vector.load %arg4[%c208_328, %c0_329] : memref<840x128xf32, #tpu.memory_space<vmem>>, vector<32x128xf32>
    %835 = vector.extract_strided_slice %834 {offsets = [0, 80], sizes = [32, 16], strides = [1, 1]} : vector<32x128xf32> to vector<32x16xf32>
    %cst_330 = arith.constant dense<0.000000e+00> : vector<64x16xf32>
    %836 = tpu.matmul %826, %835, %cst_330 {dimension_numbers = #tpu.dot_dimension_numbers<[1], [0], [0], [1], [0, 0, 1, 1], [], []>} : vector<64x32xf32>, vector<32x16xf32>, vector<64x16xf32> -> vector<64x16xf32>
    %c784_331 = arith.constant 784 : index
    %c0_332 = arith.constant 0 : index
    %837 = vector.load %arg4[%c784_331, %c0_332] : memref<840x128xf32, #tpu.memory_space<vmem>>, vector<1x128xf32>
    %838 = vector.extract_strided_slice %837 {offsets = [0, 16], sizes = [1, 16], strides = [1, 1]} : vector<1x128xf32> to vector<1x16xf32>
    %839 = vector.broadcast %838 : vector<1x16xf32> to vector<64x16xf32>
    %840 = arith.addf %836, %839 : vector<64x16xf32>
    %c208_333 = arith.constant 208 : index
    %c0_334 = arith.constant 0 : index
    %841 = vector.load %arg4[%c208_333, %c0_334] : memref<840x128xf32, #tpu.memory_space<vmem>>, vector<32x128xf32>
    %842 = vector.extract_strided_slice %841 {offsets = [0, 96], sizes = [32, 16], strides = [1, 1]} : vector<32x128xf32> to vector<32x16xf32>
    %cst_335 = arith.constant dense<0.000000e+00> : vector<64x16xf32>
    %843 = tpu.matmul %824, %842, %cst_335 {dimension_numbers = #tpu.dot_dimension_numbers<[1], [0], [0], [1], [0, 0, 1, 1], [], []>} : vector<64x32xf32>, vector<32x16xf32>, vector<64x16xf32> -> vector<64x16xf32>
    %c784_336 = arith.constant 784 : index
    %c0_337 = arith.constant 0 : index
    %844 = vector.load %arg4[%c784_336, %c0_337] : memref<840x128xf32, #tpu.memory_space<vmem>>, vector<1x128xf32>
    %845 = vector.extract_strided_slice %844 {offsets = [0, 32], sizes = [1, 16], strides = [1, 1]} : vector<1x128xf32> to vector<1x16xf32>
    %846 = vector.broadcast %845 : vector<1x16xf32> to vector<64x16xf32>
    %847 = arith.addf %843, %846 : vector<64x16xf32>
    %848 = vector.extract_strided_slice %833 {offsets = [0, 0], sizes = [9, 4], strides = [1, 1]} : vector<9x16xf32> to vector<9x4xf32>
    %849 = vector.extract_strided_slice %840 {offsets = [0, 0], sizes = [64, 4], strides = [1, 1]} : vector<64x16xf32> to vector<64x4xf32>
    %cst_338 = arith.constant dense<0.000000e+00> : vector<9x64xf32>
    %850 = tpu.matmul %848, %849, %cst_338 {dimension_numbers = #tpu.dot_dimension_numbers<[1], [1], [0], [0], [0, 0, 1, 0], [], []>} : vector<9x4xf32>, vector<64x4xf32>, vector<9x64xf32> -> vector<9x64xf32>
    %cst_339 = arith.constant 5.000000e-01 : f32
    %851 = vector.broadcast %cst_339 : f32 to vector<9x64xf32>
    %852 = arith.mulf %850, %851 : vector<9x64xf32>
    %cst_340 = arith.constant dense<0xFF800000> : vector<9xf32>
    %853 = vector.multi_reduction <maximumf>, %852, %cst_340 [1] : vector<9x64xf32> to vector<9xf32>
    %854 = vector.shape_cast %853 : vector<9xf32> to vector<9x1xf32>
    %855 = vector.broadcast %854 : vector<9x1xf32> to vector<9x64xf32>
    %856 = arith.subf %852, %855 : vector<9x64xf32>
    %857 = math.exp %856 : vector<9x64xf32>
    %cst_341 = arith.constant dense<0.000000e+00> : vector<9xf32>
    %858 = vector.multi_reduction <add>, %857, %cst_341 [1] : vector<9x64xf32> to vector<9xf32>
    %859 = vector.shape_cast %858 : vector<9xf32> to vector<9x1xf32>
    %860 = tpu.reciprocal %859 {approx = true} : vector<9x1xf32> -> vector<9x1xf32>
    %861 = vector.broadcast %860 : vector<9x1xf32> to vector<9x64xf32>
    %862 = arith.mulf %857, %861 : vector<9x64xf32>
    %863 = vector.extract_strided_slice %847 {offsets = [0, 0], sizes = [64, 4], strides = [1, 1]} : vector<64x16xf32> to vector<64x4xf32>
    %cst_342 = arith.constant dense<0.000000e+00> : vector<9x4xf32>
    %864 = tpu.matmul %862, %863, %cst_342 {dimension_numbers = #tpu.dot_dimension_numbers<[1], [0], [0], [1], [0, 0, 1, 1], [], []>} : vector<9x64xf32>, vector<64x4xf32>, vector<9x4xf32> -> vector<9x4xf32>
    %865 = vector.extract_strided_slice %833 {offsets = [0, 4], sizes = [9, 4], strides = [1, 1]} : vector<9x16xf32> to vector<9x4xf32>
    %866 = vector.extract_strided_slice %840 {offsets = [0, 4], sizes = [64, 4], strides = [1, 1]} : vector<64x16xf32> to vector<64x4xf32>
    %cst_343 = arith.constant dense<0.000000e+00> : vector<9x64xf32>
    %867 = tpu.matmul %865, %866, %cst_343 {dimension_numbers = #tpu.dot_dimension_numbers<[1], [1], [0], [0], [0, 0, 1, 0], [], []>} : vector<9x4xf32>, vector<64x4xf32>, vector<9x64xf32> -> vector<9x64xf32>
    %cst_344 = arith.constant 5.000000e-01 : f32
    %868 = vector.broadcast %cst_344 : f32 to vector<9x64xf32>
    %869 = arith.mulf %867, %868 : vector<9x64xf32>
    %cst_345 = arith.constant dense<0xFF800000> : vector<9xf32>
    %870 = vector.multi_reduction <maximumf>, %869, %cst_345 [1] : vector<9x64xf32> to vector<9xf32>
    %871 = vector.shape_cast %870 : vector<9xf32> to vector<9x1xf32>
    %872 = vector.broadcast %871 : vector<9x1xf32> to vector<9x64xf32>
    %873 = arith.subf %869, %872 : vector<9x64xf32>
    %874 = math.exp %873 : vector<9x64xf32>
    %cst_346 = arith.constant dense<0.000000e+00> : vector<9xf32>
    %875 = vector.multi_reduction <add>, %874, %cst_346 [1] : vector<9x64xf32> to vector<9xf32>
    %876 = vector.shape_cast %875 : vector<9xf32> to vector<9x1xf32>
    %877 = tpu.reciprocal %876 {approx = true} : vector<9x1xf32> -> vector<9x1xf32>
    %878 = vector.broadcast %877 : vector<9x1xf32> to vector<9x64xf32>
    %879 = arith.mulf %874, %878 : vector<9x64xf32>
    %880 = vector.extract_strided_slice %847 {offsets = [0, 4], sizes = [64, 4], strides = [1, 1]} : vector<64x16xf32> to vector<64x4xf32>
    %cst_347 = arith.constant dense<0.000000e+00> : vector<9x4xf32>
    %881 = tpu.matmul %879, %880, %cst_347 {dimension_numbers = #tpu.dot_dimension_numbers<[1], [0], [0], [1], [0, 0, 1, 1], [], []>} : vector<9x64xf32>, vector<64x4xf32>, vector<9x4xf32> -> vector<9x4xf32>
    %882 = vector.extract_strided_slice %833 {offsets = [0, 8], sizes = [9, 4], strides = [1, 1]} : vector<9x16xf32> to vector<9x4xf32>
    %883 = vector.extract_strided_slice %840 {offsets = [0, 8], sizes = [64, 4], strides = [1, 1]} : vector<64x16xf32> to vector<64x4xf32>
    %cst_348 = arith.constant dense<0.000000e+00> : vector<9x64xf32>
    %884 = tpu.matmul %882, %883, %cst_348 {dimension_numbers = #tpu.dot_dimension_numbers<[1], [1], [0], [0], [0, 0, 1, 0], [], []>} : vector<9x4xf32>, vector<64x4xf32>, vector<9x64xf32> -> vector<9x64xf32>
    %cst_349 = arith.constant 5.000000e-01 : f32
    %885 = vector.broadcast %cst_349 : f32 to vector<9x64xf32>
    %886 = arith.mulf %884, %885 : vector<9x64xf32>
    %cst_350 = arith.constant dense<0xFF800000> : vector<9xf32>
    %887 = vector.multi_reduction <maximumf>, %886, %cst_350 [1] : vector<9x64xf32> to vector<9xf32>
    %888 = vector.shape_cast %887 : vector<9xf32> to vector<9x1xf32>
    %889 = vector.broadcast %888 : vector<9x1xf32> to vector<9x64xf32>
    %890 = arith.subf %886, %889 : vector<9x64xf32>
    %891 = math.exp %890 : vector<9x64xf32>
    %cst_351 = arith.constant dense<0.000000e+00> : vector<9xf32>
    %892 = vector.multi_reduction <add>, %891, %cst_351 [1] : vector<9x64xf32> to vector<9xf32>
    %893 = vector.shape_cast %892 : vector<9xf32> to vector<9x1xf32>
    %894 = tpu.reciprocal %893 {approx = true} : vector<9x1xf32> -> vector<9x1xf32>
    %895 = vector.broadcast %894 : vector<9x1xf32> to vector<9x64xf32>
    %896 = arith.mulf %891, %895 : vector<9x64xf32>
    %897 = vector.extract_strided_slice %847 {offsets = [0, 8], sizes = [64, 4], strides = [1, 1]} : vector<64x16xf32> to vector<64x4xf32>
    %cst_352 = arith.constant dense<0.000000e+00> : vector<9x4xf32>
    %898 = tpu.matmul %896, %897, %cst_352 {dimension_numbers = #tpu.dot_dimension_numbers<[1], [0], [0], [1], [0, 0, 1, 1], [], []>} : vector<9x64xf32>, vector<64x4xf32>, vector<9x4xf32> -> vector<9x4xf32>
    %899 = vector.extract_strided_slice %833 {offsets = [0, 12], sizes = [9, 4], strides = [1, 1]} : vector<9x16xf32> to vector<9x4xf32>
    %900 = vector.extract_strided_slice %840 {offsets = [0, 12], sizes = [64, 4], strides = [1, 1]} : vector<64x16xf32> to vector<64x4xf32>
    %cst_353 = arith.constant dense<0.000000e+00> : vector<9x64xf32>
    %901 = tpu.matmul %899, %900, %cst_353 {dimension_numbers = #tpu.dot_dimension_numbers<[1], [1], [0], [0], [0, 0, 1, 0], [], []>} : vector<9x4xf32>, vector<64x4xf32>, vector<9x64xf32> -> vector<9x64xf32>
    %cst_354 = arith.constant 5.000000e-01 : f32
    %902 = vector.broadcast %cst_354 : f32 to vector<9x64xf32>
    %903 = arith.mulf %901, %902 : vector<9x64xf32>
    %cst_355 = arith.constant dense<0xFF800000> : vector<9xf32>
    %904 = vector.multi_reduction <maximumf>, %903, %cst_355 [1] : vector<9x64xf32> to vector<9xf32>
    %905 = vector.shape_cast %904 : vector<9xf32> to vector<9x1xf32>
    %906 = vector.broadcast %905 : vector<9x1xf32> to vector<9x64xf32>
    %907 = arith.subf %903, %906 : vector<9x64xf32>
    %908 = math.exp %907 : vector<9x64xf32>
    %cst_356 = arith.constant dense<0.000000e+00> : vector<9xf32>
    %909 = vector.multi_reduction <add>, %908, %cst_356 [1] : vector<9x64xf32> to vector<9xf32>
    %910 = vector.shape_cast %909 : vector<9xf32> to vector<9x1xf32>
    %911 = tpu.reciprocal %910 {approx = true} : vector<9x1xf32> -> vector<9x1xf32>
    %912 = vector.broadcast %911 : vector<9x1xf32> to vector<9x64xf32>
    %913 = arith.mulf %908, %912 : vector<9x64xf32>
    %914 = vector.extract_strided_slice %847 {offsets = [0, 12], sizes = [64, 4], strides = [1, 1]} : vector<64x16xf32> to vector<64x4xf32>
    %cst_357 = arith.constant dense<0.000000e+00> : vector<9x4xf32>
    %915 = tpu.matmul %913, %914, %cst_357 {dimension_numbers = #tpu.dot_dimension_numbers<[1], [0], [0], [1], [0, 0, 1, 1], [], []>} : vector<9x64xf32>, vector<64x4xf32>, vector<9x4xf32> -> vector<9x4xf32>
    %916 = tpu.concatenate %864, %881, %898, %915 in 1 : vector<9x4xf32>, vector<9x4xf32>, vector<9x4xf32>, vector<9x4xf32> -> vector<9x16xf32>
    %c240 = arith.constant 240 : index
    %c0_358 = arith.constant 0 : index
    %917 = vector.load %arg4[%c240, %c0_358] : memref<840x128xf32, #tpu.memory_space<vmem>>, vector<16x128xf32>
    %918 = vector.extract_strided_slice %917 {offsets = [0, 0], sizes = [16, 32], strides = [1, 1]} : vector<16x128xf32> to vector<16x32xf32>
    %cst_359 = arith.constant dense<0.000000e+00> : vector<9x32xf32>
    %919 = tpu.matmul %916, %918, %cst_359 {dimension_numbers = #tpu.dot_dimension_numbers<[1], [0], [0], [1], [0, 0, 1, 1], [], []>} : vector<9x16xf32>, vector<16x32xf32>, vector<9x32xf32> -> vector<9x32xf32>
    %c784_360 = arith.constant 784 : index
    %c0_361 = arith.constant 0 : index
    %920 = vector.load %arg4[%c784_360, %c0_361] : memref<840x128xf32, #tpu.memory_space<vmem>>, vector<1x128xf32>
    %921 = vector.extract_strided_slice %920 {offsets = [0, 48], sizes = [1, 32], strides = [1, 1]} : vector<1x128xf32> to vector<1x32xf32>
    %922 = vector.broadcast %921 : vector<1x32xf32> to vector<9x32xf32>
    %923 = arith.addf %919, %922 : vector<9x32xf32>
    %924 = arith.addf %701, %923 : vector<9x32xf32>
    %cst_362 = arith.constant dense<0.000000e+00> : vector<9xf32>
    %925 = vector.multi_reduction <add>, %924, %cst_362 [1] : vector<9x32xf32> to vector<9xf32>
    %926 = vector.shape_cast %925 : vector<9xf32> to vector<9x1xf32>
    %cst_363 = arith.constant 3.200000e+01 : f32
    %927 = vector.broadcast %cst_363 : f32 to vector<9x1xf32>
    %928 = arith.divf %926, %927 : vector<9x1xf32>
    %929 = vector.broadcast %928 : vector<9x1xf32> to vector<9x32xf32>
    %930 = arith.subf %924, %929 : vector<9x32xf32>
    %931 = arith.mulf %930, %930 : vector<9x32xf32>
    %cst_364 = arith.constant dense<0.000000e+00> : vector<9xf32>
    %932 = vector.multi_reduction <add>, %931, %cst_364 [1] : vector<9x32xf32> to vector<9xf32>
    %933 = vector.shape_cast %932 : vector<9xf32> to vector<9x1xf32>
    %cst_365 = arith.constant 3.200000e+01 : f32
    %934 = vector.broadcast %cst_365 : f32 to vector<9x1xf32>
    %935 = arith.divf %933, %934 : vector<9x1xf32>
    %cst_366 = arith.constant 9.99999974E-6 : f32
    %936 = vector.broadcast %cst_366 : f32 to vector<9x1xf32>
    %937 = arith.addf %935, %936 : vector<9x1xf32>
    %938 = math.rsqrt %937 : vector<9x1xf32>
    %939 = vector.broadcast %938 : vector<9x1xf32> to vector<9x32xf32>
    %940 = arith.mulf %930, %939 : vector<9x32xf32>
    %c784_367 = arith.constant 784 : index
    %c0_368 = arith.constant 0 : index
    %941 = vector.load %arg4[%c784_367, %c0_368] : memref<840x128xf32, #tpu.memory_space<vmem>>, vector<1x128xf32>
    %942 = vector.extract_strided_slice %941 {offsets = [0, 80], sizes = [1, 32], strides = [1, 1]} : vector<1x128xf32> to vector<1x32xf32>
    %943 = vector.broadcast %942 : vector<1x32xf32> to vector<9x32xf32>
    %944 = arith.mulf %940, %943 : vector<9x32xf32>
    %c792 = arith.constant 792 : index
    %c0_369 = arith.constant 0 : index
    %945 = vector.load %arg4[%c792, %c0_369] : memref<840x128xf32, #tpu.memory_space<vmem>>, vector<1x128xf32>
    %946 = vector.extract_strided_slice %945 {offsets = [0, 0], sizes = [1, 32], strides = [1, 1]} : vector<1x128xf32> to vector<1x32xf32>
    %947 = vector.broadcast %946 : vector<1x32xf32> to vector<9x32xf32>
    %948 = arith.addf %944, %947 : vector<9x32xf32>
    %c256 = arith.constant 256 : index
    %c0_370 = arith.constant 0 : index
    %949 = vector.load %arg4[%c256, %c0_370] : memref<840x128xf32, #tpu.memory_space<vmem>>, vector<32x128xf32>
    %950 = vector.extract_strided_slice %949 {offsets = [0, 0], sizes = [32, 32], strides = [1, 1]} : vector<32x128xf32> to vector<32x32xf32>
    %cst_371 = arith.constant dense<0.000000e+00> : vector<64x32xf32>
    %951 = tpu.matmul %824, %950, %cst_371 {dimension_numbers = #tpu.dot_dimension_numbers<[1], [0], [0], [1], [0, 0, 1, 1], [], []>} : vector<64x32xf32>, vector<32x32xf32>, vector<64x32xf32> -> vector<64x32xf32>
    %c792_372 = arith.constant 792 : index
    %c0_373 = arith.constant 0 : index
    %952 = vector.load %arg4[%c792_372, %c0_373] : memref<840x128xf32, #tpu.memory_space<vmem>>, vector<1x128xf32>
    %953 = vector.extract_strided_slice %952 {offsets = [0, 32], sizes = [1, 32], strides = [1, 1]} : vector<1x128xf32> to vector<1x32xf32>
    %954 = vector.broadcast %953 : vector<1x32xf32> to vector<64x32xf32>
    %955 = arith.addf %951, %954 : vector<64x32xf32>
    %c208_374 = arith.constant 208 : index
    %c0_375 = arith.constant 0 : index
    %956 = vector.load %arg4[%c208_374, %c0_375] : memref<840x128xf32, #tpu.memory_space<vmem>>, vector<32x128xf32>
    %957 = vector.extract_strided_slice %956 {offsets = [0, 112], sizes = [32, 4], strides = [1, 1]} : vector<32x128xf32> to vector<32x4xf32>
    %cst_376 = arith.constant dense<0.000000e+00> : vector<64x4xf32>
    %958 = tpu.matmul %955, %957, %cst_376 {dimension_numbers = #tpu.dot_dimension_numbers<[1], [0], [0], [1], [0, 0, 1, 1], [], []>} : vector<64x32xf32>, vector<32x4xf32>, vector<64x4xf32> -> vector<64x4xf32>
    %959 = arith.mulf %955, %955 : vector<64x32xf32>
    %c208_377 = arith.constant 208 : index
    %c0_378 = arith.constant 0 : index
    %960 = vector.load %arg4[%c208_377, %c0_378] : memref<840x128xf32, #tpu.memory_space<vmem>>, vector<32x128xf32>
    %961 = vector.extract_strided_slice %960 {offsets = [0, 112], sizes = [32, 4], strides = [1, 1]} : vector<32x128xf32> to vector<32x4xf32>
    %cst_379 = arith.constant dense<0.000000e+00> : vector<64x4xf32>
    %962 = tpu.matmul %959, %961, %cst_379 {dimension_numbers = #tpu.dot_dimension_numbers<[1], [0], [0], [1], [0, 0, 1, 1], [], []>} : vector<64x32xf32>, vector<32x4xf32>, vector<64x4xf32> -> vector<64x4xf32>
    %963 = arith.mulf %958, %958 : vector<64x4xf32>
    %964 = arith.subf %962, %963 : vector<64x4xf32>
    %cst_380 = arith.constant 9.99999997E-7 : f32
    %965 = vector.broadcast %cst_380 : f32 to vector<64x4xf32>
    %966 = arith.addf %964, %965 : vector<64x4xf32>
    %967 = math.rsqrt %966 : vector<64x4xf32>
    %c800 = arith.constant 800 : index
    %c0_381 = arith.constant 0 : index
    %968 = vector.load %arg4[%c800, %c0_381] : memref<840x128xf32, #tpu.memory_space<vmem>>, vector<4x128xf32>
    %969 = vector.extract_strided_slice %968 {offsets = [0, 0], sizes = [4, 32], strides = [1, 1]} : vector<4x128xf32> to vector<4x32xf32>
    %cst_382 = arith.constant dense<0.000000e+00> : vector<64x32xf32>
    %970 = tpu.matmul %958, %969, %cst_382 {dimension_numbers = #tpu.dot_dimension_numbers<[1], [0], [0], [1], [0, 0, 1, 1], [], []>} : vector<64x4xf32>, vector<4x32xf32>, vector<64x32xf32> -> vector<64x32xf32>
    %c800_383 = arith.constant 800 : index
    %c0_384 = arith.constant 0 : index
    %971 = vector.load %arg4[%c800_383, %c0_384] : memref<840x128xf32, #tpu.memory_space<vmem>>, vector<4x128xf32>
    %972 = vector.extract_strided_slice %971 {offsets = [0, 0], sizes = [4, 32], strides = [1, 1]} : vector<4x128xf32> to vector<4x32xf32>
    %cst_385 = arith.constant dense<0.000000e+00> : vector<64x32xf32>
    %973 = tpu.matmul %967, %972, %cst_385 {dimension_numbers = #tpu.dot_dimension_numbers<[1], [0], [0], [1], [0, 0, 1, 1], [], []>} : vector<64x4xf32>, vector<4x32xf32>, vector<64x32xf32> -> vector<64x32xf32>
    %974 = arith.subf %955, %970 : vector<64x32xf32>
    %975 = arith.mulf %974, %973 : vector<64x32xf32>
    %c792_386 = arith.constant 792 : index
    %c0_387 = arith.constant 0 : index
    %976 = vector.load %arg4[%c792_386, %c0_387] : memref<840x128xf32, #tpu.memory_space<vmem>>, vector<1x128xf32>
    %977 = vector.extract_strided_slice %976 {offsets = [0, 64], sizes = [1, 32], strides = [1, 1]} : vector<1x128xf32> to vector<1x32xf32>
    %978 = vector.broadcast %977 : vector<1x32xf32> to vector<64x32xf32>
    %979 = arith.mulf %975, %978 : vector<64x32xf32>
    %c792_388 = arith.constant 792 : index
    %c0_389 = arith.constant 0 : index
    %980 = vector.load %arg4[%c792_388, %c0_389] : memref<840x128xf32, #tpu.memory_space<vmem>>, vector<1x128xf32>
    %981 = vector.extract_strided_slice %980 {offsets = [0, 96], sizes = [1, 32], strides = [1, 1]} : vector<1x128xf32> to vector<1x32xf32>
    %982 = vector.broadcast %981 : vector<1x32xf32> to vector<64x32xf32>
    %983 = arith.addf %979, %982 : vector<64x32xf32>
    %cst_390 = arith.constant 5.000000e-01 : f32
    %984 = vector.broadcast %cst_390 : f32 to vector<64x32xf32>
    %985 = arith.mulf %984, %983 : vector<64x32xf32>
    %986 = arith.mulf %983, %983 : vector<64x32xf32>
    %987 = arith.mulf %986, %983 : vector<64x32xf32>
    %cst_391 = arith.constant 4.471500e-02 : f32
    %988 = vector.broadcast %cst_391 : f32 to vector<64x32xf32>
    %989 = arith.mulf %988, %987 : vector<64x32xf32>
    %990 = arith.addf %983, %989 : vector<64x32xf32>
    %cst_392 = arith.constant 0.797884583 : f32
    %991 = vector.broadcast %cst_392 : f32 to vector<64x32xf32>
    %992 = arith.mulf %991, %990 : vector<64x32xf32>
    %993 = math.tanh %992 : vector<64x32xf32>
    %cst_393 = arith.constant 1.000000e+00 : f32
    %994 = vector.broadcast %cst_393 : f32 to vector<64x32xf32>
    %995 = arith.addf %994, %993 : vector<64x32xf32>
    %996 = arith.mulf %985, %995 : vector<64x32xf32>
    %c256_394 = arith.constant 256 : index
    %c0_395 = arith.constant 0 : index
    %997 = vector.load %arg4[%c256_394, %c0_395] : memref<840x128xf32, #tpu.memory_space<vmem>>, vector<32x128xf32>
    %998 = vector.extract_strided_slice %997 {offsets = [0, 32], sizes = [32, 64], strides = [1, 1]} : vector<32x128xf32> to vector<32x64xf32>
    %cst_396 = arith.constant dense<0.000000e+00> : vector<64x64xf32>
    %999 = tpu.matmul %996, %998, %cst_396 {dimension_numbers = #tpu.dot_dimension_numbers<[1], [0], [0], [1], [0, 0, 1, 1], [], []>} : vector<64x32xf32>, vector<32x64xf32>, vector<64x64xf32> -> vector<64x64xf32>
    %c808 = arith.constant 808 : index
    %c0_397 = arith.constant 0 : index
    %1000 = vector.load %arg4[%c808, %c0_397] : memref<840x128xf32, #tpu.memory_space<vmem>>, vector<1x128xf32>
    %1001 = vector.extract_strided_slice %1000 {offsets = [0, 0], sizes = [1, 64], strides = [1, 1]} : vector<1x128xf32> to vector<1x64xf32>
    %1002 = vector.broadcast %1001 : vector<1x64xf32> to vector<64x64xf32>
    %1003 = arith.addf %999, %1002 : vector<64x64xf32>
    %cst_398 = arith.constant 5.000000e-01 : f32
    %1004 = vector.broadcast %cst_398 : f32 to vector<64x64xf32>
    %1005 = arith.mulf %1004, %1003 : vector<64x64xf32>
    %1006 = arith.mulf %1003, %1003 : vector<64x64xf32>
    %1007 = arith.mulf %1006, %1003 : vector<64x64xf32>
    %cst_399 = arith.constant 4.471500e-02 : f32
    %1008 = vector.broadcast %cst_399 : f32 to vector<64x64xf32>
    %1009 = arith.mulf %1008, %1007 : vector<64x64xf32>
    %1010 = arith.addf %1003, %1009 : vector<64x64xf32>
    %cst_400 = arith.constant 0.797884583 : f32
    %1011 = vector.broadcast %cst_400 : f32 to vector<64x64xf32>
    %1012 = arith.mulf %1011, %1010 : vector<64x64xf32>
    %1013 = math.tanh %1012 : vector<64x64xf32>
    %cst_401 = arith.constant 1.000000e+00 : f32
    %1014 = vector.broadcast %cst_401 : f32 to vector<64x64xf32>
    %1015 = arith.addf %1014, %1013 : vector<64x64xf32>
    %1016 = arith.mulf %1005, %1015 : vector<64x64xf32>
    %1017 = vector.extract_strided_slice %948 {offsets = [1, 0], sizes = [4, 32], strides = [1, 1]} : vector<9x32xf32> to vector<4x32xf32>
    %1018 = vector.extract_strided_slice %1017 {offsets = [0, 0], sizes = [1, 32], strides = [1, 1]} : vector<4x32xf32> to vector<1x32xf32>
    %1019 = vector.extract_strided_slice %1017 {offsets = [1, 0], sizes = [1, 32], strides = [1, 1]} : vector<4x32xf32> to vector<1x32xf32>
    %1020 = vector.extract_strided_slice %1017 {offsets = [2, 0], sizes = [1, 32], strides = [1, 1]} : vector<4x32xf32> to vector<1x32xf32>
    %1021 = vector.extract_strided_slice %1017 {offsets = [3, 0], sizes = [1, 32], strides = [1, 1]} : vector<4x32xf32> to vector<1x32xf32>
    %1022 = tpu.concatenate %1018, %1019, %1020, %1021 in 1 : vector<1x32xf32>, vector<1x32xf32>, vector<1x32xf32>, vector<1x32xf32> -> vector<1x128xf32>
    %c288 = arith.constant 288 : index
    %c0_402 = arith.constant 0 : index
    %1023 = vector.load %arg4[%c288, %c0_402] : memref<840x128xf32, #tpu.memory_space<vmem>>, vector<128x128xf32>
    %cst_403 = arith.constant dense<0.000000e+00> : vector<1x128xf32>
    %1024 = tpu.matmul %1022, %1023, %cst_403 {dimension_numbers = #tpu.dot_dimension_numbers<[1], [0], [0], [1], [0, 0, 1, 1], [], []>} : vector<1x128xf32>, vector<128x128xf32>, vector<1x128xf32> -> vector<1x128xf32>
    %c816 = arith.constant 816 : index
    %c0_404 = arith.constant 0 : index
    %1025 = vector.load %arg4[%c816, %c0_404] : memref<840x128xf32, #tpu.memory_space<vmem>>, vector<1x128xf32>
    %1026 = arith.addf %1024, %1025 : vector<1x128xf32>
    %cst_405 = arith.constant 0.000000e+00 : f32
    %1027 = vector.broadcast %cst_405 : f32 to vector<1x128xf32>
    %1028 = arith.maximumf %1026, %1027 : vector<1x128xf32>
    %c416 = arith.constant 416 : index
    %c0_406 = arith.constant 0 : index
    %1029 = vector.load %arg4[%c416, %c0_406] : memref<840x128xf32, #tpu.memory_space<vmem>>, vector<128x128xf32>
    %cst_407 = arith.constant dense<0.000000e+00> : vector<1x128xf32>
    %1030 = tpu.matmul %1028, %1029, %cst_407 {dimension_numbers = #tpu.dot_dimension_numbers<[1], [0], [0], [1], [0, 0, 1, 1], [], []>} : vector<1x128xf32>, vector<128x128xf32>, vector<1x128xf32> -> vector<1x128xf32>
    %c824 = arith.constant 824 : index
    %c0_408 = arith.constant 0 : index
    %1031 = vector.load %arg4[%c824, %c0_408] : memref<840x128xf32, #tpu.memory_space<vmem>>, vector<1x128xf32>
    %1032 = arith.addf %1030, %1031 : vector<1x128xf32>
    %cst_409 = arith.constant 0.000000e+00 : f32
    %1033 = vector.broadcast %cst_409 : f32 to vector<1x128xf32>
    %1034 = arith.maximumf %1032, %1033 : vector<1x128xf32>
    %c544 = arith.constant 544 : index
    %c0_410 = arith.constant 0 : index
    %1035 = vector.load %arg4[%c544, %c0_410] : memref<840x128xf32, #tpu.memory_space<vmem>>, vector<128x128xf32>
    %1036 = vector.extract_strided_slice %1035 {offsets = [0, 0], sizes = [128, 16], strides = [1, 1]} : vector<128x128xf32> to vector<128x16xf32>
    %cst_411 = arith.constant dense<0.000000e+00> : vector<1x16xf32>
    %1037 = tpu.matmul %1034, %1036, %cst_411 {dimension_numbers = #tpu.dot_dimension_numbers<[1], [0], [0], [1], [0, 0, 1, 1], [], []>} : vector<1x128xf32>, vector<128x16xf32>, vector<1x16xf32> -> vector<1x16xf32>
    %c784_412 = arith.constant 784 : index
    %c0_413 = arith.constant 0 : index
    %1038 = vector.load %arg4[%c784_412, %c0_413] : memref<840x128xf32, #tpu.memory_space<vmem>>, vector<1x128xf32>
    %1039 = vector.extract_strided_slice %1038 {offsets = [0, 112], sizes = [1, 16], strides = [1, 1]} : vector<1x128xf32> to vector<1x16xf32>
    %1040 = arith.addf %1037, %1039 : vector<1x16xf32>
    %1041 = vector.extract_strided_slice %1040 {offsets = [0, 0], sizes = [1, 4], strides = [1, 1]} : vector<1x16xf32> to vector<1x4xf32>
    %1042 = vector.extract_strided_slice %1040 {offsets = [0, 4], sizes = [1, 4], strides = [1, 1]} : vector<1x16xf32> to vector<1x4xf32>
    %1043 = vector.extract_strided_slice %1040 {offsets = [0, 8], sizes = [1, 4], strides = [1, 1]} : vector<1x16xf32> to vector<1x4xf32>
    %1044 = vector.extract_strided_slice %1040 {offsets = [0, 12], sizes = [1, 4], strides = [1, 1]} : vector<1x16xf32> to vector<1x4xf32>
    %1045 = tpu.concatenate %1041, %1042, %1043, %1044 in 0 : vector<1x4xf32>, vector<1x4xf32>, vector<1x4xf32>, vector<1x4xf32> -> vector<4x4xf32>
    %1046 = vector.extract_strided_slice %1016 {offsets = [0, 0], sizes = [64, 4], strides = [1, 1]} : vector<64x64xf32> to vector<64x4xf32>
    %cst_414 = arith.constant dense<0.000000e+00> : vector<4x64xf32>
    %1047 = tpu.matmul %1045, %1046, %cst_414 {dimension_numbers = #tpu.dot_dimension_numbers<[1], [1], [0], [0], [0, 0, 1, 0], [], []>} : vector<4x4xf32>, vector<64x4xf32>, vector<4x64xf32> -> vector<4x64xf32>
    %1048 = vector.extract_strided_slice %1016 {offsets = [0, 4], sizes = [64, 4], strides = [1, 1]} : vector<64x64xf32> to vector<64x4xf32>
    %cst_415 = arith.constant dense<0.000000e+00> : vector<4x64xf32>
    %1049 = tpu.matmul %1045, %1048, %cst_415 {dimension_numbers = #tpu.dot_dimension_numbers<[1], [1], [0], [0], [0, 0, 1, 0], [], []>} : vector<4x4xf32>, vector<64x4xf32>, vector<4x64xf32> -> vector<4x64xf32>
    %1050 = vector.extract_strided_slice %1016 {offsets = [0, 8], sizes = [64, 4], strides = [1, 1]} : vector<64x64xf32> to vector<64x4xf32>
    %cst_416 = arith.constant dense<0.000000e+00> : vector<4x64xf32>
    %1051 = tpu.matmul %1045, %1050, %cst_416 {dimension_numbers = #tpu.dot_dimension_numbers<[1], [1], [0], [0], [0, 0, 1, 0], [], []>} : vector<4x4xf32>, vector<64x4xf32>, vector<4x64xf32> -> vector<4x64xf32>
    %1052 = vector.extract_strided_slice %1016 {offsets = [0, 12], sizes = [64, 4], strides = [1, 1]} : vector<64x64xf32> to vector<64x4xf32>
    %cst_417 = arith.constant dense<0.000000e+00> : vector<4x64xf32>
    %1053 = tpu.matmul %1045, %1052, %cst_417 {dimension_numbers = #tpu.dot_dimension_numbers<[1], [1], [0], [0], [0, 0, 1, 0], [], []>} : vector<4x4xf32>, vector<64x4xf32>, vector<4x64xf32> -> vector<4x64xf32>
    %1054 = vector.extract_strided_slice %1016 {offsets = [0, 16], sizes = [64, 4], strides = [1, 1]} : vector<64x64xf32> to vector<64x4xf32>
    %cst_418 = arith.constant dense<0.000000e+00> : vector<4x64xf32>
    %1055 = tpu.matmul %1045, %1054, %cst_418 {dimension_numbers = #tpu.dot_dimension_numbers<[1], [1], [0], [0], [0, 0, 1, 0], [], []>} : vector<4x4xf32>, vector<64x4xf32>, vector<4x64xf32> -> vector<4x64xf32>
    %1056 = vector.extract_strided_slice %1016 {offsets = [0, 20], sizes = [64, 4], strides = [1, 1]} : vector<64x64xf32> to vector<64x4xf32>
    %cst_419 = arith.constant dense<0.000000e+00> : vector<4x64xf32>
    %1057 = tpu.matmul %1045, %1056, %cst_419 {dimension_numbers = #tpu.dot_dimension_numbers<[1], [1], [0], [0], [0, 0, 1, 0], [], []>} : vector<4x4xf32>, vector<64x4xf32>, vector<4x64xf32> -> vector<4x64xf32>
    %1058 = vector.extract_strided_slice %1016 {offsets = [0, 24], sizes = [64, 4], strides = [1, 1]} : vector<64x64xf32> to vector<64x4xf32>
    %cst_420 = arith.constant dense<0.000000e+00> : vector<4x64xf32>
    %1059 = tpu.matmul %1045, %1058, %cst_420 {dimension_numbers = #tpu.dot_dimension_numbers<[1], [1], [0], [0], [0, 0, 1, 0], [], []>} : vector<4x4xf32>, vector<64x4xf32>, vector<4x64xf32> -> vector<4x64xf32>
    %1060 = vector.extract_strided_slice %1016 {offsets = [0, 28], sizes = [64, 4], strides = [1, 1]} : vector<64x64xf32> to vector<64x4xf32>
    %cst_421 = arith.constant dense<0.000000e+00> : vector<4x64xf32>
    %1061 = tpu.matmul %1045, %1060, %cst_421 {dimension_numbers = #tpu.dot_dimension_numbers<[1], [1], [0], [0], [0, 0, 1, 0], [], []>} : vector<4x4xf32>, vector<64x4xf32>, vector<4x64xf32> -> vector<4x64xf32>
    %1062 = vector.extract_strided_slice %1016 {offsets = [0, 32], sizes = [64, 4], strides = [1, 1]} : vector<64x64xf32> to vector<64x4xf32>
    %cst_422 = arith.constant dense<0.000000e+00> : vector<4x64xf32>
    %1063 = tpu.matmul %1045, %1062, %cst_422 {dimension_numbers = #tpu.dot_dimension_numbers<[1], [1], [0], [0], [0, 0, 1, 0], [], []>} : vector<4x4xf32>, vector<64x4xf32>, vector<4x64xf32> -> vector<4x64xf32>
    %1064 = vector.extract_strided_slice %1016 {offsets = [0, 36], sizes = [64, 4], strides = [1, 1]} : vector<64x64xf32> to vector<64x4xf32>
    %cst_423 = arith.constant dense<0.000000e+00> : vector<4x64xf32>
    %1065 = tpu.matmul %1045, %1064, %cst_423 {dimension_numbers = #tpu.dot_dimension_numbers<[1], [1], [0], [0], [0, 0, 1, 0], [], []>} : vector<4x4xf32>, vector<64x4xf32>, vector<4x64xf32> -> vector<4x64xf32>
    %1066 = vector.extract_strided_slice %1016 {offsets = [0, 40], sizes = [64, 4], strides = [1, 1]} : vector<64x64xf32> to vector<64x4xf32>
    %cst_424 = arith.constant dense<0.000000e+00> : vector<4x64xf32>
    %1067 = tpu.matmul %1045, %1066, %cst_424 {dimension_numbers = #tpu.dot_dimension_numbers<[1], [1], [0], [0], [0, 0, 1, 0], [], []>} : vector<4x4xf32>, vector<64x4xf32>, vector<4x64xf32> -> vector<4x64xf32>
    %1068 = vector.extract_strided_slice %1016 {offsets = [0, 44], sizes = [64, 4], strides = [1, 1]} : vector<64x64xf32> to vector<64x4xf32>
    %cst_425 = arith.constant dense<0.000000e+00> : vector<4x64xf32>
    %1069 = tpu.matmul %1045, %1068, %cst_425 {dimension_numbers = #tpu.dot_dimension_numbers<[1], [1], [0], [0], [0, 0, 1, 0], [], []>} : vector<4x4xf32>, vector<64x4xf32>, vector<4x64xf32> -> vector<4x64xf32>
    %1070 = vector.extract_strided_slice %1016 {offsets = [0, 48], sizes = [64, 4], strides = [1, 1]} : vector<64x64xf32> to vector<64x4xf32>
    %cst_426 = arith.constant dense<0.000000e+00> : vector<4x64xf32>
    %1071 = tpu.matmul %1045, %1070, %cst_426 {dimension_numbers = #tpu.dot_dimension_numbers<[1], [1], [0], [0], [0, 0, 1, 0], [], []>} : vector<4x4xf32>, vector<64x4xf32>, vector<4x64xf32> -> vector<4x64xf32>
    %1072 = vector.extract_strided_slice %1016 {offsets = [0, 52], sizes = [64, 4], strides = [1, 1]} : vector<64x64xf32> to vector<64x4xf32>
    %cst_427 = arith.constant dense<0.000000e+00> : vector<4x64xf32>
    %1073 = tpu.matmul %1045, %1072, %cst_427 {dimension_numbers = #tpu.dot_dimension_numbers<[1], [1], [0], [0], [0, 0, 1, 0], [], []>} : vector<4x4xf32>, vector<64x4xf32>, vector<4x64xf32> -> vector<4x64xf32>
    %1074 = vector.extract_strided_slice %1016 {offsets = [0, 56], sizes = [64, 4], strides = [1, 1]} : vector<64x64xf32> to vector<64x4xf32>
    %cst_428 = arith.constant dense<0.000000e+00> : vector<4x64xf32>
    %1075 = tpu.matmul %1045, %1074, %cst_428 {dimension_numbers = #tpu.dot_dimension_numbers<[1], [1], [0], [0], [0, 0, 1, 0], [], []>} : vector<4x4xf32>, vector<64x4xf32>, vector<4x64xf32> -> vector<4x64xf32>
    %1076 = vector.extract_strided_slice %1016 {offsets = [0, 60], sizes = [64, 4], strides = [1, 1]} : vector<64x64xf32> to vector<64x4xf32>
    %cst_429 = arith.constant dense<0.000000e+00> : vector<4x64xf32>
    %1077 = tpu.matmul %1045, %1076, %cst_429 {dimension_numbers = #tpu.dot_dimension_numbers<[1], [1], [0], [0], [0, 0, 1, 0], [], []>} : vector<4x4xf32>, vector<64x4xf32>, vector<4x64xf32> -> vector<4x64xf32>
    %1078 = tpu.concatenate %1047, %1049, %1051, %1053, %1055, %1057, %1059, %1061, %1063, %1065, %1067, %1069, %1071, %1073, %1075, %1077 in 1 : vector<4x64xf32>, vector<4x64xf32>, vector<4x64xf32>, vector<4x64xf32>, vector<4x64xf32>, vector<4x64xf32>, vector<4x64xf32>, vector<4x64xf32>, vector<4x64xf32>, vector<4x64xf32>, vector<4x64xf32>, vector<4x64xf32>, vector<4x64xf32>, vector<4x64xf32>, vector<4x64xf32>, vector<4x64xf32> -> vector<4x1024xf32>
    %c0_430 = arith.constant 0 : index
    %c0_431 = arith.constant 0 : index
    %c0_432 = arith.constant 0 : index
    %1079 = vector.load %arg5[%c0_430, %c0_431, %c0_432] : memref<1x4x1024xf32, #tpu.memory_space<vmem>>, vector<1x4x1024xf32>
    %1080 = vector.shape_cast %1079 : vector<1x4x1024xf32> to vector<4x1024xf32>
    %1081 = vector.shape_cast %1078 : vector<4x1024xf32> to vector<1x4x1024xf32>
    tpu.vector_store %arg5[%c0_430, %c0_431, %c0_432], %1081 {strides = array<i32>} : memref<1x4x1024xf32, #tpu.memory_space<vmem>>, vector<1x4x1024xf32>,
    %1082 = vector.extract_strided_slice %948 {offsets = [0, 0], sizes = [1, 32], strides = [1, 1]} : vector<9x32xf32> to vector<1x32xf32>
    %c256_433 = arith.constant 256 : index
    %c0_434 = arith.constant 0 : index
    %1083 = vector.load %arg4[%c256_433, %c0_434] : memref<840x128xf32, #tpu.memory_space<vmem>>, vector<32x128xf32>
    %1084 = vector.extract_strided_slice %1083 {offsets = [0, 96], sizes = [32, 32], strides = [1, 1]} : vector<32x128xf32> to vector<32x32xf32>
    %cst_435 = arith.constant dense<0.000000e+00> : vector<1x32xf32>
    %1085 = tpu.matmul %1082, %1084, %cst_435 {dimension_numbers = #tpu.dot_dimension_numbers<[1], [0], [0], [1], [0, 0, 1, 1], [], []>} : vector<1x32xf32>, vector<32x32xf32>, vector<1x32xf32> -> vector<1x32xf32>
    %c808_436 = arith.constant 808 : index
    %c0_437 = arith.constant 0 : index
    %1086 = vector.load %arg4[%c808_436, %c0_437] : memref<840x128xf32, #tpu.memory_space<vmem>>, vector<1x128xf32>
    %1087 = vector.extract_strided_slice %1086 {offsets = [0, 64], sizes = [1, 32], strides = [1, 1]} : vector<1x128xf32> to vector<1x32xf32>
    %1088 = arith.addf %1085, %1087 : vector<1x32xf32>
    %cst_438 = arith.constant 0.000000e+00 : f32
    %1089 = vector.broadcast %cst_438 : f32 to vector<1x32xf32>
    %1090 = arith.maximumf %1088, %1089 : vector<1x32xf32>
    %c672 = arith.constant 672 : index
    %c0_439 = arith.constant 0 : index
    %1091 = vector.load %arg4[%c672, %c0_439] : memref<840x128xf32, #tpu.memory_space<vmem>>, vector<32x128xf32>
    %1092 = vector.extract_strided_slice %1091 {offsets = [0, 0], sizes = [32, 32], strides = [1, 1]} : vector<32x128xf32> to vector<32x32xf32>
    %cst_440 = arith.constant dense<0.000000e+00> : vector<1x32xf32>
    %1093 = tpu.matmul %1090, %1092, %cst_440 {dimension_numbers = #tpu.dot_dimension_numbers<[1], [0], [0], [1], [0, 0, 1, 1], [], []>} : vector<1x32xf32>, vector<32x32xf32>, vector<1x32xf32> -> vector<1x32xf32>
    %c808_441 = arith.constant 808 : index
    %c0_442 = arith.constant 0 : index
    %1094 = vector.load %arg4[%c808_441, %c0_442] : memref<840x128xf32, #tpu.memory_space<vmem>>, vector<1x128xf32>
    %1095 = vector.extract_strided_slice %1094 {offsets = [0, 96], sizes = [1, 32], strides = [1, 1]} : vector<1x128xf32> to vector<1x32xf32>
    %1096 = arith.addf %1093, %1095 : vector<1x32xf32>
    %cst_443 = arith.constant 0.000000e+00 : f32
    %1097 = vector.broadcast %cst_443 : f32 to vector<1x32xf32>
    %1098 = arith.maximumf %1096, %1097 : vector<1x32xf32>
    %c208_444 = arith.constant 208 : index
    %c0_445 = arith.constant 0 : index
    %1099 = vector.load %arg4[%c208_444, %c0_445] : memref<840x128xf32, #tpu.memory_space<vmem>>, vector<32x128xf32>
    %1100 = vector.extract_strided_slice %1099 {offsets = [0, 116], sizes = [32, 4], strides = [1, 1]} : vector<32x128xf32> to vector<32x4xf32>
    %cst_446 = arith.constant dense<0.000000e+00> : vector<1x4xf32>
    %1101 = tpu.matmul %1098, %1100, %cst_446 {dimension_numbers = #tpu.dot_dimension_numbers<[1], [0], [0], [1], [0, 0, 1, 1], [], []>} : vector<1x32xf32>, vector<32x4xf32>, vector<1x4xf32> -> vector<1x4xf32>
    %c832 = arith.constant 832 : index
    %c0_447 = arith.constant 0 : index
    %1102 = vector.load %arg4[%c832, %c0_447] : memref<840x128xf32, #tpu.memory_space<vmem>>, vector<1x128xf32>
    %1103 = vector.extract_strided_slice %1102 {offsets = [0, 0], sizes = [1, 4], strides = [1, 1]} : vector<1x128xf32> to vector<1x4xf32>
    %1104 = arith.addf %1101, %1103 : vector<1x4xf32>
    %c0_448 = arith.constant 0 : index
    %c0_449 = arith.constant 0 : index
    %c0_450 = arith.constant 0 : index
    %1105 = vector.load %arg6[%c0_448, %c0_449, %c0_450] : memref<1x1x4xf32, #tpu.memory_space<vmem>>, vector<1x1x4xf32>
    %1106 = vector.shape_cast %1105 : vector<1x1x4xf32> to vector<1x4xf32>
    %1107 = vector.shape_cast %1104 : vector<1x4xf32> to vector<1x1x4xf32>
    tpu.vector_store %arg6[%c0_448, %c0_449, %c0_450], %1107 {strides = array<i32>} : memref<1x1x4xf32, #tpu.memory_space<vmem>>, vector<1x1x4xf32>,
    return
  }
  func.func @transform_0(%arg0: i32) -> (i32, i32, i32) {
    %c0_i32 = arith.constant 0 : i32
    %c0_i32_0 = arith.constant 0 : i32
    %c0_i32_1 = arith.constant 0 : i32
    return %arg0, %c0_i32, %c0_i32_0 : i32, i32, i32
  }
  func.func @transform_1(%arg0: i32) -> (i32, i32, i32) {
    %c0_i32 = arith.constant 0 : i32
    %c0_i32_0 = arith.constant 0 : i32
    %c0_i32_1 = arith.constant 0 : i32
    return %arg0, %c0_i32, %c0_i32_0 : i32, i32, i32
  }
  func.func @transform_2(%arg0: i32) -> (i32, i32) {
    %c0_i32 = arith.constant 0 : i32
    %c0_i32_0 = arith.constant 0 : i32
    %c0_i32_1 = arith.constant 0 : i32
    return %c0_i32, %c0_i32_0 : i32, i32
  }
  func.func @transform_3(%arg0: i32) -> (i32, i32) {
    %c0_i32 = arith.constant 0 : i32
    %c0_i32_0 = arith.constant 0 : i32
    %c0_i32_1 = arith.constant 0 : i32
    return %c0_i32, %c0_i32_0 : i32, i32
  }
  func.func @transform_4(%arg0: i32) -> (i32, i32, i32) {
    %c0_i32 = arith.constant 0 : i32
    %c0_i32_0 = arith.constant 0 : i32
    %c0_i32_1 = arith.constant 0 : i32
    return %arg0, %c0_i32, %c0_i32_0 : i32, i32, i32
  }
  func.func @transform_5(%arg0: i32) -> (i32, i32, i32) {
    %c0_i32 = arith.constant 0 : i32
    %c0_i32_0 = arith.constant 0 : i32
    %c0_i32_1 = arith.constant 0 : i32
    return %arg0, %c0_i32, %c0_i32_0 : i32, i32, i32
  }
}

</mosaic_0001>

<llo_original>
// kernel: sam_coreml_forward.1
$region0: #{sam_coreml_forward.1}
  #allocation0 [shape = 'u32[]', space=smem, size = 0x4, offset = 0x4, fixed_abs, tag = 'smem constant byte address 0x4 - core index']
  #allocation1 [shape = 'u32[72,128]{1,0:T(1,128)}', space=vmem, size = 0x9000, scoped, tag = 'internal scratch']
  %s0 = inlined_call_operand.vmem [shape: f32[1,9,32], index: 0, kind: input, shape index: {}]
  %s1 = inlined_call_operand.vmem [shape: f32[1,64,32], index: 1, kind: input, shape index: {}]
  %s2 = inlined_call_operand.vmem [shape: f32[64,32], index: 2, kind: input, shape index: {}]
  %s3 = inlined_call_operand.hbm [shape: f32[840,128], index: 3, kind: input, shape index: {}]
  %s4 = inlined_call_operand.vmem [shape: f32[1,4,1024], index: 4, kind: output, shape index: {0}]
  %s5 = inlined_call_operand.hbm [shape: f32[1,1,4], index: 5, kind: output, shape index: {1}]
  %6 = xla_tuple %s4, %s5
  %s7 = sld [smem:[#allocation0]]
  $region38: #{sam_coreml_forward.1} parent=0
    _
  %s9 = ssub.s32 1, %s7
  %s10 = scalar_select 0, %s9, %s7
  $region1: #{sam_coreml_forward.1} parent=0
    #allocation2 [shape = 'u8[430080]{0}', space=vmem, size = 0x69000, scoped, tag = 'input window, operand 3, single buffered']
    #allocation3 [shape = 's32[1]{0}', space=sflag, size = 0x4, scoped, tag = 'scoped memory for sam_coreml_forward.1']
    #allocation4 [shape = 's32[1]{0}', space=sflag, size = 0x4, scoped, tag = 'scoped memory for sam_coreml_forward.1']
    #allocation5 [shape = 'u8[512]{0}', space=vmem, size = 0x400, scoped, tag = 'output window, operand 1, single buffered']
    %11 = vsyncpa [#allocation3], 0
    %12 = vsyncpa [#allocation4], 0
    // Predicated region
    $region2: #{sam_coreml_forward.1} parent=1 // pred_check
      _
    $region3: #{sam_coreml_forward.1} parent=1 // pred_check_branch
      %14 = sbr.rel (0) target = $region5
    $region4: #{sam_coreml_forward.1} parent=1 // pred_region
      _
    $region5: #{sam_coreml_forward.1} parent=1 // pred_fallthru
      _
    // Predicated region
    $region6: #{sam_coreml_forward.1} parent=1 // pred_check
      _
    $region7: #{sam_coreml_forward.1} parent=1 // pred_check_branch
      %16 = sbr.rel (0) target = $region9
    $region8: #{sam_coreml_forward.1} parent=1 // pred_region
      _
    $region9: #{sam_coreml_forward.1} parent=1 // pred_fallthru
      _
    // Predicated region
    $region10: #{sam_coreml_forward.1} parent=1 // pred_check
      _
    $region11: #{sam_coreml_forward.1} parent=1 // pred_check_branch
      %18 = sbr.rel (0) target = $region13
    $region12: #{sam_coreml_forward.1} parent=1 // pred_region
      _
    $region13: #{sam_coreml_forward.1} parent=1 // pred_fallthru
      _
    // Predicated region
    $region14: #{sam_coreml_forward.1} parent=1 // pred_check
      _
    $region15: #{sam_coreml_forward.1} parent=1 // pred_check_branch
      %20 = sbr.rel (0) target = $region17
    $region16: #{sam_coreml_forward.1} parent=1 // pred_region
      %22 = vsyncadd [#allocation3], 0
      %s23 = sshll.u32 %s3, 4
      %s24 = int_to_ptr.hbm [resolvable:$true] %s23
      %s25 = sshll.u32 [#allocation2], 4
      %s26 = int_to_ptr.vmem [resolvable:$true] %s25
      %31 = dma.hbm_to_vmem [thread:$0]  %s24, 13440, %s26, [#allocation3], 128, 128, 8
    $region17: #{sam_coreml_forward.1} parent=1 // pred_fallthru
      _
    // Predicated region
    $region18: #{sam_coreml_forward.1} parent=1 // pred_check
      _
    $region19: #{sam_coreml_forward.1} parent=1 // pred_check_branch
      %33 = sbr.rel (0) target = $region21
    $region20: #{sam_coreml_forward.1} parent=1 // pred_region
      %35 = dma.done [#allocation3], 13440
    $region21: #{sam_coreml_forward.1} parent=1 // pred_fallthru
      _
    %v36 = vld [vmem:[%s0] sm:$0xff]
    %v37 = vld [vmem:[%s0 + $0x8] sm:$0x1]
    %v38 = vld [vmem:[%s1] sm:$0xff]
    %v39 = vld [vmem:[%s1 + $0x8] sm:$0xff]
    %v40 = vld [vmem:[%s1 + $0x10] sm:$0xff]
    %v41 = vld [vmem:[%s1 + $0x18] sm:$0xff]
    %v42 = vld [vmem:[%s1 + $0x20] sm:$0xff]
    %v43 = vld [vmem:[%s1 + $0x28] sm:$0xff]
    %v44 = vld [vmem:[%s1 + $0x30] sm:$0xff]
    %v45 = vld [vmem:[%s1 + $0x38] sm:$0xff]
    %v46 = vld [vmem:[%s2] sm:$0xff]
    %v47 = vld [vmem:[%s2 + $0x8] sm:$0xff]
    %v48 = vld [vmem:[%s2 + $0x10] sm:$0xff]
    %v49 = vld [vmem:[%s2 + $0x18] sm:$0xff]
    %v50 = vld [vmem:[%s2 + $0x20] sm:$0xff]
    %v51 = vld [vmem:[%s2 + $0x28] sm:$0xff]
    %v52 = vld [vmem:[%s2 + $0x30] sm:$0xff]
    %v53 = vld [vmem:[%s2 + $0x38] sm:$0xff]
    %v54 = vld [vmem:[#allocation2] sm:$0xff]
    %v55 = vld [vmem:[#allocation2 + $0x8] sm:$0xff]
    %v56 = vld [vmem:[#allocation2 + $0x10] sm:$0xff]
    %v57 = vld [vmem:[#allocation2 + $0x18] sm:$0xff]
    %v58 = vld [vmem:[#allocation2 + $0x2c0] sm:$0x1]
    %v59 = vperm.slane %v58, 0
    %vm60 = vcmask 261120
    %v62 = vsel %vm60, %v36, 0
    %v65 = vsel %vm60, %v37, 0
    %67 = vmatpush.msra.mxu0 0.0
    %68 = vmatpush.msra.mxu0 0.0
    %69 = vmatpush.msra.mxu0 0.0
    %70 = vmatpush.msra.mxu0 0.0
    %71 = vmatpush.msra.mxu0 0.0
    %72 = vmatpush.msra.mxu0 0.0
    %73 = vmatpush.msra.mxu0 0.0
    %74 = vmatpush.msra.mxu0 0.0
    %75 = vmatpush.msra.mxu0 0.0
    %76 = vmatpush.msra.mxu0 0.0
    %77 = vmatpush.msra.mxu0 0.0
    %78 = vmatpush.msra.mxu0 0.0
    %79 = vmatpush.msra.mxu0 %v57
    %80 = vmatpush.msra.mxu0 %v56
    %81 = vmatpush.msra.mxu0 %v55
    %82 = vmatpush.msra.mxu0 %v54
    %83 = vmatmul.f32.gmra.mxu0 %v62
    %v84 = vpop.f32.mrf.mxu0
    %v85 = vadd.f32 %v59, %v84
    %86 = vmatmul.f32.gmra.mxu0 %v65
    %v87 = vpop.f32.mrf.mxu0
    %v88 = vadd.f32 %v59, %v87
    %89 = vdwg.mxu0
    %94 = vrot.lane.b32.xlu0 %v54, 96
    %v95 = vpop.permute.xlu0 %94
    %96 = vrot.lane.b32.xlu0 %v55, 96
    %v97 = vpop.permute.xlu0 %96
    %98 = vrot.lane.b32.xlu0 %v56, 96
    %v99 = vpop.permute.xlu0 %98
    %100 = vrot.lane.b32.xlu0 %v57, 96
    %v101 = vpop.permute.xlu0 %100
    %107 = vrot.lane.b32.xlu0 %v59, 96
    %v108 = vpop.permute.xlu0 %107
    %110 = vmatpush.msra.mxu0 0.0
    %111 = vmatpush.msra.mxu0 0.0
    %112 = vmatpush.msra.mxu0 0.0
    %113 = vmatpush.msra.mxu0 0.0
    %114 = vmatpush.msra.mxu0 0.0
    %115 = vmatpush.msra.mxu0 0.0
    %116 = vmatpush.msra.mxu0 0.0
    %117 = vmatpush.msra.mxu0 0.0
    %118 = vmatpush.msra.mxu0 0.0
    %119 = vmatpush.msra.mxu0 0.0
    %120 = vmatpush.msra.mxu0 0.0
    %121 = vmatpush.msra.mxu0 0.0
    %122 = vmatpush.msra.mxu0 %v101
    %123 = vmatpush.msra.mxu0 %v99
    %124 = vmatpush.msra.mxu0 %v97
    %125 = vmatpush.msra.mxu0 %v95
    %126 = vmatmul.f32.gmra.mxu0 %v62
    %v127 = vpop.f32.mrf.mxu0
    %v128 = vadd.f32 %v108, %v127
    %129 = vmatmul.f32.gmra.mxu0 %v65
    %v130 = vpop.f32.mrf.mxu0
    %v131 = vadd.f32 %v108, %v130
    %132 = vdwg.mxu0
    %133 = vrot.lane.b32.xlu0 %v54, 64
    %v134 = vpop.permute.xlu0 %133
    %135 = vrot.lane.b32.xlu0 %v55, 64
    %v136 = vpop.permute.xlu0 %135
    %137 = vrot.lane.b32.xlu0 %v56, 64
    %v138 = vpop.permute.xlu0 %137
    %139 = vrot.lane.b32.xlu0 %v57, 64
    %v140 = vpop.permute.xlu0 %139
    %145 = vrot.lane.b32.xlu0 %v59, 64
    %v146 = vpop.permute.xlu0 %145
    %148 = vmatpush.msra.mxu0 0.0
    %149 = vmatpush.msra.mxu0 0.0
    %150 = vmatpush.msra.mxu0 0.0
    %151 = vmatpush.msra.mxu0 0.0
    %152 = vmatpush.msra.mxu0 0.0
    %153 = vmatpush.msra.mxu0 0.0
    %154 = vmatpush.msra.mxu0 0.0
    %155 = vmatpush.msra.mxu0 0.0
    %156 = vmatpush.msra.mxu0 0.0
    %157 = vmatpush.msra.mxu0 0.0
    %158 = vmatpush.msra.mxu0 0.0
    %159 = vmatpush.msra.mxu0 0.0
    %160 = vmatpush.msra.mxu0 %v140
    %161 = vmatpush.msra.mxu0 %v138
    %162 = vmatpush.msra.mxu0 %v136
    %163 = vmatpush.msra.mxu0 %v134
    %164 = vmatmul.f32.gmra.mxu0 %v62
    %v165 = vpop.f32.mrf.mxu0
    %v166 = vadd.f32 %v146, %v165
    %167 = vmatmul.f32.gmra.mxu0 %v65
    %v168 = vpop.f32.mrf.mxu0
    %v169 = vadd.f32 %v146, %v168
    %170 = vdwg.mxu0
    %vm171 = vcmask 64512
    %v173 = vsel %vm171, %v85, 0
    %v176 = vsel %vm171, %v88, 0
    %v179 = vsel %vm171, %v128, 0
    %v182 = vsel %vm171, %v131, 0
    %184 = vmatpush.xpose.msra.mxu0 0.0
    %185 = vmatpush.xpose.msra.mxu0 0.0
    %186 = vmatpush.xpose.msra.mxu0 0.0
    %187 = vmatpush.xpose.msra.mxu0 0.0
    %188 = vmatpush.xpose.msra.mxu0 0.0
    %189 = vmatpush.xpose.msra.mxu0 0.0
    %190 = vmatpush.xpose.msra.mxu0 0.0
    %191 = vmatpush.xpose.msra.mxu0 0.0
    %192 = vmatpush.xpose.msra.mxu0 0.0
    %193 = vmatpush.xpose.msra.mxu0 0.0
    %194 = vmatpush.xpose.msra.mxu0 0.0
    %195 = vmatpush.xpose.msra.mxu0 0.0
    %196 = vmatpush.xpose.msra.mxu0 0.0
    %197 = vmatpush.xpose.msra.mxu0 0.0
    %198 = vmatpush.xpose.msra.mxu0 %v182
    %199 = vmatpush.xpose.msra.mxu0 %v179
    %200 = vmatmul.f32.gmra.mxu0 %v173
    %v201 = vpop.f32.mrf.mxu0
    %v202 = vadd.f32 0.0, %v201
    %203 = vmatmul.f32.gmra.mxu0 %v176
    %v204 = vpop.f32.mrf.mxu0
    %v205 = vadd.f32 0.0, %v204
    %206 = vdwg.mxu0
    %v207 = vmul.f32 %v202, 0.35355338
    %v208 = vmul.f32 %v205, 0.35355338
    %vm209 = vcmask 72704
    %v210 = vsel %vm209, %v207, -inf
    %211 = vmax.xlane.f32.xlu0 %v210
    %v212 = vpop.xlane.xlu0 %211
    %vm213 = vcmask 65536
    %v214 = vsel %vm213, %v208, -inf
    %215 = vmax.xlane.f32.xlu0 %v214
    %v216 = vpop.xlane.xlu0 %215
    %v217 = vsub.f32 %v207, %v212
    %v218 = vsub.f32 %v208, %v216
    %v219 = vmul.f32 %v217, 1.442695
    %v220 = vpow.pop %v219
    %v221 = vmul.f32 %v218, 1.442695
    %v222 = vpow.pop %v221
    %v223 = vsel %vm209, %v220, 0.0
    %224 = vadd.xlane.f32.xlu0 %v223
    %v225 = vpop.xlane.xlu0 %224
    %v226 = vsel %vm213, %v222, 0.0
    %227 = vadd.xlane.f32.xlu0 %v226
    %v228 = vpop.xlane.xlu0 %227
    %v229 = vrcp.pop %v225
    %v230 = vrcp.pop %v228
    %v231 = vmul.f32 %v220, %v229
    %v232 = vmul.f32 %v222, %v230
    %v234 = vsel %vm209, %v231, 0
    %v237 = vsel %vm209, %v232, 0
    %vm239 = vcmask 1040384
    %v241 = vsel %vm239, %v169, 0
    %243 = vmatpush.msra.mxu0 0.0
    %244 = vmatpush.msra.mxu0 0.0
    %245 = vmatpush.msra.mxu0 0.0
    %246 = vmatpush.msra.mxu0 0.0
    %247 = vmatpush.msra.mxu0 0.0
    %248 = vmatpush.msra.mxu0 0.0
    %249 = vmatpush.msra.mxu0 0.0
    %250 = vmatpush.msra.mxu0 0.0
    %251 = vmatpush.msra.mxu0 0.0
    %252 = vmatpush.msra.mxu0 0.0
    %253 = vmatpush.msra.mxu0 0.0
    %254 = vmatpush.msra.mxu0 0.0
    %255 = vmatpush.msra.mxu0 0.0
    %256 = vmatpush.msra.mxu0 0.0
    %257 = vmatpush.msra.mxu0 %v241
    %258 = vmatpush.msra.mxu0 %v166
    %259 = vmatmul.f32.gmra.mxu0 %v234
    %v260 = vpop.f32.mrf.mxu0
    %v261 = vadd.f32 0.0, %v260
    %262 = vmatmul.f32.gmra.mxu0 %v237
    %v263 = vpop.f32.mrf.mxu0
    %v264 = vadd.f32 0.0, %v263
    %265 = vdwg.mxu0
    %266 = vrot.lane.b32.xlu0 %v85, 120
    %v267 = vpop.permute.xlu0 %266
    %268 = vrot.lane.b32.xlu0 %v88, 120
    %v269 = vpop.permute.xlu0 %268
    %270 = vrot.lane.b32.xlu0 %v128, 120
    %v271 = vpop.permute.xlu0 %270
    %272 = vrot.lane.b32.xlu0 %v131, 120
    %v273 = vpop.permute.xlu0 %272
    %v274 = vsel %vm171, %v267, 0
    %v276 = vsel %vm171, %v269, 0
    %v278 = vsel %vm171, %v271, 0
    %v280 = vsel %vm171, %v273, 0
    %282 = vmatpush.xpose.msra.mxu0 0.0
    %283 = vmatpush.xpose.msra.mxu0 0.0
    %284 = vmatpush.xpose.msra.mxu0 0.0
    %285 = vmatpush.xpose.msra.mxu0 0.0
    %286 = vmatpush.xpose.msra.mxu0 0.0
    %287 = vmatpush.xpose.msra.mxu0 0.0
    %288 = vmatpush.xpose.msra.mxu0 0.0
    %289 = vmatpush.xpose.msra.mxu0 0.0
    %290 = vmatpush.xpose.msra.mxu0 0.0
    %291 = vmatpush.xpose.msra.mxu0 0.0
    %292 = vmatpush.xpose.msra.mxu0 0.0
    %293 = vmatpush.xpose.msra.mxu0 0.0
    %294 = vmatpush.xpose.msra.mxu0 0.0
    %295 = vmatpush.xpose.msra.mxu0 0.0
    %296 = vmatpush.xpose.msra.mxu0 %v280
    %297 = vmatpush.xpose.msra.mxu0 %v278
    %298 = vmatmul.f32.gmra.mxu0 %v274
    %v299 = vpop.f32.mrf.mxu0
    %v300 = vadd.f32 0.0, %v299
    %301 = vmatmul.f32.gmra.mxu0 %v276
    %v302 = vpop.f32.mrf.mxu0
    %v303 = vadd.f32 0.0, %v302
    %304 = vdwg.mxu0
    %v305 = vmul.f32 %v300, 0.35355338
    %v306 = vmul.f32 %v303, 0.35355338
    %v307 = vsel %vm209, %v305, -inf
    %308 = vmax.xlane.f32.xlu0 %v307
    %v309 = vpop.xlane.xlu0 %308
    %v310 = vsel %vm213, %v306, -inf
    %311 = vmax.xlane.f32.xlu0 %v310
    %v312 = vpop.xlane.xlu0 %311
    %v313 = vsub.f32 %v305, %v309
    %v314 = vsub.f32 %v306, %v312
    %v315 = vmul.f32 %v313, 1.442695
    %v316 = vpow.pop %v315
    %v317 = vmul.f32 %v314, 1.442695
    %v318 = vpow.pop %v317
    %v319 = vsel %vm209, %v316, 0.0
    %320 = vadd.xlane.f32.xlu0 %v319
    %v321 = vpop.xlane.xlu0 %320
    %v322 = vsel %vm213, %v318, 0.0
    %323 = vadd.xlane.f32.xlu0 %v322
    %v324 = vpop.xlane.xlu0 %323
    %v325 = vrcp.pop %v321
    %v326 = vrcp.pop %v324
    %v327 = vmul.f32 %v316, %v325
    %v328 = vmul.f32 %v318, %v326
    %330 = vrot.lane.b32.xlu0 %v166, 120
    %v331 = vpop.permute.xlu0 %330
    %332 = vrot.lane.b32.xlu0 %v169, 120
    %v333 = vpop.permute.xlu0 %332
    %v336 = vsel %vm209, %v327, 0
    %v339 = vsel %vm209, %v328, 0
    %v341 = vsel %vm239, %v333, 0
    %343 = vmatpush.msra.mxu0 0.0
    %344 = vmatpush.msra.mxu0 0.0
    %345 = vmatpush.msra.mxu0 0.0
    %346 = vmatpush.msra.mxu0 0.0
    %347 = vmatpush.msra.mxu0 0.0
    %348 = vmatpush.msra.mxu0 0.0
    %349 = vmatpush.msra.mxu0 0.0
    %350 = vmatpush.msra.mxu0 0.0
    %351 = vmatpush.msra.mxu0 0.0
    %352 = vmatpush.msra.mxu0 0.0
    %353 = vmatpush.msra.mxu0 0.0
    %354 = vmatpush.msra.mxu0 0.0
    %355 = vmatpush.msra.mxu0 0.0
    %356 = vmatpush.msra.mxu0 0.0
    %357 = vmatpush.msra.mxu0 %v341
    %358 = vmatpush.msra.mxu0 %v331
    %359 = vmatmul.f32.gmra.mxu0 %v336
    %v360 = vpop.f32.mrf.mxu0
    %v361 = vadd.f32 0.0, %v360
    %362 = vmatmul.f32.gmra.mxu0 %v339
    %v363 = vpop.f32.mrf.mxu0
    %v364 = vadd.f32 0.0, %v363
    %365 = vdwg.mxu0
    %366 = vrot.lane.b32.xlu0 %v85, 112
    %v367 = vpop.permute.xlu0 %366
    %368 = vrot.lane.b32.xlu0 %v88, 112
    %v369 = vpop.permute.xlu0 %368
    %370 = vrot.lane.b32.xlu0 %v128, 112
    %v371 = vpop.permute.xlu0 %370
    %372 = vrot.lane.b32.xlu0 %v131, 112
    %v373 = vpop.permute.xlu0 %372
    %v374 = vsel %vm171, %v367, 0
    %v376 = vsel %vm171, %v369, 0
    %v378 = vsel %vm171, %v371, 0
    %v380 = vsel %vm171, %v373, 0
    %382 = vmatpush.xpose.msra.mxu0 0.0
    %383 = vmatpush.xpose.msra.mxu0 0.0
    %384 = vmatpush.xpose.msra.mxu0 0.0
    %385 = vmatpush.xpose.msra.mxu0 0.0
    %386 = vmatpush.xpose.msra.mxu0 0.0
    %387 = vmatpush.xpose.msra.mxu0 0.0
    %388 = vmatpush.xpose.msra.mxu0 0.0
    %389 = vmatpush.xpose.msra.mxu0 0.0
    %390 = vmatpush.xpose.msra.mxu0 0.0
    %391 = vmatpush.xpose.msra.mxu0 0.0
    %392 = vmatpush.xpose.msra.mxu0 0.0
    %393 = vmatpush.xpose.msra.mxu0 0.0
    %394 = vmatpush.xpose.msra.mxu0 0.0
    %395 = vmatpush.xpose.msra.mxu0 0.0
    %396 = vmatpush.xpose.msra.mxu0 %v380
    %397 = vmatpush.xpose.msra.mxu0 %v378
    %398 = vmatmul.f32.gmra.mxu0 %v374
    %v399 = vpop.f32.mrf.mxu0
    %v400 = vadd.f32 0.0, %v399
    %401 = vmatmul.f32.gmra.mxu0 %v376
    %v402 = vpop.f32.mrf.mxu0
    %v403 = vadd.f32 0.0, %v402
    %404 = vdwg.mxu0
    %v405 = vmul.f32 %v400, 0.35355338
    %v406 = vmul.f32 %v403, 0.35355338
    %v407 = vsel %vm209, %v405, -inf
    %408 = vmax.xlane.f32.xlu0 %v407
    %v409 = vpop.xlane.xlu0 %408
    %v410 = vsel %vm213, %v406, -inf
    %411 = vmax.xlane.f32.xlu0 %v410
    %v412 = vpop.xlane.xlu0 %411
    %v413 = vsub.f32 %v405, %v409
    %v414 = vsub.f32 %v406, %v412
    %v415 = vmul.f32 %v413, 1.442695
    %v416 = vpow.pop %v415
    %v417 = vmul.f32 %v414, 1.442695
    %v418 = vpow.pop %v417
    %v419 = vsel %vm209, %v416, 0.0
    %420 = vadd.xlane.f32.xlu0 %v419
    %v421 = vpop.xlane.xlu0 %420
    %v422 = vsel %vm213, %v418, 0.0
    %423 = vadd.xlane.f32.xlu0 %v422
    %v424 = vpop.xlane.xlu0 %423
    %v425 = vrcp.pop %v421
    %v426 = vrcp.pop %v424
    %v427 = vmul.f32 %v416, %v425
    %v428 = vmul.f32 %v418, %v426
    %429 = vrot.lane.b32.xlu0 %v166, 112
    %v430 = vpop.permute.xlu0 %429
    %431 = vrot.lane.b32.xlu0 %v169, 112
    %v432 = vpop.permute.xlu0 %431
    %v435 = vsel %vm209, %v427, 0
    %v438 = vsel %vm209, %v428, 0
    %v440 = vsel %vm239, %v432, 0
    %442 = vmatpush.msra.mxu0 0.0
    %443 = vmatpush.msra.mxu0 0.0
    %444 = vmatpush.msra.mxu0 0.0
    %445 = vmatpush.msra.mxu0 0.0
    %446 = vmatpush.msra.mxu0 0.0
    %447 = vmatpush.msra.mxu0 0.0
    %448 = vmatpush.msra.mxu0 0.0
    %449 = vmatpush.msra.mxu0 0.0
    %450 = vmatpush.msra.mxu0 0.0
    %451 = vmatpush.msra.mxu0 0.0
    %452 = vmatpush.msra.mxu0 0.0
    %453 = vmatpush.msra.mxu0 0.0
    %454 = vmatpush.msra.mxu0 0.0
    %455 = vmatpush.msra.mxu0 0.0
    %456 = vmatpush.msra.mxu0 %v440
    %457 = vmatpush.msra.mxu0 %v430
    %458 = vmatmul.f32.gmra.mxu0 %v435
    %v459 = vpop.f32.mrf.mxu0
    %v460 = vadd.f32 0.0, %v459
    %461 = vmatmul.f32.gmra.mxu0 %v438
    %v462 = vpop.f32.mrf.mxu0
    %v463 = vadd.f32 0.0, %v462
    %464 = vdwg.mxu0
    %465 = vrot.lane.b32.xlu0 %v85, 104
    %v466 = vpop.permute.xlu0 %465
    %467 = vrot.lane.b32.xlu0 %v88, 104
    %v468 = vpop.permute.xlu0 %467
    %469 = vrot.lane.b32.xlu0 %v128, 104
    %v470 = vpop.permute.xlu0 %469
    %471 = vrot.lane.b32.xlu0 %v131, 104
    %v472 = vpop.permute.xlu0 %471
    %v473 = vsel %vm171, %v466, 0
    %v475 = vsel %vm171, %v468, 0
    %v477 = vsel %vm171, %v470, 0
    %v479 = vsel %vm171, %v472, 0
    %481 = vmatpush.xpose.msra.mxu0 0.0
    %482 = vmatpush.xpose.msra.mxu0 0.0
    %483 = vmatpush.xpose.msra.mxu0 0.0
    %484 = vmatpush.xpose.msra.mxu0 0.0
    %485 = vmatpush.xpose.msra.mxu0 0.0
    %486 = vmatpush.xpose.msra.mxu0 0.0
    %487 = vmatpush.xpose.msra.mxu0 0.0
    %488 = vmatpush.xpose.msra.mxu0 0.0
    %489 = vmatpush.xpose.msra.mxu0 0.0
    %490 = vmatpush.xpose.msra.mxu0 0.0
    %491 = vmatpush.xpose.msra.mxu0 0.0
    %492 = vmatpush.xpose.msra.mxu0 0.0
    %493 = vmatpush.xpose.msra.mxu0 0.0
    %494 = vmatpush.xpose.msra.mxu0 0.0
    %495 = vmatpush.xpose.msra.mxu0 %v479
    %496 = vmatpush.xpose.msra.mxu0 %v477
    %497 = vmatmul.f32.gmra.mxu0 %v473
    %v498 = vpop.f32.mrf.mxu0
    %v499 = vadd.f32 0.0, %v498
    %500 = vmatmul.f32.gmra.mxu0 %v475
    %v501 = vpop.f32.mrf.mxu0
    %v502 = vadd.f32 0.0, %v501
    %503 = vdwg.mxu0
    %v504 = vmul.f32 %v499, 0.35355338
    %v505 = vmul.f32 %v502, 0.35355338
    %v506 = vsel %vm209, %v504, -inf
    %507 = vmax.xlane.f32.xlu0 %v506
    %v508 = vpop.xlane.xlu0 %507
    %v509 = vsel %vm213, %v505, -inf
    %510 = vmax.xlane.f32.xlu0 %v509
    %v511 = vpop.xlane.xlu0 %510
    %v512 = vsub.f32 %v504, %v508
    %v513 = vsub.f32 %v505, %v511
    %v514 = vmul.f32 %v512, 1.442695
    %v515 = vpow.pop %v514
    %v516 = vmul.f32 %v513, 1.442695
    %v517 = vpow.pop %v516
    %v518 = vsel %vm209, %v515, 0.0
    %519 = vadd.xlane.f32.xlu0 %v518
    %v520 = vpop.xlane.xlu0 %519
    %v521 = vsel %vm213, %v517, 0.0
    %522 = vadd.xlane.f32.xlu0 %v521
    %v523 = vpop.xlane.xlu0 %522
    %v524 = vrcp.pop %v520
    %v525 = vrcp.pop %v523
    %v526 = vmul.f32 %v515, %v524
    %v527 = vmul.f32 %v517, %v525
    %528 = vrot.lane.b32.xlu0 %v166, 104
    %v529 = vpop.permute.xlu0 %528
    %530 = vrot.lane.b32.xlu0 %v169, 104
    %v531 = vpop.permute.xlu0 %530
    %v534 = vsel %vm209, %v526, 0
    %v537 = vsel %vm209, %v527, 0
    %v539 = vsel %vm239, %v531, 0
    %541 = vmatpush.msra.mxu0 0.0
    %542 = vmatpush.msra.mxu0 0.0
    %543 = vmatpush.msra.mxu0 0.0
    %544 = vmatpush.msra.mxu0 0.0
    %545 = vmatpush.msra.mxu0 0.0
    %546 = vmatpush.msra.mxu0 0.0
    %547 = vmatpush.msra.mxu0 0.0
    %548 = vmatpush.msra.mxu0 0.0
    %549 = vmatpush.msra.mxu0 0.0
    %550 = vmatpush.msra.mxu0 0.0
    %551 = vmatpush.msra.mxu0 0.0
    %552 = vmatpush.msra.mxu0 0.0
    %553 = vmatpush.msra.mxu0 0.0
    %554 = vmatpush.msra.mxu0 0.0
    %555 = vmatpush.msra.mxu0 %v539
    %556 = vmatpush.msra.mxu0 %v529
    %557 = vmatmul.f32.gmra.mxu0 %v534
    %v558 = vpop.f32.mrf.mxu0
    %v559 = vadd.f32 0.0, %v558
    %560 = vmatmul.f32.gmra.mxu0 %v537
    %v561 = vpop.f32.mrf.mxu0
    %v562 = vadd.f32 0.0, %v561
    %563 = vdwg.mxu0
    %566 = vrot.lane.b32.xlu0 %v361, 8
    %v567 = vpop.permute.xlu0 %566
    %568 = vrot.lane.b32.xlu0 %v364, 8
    %v569 = vpop.permute.xlu0 %568
    %574 = vrot.lane.b32.xlu0 %v460, 16
    %v575 = vpop.permute.xlu0 %574
    %576 = vrot.lane.b32.xlu0 %v463, 16
    %v577 = vpop.permute.xlu0 %576
    %582 = vrot.lane.b32.xlu0 %v559, 24
    %v583 = vpop.permute.xlu0 %582
    %584 = vrot.lane.b32.xlu0 %v562, 24
    %v585 = vpop.permute.xlu0 %584
    %v588 = vsel %vm171, %v261, %v567
    %v589 = vsel %vm171, %v264, %v569
    %vm590 = vcmask 130048
    %v591 = vsel %vm590, %v588, %v575
    %v592 = vsel %vm590, %v589, %v577
    %vm593 = vcmask 195584
    %v594 = vsel %vm593, %v591, %v583
    %v595 = vsel %vm593, %v592, %v585
    %596 = vrot.lane.b32.xlu0 %v54, 32
    %v597 = vpop.permute.xlu0 %596
    %598 = vrot.lane.b32.xlu0 %v55, 32
    %v599 = vpop.permute.xlu0 %598
    %600 = vrot.lane.b32.xlu0 %v56, 32
    %v601 = vpop.permute.xlu0 %600
    %602 = vrot.lane.b32.xlu0 %v57, 32
    %v603 = vpop.permute.xlu0 %602
    %608 = vrot.lane.b32.xlu0 %v59, 32
    %v609 = vpop.permute.xlu0 %608
    %v612 = vsel %vm60, %v594, 0
    %v615 = vsel %vm60, %v595, 0
    %617 = vmatpush.msra.mxu0 0.0
    %618 = vmatpush.msra.mxu0 0.0
    %619 = vmatpush.msra.mxu0 0.0
    %620 = vmatpush.msra.mxu0 0.0
    %621 = vmatpush.msra.mxu0 0.0
    %622 = vmatpush.msra.mxu0 0.0
    %623 = vmatpush.msra.mxu0 0.0
    %624 = vmatpush.msra.mxu0 0.0
    %625 = vmatpush.msra.mxu0 0.0
    %626 = vmatpush.msra.mxu0 0.0
    %627 = vmatpush.msra.mxu0 0.0
    %628 = vmatpush.msra.mxu0 0.0
    %629 = vmatpush.msra.mxu0 %v603
    %630 = vmatpush.msra.mxu0 %v601
    %631 = vmatpush.msra.mxu0 %v599
    %632 = vmatpush.msra.mxu0 %v597
    %633 = vmatmul.f32.gmra.mxu0 %v612
    %v634 = vpop.f32.mrf.mxu0
    %v635 = vadd.f32 %v609, %v634
    %636 = vmatmul.f32.gmra.mxu0 %v615
    %v637 = vpop.f32.mrf.mxu0
    %v638 = vadd.f32 %v609, %v637
    %639 = vdwg.mxu0
    %v640 = vsel %vm60, %v635, 0.0
    %641 = vadd.xlane.f32.xlu0 %v640
    %v642 = vpop.xlane.xlu0 %641
    %vm643 = vcmask 253952
    %v644 = vsel %vm643, %v638, 0.0
    %645 = vadd.xlane.f32.xlu0 %v644
    %v646 = vpop.xlane.xlu0 %645
    %v647 = vrcp.pop 32.0
    %v648 = vmul.f32 32.0, %v647
    %v649 = vsub.f32 1.0, %v648
    %v650 = vmul.f32 %v647, %v649
    %v651 = vadd.f32 %v647, %v650
    %vm652 = vweird.f32 %v647
    %v653 = vsel %vm652, %v647, %v651
    %v654 = vmul.f32 %v642, %v653
    %v655 = vmul.f32 %v646, %v653
    %v656 = vsub.f32 %v635, %v654
    %v657 = vsub.f32 %v638, %v655
    %v658 = vmul.f32 %v656, %v656
    %v659 = vmul.f32 %v657, %v657
    %v660 = vsel %vm60, %v658, 0.0
    %661 = vadd.xlane.f32.xlu0 %v660
    %v662 = vpop.xlane.xlu0 %661
    %v663 = vsel %vm643, %v659, 0.0
    %664 = vadd.xlane.f32.xlu0 %v663
    %v665 = vpop.xlane.xlu0 %664
    %v666 = vmul.f32 %v662, %v653
    %v667 = vmul.f32 %v665, %v653
    %v668 = vadd.f32 %v666, 1e-05
    %v669 = vadd.f32 %v667, 1e-05
    %v670 = vrsqrt.pop %v668
    %v671 = vmul.f32 %v670, %v668
    %v672 = vmul.f32 %v671, %v670
    %v673 = vmul.f32 0.5, %v672
    %v674 = vsub.f32 1.5, %v673
    %v675 = vmul.f32 %v670, %v674
    %vm676 = vweird.f32 %v668
    %vm677 = vweird.f32 %v670
    %vm678 = vmor %vm676, %vm677
    %v679 = vsel %vm678, %v670, %v675
    %v680 = vrsqrt.pop %v669
    %v681 = vmul.f32 %v680, %v669
    %v682 = vmul.f32 %v681, %v680
    %v683 = vmul.f32 0.5, %v682
    %v684 = vsub.f32 1.5, %v683
    %v685 = vmul.f32 %v680, %v684
    %vm686 = vweird.f32 %v669
    %vm687 = vweird.f32 %v680
    %vm688 = vmor %vm686, %vm687
    %v689 = vsel %vm688, %v680, %v685
    %v690 = vmul.f32 %v656, %v679
    %v691 = vmul.f32 %v657, %v689
    %v692 = vld [vmem:[#allocation2 + $0x2c8] sm:$0x1]
    %v693 = vperm.slane %v692, 0
    %v694 = vmul.f32 %v690, %v693
    %v695 = vmul.f32 %v691, %v693
    %697 = vrot.lane.b32.xlu0 %v693, 96
    %v698 = vpop.permute.xlu0 %697
    %v700 = vadd.f32 %v694, %v698
    %v701 = vadd.f32 %v695, %v698
    %v702 = vadd.f32 %v38, %v46
    %v703 = vadd.f32 %v39, %v47
    %v704 = vadd.f32 %v40, %v48
    %v705 = vadd.f32 %v41, %v49
    %v706 = vadd.f32 %v42, %v50
    %v707 = vadd.f32 %v43, %v51
    %v708 = vadd.f32 %v44, %v52
    %v709 = vadd.f32 %v45, %v53
    %v710 = vadd.f32 %v700, %v36
    %v711 = vadd.f32 %v701, %v37
    %v712 = vld [vmem:[#allocation2 + $0x20] sm:$0xff]
    %v713 = vld [vmem:[#allocation2 + $0x28] sm:$0xff]
    %v714 = vld [vmem:[#allocation2 + $0x30] sm:$0xff]
    %v715 = vld [vmem:[#allocation2 + $0x38] sm:$0xff]
    %716 = vrot.lane.b32.xlu0 %v693, 64
    %v717 = vpop.permute.xlu0 %716
    %v720 = vsel %vm60, %v710, 0
    %v723 = vsel %vm60, %v711, 0
    %725 = vmatpush.msra.mxu0 0.0
    %726 = vmatpush.msra.mxu0 0.0
    %727 = vmatpush.msra.mxu0 0.0
    %728 = vmatpush.msra.mxu0 0.0
    %729 = vmatpush.msra.mxu0 0.0
    %730 = vmatpush.msra.mxu0 0.0
    %731 = vmatpush.msra.mxu0 0.0
    %732 = vmatpush.msra.mxu0 0.0
    %733 = vmatpush.msra.mxu0 0.0
    %734 = vmatpush.msra.mxu0 0.0
    %735 = vmatpush.msra.mxu0 0.0
    %736 = vmatpush.msra.mxu0 0.0
    %737 = vmatpush.msra.mxu0 %v715
    %738 = vmatpush.msra.mxu0 %v714
    %739 = vmatpush.msra.mxu0 %v713
    %740 = vmatpush.msra.mxu0 %v712
    %741 = vmatmul.f32.gmra.mxu0 %v720
    %v742 = vpop.f32.mrf.mxu0
    %v743 = vadd.f32 %v717, %v742
    %744 = vmatmul.f32.gmra.mxu0 %v723
    %v745 = vpop.f32.mrf.mxu0
    %v746 = vadd.f32 %v717, %v745
    %747 = vdwg.mxu0
    %752 = vrot.lane.b32.xlu0 %v712, 112
    %v753 = vpop.permute.xlu0 %752
    %754 = vrot.lane.b32.xlu0 %v713, 112
    %v755 = vpop.permute.xlu0 %754
    %756 = vrot.lane.b32.xlu0 %v714, 112
    %v757 = vpop.permute.xlu0 %756
    %758 = vrot.lane.b32.xlu0 %v715, 112
    %v759 = vpop.permute.xlu0 %758
    %764 = vrot.lane.b32.xlu0 %v693, 48
    %v765 = vpop.permute.xlu0 %764
    %v768 = vsel %vm60, %v702, 0
    %v771 = vsel %vm60, %v703, 0
    %v774 = vsel %vm60, %v704, 0
    %v777 = vsel %vm60, %v705, 0
    %v780 = vsel %vm60, %v706, 0
    %v783 = vsel %vm60, %v707, 0
    %v786 = vsel %vm60, %v708, 0
    %v789 = vsel %vm60, %v709, 0
    %791 = vmatpush.msra.mxu0 0.0
    %792 = vmatpush.msra.mxu0 0.0
    %793 = vmatpush.msra.mxu0 0.0
    %794 = vmatpush.msra.mxu0 0.0
    %795 = vmatpush.msra.mxu0 0.0
    %796 = vmatpush.msra.mxu0 0.0
    %797 = vmatpush.msra.mxu0 0.0
    %798 = vmatpush.msra.mxu0 0.0
    %799 = vmatpush.msra.mxu0 0.0
    %800 = vmatpush.msra.mxu0 0.0
    %801 = vmatpush.msra.mxu0 0.0
    %802 = vmatpush.msra.mxu0 0.0
    %803 = vmatpush.msra.mxu0 %v759
    %804 = vmatpush.msra.mxu0 %v757
    %805 = vmatpush.msra.mxu0 %v755
    %806 = vmatpush.msra.mxu0 %v753
    %807 = vmatmul.f32.gmra.mxu0 %v768
    %v808 = vpop.f32.mrf.mxu0
    %v809 = vadd.f32 %v765, %v808
    %810 = vmatmul.f32.gmra.mxu0 %v771
    %v811 = vpop.f32.mrf.mxu0
    %v812 = vadd.f32 %v765, %v811
    %813 = vmatmul.f32.gmra.mxu0 %v774
    %v814 = vpop.f32.mrf.mxu0
    %v815 = vadd.f32 %v765, %v814
    %816 = vmatmul.f32.gmra.mxu0 %v777
    %v817 = vpop.f32.mrf.mxu0
    %v818 = vadd.f32 %v765, %v817
    %819 = vmatmul.f32.gmra.mxu0 %v780
    %v820 = vpop.f32.mrf.mxu0
    %v821 = vadd.f32 %v765, %v820
    %822 = vmatmul.f32.gmra.mxu0 %v783
    %v823 = vpop.f32.mrf.mxu0
    %v824 = vadd.f32 %v765, %v823
    %825 = vmatmul.f32.gmra.mxu0 %v786
    %v826 = vpop.f32.mrf.mxu0
    %v827 = vadd.f32 %v765, %v826
    %828 = vmatmul.f32.gmra.mxu0 %v789
    %v829 = vpop.f32.mrf.mxu0
    %v830 = vadd.f32 %v765, %v829
    %831 = vdwg.mxu0
    %832 = vrot.lane.b32.xlu0 %v712, 96
    %v833 = vpop.permute.xlu0 %832
    %834 = vrot.lane.b32.xlu0 %v713, 96
    %v835 = vpop.permute.xlu0 %834
    %836 = vrot.lane.b32.xlu0 %v714, 96
    %v837 = vpop.permute.xlu0 %836
    %838 = vrot.lane.b32.xlu0 %v715, 96
    %v839 = vpop.permute.xlu0 %838
    %844 = vrot.lane.b32.xlu0 %v693, 32
    %v845 = vpop.permute.xlu0 %844
    %v848 = vsel %vm60, %v38, 0
    %v851 = vsel %vm60, %v39, 0
    %v854 = vsel %vm60, %v40, 0
    %v857 = vsel %vm60, %v41, 0
    %v860 = vsel %vm60, %v42, 0
    %v863 = vsel %vm60, %v43, 0
    %v866 = vsel %vm60, %v44, 0
    %v869 = vsel %vm60, %v45, 0
    %871 = vmatpush.msra.mxu0 0.0
    %872 = vmatpush.msra.mxu0 0.0
    %873 = vmatpush.msra.mxu0 0.0
    %874 = vmatpush.msra.mxu0 0.0
    %875 = vmatpush.msra.mxu0 0.0
    %876 = vmatpush.msra.mxu0 0.0
    %877 = vmatpush.msra.mxu0 0.0
    %878 = vmatpush.msra.mxu0 0.0
    %879 = vmatpush.msra.mxu0 0.0
    %880 = vmatpush.msra.mxu0 0.0
    %881 = vmatpush.msra.mxu0 0.0
    %882 = vmatpush.msra.mxu0 0.0
    %883 = vmatpush.msra.mxu0 %v839
    %884 = vmatpush.msra.mxu0 %v837
    %885 = vmatpush.msra.mxu0 %v835
    %886 = vmatpush.msra.mxu0 %v833
    %887 = vmatmul.f32.gmra.mxu0 %v848
    %v888 = vpop.f32.mrf.mxu0
    %v889 = vadd.f32 %v845, %v888
    %890 = vmatmul.f32.gmra.mxu0 %v851
    %v891 = vpop.f32.mrf.mxu0
    %v892 = vadd.f32 %v845, %v891
    %893 = vmatmul.f32.gmra.mxu0 %v854
    %v894 = vpop.f32.mrf.mxu0
    %v895 = vadd.f32 %v845, %v894
    %896 = vmatmul.f32.gmra.mxu0 %v857
    %v897 = vpop.f32.mrf.mxu0
    %v898 = vadd.f32 %v845, %v897
    %899 = vmatmul.f32.gmra.mxu0 %v860
    %v900 = vpop.f32.mrf.mxu0
    %v901 = vadd.f32 %v845, %v900
    %902 = vmatmul.f32.gmra.mxu0 %v863
    %v903 = vpop.f32.mrf.mxu0
    %v904 = vadd.f32 %v845, %v903
    %905 = vmatmul.f32.gmra.mxu0 %v866
    %v906 = vpop.f32.mrf.mxu0
    %v907 = vadd.f32 %v845, %v906
    %908 = vmatmul.f32.gmra.mxu0 %v869
    %v909 = vpop.f32.mrf.mxu0
    %v910 = vadd.f32 %v845, %v909
    %911 = vdwg.mxu0
    %vm912 = vcmask 31744
    %v914 = vsel %vm912, %v743, 0
    %v917 = vsel %vm912, %v746, 0
    %v920 = vsel %vm912, %v809, 0
    %v923 = vsel %vm912, %v812, 0
    %v926 = vsel %vm912, %v815, 0
    %v929 = vsel %vm912, %v818, 0
    %v932 = vsel %vm912, %v821, 0
    %v935 = vsel %vm912, %v824, 0
    %v938 = vsel %vm912, %v827, 0
    %v941 = vsel %vm912, %v830, 0
    %943 = vmatpush.xpose.msra.mxu0 0.0
    %944 = vmatpush.xpose.msra.mxu0 0.0
    %945 = vmatpush.xpose.msra.mxu0 0.0
    %946 = vmatpush.xpose.msra.mxu0 0.0
    %947 = vmatpush.xpose.msra.mxu0 0.0
    %948 = vmatpush.xpose.msra.mxu0 0.0
    %949 = vmatpush.xpose.msra.mxu0 0.0
    %950 = vmatpush.xpose.msra.mxu0 0.0
    %951 = vmatpush.xpose.msra.mxu0 %v941
    %952 = vmatpush.xpose.msra.mxu0 %v938
    %953 = vmatpush.xpose.msra.mxu0 %v935
    %954 = vmatpush.xpose.msra.mxu0 %v932
    %955 = vmatpush.xpose.msra.mxu0 %v929
    %956 = vmatpush.xpose.msra.mxu0 %v926
    %957 = vmatpush.xpose.msra.mxu0 %v923
    %958 = vmatpush.xpose.msra.mxu0 %v920
    %959 = vmatmul.f32.gmra.mxu0 %v914
    %v960 = vpop.f32.mrf.mxu0
    %v961 = vadd.f32 0.0, %v960
    %962 = vmatmul.f32.gmra.mxu0 %v917
    %v963 = vpop.f32.mrf.mxu0
    %v964 = vadd.f32 0.0, %v963
    %965 = vdwg.mxu0
    %v966 = vmul.f32 %v961, 0.5
    %v967 = vmul.f32 %v964, 0.5
    %vm968 = vcmask 523264
    %v969 = vsel %vm968, %v966, -inf
    %970 = vmax.xlane.f32.xlu0 %v969
    %v971 = vpop.xlane.xlu0 %970
    %vm972 = vcmask 516096
    %v973 = vsel %vm972, %v967, -inf
    %974 = vmax.xlane.f32.xlu0 %v973
    %v975 = vpop.xlane.xlu0 %974
    %v976 = vsub.f32 %v966, %v971
    %v977 = vsub.f32 %v967, %v975
    %v978 = vmul.f32 %v976, 1.442695
    %v979 = vpow.pop %v978
    %v980 = vmul.f32 %v977, 1.442695
    %v981 = vpow.pop %v980
    %v982 = vsel %vm968, %v979, 0.0
    %983 = vadd.xlane.f32.xlu0 %v982
    %v984 = vpop.xlane.xlu0 %983
    %v985 = vsel %vm972, %v981, 0.0
    %986 = vadd.xlane.f32.xlu0 %v985
    %v987 = vpop.xlane.xlu0 %986
    %v988 = vrcp.pop %v984
    %v989 = vrcp.pop %v987
    %v990 = vmul.f32 %v979, %v988
    %v991 = vmul.f32 %v981, %v989
    %v993 = vsel %vm968, %v990, 0
    %v996 = vsel %vm968, %v991, 0
    %998 = vmatpush.msra.mxu0 0.0
    %999 = vmatpush.msra.mxu0 0.0
    %1000 = vmatpush.msra.mxu0 0.0
    %1001 = vmatpush.msra.mxu0 0.0
    %1002 = vmatpush.msra.mxu0 0.0
    %1003 = vmatpush.msra.mxu0 0.0
    %1004 = vmatpush.msra.mxu0 0.0
    %1005 = vmatpush.msra.mxu0 0.0
    %1006 = vmatpush.msra.mxu0 %v910
    %1007 = vmatpush.msra.mxu0 %v907
    %1008 = vmatpush.msra.mxu0 %v904
    %1009 = vmatpush.msra.mxu0 %v901
    %1010 = vmatpush.msra.mxu0 %v898
    %1011 = vmatpush.msra.mxu0 %v895
    %1012 = vmatpush.msra.mxu0 %v892
    %1013 = vmatpush.msra.mxu0 %v889
    %1014 = vmatmul.f32.gmra.mxu0 %v993
    %v1015 = vpop.f32.mrf.mxu0
    %v1016 = vadd.f32 0.0, %v1015
    %1017 = vmatmul.f32.gmra.mxu0 %v996
    %v1018 = vpop.f32.mrf.mxu0
    %v1019 = vadd.f32 0.0, %v1018
    %1020 = vdwg.mxu0
    %1021 = vrot.lane.b32.xlu0 %v743, 124
    %v1022 = vpop.permute.xlu0 %1021
    %1023 = vrot.lane.b32.xlu0 %v746, 124
    %v1024 = vpop.permute.xlu0 %1023
    %1025 = vrot.lane.b32.xlu0 %v809, 124
    %v1026 = vpop.permute.xlu0 %1025
    %1027 = vrot.lane.b32.xlu0 %v812, 124
    %v1028 = vpop.permute.xlu0 %1027
    %1029 = vrot.lane.b32.xlu0 %v815, 124
    %v1030 = vpop.permute.xlu0 %1029
    %1031 = vrot.lane.b32.xlu0 %v818, 124
    %v1032 = vpop.permute.xlu0 %1031
    %1033 = vrot.lane.b32.xlu0 %v821, 124
    %v1034 = vpop.permute.xlu0 %1033
    %1035 = vrot.lane.b32.xlu0 %v824, 124
    %v1036 = vpop.permute.xlu0 %1035
    %1037 = vrot.lane.b32.xlu0 %v827, 124
    %v1038 = vpop.permute.xlu0 %1037
    %1039 = vrot.lane.b32.xlu0 %v830, 124
    %v1040 = vpop.permute.xlu0 %1039
    %v1041 = vsel %vm912, %v1022, 0
    %v1043 = vsel %vm912, %v1024, 0
    %v1045 = vsel %vm912, %v1026, 0
    %v1047 = vsel %vm912, %v1028, 0
    %v1049 = vsel %vm912, %v1030, 0
    %v1051 = vsel %vm912, %v1032, 0
    %v1053 = vsel %vm912, %v1034, 0
    %v1055 = vsel %vm912, %v1036, 0
    %v1057 = vsel %vm912, %v1038, 0
    %v1059 = vsel %vm912, %v1040, 0
    %1061 = vmatpush.xpose.msra.mxu0 0.0
    %1062 = vmatpush.xpose.msra.mxu0 0.0
    %1063 = vmatpush.xpose.msra.mxu0 0.0
    %1064 = vmatpush.xpose.msra.mxu0 0.0
    %1065 = vmatpush.xpose.msra.mxu0 0.0
    %1066 = vmatpush.xpose.msra.mxu0 0.0
    %1067 = vmatpush.xpose.msra.mxu0 0.0
    %1068 = vmatpush.xpose.msra.mxu0 0.0
    %1069 = vmatpush.xpose.msra.mxu0 %v1059
    %1070 = vmatpush.xpose.msra.mxu0 %v1057
    %1071 = vmatpush.xpose.msra.mxu0 %v1055
    %1072 = vmatpush.xpose.msra.mxu0 %v1053
    %1073 = vmatpush.xpose.msra.mxu0 %v1051
    %1074 = vmatpush.xpose.msra.mxu0 %v1049
    %1075 = vmatpush.xpose.msra.mxu0 %v1047
    %1076 = vmatpush.xpose.msra.mxu0 %v1045
    %1077 = vmatmul.f32.gmra.mxu0 %v1041
    %v1078 = vpop.f32.mrf.mxu0
    %v1079 = vadd.f32 0.0, %v1078
    %1080 = vmatmul.f32.gmra.mxu0 %v1043
    %v1081 = vpop.f32.mrf.mxu0
    %v1082 = vadd.f32 0.0, %v1081
    %1083 = vdwg.mxu0
    %v1084 = vmul.f32 %v1079, 0.5
    %v1085 = vmul.f32 %v1082, 0.5
    %v1086 = vsel %vm968, %v1084, -inf
    %1087 = vmax.xlane.f32.xlu0 %v1086
    %v1088 = vpop.xlane.xlu0 %1087
    %v1089 = vsel %vm972, %v1085, -inf
    %1090 = vmax.xlane.f32.xlu0 %v1089
    %v1091 = vpop.xlane.xlu0 %1090
    %v1092 = vsub.f32 %v1084, %v1088
    %v1093 = vsub.f32 %v1085, %v1091
    %v1094 = vmul.f32 %v1092, 1.442695
    %v1095 = vpow.pop %v1094
    %v1096 = vmul.f32 %v1093, 1.442695
    %v1097 = vpow.pop %v1096
    %v1098 = vsel %vm968, %v1095, 0.0
    %1099 = vadd.xlane.f32.xlu0 %v1098
    %v1100 = vpop.xlane.xlu0 %1099
    %v1101 = vsel %vm972, %v1097, 0.0
    %1102 = vadd.xlane.f32.xlu0 %v1101
    %v1103 = vpop.xlane.xlu0 %1102
    %v1104 = vrcp.pop %v1100
    %v1105 = vrcp.pop %v1103
    %v1106 = vmul.f32 %v1095, %v1104
    %v1107 = vmul.f32 %v1097, %v1105
    %1116 = vrot.lane.b32.xlu0 %v889, 124
    %v1117 = vpop.permute.xlu0 %1116
    %1118 = vrot.lane.b32.xlu0 %v892, 124
    %v1119 = vpop.permute.xlu0 %1118
    %1120 = vrot.lane.b32.xlu0 %v895, 124
    %v1121 = vpop.permute.xlu0 %1120
    %1122 = vrot.lane.b32.xlu0 %v898, 124
    %v1123 = vpop.permute.xlu0 %1122
    %1124 = vrot.lane.b32.xlu0 %v901, 124
    %v1125 = vpop.permute.xlu0 %1124
    %1126 = vrot.lane.b32.xlu0 %v904, 124
    %v1127 = vpop.permute.xlu0 %1126
    %1128 = vrot.lane.b32.xlu0 %v907, 124
    %v1129 = vpop.permute.xlu0 %1128
    %1130 = vrot.lane.b32.xlu0 %v910, 124
    %v1131 = vpop.permute.xlu0 %1130
    %v1141 = vsel %vm968, %v1106, 0
    %v1144 = vsel %vm968, %v1107, 0
    %1146 = vmatpush.msra.mxu0 0.0
    %1147 = vmatpush.msra.mxu0 0.0
    %1148 = vmatpush.msra.mxu0 0.0
    %1149 = vmatpush.msra.mxu0 0.0
    %1150 = vmatpush.msra.mxu0 0.0
    %1151 = vmatpush.msra.mxu0 0.0
    %1152 = vmatpush.msra.mxu0 0.0
    %1153 = vmatpush.msra.mxu0 0.0
    %1154 = vmatpush.msra.mxu0 %v1131
    %1155 = vmatpush.msra.mxu0 %v1129
    %1156 = vmatpush.msra.mxu0 %v1127
    %1157 = vmatpush.msra.mxu0 %v1125
    %1158 = vmatpush.msra.mxu0 %v1123
    %1159 = vmatpush.msra.mxu0 %v1121
    %1160 = vmatpush.msra.mxu0 %v1119
    %1161 = vmatpush.msra.mxu0 %v1117
    %1162 = vmatmul.f32.gmra.mxu0 %v1141
    %v1163 = vpop.f32.mrf.mxu0
    %v1164 = vadd.f32 0.0, %v1163
    %1165 = vmatmul.f32.gmra.mxu0 %v1144
    %v1166 = vpop.f32.mrf.mxu0
    %v1167 = vadd.f32 0.0, %v1166
    %1168 = vdwg.mxu0
    %1169 = vrot.lane.b32.xlu0 %v743, 120
    %v1170 = vpop.permute.xlu0 %1169
    %1171 = vrot.lane.b32.xlu0 %v746, 120
    %v1172 = vpop.permute.xlu0 %1171
    %1173 = vrot.lane.b32.xlu0 %v809, 120
    %v1174 = vpop.permute.xlu0 %1173
    %1175 = vrot.lane.b32.xlu0 %v812, 120
    %v1176 = vpop.permute.xlu0 %1175
    %1177 = vrot.lane.b32.xlu0 %v815, 120
    %v1178 = vpop.permute.xlu0 %1177
    %1179 = vrot.lane.b32.xlu0 %v818, 120
    %v1180 = vpop.permute.xlu0 %1179
    %1181 = vrot.lane.b32.xlu0 %v821, 120
    %v1182 = vpop.permute.xlu0 %1181
    %1183 = vrot.lane.b32.xlu0 %v824, 120
    %v1184 = vpop.permute.xlu0 %1183
    %1185 = vrot.lane.b32.xlu0 %v827, 120
    %v1186 = vpop.permute.xlu0 %1185
    %1187 = vrot.lane.b32.xlu0 %v830, 120
    %v1188 = vpop.permute.xlu0 %1187
    %v1189 = vsel %vm912, %v1170, 0
    %v1191 = vsel %vm912, %v1172, 0
    %v1193 = vsel %vm912, %v1174, 0
    %v1195 = vsel %vm912, %v1176, 0
    %v1197 = vsel %vm912, %v1178, 0
    %v1199 = vsel %vm912, %v1180, 0
    %v1201 = vsel %vm912, %v1182, 0
    %v1203 = vsel %vm912, %v1184, 0
    %v1205 = vsel %vm912, %v1186, 0
    %v1207 = vsel %vm912, %v1188, 0
    %1209 = vmatpush.xpose.msra.mxu0 0.0
    %1210 = vmatpush.xpose.msra.mxu0 0.0
    %1211 = vmatpush.xpose.msra.mxu0 0.0
    %1212 = vmatpush.xpose.msra.mxu0 0.0
    %1213 = vmatpush.xpose.msra.mxu0 0.0
    %1214 = vmatpush.xpose.msra.mxu0 0.0
    %1215 = vmatpush.xpose.msra.mxu0 0.0
    %1216 = vmatpush.xpose.msra.mxu0 0.0
    %1217 = vmatpush.xpose.msra.mxu0 %v1207
    %1218 = vmatpush.xpose.msra.mxu0 %v1205
    %1219 = vmatpush.xpose.msra.mxu0 %v1203
    %1220 = vmatpush.xpose.msra.mxu0 %v1201
    %1221 = vmatpush.xpose.msra.mxu0 %v1199
    %1222 = vmatpush.xpose.msra.mxu0 %v1197
    %1223 = vmatpush.xpose.msra.mxu0 %v1195
    %1224 = vmatpush.xpose.msra.mxu0 %v1193
    %1225 = vmatmul.f32.gmra.mxu0 %v1189
    %v1226 = vpop.f32.mrf.mxu0
    %v1227 = vadd.f32 0.0, %v1226
    %1228 = vmatmul.f32.gmra.mxu0 %v1191
    %v1229 = vpop.f32.mrf.mxu0
    %v1230 = vadd.f32 0.0, %v1229
    %1231 = vdwg.mxu0
    %v1232 = vmul.f32 %v1227, 0.5
    %v1233 = vmul.f32 %v1230, 0.5
    %v1234 = vsel %vm968, %v1232, -inf
    %1235 = vmax.xlane.f32.xlu0 %v1234
    %v1236 = vpop.xlane.xlu0 %1235
    %v1237 = vsel %vm972, %v1233, -inf
    %1238 = vmax.xlane.f32.xlu0 %v1237
    %v1239 = vpop.xlane.xlu0 %1238
    %v1240 = vsub.f32 %v1232, %v1236
    %v1241 = vsub.f32 %v1233, %v1239
    %v1242 = vmul.f32 %v1240, 1.442695
    %v1243 = vpow.pop %v1242
    %v1244 = vmul.f32 %v1241, 1.442695
    %v1245 = vpow.pop %v1244
    %v1246 = vsel %vm968, %v1243, 0.0
    %1247 = vadd.xlane.f32.xlu0 %v1246
    %v1248 = vpop.xlane.xlu0 %1247
    %v1249 = vsel %vm972, %v1245, 0.0
    %1250 = vadd.xlane.f32.xlu0 %v1249
    %v1251 = vpop.xlane.xlu0 %1250
    %v1252 = vrcp.pop %v1248
    %v1253 = vrcp.pop %v1251
    %v1254 = vmul.f32 %v1243, %v1252
    %v1255 = vmul.f32 %v1245, %v1253
    %1256 = vrot.lane.b32.xlu0 %v889, 120
    %v1257 = vpop.permute.xlu0 %1256
    %1258 = vrot.lane.b32.xlu0 %v892, 120
    %v1259 = vpop.permute.xlu0 %1258
    %1260 = vrot.lane.b32.xlu0 %v895, 120
    %v1261 = vpop.permute.xlu0 %1260
    %1262 = vrot.lane.b32.xlu0 %v898, 120
    %v1263 = vpop.permute.xlu0 %1262
    %1264 = vrot.lane.b32.xlu0 %v901, 120
    %v1265 = vpop.permute.xlu0 %1264
    %1266 = vrot.lane.b32.xlu0 %v904, 120
    %v1267 = vpop.permute.xlu0 %1266
    %1268 = vrot.lane.b32.xlu0 %v907, 120
    %v1269 = vpop.permute.xlu0 %1268
    %1270 = vrot.lane.b32.xlu0 %v910, 120
    %v1271 = vpop.permute.xlu0 %1270
    %v1281 = vsel %vm968, %v1254, 0
    %v1284 = vsel %vm968, %v1255, 0
    %1286 = vmatpush.msra.mxu0 0.0
    %1287 = vmatpush.msra.mxu0 0.0
    %1288 = vmatpush.msra.mxu0 0.0
    %1289 = vmatpush.msra.mxu0 0.0
    %1290 = vmatpush.msra.mxu0 0.0
    %1291 = vmatpush.msra.mxu0 0.0
    %1292 = vmatpush.msra.mxu0 0.0
    %1293 = vmatpush.msra.mxu0 0.0
    %1294 = vmatpush.msra.mxu0 %v1271
    %1295 = vmatpush.msra.mxu0 %v1269
    %1296 = vmatpush.msra.mxu0 %v1267
    %1297 = vmatpush.msra.mxu0 %v1265
    %1298 = vmatpush.msra.mxu0 %v1263
    %1299 = vmatpush.msra.mxu0 %v1261
    %1300 = vmatpush.msra.mxu0 %v1259
    %1301 = vmatpush.msra.mxu0 %v1257
    %1302 = vmatmul.f32.gmra.mxu0 %v1281
    %v1303 = vpop.f32.mrf.mxu0
    %v1304 = vadd.f32 0.0, %v1303
    %1305 = vmatmul.f32.gmra.mxu0 %v1284
    %v1306 = vpop.f32.mrf.mxu0
    %v1307 = vadd.f32 0.0, %v1306
    %1308 = vdwg.mxu0
    %1309 = vrot.lane.b32.xlu0 %v743, 116
    %v1310 = vpop.permute.xlu0 %1309
    %1311 = vrot.lane.b32.xlu0 %v746, 116
    %v1312 = vpop.permute.xlu0 %1311
    %1313 = vrot.lane.b32.xlu0 %v809, 116
    %v1314 = vpop.permute.xlu0 %1313
    %1315 = vrot.lane.b32.xlu0 %v812, 116
    %v1316 = vpop.permute.xlu0 %1315
    %1317 = vrot.lane.b32.xlu0 %v815, 116
    %v1318 = vpop.permute.xlu0 %1317
    %1319 = vrot.lane.b32.xlu0 %v818, 116
    %v1320 = vpop.permute.xlu0 %1319
    %1321 = vrot.lane.b32.xlu0 %v821, 116
    %v1322 = vpop.permute.xlu0 %1321
    %1323 = vrot.lane.b32.xlu0 %v824, 116
    %v1324 = vpop.permute.xlu0 %1323
    %1325 = vrot.lane.b32.xlu0 %v827, 116
    %v1326 = vpop.permute.xlu0 %1325
    %1327 = vrot.lane.b32.xlu0 %v830, 116
    %v1328 = vpop.permute.xlu0 %1327
    %v1329 = vsel %vm912, %v1310, 0
    %v1331 = vsel %vm912, %v1312, 0
    %v1333 = vsel %vm912, %v1314, 0
    %v1335 = vsel %vm912, %v1316, 0
    %v1337 = vsel %vm912, %v1318, 0
    %v1339 = vsel %vm912, %v1320, 0
    %v1341 = vsel %vm912, %v1322, 0
    %v1343 = vsel %vm912, %v1324, 0
    %v1345 = vsel %vm912, %v1326, 0
    %v1347 = vsel %vm912, %v1328, 0
    %1349 = vmatpush.xpose.msra.mxu0 0.0
    %1350 = vmatpush.xpose.msra.mxu0 0.0
    %1351 = vmatpush.xpose.msra.mxu0 0.0
    %1352 = vmatpush.xpose.msra.mxu0 0.0
    %1353 = vmatpush.xpose.msra.mxu0 0.0
    %1354 = vmatpush.xpose.msra.mxu0 0.0
    %1355 = vmatpush.xpose.msra.mxu0 0.0
    %1356 = vmatpush.xpose.msra.mxu0 0.0
    %1357 = vmatpush.xpose.msra.mxu0 %v1347
    %1358 = vmatpush.xpose.msra.mxu0 %v1345
    %1359 = vmatpush.xpose.msra.mxu0 %v1343
    %1360 = vmatpush.xpose.msra.mxu0 %v1341
    %1361 = vmatpush.xpose.msra.mxu0 %v1339
    %1362 = vmatpush.xpose.msra.mxu0 %v1337
    %1363 = vmatpush.xpose.msra.mxu0 %v1335
    %1364 = vmatpush.xpose.msra.mxu0 %v1333
    %1365 = vmatmul.f32.gmra.mxu0 %v1329
    %v1366 = vpop.f32.mrf.mxu0
    %v1367 = vadd.f32 0.0, %v1366
    %1368 = vmatmul.f32.gmra.mxu0 %v1331
    %v1369 = vpop.f32.mrf.mxu0
    %v1370 = vadd.f32 0.0, %v1369
    %1371 = vdwg.mxu0
    %v1372 = vmul.f32 %v1367, 0.5
    %v1373 = vmul.f32 %v1370, 0.5
    %v1374 = vsel %vm968, %v1372, -inf
    %1375 = vmax.xlane.f32.xlu0 %v1374
    %v1376 = vpop.xlane.xlu0 %1375
    %v1377 = vsel %vm972, %v1373, -inf
    %1378 = vmax.xlane.f32.xlu0 %v1377
    %v1379 = vpop.xlane.xlu0 %1378
    %v1380 = vsub.f32 %v1372, %v1376
    %v1381 = vsub.f32 %v1373, %v1379
    %v1382 = vmul.f32 %v1380, 1.442695
    %v1383 = vpow.pop %v1382
    %v1384 = vmul.f32 %v1381, 1.442695
    %v1385 = vpow.pop %v1384
    %v1386 = vsel %vm968, %v1383, 0.0
    %1387 = vadd.xlane.f32.xlu0 %v1386
    %v1388 = vpop.xlane.xlu0 %1387
    %v1389 = vsel %vm972, %v1385, 0.0
    %1390 = vadd.xlane.f32.xlu0 %v1389
    %v1391 = vpop.xlane.xlu0 %1390
    %v1392 = vrcp.pop %v1388
    %v1393 = vrcp.pop %v1391
    %v1394 = vmul.f32 %v1383, %v1392
    %v1395 = vmul.f32 %v1385, %v1393
    %1396 = vrot.lane.b32.xlu0 %v889, 116
    %v1397 = vpop.permute.xlu0 %1396
    %1398 = vrot.lane.b32.xlu0 %v892, 116
    %v1399 = vpop.permute.xlu0 %1398
    %1400 = vrot.lane.b32.xlu0 %v895, 116
    %v1401 = vpop.permute.xlu0 %1400
    %1402 = vrot.lane.b32.xlu0 %v898, 116
    %v1403 = vpop.permute.xlu0 %1402
    %1404 = vrot.lane.b32.xlu0 %v901, 116
    %v1405 = vpop.permute.xlu0 %1404
    %1406 = vrot.lane.b32.xlu0 %v904, 116
    %v1407 = vpop.permute.xlu0 %1406
    %1408 = vrot.lane.b32.xlu0 %v907, 116
    %v1409 = vpop.permute.xlu0 %1408
    %1410 = vrot.lane.b32.xlu0 %v910, 116
    %v1411 = vpop.permute.xlu0 %1410
    %v1421 = vsel %vm968, %v1394, 0
    %v1424 = vsel %vm968, %v1395, 0
    %1426 = vmatpush.msra.mxu0 0.0
    %1427 = vmatpush.msra.mxu0 0.0
    %1428 = vmatpush.msra.mxu0 0.0
    %1429 = vmatpush.msra.mxu0 0.0
    %1430 = vmatpush.msra.mxu0 0.0
    %1431 = vmatpush.msra.mxu0 0.0
    %1432 = vmatpush.msra.mxu0 0.0
    %1433 = vmatpush.msra.mxu0 0.0
    %1434 = vmatpush.msra.mxu0 %v1411
    %1435 = vmatpush.msra.mxu0 %v1409
    %1436 = vmatpush.msra.mxu0 %v1407
    %1437 = vmatpush.msra.mxu0 %v1405
    %1438 = vmatpush.msra.mxu0 %v1403
    %1439 = vmatpush.msra.mxu0 %v1401
    %1440 = vmatpush.msra.mxu0 %v1399
    %1441 = vmatpush.msra.mxu0 %v1397
    %1442 = vmatmul.f32.gmra.mxu0 %v1421
    %v1443 = vpop.f32.mrf.mxu0
    %v1444 = vadd.f32 0.0, %v1443
    %1445 = vmatmul.f32.gmra.mxu0 %v1424
    %v1446 = vpop.f32.mrf.mxu0
    %v1447 = vadd.f32 0.0, %v1446
    %1448 = vdwg.mxu0
    %1451 = vrot.lane.b32.xlu0 %v1164, 4
    %v1452 = vpop.permute.xlu0 %1451
    %1453 = vrot.lane.b32.xlu0 %v1167, 4
    %v1454 = vpop.permute.xlu0 %1453
    %1459 = vrot.lane.b32.xlu0 %v1304, 8
    %v1460 = vpop.permute.xlu0 %1459
    %1461 = vrot.lane.b32.xlu0 %v1307, 8
    %v1462 = vpop.permute.xlu0 %1461
    %1467 = vrot.lane.b32.xlu0 %v1444, 12
    %v1468 = vpop.permute.xlu0 %1467
    %1469 = vrot.lane.b32.xlu0 %v1447, 12
    %v1470 = vpop.permute.xlu0 %1469
    %v1473 = vsel %vm912, %v1016, %v1452
    %v1474 = vsel %vm912, %v1019, %v1454
    %v1475 = vsel %vm171, %v1473, %v1460
    %v1476 = vsel %vm171, %v1474, %v1462
    %vm1477 = vcmask 97280
    %v1478 = vsel %vm1477, %v1475, %v1468
    %v1479 = vsel %vm1477, %v1476, %v1470
    %v1480 = vld [vmem:[#allocation2 + $0x40] sm:$0xff]
    %v1481 = vld [vmem:[#allocation2 + $0x48] sm:$0xff]
    %v1482 = vld [vmem:[#allocation2 + $0x2d0] sm:$0x1]
    %v1483 = vperm.slane %v1482, 0
    %v1485 = vsel %vm590, %v1478, 0
    %v1488 = vsel %vm590, %v1479, 0
    %1490 = vmatpush.msra.mxu0 0.0
    %1491 = vmatpush.msra.mxu0 0.0
    %1492 = vmatpush.msra.mxu0 0.0
    %1493 = vmatpush.msra.mxu0 0.0
    %1494 = vmatpush.msra.mxu0 0.0
    %1495 = vmatpush.msra.mxu0 0.0
    %1496 = vmatpush.msra.mxu0 0.0
    %1497 = vmatpush.msra.mxu0 0.0
    %1498 = vmatpush.msra.mxu0 0.0
    %1499 = vmatpush.msra.mxu0 0.0
    %1500 = vmatpush.msra.mxu0 0.0
    %1501 = vmatpush.msra.mxu0 0.0
    %1502 = vmatpush.msra.mxu0 0.0
    %1503 = vmatpush.msra.mxu0 0.0
    %1504 = vmatpush.msra.mxu0 %v1481
    %1505 = vmatpush.msra.mxu0 %v1480
    %1506 = vmatmul.f32.gmra.mxu0 %v1485
    %v1507 = vpop.f32.mrf.mxu0
    %v1508 = vadd.f32 %v1483, %v1507
    %1509 = vmatmul.f32.gmra.mxu0 %v1488
    %v1510 = vpop.f32.mrf.mxu0
    %v1511 = vadd.f32 %v1483, %v1510
    %1512 = vdwg.mxu0
    %v1513 = vadd.f32 %v700, %v1508
    %v1514 = vadd.f32 %v701, %v1511
    %v1515 = vsel %vm60, %v1513, 0.0
    %1516 = vadd.xlane.f32.xlu0 %v1515
    %v1517 = vpop.xlane.xlu0 %1516
    %v1518 = vsel %vm643, %v1514, 0.0
    %1519 = vadd.xlane.f32.xlu0 %v1518
    %v1520 = vpop.xlane.xlu0 %1519
    %v1521 = vmul.f32 %v1517, %v653
    %v1522 = vmul.f32 %v1520, %v653
    %v1523 = vsub.f32 %v1513, %v1521
    %v1524 = vsub.f32 %v1514, %v1522
    %v1525 = vmul.f32 %v1523, %v1523
    %v1526 = vmul.f32 %v1524, %v1524
    %v1527 = vsel %vm60, %v1525, 0.0
    %1528 = vadd.xlane.f32.xlu0 %v1527
    %v1529 = vpop.xlane.xlu0 %1528
    %v1530 = vsel %vm643, %v1526, 0.0
    %1531 = vadd.xlane.f32.xlu0 %v1530
    %v1532 = vpop.xlane.xlu0 %1531
    %v1533 = vmul.f32 %v1529, %v653
    %v1534 = vmul.f32 %v1532, %v653
    %v1535 = vadd.f32 %v1533, 1e-05
    %v1536 = vadd.f32 %v1534, 1e-05
    %v1537 = vrsqrt.pop %v1535
    %v1538 = vmul.f32 %v1537, %v1535
    %v1539 = vmul.f32 %v1538, %v1537
    %v1540 = vmul.f32 0.5, %v1539
    %v1541 = vsub.f32 1.5, %v1540
    %v1542 = vmul.f32 %v1537, %v1541
    %vm1543 = vweird.f32 %v1535
    %vm1544 = vweird.f32 %v1537
    %vm1545 = vmor %vm1543, %vm1544
    %v1546 = vsel %vm1545, %v1537, %v1542
    %v1547 = vrsqrt.pop %v1536
    %v1548 = vmul.f32 %v1547, %v1536
    %v1549 = vmul.f32 %v1548, %v1547
    %v1550 = vmul.f32 0.5, %v1549
    %v1551 = vsub.f32 1.5, %v1550
    %v1552 = vmul.f32 %v1547, %v1551
    %vm1553 = vweird.f32 %v1536
    %vm1554 = vweird.f32 %v1547
    %vm1555 = vmor %vm1553, %vm1554
    %v1556 = vsel %vm1555, %v1547, %v1552
    %v1557 = vmul.f32 %v1523, %v1546
    %v1558 = vmul.f32 %v1524, %v1556
    %1560 = vrot.lane.b32.xlu0 %v1483, 96
    %v1561 = vpop.permute.xlu0 %1560
    %v1563 = vmul.f32 %v1557, %v1561
    %v1564 = vmul.f32 %v1558, %v1561
    %1565 = vrot.lane.b32.xlu0 %v1483, 64
    %v1566 = vpop.permute.xlu0 %1565
    %v1568 = vadd.f32 %v1563, %v1566
    %v1569 = vadd.f32 %v1564, %v1566
    %v1570 = vld [vmem:[#allocation2 + $0x2d8] sm:$0x1]
    %v1571 = vperm.slane %v1570, 0
    %1572 = vrot.lane.b32.xlu0 %v712, 80
    %v1573 = vpop.permute.xlu0 %1572
    %1574 = vrot.lane.b32.xlu0 %v713, 80
    %v1575 = vpop.permute.xlu0 %1574
    %1576 = vrot.lane.b32.xlu0 %v714, 80
    %v1577 = vpop.permute.xlu0 %1576
    %1578 = vrot.lane.b32.xlu0 %v715, 80
    %v1579 = vpop.permute.xlu0 %1578
    %v1585 = vsel %vm60, %v1568, 0
    %v1588 = vsel %vm60, %v1569, 0
    %1590 = vmatpush.msra.mxu0 0.0
    %1591 = vmatpush.msra.mxu0 0.0
    %1592 = vmatpush.msra.mxu0 0.0
    %1593 = vmatpush.msra.mxu0 0.0
    %1594 = vmatpush.msra.mxu0 0.0
    %1595 = vmatpush.msra.mxu0 0.0
    %1596 = vmatpush.msra.mxu0 0.0
    %1597 = vmatpush.msra.mxu0 0.0
    %1598 = vmatpush.msra.mxu0 0.0
    %1599 = vmatpush.msra.mxu0 0.0
    %1600 = vmatpush.msra.mxu0 0.0
    %1601 = vmatpush.msra.mxu0 0.0
    %1602 = vmatpush.msra.mxu0 %v1579
    %1603 = vmatpush.msra.mxu0 %v1577
    %1604 = vmatpush.msra.mxu0 %v1575
    %1605 = vmatpush.msra.mxu0 %v1573
    %1606 = vmatmul.f32.gmra.mxu0 %v1585
    %v1607 = vpop.f32.mrf.mxu0
    %v1608 = vadd.f32 %v1571, %v1607
    %1609 = vmatmul.f32.gmra.mxu0 %v1588
    %v1610 = vpop.f32.mrf.mxu0
    %v1611 = vadd.f32 %v1571, %v1610
    %1612 = vdwg.mxu0
    %v1613 = vmax.f32 %v1608, 0.0
    %v1614 = vmax.f32 %v1611, 0.0
    %v1615 = vld [vmem:[#allocation2 + $0x50] sm:$0xff]
    %v1616 = vld [vmem:[#allocation2 + $0x58] sm:$0xff]
    %v1617 = vld [vmem:[#allocation2 + $0x60] sm:$0xff]
    %v1618 = vld [vmem:[#allocation2 + $0x68] sm:$0xff]
    %v1619 = vld [vmem:[#allocation2 + $0x70] sm:$0xff]
    %v1620 = vld [vmem:[#allocation2 + $0x78] sm:$0xff]
    %v1621 = vld [vmem:[#allocation2 + $0x80] sm:$0xff]
    %v1622 = vld [vmem:[#allocation2 + $0x88] sm:$0xff]
    %1623 = vrot.lane.b32.xlu0 %v1483, 32
    %v1624 = vpop.permute.xlu0 %1623
    %v1627 = vsel %vm968, %v1613, 0
    %v1630 = vsel %vm968, %v1614, 0
    %1632 = vmatpush.msra.mxu0 0.0
    %1633 = vmatpush.msra.mxu0 0.0
    %1634 = vmatpush.msra.mxu0 0.0
    %1635 = vmatpush.msra.mxu0 0.0
    %1636 = vmatpush.msra.mxu0 0.0
    %1637 = vmatpush.msra.mxu0 0.0
    %1638 = vmatpush.msra.mxu0 0.0
    %1639 = vmatpush.msra.mxu0 0.0
    %1640 = vmatpush.msra.mxu0 %v1622
    %1641 = vmatpush.msra.mxu0 %v1621
    %1642 = vmatpush.msra.mxu0 %v1620
    %1643 = vmatpush.msra.mxu0 %v1619
    %1644 = vmatpush.msra.mxu0 %v1618
    %1645 = vmatpush.msra.mxu0 %v1617
    %1646 = vmatpush.msra.mxu0 %v1616
    %1647 = vmatpush.msra.mxu0 %v1615
    %1648 = vmatmul.f32.gmra.mxu0 %v1627
    %v1649 = vpop.f32.mrf.mxu0
    %v1650 = vadd.f32 %v1624, %v1649
    %1651 = vmatmul.f32.gmra.mxu0 %v1630
    %v1652 = vpop.f32.mrf.mxu0
    %v1653 = vadd.f32 %v1624, %v1652
    %1654 = vdwg.mxu0
    %v1655 = vadd.f32 %v1568, %v1650
    %v1656 = vadd.f32 %v1569, %v1653
    %v1657 = vsel %vm60, %v1655, 0.0
    %1658 = vadd.xlane.f32.xlu0 %v1657
    %v1659 = vpop.xlane.xlu0 %1658
    %v1660 = vsel %vm643, %v1656, 0.0
    %1661 = vadd.xlane.f32.xlu0 %v1660
    %v1662 = vpop.xlane.xlu0 %1661
    %v1663 = vmul.f32 %v1659, %v653
    %v1664 = vmul.f32 %v1662, %v653
    %v1665 = vsub.f32 %v1655, %v1663
    %v1666 = vsub.f32 %v1656, %v1664
    %v1667 = vmul.f32 %v1665, %v1665
    %v1668 = vmul.f32 %v1666, %v1666
    %v1669 = vsel %vm60, %v1667, 0.0
    %1670 = vadd.xlane.f32.xlu0 %v1669
    %v1671 = vpop.xlane.xlu0 %1670
    %v1672 = vsel %vm643, %v1668, 0.0
    %1673 = vadd.xlane.f32.xlu0 %v1672
    %v1674 = vpop.xlane.xlu0 %1673
    %v1675 = vmul.f32 %v1671, %v653
    %v1676 = vmul.f32 %v1674, %v653
    %v1677 = vadd.f32 %v1675, 1e-05
    %v1678 = vadd.f32 %v1676, 1e-05
    %v1679 = vrsqrt.pop %v1677
    %v1680 = vmul.f32 %v1679, %v1677
    %v1681 = vmul.f32 %v1680, %v1679
    %v1682 = vmul.f32 0.5, %v1681
    %v1683 = vsub.f32 1.5, %v1682
    %v1684 = vmul.f32 %v1679, %v1683
    %vm1685 = vweird.f32 %v1677
    %vm1686 = vweird.f32 %v1679
    %vm1687 = vmor %vm1685, %vm1686
    %v1688 = vsel %vm1687, %v1679, %v1684
    %v1689 = vrsqrt.pop %v1678
    %v1690 = vmul.f32 %v1689, %v1678
    %v1691 = vmul.f32 %v1690, %v1689
    %v1692 = vmul.f32 0.5, %v1691
    %v1693 = vsub.f32 1.5, %v1692
    %v1694 = vmul.f32 %v1689, %v1693
    %vm1695 = vweird.f32 %v1678
    %vm1696 = vweird.f32 %v1689
    %vm1697 = vmor %vm1695, %vm1696
    %v1698 = vsel %vm1697, %v1689, %v1694
    %v1699 = vmul.f32 %v1665, %v1688
    %v1700 = vmul.f32 %v1666, %v1698
    %1702 = vrot.lane.b32.xlu0 %v1571, 64
    %v1703 = vpop.permute.xlu0 %1702
    %v1705 = vmul.f32 %v1699, %v1703
    %v1706 = vmul.f32 %v1700, %v1703
    %1707 = vrot.lane.b32.xlu0 %v1571, 32
    %v1708 = vpop.permute.xlu0 %1707
    %v1710 = vadd.f32 %v1705, %v1708
    %v1711 = vadd.f32 %v1706, %v1708
    %v1712 = vadd.f32 %v1710, %v36
    %v1713 = vadd.f32 %v1711, %v37
    %1714 = vrot.lane.b32.xlu0 %v712, 16
    %v1715 = vpop.permute.xlu0 %1714
    %1716 = vrot.lane.b32.xlu0 %v713, 16
    %v1717 = vpop.permute.xlu0 %1716
    %1718 = vrot.lane.b32.xlu0 %v714, 16
    %v1719 = vpop.permute.xlu0 %1718
    %1720 = vrot.lane.b32.xlu0 %v715, 16
    %v1721 = vpop.permute.xlu0 %1720
    %1726 = vrot.lane.b32.xlu0 %v693, 16
    %v1727 = vpop.permute.xlu0 %1726
    %1729 = vmatpush.msra.mxu0 0.0
    %1730 = vmatpush.msra.mxu0 0.0
    %1731 = vmatpush.msra.mxu0 0.0
    %1732 = vmatpush.msra.mxu0 0.0
    %1733 = vmatpush.msra.mxu0 0.0
    %1734 = vmatpush.msra.mxu0 0.0
    %1735 = vmatpush.msra.mxu0 0.0
    %1736 = vmatpush.msra.mxu0 0.0
    %1737 = vmatpush.msra.mxu0 0.0
    %1738 = vmatpush.msra.mxu0 0.0
    %1739 = vmatpush.msra.mxu0 0.0
    %1740 = vmatpush.msra.mxu0 0.0
    %1741 = vmatpush.msra.mxu0 %v1721
    %1742 = vmatpush.msra.mxu0 %v1719
    %1743 = vmatpush.msra.mxu0 %v1717
    %1744 = vmatpush.msra.mxu0 %v1715
    %1745 = vmatmul.f32.gmra.mxu0 %v768
    %v1746 = vpop.f32.mrf.mxu0
    %v1747 = vadd.f32 %v1727, %v1746
    %1748 = vmatmul.f32.gmra.mxu0 %v771
    %v1749 = vpop.f32.mrf.mxu0
    %v1750 = vadd.f32 %v1727, %v1749
    %1751 = vmatmul.f32.gmra.mxu0 %v774
    %v1752 = vpop.f32.mrf.mxu0
    %v1753 = vadd.f32 %v1727, %v1752
    %1754 = vmatmul.f32.gmra.mxu0 %v777
    %v1755 = vpop.f32.mrf.mxu0
    %v1756 = vadd.f32 %v1727, %v1755
    %1757 = vmatmul.f32.gmra.mxu0 %v780
    %v1758 = vpop.f32.mrf.mxu0
    %v1759 = vadd.f32 %v1727, %v1758
    %1760 = vmatmul.f32.gmra.mxu0 %v783
    %v1761 = vpop.f32.mrf.mxu0
    %v1762 = vadd.f32 %v1727, %v1761
    %1763 = vmatmul.f32.gmra.mxu0 %v786
    %v1764 = vpop.f32.mrf.mxu0
    %v1765 = vadd.f32 %v1727, %v1764
    %1766 = vmatmul.f32.gmra.mxu0 %v789
    %v1767 = vpop.f32.mrf.mxu0
    %v1768 = vadd.f32 %v1727, %v1767
    %1769 = vdwg.mxu0
    %v1770 = vld [vmem:[#allocation2 + $0x90] sm:$0xff]
    %v1771 = vld [vmem:[#allocation2 + $0x98] sm:$0xff]
    %v1772 = vld [vmem:[#allocation2 + $0xa0] sm:$0xff]
    %v1773 = vld [vmem:[#allocation2 + $0xa8] sm:$0xff]
    %v1774 = vld [vmem:[#allocation2 + $0x2e0] sm:$0x1]
    %v1775 = vperm.slane %v1774, 0
    %v1777 = vsel %vm60, %v1712, 0
    %v1780 = vsel %vm60, %v1713, 0
    %1782 = vmatpush.msra.mxu0 0.0
    %1783 = vmatpush.msra.mxu0 0.0
    %1784 = vmatpush.msra.mxu0 0.0
    %1785 = vmatpush.msra.mxu0 0.0
    %1786 = vmatpush.msra.mxu0 0.0
    %1787 = vmatpush.msra.mxu0 0.0
    %1788 = vmatpush.msra.mxu0 0.0
    %1789 = vmatpush.msra.mxu0 0.0
    %1790 = vmatpush.msra.mxu0 0.0
    %1791 = vmatpush.msra.mxu0 0.0
    %1792 = vmatpush.msra.mxu0 0.0
    %1793 = vmatpush.msra.mxu0 0.0
    %1794 = vmatpush.msra.mxu0 %v1773
    %1795 = vmatpush.msra.mxu0 %v1772
    %1796 = vmatpush.msra.mxu0 %v1771
    %1797 = vmatpush.msra.mxu0 %v1770
    %1798 = vmatmul.f32.gmra.mxu0 %v1777
    %v1799 = vpop.f32.mrf.mxu0
    %v1800 = vadd.f32 %v1775, %v1799
    %1801 = vmatmul.f32.gmra.mxu0 %v1780
    %v1802 = vpop.f32.mrf.mxu0
    %v1803 = vadd.f32 %v1775, %v1802
    %1804 = vdwg.mxu0
    %1809 = vrot.lane.b32.xlu0 %v1770, 112
    %v1810 = vpop.permute.xlu0 %1809
    %1811 = vrot.lane.b32.xlu0 %v1771, 112
    %v1812 = vpop.permute.xlu0 %1811
    %1813 = vrot.lane.b32.xlu0 %v1772, 112
    %v1814 = vpop.permute.xlu0 %1813
    %1815 = vrot.lane.b32.xlu0 %v1773, 112
    %v1816 = vpop.permute.xlu0 %1815
    %1822 = vrot.lane.b32.xlu0 %v1775, 112
    %v1823 = vpop.permute.xlu0 %1822
    %v1826 = vsel %vm60, %v1710, 0
    %v1829 = vsel %vm60, %v1711, 0
    %1831 = vmatpush.msra.mxu0 0.0
    %1832 = vmatpush.msra.mxu0 0.0
    %1833 = vmatpush.msra.mxu0 0.0
    %1834 = vmatpush.msra.mxu0 0.0
    %1835 = vmatpush.msra.mxu0 0.0
    %1836 = vmatpush.msra.mxu0 0.0
    %1837 = vmatpush.msra.mxu0 0.0
    %1838 = vmatpush.msra.mxu0 0.0
    %1839 = vmatpush.msra.mxu0 0.0
    %1840 = vmatpush.msra.mxu0 0.0
    %1841 = vmatpush.msra.mxu0 0.0
    %1842 = vmatpush.msra.mxu0 0.0
    %1843 = vmatpush.msra.mxu0 %v1816
    %1844 = vmatpush.msra.mxu0 %v1814
    %1845 = vmatpush.msra.mxu0 %v1812
    %1846 = vmatpush.msra.mxu0 %v1810
    %1847 = vmatmul.f32.gmra.mxu0 %v1826
    %v1848 = vpop.f32.mrf.mxu0
    %v1849 = vadd.f32 %v1823, %v1848
    %1850 = vmatmul.f32.gmra.mxu0 %v1829
    %v1851 = vpop.f32.mrf.mxu0
    %v1852 = vadd.f32 %v1823, %v1851
    %1853 = vdwg.mxu0
    %v1855 = vsel %vm912, %v1747, 0
    %v1858 = vsel %vm912, %v1750, 0
    %v1861 = vsel %vm912, %v1753, 0
    %v1864 = vsel %vm912, %v1756, 0
    %v1867 = vsel %vm912, %v1759, 0
    %v1870 = vsel %vm912, %v1762, 0
    %v1873 = vsel %vm912, %v1765, 0
    %v1876 = vsel %vm912, %v1768, 0
    %v1879 = vsel %vm912, %v1800, 0
    %v1882 = vsel %vm912, %v1803, 0
    %1884 = vmatpush.xpose.msra.mxu0 0.0
    %1885 = vmatpush.xpose.msra.mxu0 0.0
    %1886 = vmatpush.xpose.msra.mxu0 0.0
    %1887 = vmatpush.xpose.msra.mxu0 0.0
    %1888 = vmatpush.xpose.msra.mxu0 0.0
    %1889 = vmatpush.xpose.msra.mxu0 0.0
    %1890 = vmatpush.xpose.msra.mxu0 0.0
    %1891 = vmatpush.xpose.msra.mxu0 0.0
    %1892 = vmatpush.xpose.msra.mxu0 0.0
    %1893 = vmatpush.xpose.msra.mxu0 0.0
    %1894 = vmatpush.xpose.msra.mxu0 0.0
    %1895 = vmatpush.xpose.msra.mxu0 0.0
    %1896 = vmatpush.xpose.msra.mxu0 0.0
    %1897 = vmatpush.xpose.msra.mxu0 0.0
    %1898 = vmatpush.xpose.msra.mxu0 %v1882
    %1899 = vmatpush.xpose.msra.mxu0 %v1879
    %1900 = vmatmul.f32.gmra.mxu0 %v1855
    %v1901 = vpop.f32.mrf.mxu0
    %v1902 = vadd.f32 0.0, %v1901
    %1903 = vmatmul.f32.gmra.mxu0 %v1858
    %v1904 = vpop.f32.mrf.mxu0
    %v1905 = vadd.f32 0.0, %v1904
    %1906 = vmatmul.f32.gmra.mxu0 %v1861
    %v1907 = vpop.f32.mrf.mxu0
    %v1908 = vadd.f32 0.0, %v1907
    %1909 = vmatmul.f32.gmra.mxu0 %v1864
    %v1910 = vpop.f32.mrf.mxu0
    %v1911 = vadd.f32 0.0, %v1910
    %1912 = vmatmul.f32.gmra.mxu0 %v1867
    %v1913 = vpop.f32.mrf.mxu0
    %v1914 = vadd.f32 0.0, %v1913
    %1915 = vmatmul.f32.gmra.mxu0 %v1870
    %v1916 = vpop.f32.mrf.mxu0
    %v1917 = vadd.f32 0.0, %v1916
    %1918 = vmatmul.f32.gmra.mxu0 %v1873
    %v1919 = vpop.f32.mrf.mxu0
    %v1920 = vadd.f32 0.0, %v1919
    %1921 = vmatmul.f32.gmra.mxu0 %v1876
    %v1922 = vpop.f32.mrf.mxu0
    %v1923 = vadd.f32 0.0, %v1922
    %1924 = vdwg.mxu0
    %v1925 = vmul.f32 %v1902, 0.5
    %v1926 = vmul.f32 %v1905, 0.5
    %v1927 = vmul.f32 %v1908, 0.5
    %v1928 = vmul.f32 %v1911, 0.5
    %v1929 = vmul.f32 %v1914, 0.5
    %v1930 = vmul.f32 %v1917, 0.5
    %v1931 = vmul.f32 %v1920, 0.5
    %v1932 = vmul.f32 %v1923, 0.5
    %v1933 = vsel %vm209, %v1925, -inf
    %1934 = vmax.xlane.f32.xlu0 %v1933
    %v1935 = vpop.xlane.xlu0 %1934
    %v1936 = vsel %vm209, %v1926, -inf
    %1937 = vmax.xlane.f32.xlu0 %v1936
    %v1938 = vpop.xlane.xlu0 %1937
    %v1939 = vsel %vm209, %v1927, -inf
    %1940 = vmax.xlane.f32.xlu0 %v1939
    %v1941 = vpop.xlane.xlu0 %1940
    %v1942 = vsel %vm209, %v1928, -inf
    %1943 = vmax.xlane.f32.xlu0 %v1942
    %v1944 = vpop.xlane.xlu0 %1943
    %v1945 = vsel %vm209, %v1929, -inf
    %1946 = vmax.xlane.f32.xlu0 %v1945
    %v1947 = vpop.xlane.xlu0 %1946
    %v1948 = vsel %vm209, %v1930, -inf
    %1949 = vmax.xlane.f32.xlu0 %v1948
    %v1950 = vpop.xlane.xlu0 %1949
    %v1951 = vsel %vm209, %v1931, -inf
    %1952 = vmax.xlane.f32.xlu0 %v1951
    %v1953 = vpop.xlane.xlu0 %1952
    %v1954 = vsel %vm209, %v1932, -inf
    %1955 = vmax.xlane.f32.xlu0 %v1954
    %v1956 = vpop.xlane.xlu0 %1955
    %v1957 = vsub.f32 %v1925, %v1935
    %v1958 = vsub.f32 %v1926, %v1938
    %v1959 = vsub.f32 %v1927, %v1941
    %v1960 = vsub.f32 %v1928, %v1944
    %v1961 = vsub.f32 %v1929, %v1947
    %v1962 = vsub.f32 %v1930, %v1950
    %v1963 = vsub.f32 %v1931, %v1953
    %v1964 = vsub.f32 %v1932, %v1956
    %v1965 = vmul.f32 %v1957, 1.442695
    %v1966 = vpow.pop %v1965
    %v1967 = vmul.f32 %v1958, 1.442695
    %v1968 = vpow.pop %v1967
    %v1969 = vmul.f32 %v1959, 1.442695
    %v1970 = vpow.pop %v1969
    %v1971 = vmul.f32 %v1960, 1.442695
    %v1972 = vpow.pop %v1971
    %v1973 = vmul.f32 %v1961, 1.442695
    %v1974 = vpow.pop %v1973
    %v1975 = vmul.f32 %v1962, 1.442695
    %v1976 = vpow.pop %v1975
    %v1977 = vmul.f32 %v1963, 1.442695
    %v1978 = vpow.pop %v1977
    %v1979 = vmul.f32 %v1964, 1.442695
    %v1980 = vpow.pop %v1979
    %v1981 = vsel %vm209, %v1966, 0.0
    %1982 = vadd.xlane.f32.xlu0 %v1981
    %v1983 = vpop.xlane.xlu0 %1982
    %v1984 = vsel %vm209, %v1968, 0.0
    %1985 = vadd.xlane.f32.xlu0 %v1984
    %v1986 = vpop.xlane.xlu0 %1985
    %v1987 = vsel %vm209, %v1970, 0.0
    %1988 = vadd.xlane.f32.xlu0 %v1987
    %v1989 = vpop.xlane.xlu0 %1988
    %v1990 = vsel %vm209, %v1972, 0.0
    %1991 = vadd.xlane.f32.xlu0 %v1990
    %v1992 = vpop.xlane.xlu0 %1991
    %v1993 = vsel %vm209, %v1974, 0.0
    %1994 = vadd.xlane.f32.xlu0 %v1993
    %v1995 = vpop.xlane.xlu0 %1994
    %v1996 = vsel %vm209, %v1976, 0.0
    %1997 = vadd.xlane.f32.xlu0 %v1996
    %v1998 = vpop.xlane.xlu0 %1997
    %v1999 = vsel %vm209, %v1978, 0.0
    %2000 = vadd.xlane.f32.xlu0 %v1999
    %v2001 = vpop.xlane.xlu0 %2000
    %v2002 = vsel %vm209, %v1980, 0.0
    %2003 = vadd.xlane.f32.xlu0 %v2002
    %v2004 = vpop.xlane.xlu0 %2003
    %v2005 = vrcp.pop %v1983
    %v2006 = vrcp.pop %v1986
    %v2007 = vrcp.pop %v1989
    %v2008 = vrcp.pop %v1992
    %v2009 = vrcp.pop %v1995
    %v2010 = vrcp.pop %v1998
    %v2011 = vrcp.pop %v2001
    %v2012 = vrcp.pop %v2004
    %v2013 = vmul.f32 %v1966, %v2005
    %v2014 = vmul.f32 %v1968, %v2006
    %v2015 = vmul.f32 %v1970, %v2007
    %v2016 = vmul.f32 %v1972, %v2008
    %v2017 = vmul.f32 %v1974, %v2009
    %v2018 = vmul.f32 %v1976, %v2010
    %v2019 = vmul.f32 %v1978, %v2011
    %v2020 = vmul.f32 %v1980, %v2012
    %v2022 = vsel %vm209, %v2013, 0
    %v2025 = vsel %vm209, %v2014, 0
    %v2028 = vsel %vm209, %v2015, 0
    %v2031 = vsel %vm209, %v2016, 0
    %v2034 = vsel %vm209, %v2017, 0
    %v2037 = vsel %vm209, %v2018, 0
    %v2040 = vsel %vm209, %v2019, 0
    %v2043 = vsel %vm209, %v2020, 0
    %v2046 = vsel %vm239, %v1852, 0
    %2048 = vmatpush.msra.mxu0 0.0
    %2049 = vmatpush.msra.mxu0 0.0
    %2050 = vmatpush.msra.mxu0 0.0
    %2051 = vmatpush.msra.mxu0 0.0
    %2052 = vmatpush.msra.mxu0 0.0
    %2053 = vmatpush.msra.mxu0 0.0
    %2054 = vmatpush.msra.mxu0 0.0
    %2055 = vmatpush.msra.mxu0 0.0
    %2056 = vmatpush.msra.mxu0 0.0
    %2057 = vmatpush.msra.mxu0 0.0
    %2058 = vmatpush.msra.mxu0 0.0
    %2059 = vmatpush.msra.mxu0 0.0
    %2060 = vmatpush.msra.mxu0 0.0
    %2061 = vmatpush.msra.mxu0 0.0
    %2062 = vmatpush.msra.mxu0 %v2046
    %2063 = vmatpush.msra.mxu0 %v1849
    %2064 = vmatmul.f32.gmra.mxu0 %v2022
    %v2065 = vpop.f32.mrf.mxu0
    %v2066 = vadd.f32 0.0, %v2065
    %2067 = vmatmul.f32.gmra.mxu0 %v2025
    %v2068 = vpop.f32.mrf.mxu0
    %v2069 = vadd.f32 0.0, %v2068
    %2070 = vmatmul.f32.gmra.mxu0 %v2028
    %v2071 = vpop.f32.mrf.mxu0
    %v2072 = vadd.f32 0.0, %v2071
    %2073 = vmatmul.f32.gmra.mxu0 %v2031
    %v2074 = vpop.f32.mrf.mxu0
    %v2075 = vadd.f32 0.0, %v2074
    %2076 = vmatmul.f32.gmra.mxu0 %v2034
    %v2077 = vpop.f32.mrf.mxu0
    %v2078 = vadd.f32 0.0, %v2077
    %2079 = vmatmul.f32.gmra.mxu0 %v2037
    %v2080 = vpop.f32.mrf.mxu0
    %v2081 = vadd.f32 0.0, %v2080
    %2082 = vmatmul.f32.gmra.mxu0 %v2040
    %v2083 = vpop.f32.mrf.mxu0
    %v2084 = vadd.f32 0.0, %v2083
    %2085 = vmatmul.f32.gmra.mxu0 %v2043
    %v2086 = vpop.f32.mrf.mxu0
    %v2087 = vadd.f32 0.0, %v2086
    %2088 = vdwg.mxu0
    %2089 = vrot.lane.b32.xlu0 %v1747, 124
    %v2090 = vpop.permute.xlu0 %2089
    %2091 = vrot.lane.b32.xlu0 %v1750, 124
    %v2092 = vpop.permute.xlu0 %2091
    %2093 = vrot.lane.b32.xlu0 %v1753, 124
    %v2094 = vpop.permute.xlu0 %2093
    %2095 = vrot.lane.b32.xlu0 %v1756, 124
    %v2096 = vpop.permute.xlu0 %2095
    %2097 = vrot.lane.b32.xlu0 %v1759, 124
    %v2098 = vpop.permute.xlu0 %2097
    %2099 = vrot.lane.b32.xlu0 %v1762, 124
    %v2100 = vpop.permute.xlu0 %2099
    %2101 = vrot.lane.b32.xlu0 %v1765, 124
    %v2102 = vpop.permute.xlu0 %2101
    %2103 = vrot.lane.b32.xlu0 %v1768, 124
    %v2104 = vpop.permute.xlu0 %2103
    %2105 = vrot.lane.b32.xlu0 %v1800, 124
    %v2106 = vpop.permute.xlu0 %2105
    %2107 = vrot.lane.b32.xlu0 %v1803, 124
    %v2108 = vpop.permute.xlu0 %2107
    %v2109 = vsel %vm912, %v2090, 0
    %v2111 = vsel %vm912, %v2092, 0
    %v2113 = vsel %vm912, %v2094, 0
    %v2115 = vsel %vm912, %v2096, 0
    %v2117 = vsel %vm912, %v2098, 0
    %v2119 = vsel %vm912, %v2100, 0
    %v2121 = vsel %vm912, %v2102, 0
    %v2123 = vsel %vm912, %v2104, 0
    %v2125 = vsel %vm912, %v2106, 0
    %v2127 = vsel %vm912, %v2108, 0
    %2129 = vmatpush.xpose.msra.mxu0 0.0
    %2130 = vmatpush.xpose.msra.mxu0 0.0
    %2131 = vmatpush.xpose.msra.mxu0 0.0
    %2132 = vmatpush.xpose.msra.mxu0 0.0
    %2133 = vmatpush.xpose.msra.mxu0 0.0
    %2134 = vmatpush.xpose.msra.mxu0 0.0
    %2135 = vmatpush.xpose.msra.mxu0 0.0
    %2136 = vmatpush.xpose.msra.mxu0 0.0
    %2137 = vmatpush.xpose.msra.mxu0 0.0
    %2138 = vmatpush.xpose.msra.mxu0 0.0
    %2139 = vmatpush.xpose.msra.mxu0 0.0
    %2140 = vmatpush.xpose.msra.mxu0 0.0
    %2141 = vmatpush.xpose.msra.mxu0 0.0
    %2142 = vmatpush.xpose.msra.mxu0 0.0
    %2143 = vmatpush.xpose.msra.mxu0 %v2127
    %2144 = vmatpush.xpose.msra.mxu0 %v2125
    %2145 = vmatmul.f32.gmra.mxu0 %v2109
    %v2146 = vpop.f32.mrf.mxu0
    %v2147 = vadd.f32 0.0, %v2146
    %2148 = vmatmul.f32.gmra.mxu0 %v2111
    %v2149 = vpop.f32.mrf.mxu0
    %v2150 = vadd.f32 0.0, %v2149
    %2151 = vmatmul.f32.gmra.mxu0 %v2113
    %v2152 = vpop.f32.mrf.mxu0
    %v2153 = vadd.f32 0.0, %v2152
    %2154 = vmatmul.f32.gmra.mxu0 %v2115
    %v2155 = vpop.f32.mrf.mxu0
    %v2156 = vadd.f32 0.0, %v2155
    %2157 = vmatmul.f32.gmra.mxu0 %v2117
    %v2158 = vpop.f32.mrf.mxu0
    %v2159 = vadd.f32 0.0, %v2158
    %2160 = vmatmul.f32.gmra.mxu0 %v2119
    %v2161 = vpop.f32.mrf.mxu0
    %v2162 = vadd.f32 0.0, %v2161
    %2163 = vmatmul.f32.gmra.mxu0 %v2121
    %v2164 = vpop.f32.mrf.mxu0
    %v2165 = vadd.f32 0.0, %v2164
    %2166 = vmatmul.f32.gmra.mxu0 %v2123
    %v2167 = vpop.f32.mrf.mxu0
    %v2168 = vadd.f32 0.0, %v2167
    %2169 = vdwg.mxu0
    %v2170 = vmul.f32 %v2147, 0.5
    %v2171 = vmul.f32 %v2150, 0.5
    %v2172 = vmul.f32 %v2153, 0.5
    %v2173 = vmul.f32 %v2156, 0.5
    %v2174 = vmul.f32 %v2159, 0.5
    %v2175 = vmul.f32 %v2162, 0.5
    %v2176 = vmul.f32 %v2165, 0.5
    %v2177 = vmul.f32 %v2168, 0.5
    %v2178 = vsel %vm209, %v2170, -inf
    %2179 = vmax.xlane.f32.xlu0 %v2178
    %v2180 = vpop.xlane.xlu0 %2179
    %v2181 = vsel %vm209, %v2171, -inf
    %2182 = vmax.xlane.f32.xlu0 %v2181
    %v2183 = vpop.xlane.xlu0 %2182
    %v2184 = vsel %vm209, %v2172, -inf
    %2185 = vmax.xlane.f32.xlu0 %v2184
    %v2186 = vpop.xlane.xlu0 %2185
    %v2187 = vsel %vm209, %v2173, -inf
    %2188 = vmax.xlane.f32.xlu0 %v2187
    %v2189 = vpop.xlane.xlu0 %2188
    %v2190 = vsel %vm209, %v2174, -inf
    %2191 = vmax.xlane.f32.xlu0 %v2190
    %v2192 = vpop.xlane.xlu0 %2191
    %v2193 = vsel %vm209, %v2175, -inf
    %2194 = vmax.xlane.f32.xlu0 %v2193
    %v2195 = vpop.xlane.xlu0 %2194
    %v2196 = vsel %vm209, %v2176, -inf
    %2197 = vmax.xlane.f32.xlu0 %v2196
    %v2198 = vpop.xlane.xlu0 %2197
    %v2199 = vsel %vm209, %v2177, -inf
    %2200 = vmax.xlane.f32.xlu0 %v2199
    %v2201 = vpop.xlane.xlu0 %2200
    %v2202 = vsub.f32 %v2170, %v2180
    %v2203 = vsub.f32 %v2171, %v2183
    %v2204 = vsub.f32 %v2172, %v2186
    %v2205 = vsub.f32 %v2173, %v2189
    %v2206 = vsub.f32 %v2174, %v2192
    %v2207 = vsub.f32 %v2175, %v2195
    %v2208 = vsub.f32 %v2176, %v2198
    %v2209 = vsub.f32 %v2177, %v2201
    %v2210 = vmul.f32 %v2202, 1.442695
    %v2211 = vpow.pop %v2210
    %v2212 = vmul.f32 %v2203, 1.442695
    %v2213 = vpow.pop %v2212
    %v2214 = vmul.f32 %v2204, 1.442695
    %v2215 = vpow.pop %v2214
    %v2216 = vmul.f32 %v2205, 1.442695
    %v2217 = vpow.pop %v2216
    %v2218 = vmul.f32 %v2206, 1.442695
    %v2219 = vpow.pop %v2218
    %v2220 = vmul.f32 %v2207, 1.442695
    %v2221 = vpow.pop %v2220
    %v2222 = vmul.f32 %v2208, 1.442695
    %v2223 = vpow.pop %v2222
    %v2224 = vmul.f32 %v2209, 1.442695
    %v2225 = vpow.pop %v2224
    %v2226 = vsel %vm209, %v2211, 0.0
    %2227 = vadd.xlane.f32.xlu0 %v2226
    %v2228 = vpop.xlane.xlu0 %2227
    %v2229 = vsel %vm209, %v2213, 0.0
    %2230 = vadd.xlane.f32.xlu0 %v2229
    %v2231 = vpop.xlane.xlu0 %2230
    %v2232 = vsel %vm209, %v2215, 0.0
    %2233 = vadd.xlane.f32.xlu0 %v2232
    %v2234 = vpop.xlane.xlu0 %2233
    %v2235 = vsel %vm209, %v2217, 0.0
    %2236 = vadd.xlane.f32.xlu0 %v2235
    %v2237 = vpop.xlane.xlu0 %2236
    %v2238 = vsel %vm209, %v2219, 0.0
    %2239 = vadd.xlane.f32.xlu0 %v2238
    %v2240 = vpop.xlane.xlu0 %2239
    %v2241 = vsel %vm209, %v2221, 0.0
    %2242 = vadd.xlane.f32.xlu0 %v2241
    %v2243 = vpop.xlane.xlu0 %2242
    %v2244 = vsel %vm209, %v2223, 0.0
    %2245 = vadd.xlane.f32.xlu0 %v2244
    %v2246 = vpop.xlane.xlu0 %2245
    %v2247 = vsel %vm209, %v2225, 0.0
    %2248 = vadd.xlane.f32.xlu0 %v2247
    %v2249 = vpop.xlane.xlu0 %2248
    %v2250 = vrcp.pop %v2228
    %v2251 = vrcp.pop %v2231
    %v2252 = vrcp.pop %v2234
    %v2253 = vrcp.pop %v2237
    %v2254 = vrcp.pop %v2240
    %v2255 = vrcp.pop %v2243
    %v2256 = vrcp.pop %v2246
    %v2257 = vrcp.pop %v2249
    %v2258 = vmul.f32 %v2211, %v2250
    %v2259 = vmul.f32 %v2213, %v2251
    %v2260 = vmul.f32 %v2215, %v2252
    %v2261 = vmul.f32 %v2217, %v2253
    %v2262 = vmul.f32 %v2219, %v2254
    %v2263 = vmul.f32 %v2221, %v2255
    %v2264 = vmul.f32 %v2223, %v2256
    %v2265 = vmul.f32 %v2225, %v2257
    %2267 = vrot.lane.b32.xlu0 %v1849, 124
    %v2268 = vpop.permute.xlu0 %2267
    %2269 = vrot.lane.b32.xlu0 %v1852, 124
    %v2270 = vpop.permute.xlu0 %2269
    %v2273 = vsel %vm209, %v2258, 0
    %v2276 = vsel %vm209, %v2259, 0
    %v2279 = vsel %vm209, %v2260, 0
    %v2282 = vsel %vm209, %v2261, 0
    %v2285 = vsel %vm209, %v2262, 0
    %v2288 = vsel %vm209, %v2263, 0
    %v2291 = vsel %vm209, %v2264, 0
    %v2294 = vsel %vm209, %v2265, 0
    %v2296 = vsel %vm239, %v2270, 0
    %2298 = vmatpush.msra.mxu0 0.0
    %2299 = vmatpush.msra.mxu0 0.0
    %2300 = vmatpush.msra.mxu0 0.0
    %2301 = vmatpush.msra.mxu0 0.0
    %2302 = vmatpush.msra.mxu0 0.0
    %2303 = vmatpush.msra.mxu0 0.0
    %2304 = vmatpush.msra.mxu0 0.0
    %2305 = vmatpush.msra.mxu0 0.0
    %2306 = vmatpush.msra.mxu0 0.0
    %2307 = vmatpush.msra.mxu0 0.0
    %2308 = vmatpush.msra.mxu0 0.0
    %2309 = vmatpush.msra.mxu0 0.0
    %2310 = vmatpush.msra.mxu0 0.0
    %2311 = vmatpush.msra.mxu0 0.0
    %2312 = vmatpush.msra.mxu0 %v2296
    %2313 = vmatpush.msra.mxu0 %v2268
    %2314 = vmatmul.f32.gmra.mxu0 %v2273
    %v2315 = vpop.f32.mrf.mxu0
    %v2316 = vadd.f32 0.0, %v2315
    %2317 = vmatmul.f32.gmra.mxu0 %v2276
    %v2318 = vpop.f32.mrf.mxu0
    %v2319 = vadd.f32 0.0, %v2318
    %2320 = vmatmul.f32.gmra.mxu0 %v2279
    %v2321 = vpop.f32.mrf.mxu0
    %v2322 = vadd.f32 0.0, %v2321
    %2323 = vmatmul.f32.gmra.mxu0 %v2282
    %v2324 = vpop.f32.mrf.mxu0
    %v2325 = vadd.f32 0.0, %v2324
    %2326 = vmatmul.f32.gmra.mxu0 %v2285
    %v2327 = vpop.f32.mrf.mxu0
    %v2328 = vadd.f32 0.0, %v2327
    %2329 = vmatmul.f32.gmra.mxu0 %v2288
    %v2330 = vpop.f32.mrf.mxu0
    %v2331 = vadd.f32 0.0, %v2330
    %2332 = vmatmul.f32.gmra.mxu0 %v2291
    %v2333 = vpop.f32.mrf.mxu0
    %v2334 = vadd.f32 0.0, %v2333
    %2335 = vmatmul.f32.gmra.mxu0 %v2294
    %v2336 = vpop.f32.mrf.mxu0
    %v2337 = vadd.f32 0.0, %v2336
    %2338 = vdwg.mxu0
    %2339 = vrot.lane.b32.xlu0 %v1747, 120
    %v2340 = vpop.permute.xlu0 %2339
    %2341 = vrot.lane.b32.xlu0 %v1750, 120
    %v2342 = vpop.permute.xlu0 %2341
    %2343 = vrot.lane.b32.xlu0 %v1753, 120
    %v2344 = vpop.permute.xlu0 %2343
    %2345 = vrot.lane.b32.xlu0 %v1756, 120
    %v2346 = vpop.permute.xlu0 %2345
    %2347 = vrot.lane.b32.xlu0 %v1759, 120
    %v2348 = vpop.permute.xlu0 %2347
    %2349 = vrot.lane.b32.xlu0 %v1762, 120
    %v2350 = vpop.permute.xlu0 %2349
    %2351 = vrot.lane.b32.xlu0 %v1765, 120
    %v2352 = vpop.permute.xlu0 %2351
    %2353 = vrot.lane.b32.xlu0 %v1768, 120
    %v2354 = vpop.permute.xlu0 %2353
    %2355 = vrot.lane.b32.xlu0 %v1800, 120
    %v2356 = vpop.permute.xlu0 %2355
    %2357 = vrot.lane.b32.xlu0 %v1803, 120
    %v2358 = vpop.permute.xlu0 %2357
    %v2359 = vsel %vm912, %v2340, 0
    %v2361 = vsel %vm912, %v2342, 0
    %v2363 = vsel %vm912, %v2344, 0
    %v2365 = vsel %vm912, %v2346, 0
    %v2367 = vsel %vm912, %v2348, 0
    %v2369 = vsel %vm912, %v2350, 0
    %v2371 = vsel %vm912, %v2352, 0
    %v2373 = vsel %vm912, %v2354, 0
    %v2375 = vsel %vm912, %v2356, 0
    %v2377 = vsel %vm912, %v2358, 0
    %2379 = vmatpush.xpose.msra.mxu0 0.0
    %2380 = vmatpush.xpose.msra.mxu0 0.0
    %2381 = vmatpush.xpose.msra.mxu0 0.0
    %2382 = vmatpush.xpose.msra.mxu0 0.0
    %2383 = vmatpush.xpose.msra.mxu0 0.0
    %2384 = vmatpush.xpose.msra.mxu0 0.0
    %2385 = vmatpush.xpose.msra.mxu0 0.0
    %2386 = vmatpush.xpose.msra.mxu0 0.0
    %2387 = vmatpush.xpose.msra.mxu0 0.0
    %2388 = vmatpush.xpose.msra.mxu0 0.0
    %2389 = vmatpush.xpose.msra.mxu0 0.0
    %2390 = vmatpush.xpose.msra.mxu0 0.0
    %2391 = vmatpush.xpose.msra.mxu0 0.0
    %2392 = vmatpush.xpose.msra.mxu0 0.0
    %2393 = vmatpush.xpose.msra.mxu0 %v2377
    %2394 = vmatpush.xpose.msra.mxu0 %v2375
    %2395 = vmatmul.f32.gmra.mxu0 %v2359
    %v2396 = vpop.f32.mrf.mxu0
    %v2397 = vadd.f32 0.0, %v2396
    %2398 = vmatmul.f32.gmra.mxu0 %v2361
    %v2399 = vpop.f32.mrf.mxu0
    %v2400 = vadd.f32 0.0, %v2399
    %2401 = vmatmul.f32.gmra.mxu0 %v2363
    %v2402 = vpop.f32.mrf.mxu0
    %v2403 = vadd.f32 0.0, %v2402
    %2404 = vmatmul.f32.gmra.mxu0 %v2365
    %v2405 = vpop.f32.mrf.mxu0
    %v2406 = vadd.f32 0.0, %v2405
    %2407 = vmatmul.f32.gmra.mxu0 %v2367
    %v2408 = vpop.f32.mrf.mxu0
    %v2409 = vadd.f32 0.0, %v2408
    %2410 = vmatmul.f32.gmra.mxu0 %v2369
    %v2411 = vpop.f32.mrf.mxu0
    %v2412 = vadd.f32 0.0, %v2411
    %2413 = vmatmul.f32.gmra.mxu0 %v2371
    %v2414 = vpop.f32.mrf.mxu0
    %v2415 = vadd.f32 0.0, %v2414
    %2416 = vmatmul.f32.gmra.mxu0 %v2373
    %v2417 = vpop.f32.mrf.mxu0
    %v2418 = vadd.f32 0.0, %v2417
    %2419 = vdwg.mxu0
    %v2420 = vmul.f32 %v2397, 0.5
    %v2421 = vmul.f32 %v2400, 0.5
    %v2422 = vmul.f32 %v2403, 0.5
    %v2423 = vmul.f32 %v2406, 0.5
    %v2424 = vmul.f32 %v2409, 0.5
    %v2425 = vmul.f32 %v2412, 0.5
    %v2426 = vmul.f32 %v2415, 0.5
    %v2427 = vmul.f32 %v2418, 0.5
    %v2428 = vsel %vm209, %v2420, -inf
    %2429 = vmax.xlane.f32.xlu0 %v2428
    %v2430 = vpop.xlane.xlu0 %2429
    %v2431 = vsel %vm209, %v2421, -inf
    %2432 = vmax.xlane.f32.xlu0 %v2431
    %v2433 = vpop.xlane.xlu0 %2432
    %v2434 = vsel %vm209, %v2422, -inf
    %2435 = vmax.xlane.f32.xlu0 %v2434
    %v2436 = vpop.xlane.xlu0 %2435
    %v2437 = vsel %vm209, %v2423, -inf
    %2438 = vmax.xlane.f32.xlu0 %v2437
    %v2439 = vpop.xlane.xlu0 %2438
    %v2440 = vsel %vm209, %v2424, -inf
    %2441 = vmax.xlane.f32.xlu0 %v2440
    %v2442 = vpop.xlane.xlu0 %2441
    %v2443 = vsel %vm209, %v2425, -inf
    %2444 = vmax.xlane.f32.xlu0 %v2443
    %v2445 = vpop.xlane.xlu0 %2444
    %v2446 = vsel %vm209, %v2426, -inf
    %2447 = vmax.xlane.f32.xlu0 %v2446
    %v2448 = vpop.xlane.xlu0 %2447
    %v2449 = vsel %vm209, %v2427, -inf
    %2450 = vmax.xlane.f32.xlu0 %v2449
    %v2451 = vpop.xlane.xlu0 %2450
    %v2452 = vsub.f32 %v2420, %v2430
    %v2453 = vsub.f32 %v2421, %v2433
    %v2454 = vsub.f32 %v2422, %v2436
    %v2455 = vsub.f32 %v2423, %v2439
    %v2456 = vsub.f32 %v2424, %v2442
    %v2457 = vsub.f32 %v2425, %v2445
    %v2458 = vsub.f32 %v2426, %v2448
    %v2459 = vsub.f32 %v2427, %v2451
    %v2460 = vmul.f32 %v2452, 1.442695
    %v2461 = vpow.pop %v2460
    %v2462 = vmul.f32 %v2453, 1.442695
    %v2463 = vpow.pop %v2462
    %v2464 = vmul.f32 %v2454, 1.442695
    %v2465 = vpow.pop %v2464
    %v2466 = vmul.f32 %v2455, 1.442695
    %v2467 = vpow.pop %v2466
    %v2468 = vmul.f32 %v2456, 1.442695
    %v2469 = vpow.pop %v2468
    %v2470 = vmul.f32 %v2457, 1.442695
    %v2471 = vpow.pop %v2470
    %v2472 = vmul.f32 %v2458, 1.442695
    %v2473 = vpow.pop %v2472
    %v2474 = vmul.f32 %v2459, 1.442695
    %v2475 = vpow.pop %v2474
    %v2476 = vsel %vm209, %v2461, 0.0
    %2477 = vadd.xlane.f32.xlu0 %v2476
    %v2478 = vpop.xlane.xlu0 %2477
    %v2479 = vsel %vm209, %v2463, 0.0
    %2480 = vadd.xlane.f32.xlu0 %v2479
    %v2481 = vpop.xlane.xlu0 %2480
    %v2482 = vsel %vm209, %v2465, 0.0
    %2483 = vadd.xlane.f32.xlu0 %v2482
    %v2484 = vpop.xlane.xlu0 %2483
    %v2485 = vsel %vm209, %v2467, 0.0
    %2486 = vadd.xlane.f32.xlu0 %v2485
    %v2487 = vpop.xlane.xlu0 %2486
    %v2488 = vsel %vm209, %v2469, 0.0
    %2489 = vadd.xlane.f32.xlu0 %v2488
    %v2490 = vpop.xlane.xlu0 %2489
    %v2491 = vsel %vm209, %v2471, 0.0
    %2492 = vadd.xlane.f32.xlu0 %v2491
    %v2493 = vpop.xlane.xlu0 %2492
    %v2494 = vsel %vm209, %v2473, 0.0
    %2495 = vadd.xlane.f32.xlu0 %v2494
    %v2496 = vpop.xlane.xlu0 %2495
    %v2497 = vsel %vm209, %v2475, 0.0
    %2498 = vadd.xlane.f32.xlu0 %v2497
    %v2499 = vpop.xlane.xlu0 %2498
    %v2500 = vrcp.pop %v2478
    %v2501 = vrcp.pop %v2481
    %v2502 = vrcp.pop %v2484
    %v2503 = vrcp.pop %v2487
    %v2504 = vrcp.pop %v2490
    %v2505 = vrcp.pop %v2493
    %v2506 = vrcp.pop %v2496
    %v2507 = vrcp.pop %v2499
    %v2508 = vmul.f32 %v2461, %v2500
    %v2509 = vmul.f32 %v2463, %v2501
    %v2510 = vmul.f32 %v2465, %v2502
    %v2511 = vmul.f32 %v2467, %v2503
    %v2512 = vmul.f32 %v2469, %v2504
    %v2513 = vmul.f32 %v2471, %v2505
    %v2514 = vmul.f32 %v2473, %v2506
    %v2515 = vmul.f32 %v2475, %v2507
    %2516 = vrot.lane.b32.xlu0 %v1849, 120
    %v2517 = vpop.permute.xlu0 %2516
    %2518 = vrot.lane.b32.xlu0 %v1852, 120
    %v2519 = vpop.permute.xlu0 %2518
    %v2522 = vsel %vm209, %v2508, 0
    %v2525 = vsel %vm209, %v2509, 0
    %v2528 = vsel %vm209, %v2510, 0
    %v2531 = vsel %vm209, %v2511, 0
    %v2534 = vsel %vm209, %v2512, 0
    %v2537 = vsel %vm209, %v2513, 0
    %v2540 = vsel %vm209, %v2514, 0
    %v2543 = vsel %vm209, %v2515, 0
    %v2545 = vsel %vm239, %v2519, 0
    %2547 = vmatpush.msra.mxu0 0.0
    %2548 = vmatpush.msra.mxu0 0.0
    %2549 = vmatpush.msra.mxu0 0.0
    %2550 = vmatpush.msra.mxu0 0.0
    %2551 = vmatpush.msra.mxu0 0.0
    %2552 = vmatpush.msra.mxu0 0.0
    %2553 = vmatpush.msra.mxu0 0.0
    %2554 = vmatpush.msra.mxu0 0.0
    %2555 = vmatpush.msra.mxu0 0.0
    %2556 = vmatpush.msra.mxu0 0.0
    %2557 = vmatpush.msra.mxu0 0.0
    %2558 = vmatpush.msra.mxu0 0.0
    %2559 = vmatpush.msra.mxu0 0.0
    %2560 = vmatpush.msra.mxu0 0.0
    %2561 = vmatpush.msra.mxu0 %v2545
    %2562 = vmatpush.msra.mxu0 %v2517
    %2563 = vmatmul.f32.gmra.mxu0 %v2522
    %v2564 = vpop.f32.mrf.mxu0
    %v2565 = vadd.f32 0.0, %v2564
    %2566 = vmatmul.f32.gmra.mxu0 %v2525
    %v2567 = vpop.f32.mrf.mxu0
    %v2568 = vadd.f32 0.0, %v2567
    %2569 = vmatmul.f32.gmra.mxu0 %v2528
    %v2570 = vpop.f32.mrf.mxu0
    %v2571 = vadd.f32 0.0, %v2570
    %2572 = vmatmul.f32.gmra.mxu0 %v2531
    %v2573 = vpop.f32.mrf.mxu0
    %v2574 = vadd.f32 0.0, %v2573
    %2575 = vmatmul.f32.gmra.mxu0 %v2534
    %v2576 = vpop.f32.mrf.mxu0
    %v2577 = vadd.f32 0.0, %v2576
    %2578 = vmatmul.f32.gmra.mxu0 %v2537
    %v2579 = vpop.f32.mrf.mxu0
    %v2580 = vadd.f32 0.0, %v2579
    %2581 = vmatmul.f32.gmra.mxu0 %v2540
    %v2582 = vpop.f32.mrf.mxu0
    %v2583 = vadd.f32 0.0, %v2582
    %2584 = vmatmul.f32.gmra.mxu0 %v2543
    %v2585 = vpop.f32.mrf.mxu0
    %v2586 = vadd.f32 0.0, %v2585
    %2587 = vdwg.mxu0
    %2588 = vrot.lane.b32.xlu0 %v1747, 116
    %v2589 = vpop.permute.xlu0 %2588
    %2590 = vrot.lane.b32.xlu0 %v1750, 116
    %v2591 = vpop.permute.xlu0 %2590
    %2592 = vrot.lane.b32.xlu0 %v1753, 116
    %v2593 = vpop.permute.xlu0 %2592
    %2594 = vrot.lane.b32.xlu0 %v1756, 116
    %v2595 = vpop.permute.xlu0 %2594
    %2596 = vrot.lane.b32.xlu0 %v1759, 116
    %v2597 = vpop.permute.xlu0 %2596
    %2598 = vrot.lane.b32.xlu0 %v1762, 116
    %v2599 = vpop.permute.xlu0 %2598
    %2600 = vrot.lane.b32.xlu0 %v1765, 116
    %v2601 = vpop.permute.xlu0 %2600
    %2602 = vrot.lane.b32.xlu0 %v1768, 116
    %v2603 = vpop.permute.xlu0 %2602
    %2604 = vrot.lane.b32.xlu0 %v1800, 116
    %v2605 = vpop.permute.xlu0 %2604
    %2606 = vrot.lane.b32.xlu0 %v1803, 116
    %v2607 = vpop.permute.xlu0 %2606
    %v2608 = vsel %vm912, %v2589, 0
    %v2610 = vsel %vm912, %v2591, 0
    %v2612 = vsel %vm912, %v2593, 0
    %v2614 = vsel %vm912, %v2595, 0
    %v2616 = vsel %vm912, %v2597, 0
    %v2618 = vsel %vm912, %v2599, 0
    %v2620 = vsel %vm912, %v2601, 0
    %v2622 = vsel %vm912, %v2603, 0
    %v2624 = vsel %vm912, %v2605, 0
    %v2626 = vsel %vm912, %v2607, 0
    %2628 = vmatpush.xpose.msra.mxu0 0.0
    %2629 = vmatpush.xpose.msra.mxu0 0.0
    %2630 = vmatpush.xpose.msra.mxu0 0.0
    %2631 = vmatpush.xpose.msra.mxu0 0.0
    %2632 = vmatpush.xpose.msra.mxu0 0.0
    %2633 = vmatpush.xpose.msra.mxu0 0.0
    %2634 = vmatpush.xpose.msra.mxu0 0.0
    %2635 = vmatpush.xpose.msra.mxu0 0.0
    %2636 = vmatpush.xpose.msra.mxu0 0.0
    %2637 = vmatpush.xpose.msra.mxu0 0.0
    %2638 = vmatpush.xpose.msra.mxu0 0.0
    %2639 = vmatpush.xpose.msra.mxu0 0.0
    %2640 = vmatpush.xpose.msra.mxu0 0.0
    %2641 = vmatpush.xpose.msra.mxu0 0.0
    %2642 = vmatpush.xpose.msra.mxu0 %v2626
    %2643 = vmatpush.xpose.msra.mxu0 %v2624
    %2644 = vmatmul.f32.gmra.mxu0 %v2608
    %v2645 = vpop.f32.mrf.mxu0
    %v2646 = vadd.f32 0.0, %v2645
    %2647 = vmatmul.f32.gmra.mxu0 %v2610
    %v2648 = vpop.f32.mrf.mxu0
    %v2649 = vadd.f32 0.0, %v2648
    %2650 = vmatmul.f32.gmra.mxu0 %v2612
    %v2651 = vpop.f32.mrf.mxu0
    %v2652 = vadd.f32 0.0, %v2651
    %2653 = vmatmul.f32.gmra.mxu0 %v2614
    %v2654 = vpop.f32.mrf.mxu0
    %v2655 = vadd.f32 0.0, %v2654
    %2656 = vmatmul.f32.gmra.mxu0 %v2616
    %v2657 = vpop.f32.mrf.mxu0
    %v2658 = vadd.f32 0.0, %v2657
    %2659 = vmatmul.f32.gmra.mxu0 %v2618
    %v2660 = vpop.f32.mrf.mxu0
    %v2661 = vadd.f32 0.0, %v2660
    %2662 = vmatmul.f32.gmra.mxu0 %v2620
    %v2663 = vpop.f32.mrf.mxu0
    %v2664 = vadd.f32 0.0, %v2663
    %2665 = vmatmul.f32.gmra.mxu0 %v2622
    %v2666 = vpop.f32.mrf.mxu0
    %v2667 = vadd.f32 0.0, %v2666
    %2668 = vdwg.mxu0
    %v2669 = vmul.f32 %v2646, 0.5
    %v2670 = vmul.f32 %v2649, 0.5
    %v2671 = vmul.f32 %v2652, 0.5
    %v2672 = vmul.f32 %v2655, 0.5
    %v2673 = vmul.f32 %v2658, 0.5
    %v2674 = vmul.f32 %v2661, 0.5
    %v2675 = vmul.f32 %v2664, 0.5
    %v2676 = vmul.f32 %v2667, 0.5
    %v2677 = vsel %vm209, %v2669, -inf
    %2678 = vmax.xlane.f32.xlu0 %v2677
    %v2679 = vpop.xlane.xlu0 %2678
    %v2680 = vsel %vm209, %v2670, -inf
    %2681 = vmax.xlane.f32.xlu0 %v2680
    %v2682 = vpop.xlane.xlu0 %2681
    %v2683 = vsel %vm209, %v2671, -inf
    %2684 = vmax.xlane.f32.xlu0 %v2683
    %v2685 = vpop.xlane.xlu0 %2684
    %v2686 = vsel %vm209, %v2672, -inf
    %2687 = vmax.xlane.f32.xlu0 %v2686
    %v2688 = vpop.xlane.xlu0 %2687
    %v2689 = vsel %vm209, %v2673, -inf
    %2690 = vmax.xlane.f32.xlu0 %v2689
    %v2691 = vpop.xlane.xlu0 %2690
    %v2692 = vsel %vm209, %v2674, -inf
    %2693 = vmax.xlane.f32.xlu0 %v2692
    %v2694 = vpop.xlane.xlu0 %2693
    %v2695 = vsel %vm209, %v2675, -inf
    %2696 = vmax.xlane.f32.xlu0 %v2695
    %v2697 = vpop.xlane.xlu0 %2696
    %v2698 = vsel %vm209, %v2676, -inf
    %2699 = vmax.xlane.f32.xlu0 %v2698
    %v2700 = vpop.xlane.xlu0 %2699
    %v2701 = vsub.f32 %v2669, %v2679
    %v2702 = vsub.f32 %v2670, %v2682
    %v2703 = vsub.f32 %v2671, %v2685
    %v2704 = vsub.f32 %v2672, %v2688
    %v2705 = vsub.f32 %v2673, %v2691
    %v2706 = vsub.f32 %v2674, %v2694
    %v2707 = vsub.f32 %v2675, %v2697
    %v2708 = vsub.f32 %v2676, %v2700
    %v2709 = vmul.f32 %v2701, 1.442695
    %v2710 = vpow.pop %v2709
    %v2711 = vmul.f32 %v2702, 1.442695
    %v2712 = vpow.pop %v2711
    %v2713 = vmul.f32 %v2703, 1.442695
    %v2714 = vpow.pop %v2713
    %v2715 = vmul.f32 %v2704, 1.442695
    %v2716 = vpow.pop %v2715
    %v2717 = vmul.f32 %v2705, 1.442695
    %v2718 = vpow.pop %v2717
    %v2719 = vmul.f32 %v2706, 1.442695
    %v2720 = vpow.pop %v2719
    %v2721 = vmul.f32 %v2707, 1.442695
    %v2722 = vpow.pop %v2721
    %v2723 = vmul.f32 %v2708, 1.442695
    %v2724 = vpow.pop %v2723
    %v2725 = vsel %vm209, %v2710, 0.0
    %2726 = vadd.xlane.f32.xlu0 %v2725
    %v2727 = vpop.xlane.xlu0 %2726
    %v2728 = vsel %vm209, %v2712, 0.0
    %2729 = vadd.xlane.f32.xlu0 %v2728
    %v2730 = vpop.xlane.xlu0 %2729
    %v2731 = vsel %vm209, %v2714, 0.0
    %2732 = vadd.xlane.f32.xlu0 %v2731
    %v2733 = vpop.xlane.xlu0 %2732
    %v2734 = vsel %vm209, %v2716, 0.0
    %2735 = vadd.xlane.f32.xlu0 %v2734
    %v2736 = vpop.xlane.xlu0 %2735
    %v2737 = vsel %vm209, %v2718, 0.0
    %2738 = vadd.xlane.f32.xlu0 %v2737
    %v2739 = vpop.xlane.xlu0 %2738
    %v2740 = vsel %vm209, %v2720, 0.0
    %2741 = vadd.xlane.f32.xlu0 %v2740
    %v2742 = vpop.xlane.xlu0 %2741
    %v2743 = vsel %vm209, %v2722, 0.0
    %2744 = vadd.xlane.f32.xlu0 %v2743
    %v2745 = vpop.xlane.xlu0 %2744
    %v2746 = vsel %vm209, %v2724, 0.0
    %2747 = vadd.xlane.f32.xlu0 %v2746
    %v2748 = vpop.xlane.xlu0 %2747
    %v2749 = vrcp.pop %v2727
    %v2750 = vrcp.pop %v2730
    %v2751 = vrcp.pop %v2733
    %v2752 = vrcp.pop %v2736
    %v2753 = vrcp.pop %v2739
    %v2754 = vrcp.pop %v2742
    %v2755 = vrcp.pop %v2745
    %v2756 = vrcp.pop %v2748
    %v2757 = vmul.f32 %v2710, %v2749
    %v2758 = vmul.f32 %v2712, %v2750
    %v2759 = vmul.f32 %v2714, %v2751
    %v2760 = vmul.f32 %v2716, %v2752
    %v2761 = vmul.f32 %v2718, %v2753
    %v2762 = vmul.f32 %v2720, %v2754
    %v2763 = vmul.f32 %v2722, %v2755
    %v2764 = vmul.f32 %v2724, %v2756
    %2765 = vrot.lane.b32.xlu0 %v1849, 116
    %v2766 = vpop.permute.xlu0 %2765
    %2767 = vrot.lane.b32.xlu0 %v1852, 116
    %v2768 = vpop.permute.xlu0 %2767
    %v2771 = vsel %vm209, %v2757, 0
    %v2774 = vsel %vm209, %v2758, 0
    %v2777 = vsel %vm209, %v2759, 0
    %v2780 = vsel %vm209, %v2760, 0
    %v2783 = vsel %vm209, %v2761, 0
    %v2786 = vsel %vm209, %v2762, 0
    %v2789 = vsel %vm209, %v2763, 0
    %v2792 = vsel %vm209, %v2764, 0
    %v2794 = vsel %vm239, %v2768, 0
    %2796 = vmatpush.msra.mxu0 0.0
    %2797 = vmatpush.msra.mxu0 0.0
    %2798 = vmatpush.msra.mxu0 0.0
    %2799 = vmatpush.msra.mxu0 0.0
    %2800 = vmatpush.msra.mxu0 0.0
    %2801 = vmatpush.msra.mxu0 0.0
    %2802 = vmatpush.msra.mxu0 0.0
    %2803 = vmatpush.msra.mxu0 0.0
    %2804 = vmatpush.msra.mxu0 0.0
    %2805 = vmatpush.msra.mxu0 0.0
    %2806 = vmatpush.msra.mxu0 0.0
    %2807 = vmatpush.msra.mxu0 0.0
    %2808 = vmatpush.msra.mxu0 0.0
    %2809 = vmatpush.msra.mxu0 0.0
    %2810 = vmatpush.msra.mxu0 %v2794
    %2811 = vmatpush.msra.mxu0 %v2766
    %2812 = vmatmul.f32.gmra.mxu0 %v2771
    %v2813 = vpop.f32.mrf.mxu0
    %v2814 = vadd.f32 0.0, %v2813
    %2815 = vmatmul.f32.gmra.mxu0 %v2774
    %v2816 = vpop.f32.mrf.mxu0
    %v2817 = vadd.f32 0.0, %v2816
    %2818 = vmatmul.f32.gmra.mxu0 %v2777
    %v2819 = vpop.f32.mrf.mxu0
    %v2820 = vadd.f32 0.0, %v2819
    %2821 = vmatmul.f32.gmra.mxu0 %v2780
    %v2822 = vpop.f32.mrf.mxu0
    %v2823 = vadd.f32 0.0, %v2822
    %2824 = vmatmul.f32.gmra.mxu0 %v2783
    %v2825 = vpop.f32.mrf.mxu0
    %v2826 = vadd.f32 0.0, %v2825
    %2827 = vmatmul.f32.gmra.mxu0 %v2786
    %v2828 = vpop.f32.mrf.mxu0
    %v2829 = vadd.f32 0.0, %v2828
    %2830 = vmatmul.f32.gmra.mxu0 %v2789
    %v2831 = vpop.f32.mrf.mxu0
    %v2832 = vadd.f32 0.0, %v2831
    %2833 = vmatmul.f32.gmra.mxu0 %v2792
    %v2834 = vpop.f32.mrf.mxu0
    %v2835 = vadd.f32 0.0, %v2834
    %2836 = vdwg.mxu0
    %2845 = vrot.lane.b32.xlu0 %v2316, 4
    %v2846 = vpop.permute.xlu0 %2845
    %2847 = vrot.lane.b32.xlu0 %v2319, 4
    %v2848 = vpop.permute.xlu0 %2847
    %2849 = vrot.lane.b32.xlu0 %v2322, 4
    %v2850 = vpop.permute.xlu0 %2849
    %2851 = vrot.lane.b32.xlu0 %v2325, 4
    %v2852 = vpop.permute.xlu0 %2851
    %2853 = vrot.lane.b32.xlu0 %v2328, 4
    %v2854 = vpop.permute.xlu0 %2853
    %2855 = vrot.lane.b32.xlu0 %v2331, 4
    %v2856 = vpop.permute.xlu0 %2855
    %2857 = vrot.lane.b32.xlu0 %v2334, 4
    %v2858 = vpop.permute.xlu0 %2857
    %2859 = vrot.lane.b32.xlu0 %v2337, 4
    %v2860 = vpop.permute.xlu0 %2859
    %2877 = vrot.lane.b32.xlu0 %v2565, 8
    %v2878 = vpop.permute.xlu0 %2877
    %2879 = vrot.lane.b32.xlu0 %v2568, 8
    %v2880 = vpop.permute.xlu0 %2879
    %2881 = vrot.lane.b32.xlu0 %v2571, 8
    %v2882 = vpop.permute.xlu0 %2881
    %2883 = vrot.lane.b32.xlu0 %v2574, 8
    %v2884 = vpop.permute.xlu0 %2883
    %2885 = vrot.lane.b32.xlu0 %v2577, 8
    %v2886 = vpop.permute.xlu0 %2885
    %2887 = vrot.lane.b32.xlu0 %v2580, 8
    %v2888 = vpop.permute.xlu0 %2887
    %2889 = vrot.lane.b32.xlu0 %v2583, 8
    %v2890 = vpop.permute.xlu0 %2889
    %2891 = vrot.lane.b32.xlu0 %v2586, 8
    %v2892 = vpop.permute.xlu0 %2891
    %2909 = vrot.lane.b32.xlu0 %v2814, 12
    %v2910 = vpop.permute.xlu0 %2909
    %2911 = vrot.lane.b32.xlu0 %v2817, 12
    %v2912 = vpop.permute.xlu0 %2911
    %2913 = vrot.lane.b32.xlu0 %v2820, 12
    %v2914 = vpop.permute.xlu0 %2913
    %2915 = vrot.lane.b32.xlu0 %v2823, 12
    %v2916 = vpop.permute.xlu0 %2915
    %2917 = vrot.lane.b32.xlu0 %v2826, 12
    %v2918 = vpop.permute.xlu0 %2917
    %2919 = vrot.lane.b32.xlu0 %v2829, 12
    %v2920 = vpop.permute.xlu0 %2919
    %2921 = vrot.lane.b32.xlu0 %v2832, 12
    %v2922 = vpop.permute.xlu0 %2921
    %2923 = vrot.lane.b32.xlu0 %v2835, 12
    %v2924 = vpop.permute.xlu0 %2923
    %v2933 = vsel %vm912, %v2066, %v2846
    %v2934 = vsel %vm912, %v2069, %v2848
    %v2935 = vsel %vm912, %v2072, %v2850
    %v2936 = vsel %vm912, %v2075, %v2852
    %v2937 = vsel %vm912, %v2078, %v2854
    %v2938 = vsel %vm912, %v2081, %v2856
    %v2939 = vsel %vm912, %v2084, %v2858
    %v2940 = vsel %vm912, %v2087, %v2860
    %v2941 = vsel %vm171, %v2933, %v2878
    %v2942 = vsel %vm171, %v2934, %v2880
    %v2943 = vsel %vm171, %v2935, %v2882
    %v2944 = vsel %vm171, %v2936, %v2884
    %v2945 = vsel %vm171, %v2937, %v2886
    %v2946 = vsel %vm171, %v2938, %v2888
    %v2947 = vsel %vm171, %v2939, %v2890
    %v2948 = vsel %vm171, %v2940, %v2892
    %v2949 = vsel %vm1477, %v2941, %v2910
    %v2950 = vsel %vm1477, %v2942, %v2912
    %v2951 = vsel %vm1477, %v2943, %v2914
    %v2952 = vsel %vm1477, %v2944, %v2916
    %v2953 = vsel %vm1477, %v2945, %v2918
    %v2954 = vsel %vm1477, %v2946, %v2920
    %v2955 = vsel %vm1477, %v2947, %v2922
    %v2956 = vsel %vm1477, %v2948, %v2924
    %2959 = vrot.lane.b32.xlu0 %v1480, 96
    %v2960 = vpop.permute.xlu0 %2959
    %2961 = vrot.lane.b32.xlu0 %v1481, 96
    %v2962 = vpop.permute.xlu0 %2961
    %2965 = vrot.lane.b32.xlu0 %v1775, 96
    %v2966 = vpop.permute.xlu0 %2965
    %v2969 = vsel %vm590, %v2949, 0
    %v2972 = vsel %vm590, %v2950, 0
    %v2975 = vsel %vm590, %v2951, 0
    %v2978 = vsel %vm590, %v2952, 0
    %v2981 = vsel %vm590, %v2953, 0
    %v2984 = vsel %vm590, %v2954, 0
    %v2987 = vsel %vm590, %v2955, 0
    %v2990 = vsel %vm590, %v2956, 0
    %2992 = vmatpush.msra.mxu0 0.0
    %2993 = vmatpush.msra.mxu0 0.0
    %2994 = vmatpush.msra.mxu0 0.0
    %2995 = vmatpush.msra.mxu0 0.0
    %2996 = vmatpush.msra.mxu0 0.0
    %2997 = vmatpush.msra.mxu0 0.0
    %2998 = vmatpush.msra.mxu0 0.0
    %2999 = vmatpush.msra.mxu0 0.0
    %3000 = vmatpush.msra.mxu0 0.0
    %3001 = vmatpush.msra.mxu0 0.0
    %3002 = vmatpush.msra.mxu0 0.0
    %3003 = vmatpush.msra.mxu0 0.0
    %3004 = vmatpush.msra.mxu0 0.0
    %3005 = vmatpush.msra.mxu0 0.0
    %3006 = vmatpush.msra.mxu0 %v2962
    %3007 = vmatpush.msra.mxu0 %v2960
    %3008 = vmatmul.f32.gmra.mxu0 %v2969
    %v3009 = vpop.f32.mrf.mxu0
    %v3010 = vadd.f32 %v2966, %v3009
    %3011 = vmatmul.f32.gmra.mxu0 %v2972
    %v3012 = vpop.f32.mrf.mxu0
    %v3013 = vadd.f32 %v2966, %v3012
    %3014 = vmatmul.f32.gmra.mxu0 %v2975
    %v3015 = vpop.f32.mrf.mxu0
    %v3016 = vadd.f32 %v2966, %v3015
    %3017 = vmatmul.f32.gmra.mxu0 %v2978
    %v3018 = vpop.f32.mrf.mxu0
    %v3019 = vadd.f32 %v2966, %v3018
    %3020 = vmatmul.f32.gmra.mxu0 %v2981
    %v3021 = vpop.f32.mrf.mxu0
    %v3022 = vadd.f32 %v2966, %v3021
    %3023 = vmatmul.f32.gmra.mxu0 %v2984
    %v3024 = vpop.f32.mrf.mxu0
    %v3025 = vadd.f32 %v2966, %v3024
    %3026 = vmatmul.f32.gmra.mxu0 %v2987
    %v3027 = vpop.f32.mrf.mxu0
    %v3028 = vadd.f32 %v2966, %v3027
    %3029 = vmatmul.f32.gmra.mxu0 %v2990
    %v3030 = vpop.f32.mrf.mxu0
    %v3031 = vadd.f32 %v2966, %v3030
    %3032 = vdwg.mxu0
    %v3033 = vadd.f32 %v38, %v3010
    %v3034 = vadd.f32 %v39, %v3013
    %v3035 = vadd.f32 %v40, %v3016
    %v3036 = vadd.f32 %v41, %v3019
    %v3037 = vadd.f32 %v42, %v3022
    %v3038 = vadd.f32 %v43, %v3025
    %v3039 = vadd.f32 %v44, %v3028
    %v3040 = vadd.f32 %v45, %v3031
    %v3041 = vsel %vm60, %v3033, 0.0
    %3042 = vadd.xlane.f32.xlu0 %v3041
    %v3043 = vpop.xlane.xlu0 %3042
    %v3044 = vsel %vm60, %v3034, 0.0
    %3045 = vadd.xlane.f32.xlu0 %v3044
    %v3046 = vpop.xlane.xlu0 %3045
    %v3047 = vsel %vm60, %v3035, 0.0
    %3048 = vadd.xlane.f32.xlu0 %v3047
    %v3049 = vpop.xlane.xlu0 %3048
    %v3050 = vsel %vm60, %v3036, 0.0
    %3051 = vadd.xlane.f32.xlu0 %v3050
    %v3052 = vpop.xlane.xlu0 %3051
    %v3053 = vsel %vm60, %v3037, 0.0
    %3054 = vadd.xlane.f32.xlu0 %v3053
    %v3055 = vpop.xlane.xlu0 %3054
    %v3056 = vsel %vm60, %v3038, 0.0
    %3057 = vadd.xlane.f32.xlu0 %v3056
    %v3058 = vpop.xlane.xlu0 %3057
    %v3059 = vsel %vm60, %v3039, 0.0
    %3060 = vadd.xlane.f32.xlu0 %v3059
    %v3061 = vpop.xlane.xlu0 %3060
    %v3062 = vsel %vm60, %v3040, 0.0
    %3063 = vadd.xlane.f32.xlu0 %v3062
    %v3064 = vpop.xlane.xlu0 %3063
    %v3065 = vmul.f32 %v3043, %v653
    %v3066 = vmul.f32 %v3046, %v653
    %v3067 = vmul.f32 %v3049, %v653
    %v3068 = vmul.f32 %v3052, %v653
    %v3069 = vmul.f32 %v3055, %v653
    %v3070 = vmul.f32 %v3058, %v653
    %v3071 = vmul.f32 %v3061, %v653
    %v3072 = vmul.f32 %v3064, %v653
    %v3073 = vsub.f32 %v3033, %v3065
    %v3074 = vsub.f32 %v3034, %v3066
    %v3075 = vsub.f32 %v3035, %v3067
    %v3076 = vsub.f32 %v3036, %v3068
    %v3077 = vsub.f32 %v3037, %v3069
    %v3078 = vsub.f32 %v3038, %v3070
    %v3079 = vsub.f32 %v3039, %v3071
    %v3080 = vsub.f32 %v3040, %v3072
    %v3081 = vmul.f32 %v3073, %v3073
    %v3082 = vmul.f32 %v3074, %v3074
    %v3083 = vmul.f32 %v3075, %v3075
    %v3084 = vmul.f32 %v3076, %v3076
    %v3085 = vmul.f32 %v3077, %v3077
    %v3086 = vmul.f32 %v3078, %v3078
    %v3087 = vmul.f32 %v3079, %v3079
    %v3088 = vmul.f32 %v3080, %v3080
    %v3089 = vsel %vm60, %v3081, 0.0
    %3090 = vadd.xlane.f32.xlu0 %v3089
    %v3091 = vpop.xlane.xlu0 %3090
    %v3092 = vsel %vm60, %v3082, 0.0
    %3093 = vadd.xlane.f32.xlu0 %v3092
    %v3094 = vpop.xlane.xlu0 %3093
    %v3095 = vsel %vm60, %v3083, 0.0
    %3096 = vadd.xlane.f32.xlu0 %v3095
    %v3097 = vpop.xlane.xlu0 %3096
    %v3098 = vsel %vm60, %v3084, 0.0
    %3099 = vadd.xlane.f32.xlu0 %v3098
    %v3100 = vpop.xlane.xlu0 %3099
    %v3101 = vsel %vm60, %v3085, 0.0
    %3102 = vadd.xlane.f32.xlu0 %v3101
    %v3103 = vpop.xlane.xlu0 %3102
    %v3104 = vsel %vm60, %v3086, 0.0
    %3105 = vadd.xlane.f32.xlu0 %v3104
    %v3106 = vpop.xlane.xlu0 %3105
    %v3107 = vsel %vm60, %v3087, 0.0
    %3108 = vadd.xlane.f32.xlu0 %v3107
    %v3109 = vpop.xlane.xlu0 %3108
    %v3110 = vsel %vm60, %v3088, 0.0
    %3111 = vadd.xlane.f32.xlu0 %v3110
    %v3112 = vpop.xlane.xlu0 %3111
    %v3113 = vmul.f32 %v3091, %v653
    %v3114 = vmul.f32 %v3094, %v653
    %v3115 = vmul.f32 %v3097, %v653
    %v3116 = vmul.f32 %v3100, %v653
    %v3117 = vmul.f32 %v3103, %v653
    %v3118 = vmul.f32 %v3106, %v653
    %v3119 = vmul.f32 %v3109, %v653
    %v3120 = vmul.f32 %v3112, %v653
    %v3121 = vadd.f32 %v3113, 1e-05
    %v3122 = vadd.f32 %v3114, 1e-05
    %v3123 = vadd.f32 %v3115, 1e-05
    %v3124 = vadd.f32 %v3116, 1e-05
    %v3125 = vadd.f32 %v3117, 1e-05
    %v3126 = vadd.f32 %v3118, 1e-05
    %v3127 = vadd.f32 %v3119, 1e-05
    %v3128 = vadd.f32 %v3120, 1e-05
    %v3129 = vrsqrt.pop %v3121
    %v3130 = vmul.f32 %v3129, %v3121
    %v3131 = vmul.f32 %v3130, %v3129
    %v3132 = vmul.f32 0.5, %v3131
    %v3133 = vsub.f32 1.5, %v3132
    %v3134 = vmul.f32 %v3129, %v3133
    %vm3135 = vweird.f32 %v3121
    %vm3136 = vweird.f32 %v3129
    %vm3137 = vmor %vm3135, %vm3136
    %v3138 = vsel %vm3137, %v3129, %v3134
    %v3139 = vrsqrt.pop %v3122
    %v3140 = vmul.f32 %v3139, %v3122
    %v3141 = vmul.f32 %v3140, %v3139
    %v3142 = vmul.f32 0.5, %v3141
    %v3143 = vsub.f32 1.5, %v3142
    %v3144 = vmul.f32 %v3139, %v3143
    %vm3145 = vweird.f32 %v3122
    %vm3146 = vweird.f32 %v3139
    %vm3147 = vmor %vm3145, %vm3146
    %v3148 = vsel %vm3147, %v3139, %v3144
    %v3149 = vrsqrt.pop %v3123
    %v3150 = vmul.f32 %v3149, %v3123
    %v3151 = vmul.f32 %v3150, %v3149
    %v3152 = vmul.f32 0.5, %v3151
    %v3153 = vsub.f32 1.5, %v3152
    %v3154 = vmul.f32 %v3149, %v3153
    %vm3155 = vweird.f32 %v3123
    %vm3156 = vweird.f32 %v3149
    %vm3157 = vmor %vm3155, %vm3156
    %v3158 = vsel %vm3157, %v3149, %v3154
    %v3159 = vrsqrt.pop %v3124
    %v3160 = vmul.f32 %v3159, %v3124
    %v3161 = vmul.f32 %v3160, %v3159
    %v3162 = vmul.f32 0.5, %v3161
    %v3163 = vsub.f32 1.5, %v3162
    %v3164 = vmul.f32 %v3159, %v3163
    %vm3165 = vweird.f32 %v3124
    %vm3166 = vweird.f32 %v3159
    %vm3167 = vmor %vm3165, %vm3166
    %v3168 = vsel %vm3167, %v3159, %v3164
    %v3169 = vrsqrt.pop %v3125
    %v3170 = vmul.f32 %v3169, %v3125
    %v3171 = vmul.f32 %v3170, %v3169
    %v3172 = vmul.f32 0.5, %v3171
    %v3173 = vsub.f32 1.5, %v3172
    %v3174 = vmul.f32 %v3169, %v3173
    %vm3175 = vweird.f32 %v3125
    %vm3176 = vweird.f32 %v3169
    %vm3177 = vmor %vm3175, %vm3176
    %v3178 = vsel %vm3177, %v3169, %v3174
    %v3179 = vrsqrt.pop %v3126
    %v3180 = vmul.f32 %v3179, %v3126
    %v3181 = vmul.f32 %v3180, %v3179
    %v3182 = vmul.f32 0.5, %v3181
    %v3183 = vsub.f32 1.5, %v3182
    %v3184 = vmul.f32 %v3179, %v3183
    %vm3185 = vweird.f32 %v3126
    %vm3186 = vweird.f32 %v3179
    %vm3187 = vmor %vm3185, %vm3186
    %v3188 = vsel %vm3187, %v3179, %v3184
    %v3189 = vrsqrt.pop %v3127
    %v3190 = vmul.f32 %v3189, %v3127
    %v3191 = vmul.f32 %v3190, %v3189
    %v3192 = vmul.f32 0.5, %v3191
    %v3193 = vsub.f32 1.5, %v3192
    %v3194 = vmul.f32 %v3189, %v3193
    %vm3195 = vweird.f32 %v3127
    %vm3196 = vweird.f32 %v3189
    %vm3197 = vmor %vm3195, %vm3196
    %v3198 = vsel %vm3197, %v3189, %v3194
    %v3199 = vrsqrt.pop %v3128
    %v3200 = vmul.f32 %v3199, %v3128
    %v3201 = vmul.f32 %v3200, %v3199
    %v3202 = vmul.f32 0.5, %v3201
    %v3203 = vsub.f32 1.5, %v3202
    %v3204 = vmul.f32 %v3199, %v3203
    %vm3205 = vweird.f32 %v3128
    %vm3206 = vweird.f32 %v3199
    %vm3207 = vmor %vm3205, %vm3206
    %v3208 = vsel %vm3207, %v3199, %v3204
    %v3209 = vmul.f32 %v3073, %v3138
    %v3210 = vmul.f32 %v3074, %v3148
    %v3211 = vmul.f32 %v3075, %v3158
    %v3212 = vmul.f32 %v3076, %v3168
    %v3213 = vmul.f32 %v3077, %v3178
    %v3214 = vmul.f32 %v3078, %v3188
    %v3215 = vmul.f32 %v3079, %v3198
    %v3216 = vmul.f32 %v3080, %v3208
    %3217 = vrot.lane.b32.xlu0 %v1775, 64
    %v3218 = vpop.permute.xlu0 %3217
    %v3220 = vmul.f32 %v3209, %v3218
    %v3221 = vmul.f32 %v3210, %v3218
    %v3222 = vmul.f32 %v3211, %v3218
    %v3223 = vmul.f32 %v3212, %v3218
    %v3224 = vmul.f32 %v3213, %v3218
    %v3225 = vmul.f32 %v3214, %v3218
    %v3226 = vmul.f32 %v3215, %v3218
    %v3227 = vmul.f32 %v3216, %v3218
    %3228 = vrot.lane.b32.xlu0 %v1775, 32
    %v3229 = vpop.permute.xlu0 %3228
    %v3231 = vadd.f32 %v3220, %v3229
    %v3232 = vadd.f32 %v3221, %v3229
    %v3233 = vadd.f32 %v3222, %v3229
    %v3234 = vadd.f32 %v3223, %v3229
    %v3235 = vadd.f32 %v3224, %v3229
    %v3236 = vadd.f32 %v3225, %v3229
    %v3237 = vadd.f32 %v3226, %v3229
    %v3238 = vadd.f32 %v3227, %v3229
    %v3239 = vld [vmem:[#allocation2 + $0x2e8] sm:$0x1]
    %v3240 = vperm.slane %v3239, 0
    %3241 = vrot.lane.b32.xlu0 %v1770, 96
    %v3242 = vpop.permute.xlu0 %3241
    %3243 = vrot.lane.b32.xlu0 %v1771, 96
    %v3244 = vpop.permute.xlu0 %3243
    %3245 = vrot.lane.b32.xlu0 %v1772, 96
    %v3246 = vpop.permute.xlu0 %3245
    %3247 = vrot.lane.b32.xlu0 %v1773, 96
    %v3248 = vpop.permute.xlu0 %3247
    %3253 = vmatpush.msra.mxu0 0.0
    %3254 = vmatpush.msra.mxu0 0.0
    %3255 = vmatpush.msra.mxu0 0.0
    %3256 = vmatpush.msra.mxu0 0.0
    %3257 = vmatpush.msra.mxu0 0.0
    %3258 = vmatpush.msra.mxu0 0.0
    %3259 = vmatpush.msra.mxu0 0.0
    %3260 = vmatpush.msra.mxu0 0.0
    %3261 = vmatpush.msra.mxu0 0.0
    %3262 = vmatpush.msra.mxu0 0.0
    %3263 = vmatpush.msra.mxu0 0.0
    %3264 = vmatpush.msra.mxu0 0.0
    %3265 = vmatpush.msra.mxu0 %v3248
    %3266 = vmatpush.msra.mxu0 %v3246
    %3267 = vmatpush.msra.mxu0 %v3244
    %3268 = vmatpush.msra.mxu0 %v3242
    %3269 = vmatmul.f32.gmra.mxu0 %v1777
    %v3270 = vpop.f32.mrf.mxu0
    %v3271 = vadd.f32 %v3240, %v3270
    %3272 = vmatmul.f32.gmra.mxu0 %v1780
    %v3273 = vpop.f32.mrf.mxu0
    %v3274 = vadd.f32 %v3240, %v3273
    %3275 = vdwg.mxu0
    %3276 = vrot.lane.b32.xlu0 %v1770, 64
    %v3277 = vpop.permute.xlu0 %3276
    %3278 = vrot.lane.b32.xlu0 %v1771, 64
    %v3279 = vpop.permute.xlu0 %3278
    %3280 = vrot.lane.b32.xlu0 %v1772, 64
    %v3281 = vpop.permute.xlu0 %3280
    %3282 = vrot.lane.b32.xlu0 %v1773, 64
    %v3283 = vpop.permute.xlu0 %3282
    %3289 = vrot.lane.b32.xlu0 %v3240, 96
    %v3290 = vpop.permute.xlu0 %3289
    %3292 = vmatpush.msra.mxu0 0.0
    %3293 = vmatpush.msra.mxu0 0.0
    %3294 = vmatpush.msra.mxu0 0.0
    %3295 = vmatpush.msra.mxu0 0.0
    %3296 = vmatpush.msra.mxu0 0.0
    %3297 = vmatpush.msra.mxu0 0.0
    %3298 = vmatpush.msra.mxu0 0.0
    %3299 = vmatpush.msra.mxu0 0.0
    %3300 = vmatpush.msra.mxu0 0.0
    %3301 = vmatpush.msra.mxu0 0.0
    %3302 = vmatpush.msra.mxu0 0.0
    %3303 = vmatpush.msra.mxu0 0.0
    %3304 = vmatpush.msra.mxu0 %v3283
    %3305 = vmatpush.msra.mxu0 %v3281
    %3306 = vmatpush.msra.mxu0 %v3279
    %3307 = vmatpush.msra.mxu0 %v3277
    %3308 = vmatmul.f32.gmra.mxu0 %v1777
    %v3309 = vpop.f32.mrf.mxu0
    %v3310 = vadd.f32 %v3290, %v3309
    %3311 = vmatmul.f32.gmra.mxu0 %v1780
    %v3312 = vpop.f32.mrf.mxu0
    %v3313 = vadd.f32 %v3290, %v3312
    %3314 = vdwg.mxu0
    %3315 = vrot.lane.b32.xlu0 %v1770, 32
    %v3316 = vpop.permute.xlu0 %3315
    %3317 = vrot.lane.b32.xlu0 %v1771, 32
    %v3318 = vpop.permute.xlu0 %3317
    %3319 = vrot.lane.b32.xlu0 %v1772, 32
    %v3320 = vpop.permute.xlu0 %3319
    %3321 = vrot.lane.b32.xlu0 %v1773, 32
    %v3322 = vpop.permute.xlu0 %3321
    %3327 = vrot.lane.b32.xlu0 %v3240, 64
    %v3328 = vpop.permute.xlu0 %3327
    %3330 = vmatpush.msra.mxu0 0.0
    %3331 = vmatpush.msra.mxu0 0.0
    %3332 = vmatpush.msra.mxu0 0.0
    %3333 = vmatpush.msra.mxu0 0.0
    %3334 = vmatpush.msra.mxu0 0.0
    %3335 = vmatpush.msra.mxu0 0.0
    %3336 = vmatpush.msra.mxu0 0.0
    %3337 = vmatpush.msra.mxu0 0.0
    %3338 = vmatpush.msra.mxu0 0.0
    %3339 = vmatpush.msra.mxu0 0.0
    %3340 = vmatpush.msra.mxu0 0.0
    %3341 = vmatpush.msra.mxu0 0.0
    %3342 = vmatpush.msra.mxu0 %v3322
    %3343 = vmatpush.msra.mxu0 %v3320
    %3344 = vmatpush.msra.mxu0 %v3318
    %3345 = vmatpush.msra.mxu0 %v3316
    %3346 = vmatmul.f32.gmra.mxu0 %v1826
    %v3347 = vpop.f32.mrf.mxu0
    %v3348 = vadd.f32 %v3328, %v3347
    %3349 = vmatmul.f32.gmra.mxu0 %v1829
    %v3350 = vpop.f32.mrf.mxu0
    %v3351 = vadd.f32 %v3328, %v3350
    %3352 = vdwg.mxu0
    %v3354 = vsel %vm171, %v3271, 0
    %v3357 = vsel %vm171, %v3274, 0
    %v3360 = vsel %vm171, %v3310, 0
    %v3363 = vsel %vm171, %v3313, 0
    %3365 = vmatpush.xpose.msra.mxu0 0.0
    %3366 = vmatpush.xpose.msra.mxu0 0.0
    %3367 = vmatpush.xpose.msra.mxu0 0.0
    %3368 = vmatpush.xpose.msra.mxu0 0.0
    %3369 = vmatpush.xpose.msra.mxu0 0.0
    %3370 = vmatpush.xpose.msra.mxu0 0.0
    %3371 = vmatpush.xpose.msra.mxu0 0.0
    %3372 = vmatpush.xpose.msra.mxu0 0.0
    %3373 = vmatpush.xpose.msra.mxu0 0.0
    %3374 = vmatpush.xpose.msra.mxu0 0.0
    %3375 = vmatpush.xpose.msra.mxu0 0.0
    %3376 = vmatpush.xpose.msra.mxu0 0.0
    %3377 = vmatpush.xpose.msra.mxu0 0.0
    %3378 = vmatpush.xpose.msra.mxu0 0.0
    %3379 = vmatpush.xpose.msra.mxu0 %v3363
    %3380 = vmatpush.xpose.msra.mxu0 %v3360
    %3381 = vmatmul.f32.gmra.mxu0 %v3354
    %v3382 = vpop.f32.mrf.mxu0
    %v3383 = vadd.f32 0.0, %v3382
    %3384 = vmatmul.f32.gmra.mxu0 %v3357
    %v3385 = vpop.f32.mrf.mxu0
    %v3386 = vadd.f32 0.0, %v3385
    %3387 = vdwg.mxu0
    %v3388 = vmul.f32 %v3383, 0.35355338
    %v3389 = vmul.f32 %v3386, 0.35355338
    %v3390 = vsel %vm209, %v3388, -inf
    %3391 = vmax.xlane.f32.xlu0 %v3390
    %v3392 = vpop.xlane.xlu0 %3391
    %v3393 = vsel %vm213, %v3389, -inf
    %3394 = vmax.xlane.f32.xlu0 %v3393
    %v3395 = vpop.xlane.xlu0 %3394
    %v3396 = vsub.f32 %v3388, %v3392
    %v3397 = vsub.f32 %v3389, %v3395
    %v3398 = vmul.f32 %v3396, 1.442695
    %v3399 = vpow.pop %v3398
    %v3400 = vmul.f32 %v3397, 1.442695
    %v3401 = vpow.pop %v3400
    %v3402 = vsel %vm209, %v3399, 0.0
    %3403 = vadd.xlane.f32.xlu0 %v3402
    %v3404 = vpop.xlane.xlu0 %3403
    %v3405 = vsel %vm213, %v3401, 0.0
    %3406 = vadd.xlane.f32.xlu0 %v3405
    %v3407 = vpop.xlane.xlu0 %3406
    %v3408 = vrcp.pop %v3404
    %v3409 = vrcp.pop %v3407
    %v3410 = vmul.f32 %v3399, %v3408
    %v3411 = vmul.f32 %v3401, %v3409
    %v3413 = vsel %vm209, %v3410, 0
    %v3416 = vsel %vm209, %v3411, 0
    %v3419 = vsel %vm239, %v3351, 0
    %3421 = vmatpush.msra.mxu0 0.0
    %3422 = vmatpush.msra.mxu0 0.0
    %3423 = vmatpush.msra.mxu0 0.0
    %3424 = vmatpush.msra.mxu0 0.0
    %3425 = vmatpush.msra.mxu0 0.0
    %3426 = vmatpush.msra.mxu0 0.0
    %3427 = vmatpush.msra.mxu0 0.0
    %3428 = vmatpush.msra.mxu0 0.0
    %3429 = vmatpush.msra.mxu0 0.0
    %3430 = vmatpush.msra.mxu0 0.0
    %3431 = vmatpush.msra.mxu0 0.0
    %3432 = vmatpush.msra.mxu0 0.0
    %3433 = vmatpush.msra.mxu0 0.0
    %3434 = vmatpush.msra.mxu0 0.0
    %3435 = vmatpush.msra.mxu0 %v3419
    %3436 = vmatpush.msra.mxu0 %v3348
    %3437 = vmatmul.f32.gmra.mxu0 %v3413
    %v3438 = vpop.f32.mrf.mxu0
    %v3439 = vadd.f32 0.0, %v3438
    %3440 = vmatmul.f32.gmra.mxu0 %v3416
    %v3441 = vpop.f32.mrf.mxu0
    %v3442 = vadd.f32 0.0, %v3441
    %3443 = vdwg.mxu0
    %3444 = vrot.lane.b32.xlu0 %v3271, 120
    %v3445 = vpop.permute.xlu0 %3444
    %3446 = vrot.lane.b32.xlu0 %v3274, 120
    %v3447 = vpop.permute.xlu0 %3446
    %3448 = vrot.lane.b32.xlu0 %v3310, 120
    %v3449 = vpop.permute.xlu0 %3448
    %3450 = vrot.lane.b32.xlu0 %v3313, 120
    %v3451 = vpop.permute.xlu0 %3450
    %v3452 = vsel %vm171, %v3445, 0
    %v3454 = vsel %vm171, %v3447, 0
    %v3456 = vsel %vm171, %v3449, 0
    %v3458 = vsel %vm171, %v3451, 0
    %3460 = vmatpush.xpose.msra.mxu0 0.0
    %3461 = vmatpush.xpose.msra.mxu0 0.0
    %3462 = vmatpush.xpose.msra.mxu0 0.0
    %3463 = vmatpush.xpose.msra.mxu0 0.0
    %3464 = vmatpush.xpose.msra.mxu0 0.0
    %3465 = vmatpush.xpose.msra.mxu0 0.0
    %3466 = vmatpush.xpose.msra.mxu0 0.0
    %3467 = vmatpush.xpose.msra.mxu0 0.0
    %3468 = vmatpush.xpose.msra.mxu0 0.0
    %3469 = vmatpush.xpose.msra.mxu0 0.0
    %3470 = vmatpush.xpose.msra.mxu0 0.0
    %3471 = vmatpush.xpose.msra.mxu0 0.0
    %3472 = vmatpush.xpose.msra.mxu0 0.0
    %3473 = vmatpush.xpose.msra.mxu0 0.0
    %3474 = vmatpush.xpose.msra.mxu0 %v3458
    %3475 = vmatpush.xpose.msra.mxu0 %v3456
    %3476 = vmatmul.f32.gmra.mxu0 %v3452
    %v3477 = vpop.f32.mrf.mxu0
    %v3478 = vadd.f32 0.0, %v3477
    %3479 = vmatmul.f32.gmra.mxu0 %v3454
    %v3480 = vpop.f32.mrf.mxu0
    %v3481 = vadd.f32 0.0, %v3480
    %3482 = vdwg.mxu0
    %v3483 = vmul.f32 %v3478, 0.35355338
    %v3484 = vmul.f32 %v3481, 0.35355338
    %v3485 = vsel %vm209, %v3483, -inf
    %3486 = vmax.xlane.f32.xlu0 %v3485
    %v3487 = vpop.xlane.xlu0 %3486
    %v3488 = vsel %vm213, %v3484, -inf
    %3489 = vmax.xlane.f32.xlu0 %v3488
    %v3490 = vpop.xlane.xlu0 %3489
    %v3491 = vsub.f32 %v3483, %v3487
    %v3492 = vsub.f32 %v3484, %v3490
    %v3493 = vmul.f32 %v3491, 1.442695
    %v3494 = vpow.pop %v3493
    %v3495 = vmul.f32 %v3492, 1.442695
    %v3496 = vpow.pop %v3495
    %v3497 = vsel %vm209, %v3494, 0.0
    %3498 = vadd.xlane.f32.xlu0 %v3497
    %v3499 = vpop.xlane.xlu0 %3498
    %v3500 = vsel %vm213, %v3496, 0.0
    %3501 = vadd.xlane.f32.xlu0 %v3500
    %v3502 = vpop.xlane.xlu0 %3501
    %v3503 = vrcp.pop %v3499
    %v3504 = vrcp.pop %v3502
    %v3505 = vmul.f32 %v3494, %v3503
    %v3506 = vmul.f32 %v3496, %v3504
    %3508 = vrot.lane.b32.xlu0 %v3348, 120
    %v3509 = vpop.permute.xlu0 %3508
    %3510 = vrot.lane.b32.xlu0 %v3351, 120
    %v3511 = vpop.permute.xlu0 %3510
    %v3514 = vsel %vm209, %v3505, 0
    %v3517 = vsel %vm209, %v3506, 0
    %v3519 = vsel %vm239, %v3511, 0
    %3521 = vmatpush.msra.mxu0 0.0
    %3522 = vmatpush.msra.mxu0 0.0
    %3523 = vmatpush.msra.mxu0 0.0
    %3524 = vmatpush.msra.mxu0 0.0
    %3525 = vmatpush.msra.mxu0 0.0
    %3526 = vmatpush.msra.mxu0 0.0
    %3527 = vmatpush.msra.mxu0 0.0
    %3528 = vmatpush.msra.mxu0 0.0
    %3529 = vmatpush.msra.mxu0 0.0
    %3530 = vmatpush.msra.mxu0 0.0
    %3531 = vmatpush.msra.mxu0 0.0
    %3532 = vmatpush.msra.mxu0 0.0
    %3533 = vmatpush.msra.mxu0 0.0
    %3534 = vmatpush.msra.mxu0 0.0
    %3535 = vmatpush.msra.mxu0 %v3519
    %3536 = vmatpush.msra.mxu0 %v3509
    %3537 = vmatmul.f32.gmra.mxu0 %v3514
    %v3538 = vpop.f32.mrf.mxu0
    %v3539 = vadd.f32 0.0, %v3538
    %3540 = vmatmul.f32.gmra.mxu0 %v3517
    %v3541 = vpop.f32.mrf.mxu0
    %v3542 = vadd.f32 0.0, %v3541
    %3543 = vdwg.mxu0
    %3544 = vrot.lane.b32.xlu0 %v3271, 112
    %v3545 = vpop.permute.xlu0 %3544
    %3546 = vrot.lane.b32.xlu0 %v3274, 112
    %v3547 = vpop.permute.xlu0 %3546
    %3548 = vrot.lane.b32.xlu0 %v3310, 112
    %v3549 = vpop.permute.xlu0 %3548
    %3550 = vrot.lane.b32.xlu0 %v3313, 112
    %v3551 = vpop.permute.xlu0 %3550
    %v3552 = vsel %vm171, %v3545, 0
    %v3554 = vsel %vm171, %v3547, 0
    %v3556 = vsel %vm171, %v3549, 0
    %v3558 = vsel %vm171, %v3551, 0
    %3560 = vmatpush.xpose.msra.mxu0 0.0
    %3561 = vmatpush.xpose.msra.mxu0 0.0
    %3562 = vmatpush.xpose.msra.mxu0 0.0
    %3563 = vmatpush.xpose.msra.mxu0 0.0
    %3564 = vmatpush.xpose.msra.mxu0 0.0
    %3565 = vmatpush.xpose.msra.mxu0 0.0
    %3566 = vmatpush.xpose.msra.mxu0 0.0
    %3567 = vmatpush.xpose.msra.mxu0 0.0
    %3568 = vmatpush.xpose.msra.mxu0 0.0
    %3569 = vmatpush.xpose.msra.mxu0 0.0
    %3570 = vmatpush.xpose.msra.mxu0 0.0
    %3571 = vmatpush.xpose.msra.mxu0 0.0
    %3572 = vmatpush.xpose.msra.mxu0 0.0
    %3573 = vmatpush.xpose.msra.mxu0 0.0
    %3574 = vmatpush.xpose.msra.mxu0 %v3558
    %3575 = vmatpush.xpose.msra.mxu0 %v3556
    %3576 = vmatmul.f32.gmra.mxu0 %v3552
    %v3577 = vpop.f32.mrf.mxu0
    %v3578 = vadd.f32 0.0, %v3577
    %3579 = vmatmul.f32.gmra.mxu0 %v3554
    %v3580 = vpop.f32.mrf.mxu0
    %v3581 = vadd.f32 0.0, %v3580
    %3582 = vdwg.mxu0
    %v3583 = vmul.f32 %v3578, 0.35355338
    %v3584 = vmul.f32 %v3581, 0.35355338
    %v3585 = vsel %vm209, %v3583, -inf
    %3586 = vmax.xlane.f32.xlu0 %v3585
    %v3587 = vpop.xlane.xlu0 %3586
    %v3588 = vsel %vm213, %v3584, -inf
    %3589 = vmax.xlane.f32.xlu0 %v3588
    %v3590 = vpop.xlane.xlu0 %3589
    %v3591 = vsub.f32 %v3583, %v3587
    %v3592 = vsub.f32 %v3584, %v3590
    %v3593 = vmul.f32 %v3591, 1.442695
    %v3594 = vpow.pop %v3593
    %v3595 = vmul.f32 %v3592, 1.442695
    %v3596 = vpow.pop %v3595
    %v3597 = vsel %vm209, %v3594, 0.0
    %3598 = vadd.xlane.f32.xlu0 %v3597
    %v3599 = vpop.xlane.xlu0 %3598
    %v3600 = vsel %vm213, %v3596, 0.0
    %3601 = vadd.xlane.f32.xlu0 %v3600
    %v3602 = vpop.xlane.xlu0 %3601
    %v3603 = vrcp.pop %v3599
    %v3604 = vrcp.pop %v3602
    %v3605 = vmul.f32 %v3594, %v3603
    %v3606 = vmul.f32 %v3596, %v3604
    %3607 = vrot.lane.b32.xlu0 %v3348, 112
    %v3608 = vpop.permute.xlu0 %3607
    %3609 = vrot.lane.b32.xlu0 %v3351, 112
    %v3610 = vpop.permute.xlu0 %3609
    %v3613 = vsel %vm209, %v3605, 0
    %v3616 = vsel %vm209, %v3606, 0
    %v3618 = vsel %vm239, %v3610, 0
    %3620 = vmatpush.msra.mxu0 0.0
    %3621 = vmatpush.msra.mxu0 0.0
    %3622 = vmatpush.msra.mxu0 0.0
    %3623 = vmatpush.msra.mxu0 0.0
    %3624 = vmatpush.msra.mxu0 0.0
    %3625 = vmatpush.msra.mxu0 0.0
    %3626 = vmatpush.msra.mxu0 0.0
    %3627 = vmatpush.msra.mxu0 0.0
    %3628 = vmatpush.msra.mxu0 0.0
    %3629 = vmatpush.msra.mxu0 0.0
    %3630 = vmatpush.msra.mxu0 0.0
    %3631 = vmatpush.msra.mxu0 0.0
    %3632 = vmatpush.msra.mxu0 0.0
    %3633 = vmatpush.msra.mxu0 0.0
    %3634 = vmatpush.msra.mxu0 %v3618
    %3635 = vmatpush.msra.mxu0 %v3608
    %3636 = vmatmul.f32.gmra.mxu0 %v3613
    %v3637 = vpop.f32.mrf.mxu0
    %v3638 = vadd.f32 0.0, %v3637
    %3639 = vmatmul.f32.gmra.mxu0 %v3616
    %v3640 = vpop.f32.mrf.mxu0
    %v3641 = vadd.f32 0.0, %v3640
    %3642 = vdwg.mxu0
    %3643 = vrot.lane.b32.xlu0 %v3271, 104
    %v3644 = vpop.permute.xlu0 %3643
    %3645 = vrot.lane.b32.xlu0 %v3274, 104
    %v3646 = vpop.permute.xlu0 %3645
    %3647 = vrot.lane.b32.xlu0 %v3310, 104
    %v3648 = vpop.permute.xlu0 %3647
    %3649 = vrot.lane.b32.xlu0 %v3313, 104
    %v3650 = vpop.permute.xlu0 %3649
    %v3651 = vsel %vm171, %v3644, 0
    %v3653 = vsel %vm171, %v3646, 0
    %v3655 = vsel %vm171, %v3648, 0
    %v3657 = vsel %vm171, %v3650, 0
    %3659 = vmatpush.xpose.msra.mxu0 0.0
    %3660 = vmatpush.xpose.msra.mxu0 0.0
    %3661 = vmatpush.xpose.msra.mxu0 0.0
    %3662 = vmatpush.xpose.msra.mxu0 0.0
    %3663 = vmatpush.xpose.msra.mxu0 0.0
    %3664 = vmatpush.xpose.msra.mxu0 0.0
    %3665 = vmatpush.xpose.msra.mxu0 0.0
    %3666 = vmatpush.xpose.msra.mxu0 0.0
    %3667 = vmatpush.xpose.msra.mxu0 0.0
    %3668 = vmatpush.xpose.msra.mxu0 0.0
    %3669 = vmatpush.xpose.msra.mxu0 0.0
    %3670 = vmatpush.xpose.msra.mxu0 0.0
    %3671 = vmatpush.xpose.msra.mxu0 0.0
    %3672 = vmatpush.xpose.msra.mxu0 0.0
    %3673 = vmatpush.xpose.msra.mxu0 %v3657
    %3674 = vmatpush.xpose.msra.mxu0 %v3655
    %3675 = vmatmul.f32.gmra.mxu0 %v3651
    %v3676 = vpop.f32.mrf.mxu0
    %v3677 = vadd.f32 0.0, %v3676
    %3678 = vmatmul.f32.gmra.mxu0 %v3653
    %v3679 = vpop.f32.mrf.mxu0
    %v3680 = vadd.f32 0.0, %v3679
    %3681 = vdwg.mxu0
    %v3682 = vmul.f32 %v3677, 0.35355338
    %v3683 = vmul.f32 %v3680, 0.35355338
    %v3684 = vsel %vm209, %v3682, -inf
    %3685 = vmax.xlane.f32.xlu0 %v3684
    %v3686 = vpop.xlane.xlu0 %3685
    %v3687 = vsel %vm213, %v3683, -inf
    %3688 = vmax.xlane.f32.xlu0 %v3687
    %v3689 = vpop.xlane.xlu0 %3688
    %v3690 = vsub.f32 %v3682, %v3686
    %v3691 = vsub.f32 %v3683, %v3689
    %v3692 = vmul.f32 %v3690, 1.442695
    %v3693 = vpow.pop %v3692
    %v3694 = vmul.f32 %v3691, 1.442695
    %v3695 = vpow.pop %v3694
    %v3696 = vsel %vm209, %v3693, 0.0
    %3697 = vadd.xlane.f32.xlu0 %v3696
    %v3698 = vpop.xlane.xlu0 %3697
    %v3699 = vsel %vm213, %v3695, 0.0
    %3700 = vadd.xlane.f32.xlu0 %v3699
    %v3701 = vpop.xlane.xlu0 %3700
    %v3702 = vrcp.pop %v3698
    %v3703 = vrcp.pop %v3701
    %v3704 = vmul.f32 %v3693, %v3702
    %v3705 = vmul.f32 %v3695, %v3703
    %3706 = vrot.lane.b32.xlu0 %v3348, 104
    %v3707 = vpop.permute.xlu0 %3706
    %3708 = vrot.lane.b32.xlu0 %v3351, 104
    %v3709 = vpop.permute.xlu0 %3708
    %v3712 = vsel %vm209, %v3704, 0
    %v3715 = vsel %vm209, %v3705, 0
    %v3717 = vsel %vm239, %v3709, 0
    %3719 = vmatpush.msra.mxu0 0.0
    %3720 = vmatpush.msra.mxu0 0.0
    %3721 = vmatpush.msra.mxu0 0.0
    %3722 = vmatpush.msra.mxu0 0.0
    %3723 = vmatpush.msra.mxu0 0.0
    %3724 = vmatpush.msra.mxu0 0.0
    %3725 = vmatpush.msra.mxu0 0.0
    %3726 = vmatpush.msra.mxu0 0.0
    %3727 = vmatpush.msra.mxu0 0.0
    %3728 = vmatpush.msra.mxu0 0.0
    %3729 = vmatpush.msra.mxu0 0.0
    %3730 = vmatpush.msra.mxu0 0.0
    %3731 = vmatpush.msra.mxu0 0.0
    %3732 = vmatpush.msra.mxu0 0.0
    %3733 = vmatpush.msra.mxu0 %v3717
    %3734 = vmatpush.msra.mxu0 %v3707
    %3735 = vmatmul.f32.gmra.mxu0 %v3712
    %v3736 = vpop.f32.mrf.mxu0
    %v3737 = vadd.f32 0.0, %v3736
    %3738 = vmatmul.f32.gmra.mxu0 %v3715
    %v3739 = vpop.f32.mrf.mxu0
    %v3740 = vadd.f32 0.0, %v3739
    %3741 = vdwg.mxu0
    %3744 = vrot.lane.b32.xlu0 %v3539, 8
    %v3745 = vpop.permute.xlu0 %3744
    %3746 = vrot.lane.b32.xlu0 %v3542, 8
    %v3747 = vpop.permute.xlu0 %3746
    %3752 = vrot.lane.b32.xlu0 %v3638, 16
    %v3753 = vpop.permute.xlu0 %3752
    %3754 = vrot.lane.b32.xlu0 %v3641, 16
    %v3755 = vpop.permute.xlu0 %3754
    %3760 = vrot.lane.b32.xlu0 %v3737, 24
    %v3761 = vpop.permute.xlu0 %3760
    %3762 = vrot.lane.b32.xlu0 %v3740, 24
    %v3763 = vpop.permute.xlu0 %3762
    %v3766 = vsel %vm171, %v3439, %v3745
    %v3767 = vsel %vm171, %v3442, %v3747
    %v3768 = vsel %vm590, %v3766, %v3753
    %v3769 = vsel %vm590, %v3767, %v3755
    %v3770 = vsel %vm593, %v3768, %v3761
    %v3771 = vsel %vm593, %v3769, %v3763
    %v3772 = vld [vmem:[#allocation2 + $0xb0] sm:$0xff]
    %v3773 = vld [vmem:[#allocation2 + $0xb8] sm:$0xff]
    %v3774 = vld [vmem:[#allocation2 + $0xc0] sm:$0xff]
    %v3775 = vld [vmem:[#allocation2 + $0xc8] sm:$0xff]
    %3776 = vrot.lane.b32.xlu0 %v3240, 32
    %v3777 = vpop.permute.xlu0 %3776
    %v3780 = vsel %vm60, %v3770, 0
    %v3783 = vsel %vm60, %v3771, 0
    %3785 = vmatpush.msra.mxu0 0.0
    %3786 = vmatpush.msra.mxu0 0.0
    %3787 = vmatpush.msra.mxu0 0.0
    %3788 = vmatpush.msra.mxu0 0.0
    %3789 = vmatpush.msra.mxu0 0.0
    %3790 = vmatpush.msra.mxu0 0.0
    %3791 = vmatpush.msra.mxu0 0.0
    %3792 = vmatpush.msra.mxu0 0.0
    %3793 = vmatpush.msra.mxu0 0.0
    %3794 = vmatpush.msra.mxu0 0.0
    %3795 = vmatpush.msra.mxu0 0.0
    %3796 = vmatpush.msra.mxu0 0.0
    %3797 = vmatpush.msra.mxu0 %v3775
    %3798 = vmatpush.msra.mxu0 %v3774
    %3799 = vmatpush.msra.mxu0 %v3773
    %3800 = vmatpush.msra.mxu0 %v3772
    %3801 = vmatmul.f32.gmra.mxu0 %v3780
    %v3802 = vpop.f32.mrf.mxu0
    %v3803 = vadd.f32 %v3777, %v3802
    %3804 = vmatmul.f32.gmra.mxu0 %v3783
    %v3805 = vpop.f32.mrf.mxu0
    %v3806 = vadd.f32 %v3777, %v3805
    %3807 = vdwg.mxu0
    %v3808 = vadd.f32 %v1710, %v3803
    %v3809 = vadd.f32 %v1711, %v3806
    %v3810 = vsel %vm60, %v3808, 0.0
    %3811 = vadd.xlane.f32.xlu0 %v3810
    %v3812 = vpop.xlane.xlu0 %3811
    %v3813 = vsel %vm643, %v3809, 0.0
    %3814 = vadd.xlane.f32.xlu0 %v3813
    %v3815 = vpop.xlane.xlu0 %3814
    %v3816 = vmul.f32 %v3812, %v653
    %v3817 = vmul.f32 %v3815, %v653
    %v3818 = vsub.f32 %v3808, %v3816
    %v3819 = vsub.f32 %v3809, %v3817
    %v3820 = vmul.f32 %v3818, %v3818
    %v3821 = vmul.f32 %v3819, %v3819
    %v3822 = vsel %vm60, %v3820, 0.0
    %3823 = vadd.xlane.f32.xlu0 %v3822
    %v3824 = vpop.xlane.xlu0 %3823
    %v3825 = vsel %vm643, %v3821, 0.0
    %3826 = vadd.xlane.f32.xlu0 %v3825
    %v3827 = vpop.xlane.xlu0 %3826
    %v3828 = vmul.f32 %v3824, %v653
    %v3829 = vmul.f32 %v3827, %v653
    %v3830 = vadd.f32 %v3828, 1e-05
    %v3831 = vadd.f32 %v3829, 1e-05
    %v3832 = vrsqrt.pop %v3830
    %v3833 = vmul.f32 %v3832, %v3830
    %v3834 = vmul.f32 %v3833, %v3832
    %v3835 = vmul.f32 0.5, %v3834
    %v3836 = vsub.f32 1.5, %v3835
    %v3837 = vmul.f32 %v3832, %v3836
    %vm3838 = vweird.f32 %v3830
    %vm3839 = vweird.f32 %v3832
    %vm3840 = vmor %vm3838, %vm3839
    %v3841 = vsel %vm3840, %v3832, %v3837
    %v3842 = vrsqrt.pop %v3831
    %v3843 = vmul.f32 %v3842, %v3831
    %v3844 = vmul.f32 %v3843, %v3842
    %v3845 = vmul.f32 0.5, %v3844
    %v3846 = vsub.f32 1.5, %v3845
    %v3847 = vmul.f32 %v3842, %v3846
    %vm3848 = vweird.f32 %v3831
    %vm3849 = vweird.f32 %v3842
    %vm3850 = vmor %vm3848, %vm3849
    %v3851 = vsel %vm3850, %v3842, %v3847
    %v3852 = vmul.f32 %v3818, %v3841
    %v3853 = vmul.f32 %v3819, %v3851
    %v3854 = vld [vmem:[#allocation2 + $0x2f0] sm:$0x1]
    %v3855 = vperm.slane %v3854, 0
    %v3856 = vmul.f32 %v3852, %v3855
    %v3857 = vmul.f32 %v3853, %v3855
    %3859 = vrot.lane.b32.xlu0 %v3855, 96
    %v3860 = vpop.permute.xlu0 %3859
    %v3862 = vadd.f32 %v3856, %v3860
    %v3863 = vadd.f32 %v3857, %v3860
    %v3864 = vadd.f32 %v3231, %v46
    %v3865 = vadd.f32 %v3232, %v47
    %v3866 = vadd.f32 %v3233, %v48
    %v3867 = vadd.f32 %v3234, %v49
    %v3868 = vadd.f32 %v3235, %v50
    %v3869 = vadd.f32 %v3236, %v51
    %v3870 = vadd.f32 %v3237, %v52
    %v3871 = vadd.f32 %v3238, %v53
    %v3872 = vadd.f32 %v3862, %v36
    %v3873 = vadd.f32 %v3863, %v37
    %3878 = vrot.lane.b32.xlu0 %v3772, 96
    %v3879 = vpop.permute.xlu0 %3878
    %3880 = vrot.lane.b32.xlu0 %v3773, 96
    %v3881 = vpop.permute.xlu0 %3880
    %3882 = vrot.lane.b32.xlu0 %v3774, 96
    %v3883 = vpop.permute.xlu0 %3882
    %3884 = vrot.lane.b32.xlu0 %v3775, 96
    %v3885 = vpop.permute.xlu0 %3884
    %3890 = vrot.lane.b32.xlu0 %v3855, 64
    %v3891 = vpop.permute.xlu0 %3890
    %v3894 = vsel %vm60, %v3872, 0
    %v3897 = vsel %vm60, %v3873, 0
    %3899 = vmatpush.msra.mxu0 0.0
    %3900 = vmatpush.msra.mxu0 0.0
    %3901 = vmatpush.msra.mxu0 0.0
    %3902 = vmatpush.msra.mxu0 0.0
    %3903 = vmatpush.msra.mxu0 0.0
    %3904 = vmatpush.msra.mxu0 0.0
    %3905 = vmatpush.msra.mxu0 0.0
    %3906 = vmatpush.msra.mxu0 0.0
    %3907 = vmatpush.msra.mxu0 0.0
    %3908 = vmatpush.msra.mxu0 0.0
    %3909 = vmatpush.msra.mxu0 0.0
    %3910 = vmatpush.msra.mxu0 0.0
    %3911 = vmatpush.msra.mxu0 %v3885
    %3912 = vmatpush.msra.mxu0 %v3883
    %3913 = vmatpush.msra.mxu0 %v3881
    %3914 = vmatpush.msra.mxu0 %v3879
    %3915 = vmatmul.f32.gmra.mxu0 %v3894
    %v3916 = vpop.f32.mrf.mxu0
    %v3917 = vadd.f32 %v3891, %v3916
    %3918 = vmatmul.f32.gmra.mxu0 %v3897
    %v3919 = vpop.f32.mrf.mxu0
    %v3920 = vadd.f32 %v3891, %v3919
    %3921 = vdwg.mxu0
    %3922 = vrot.lane.b32.xlu0 %v3772, 80
    %v3923 = vpop.permute.xlu0 %3922
    %3924 = vrot.lane.b32.xlu0 %v3773, 80
    %v3925 = vpop.permute.xlu0 %3924
    %3926 = vrot.lane.b32.xlu0 %v3774, 80
    %v3927 = vpop.permute.xlu0 %3926
    %3928 = vrot.lane.b32.xlu0 %v3775, 80
    %v3929 = vpop.permute.xlu0 %3928
    %3934 = vrot.lane.b32.xlu0 %v3855, 48
    %v3935 = vpop.permute.xlu0 %3934
    %v3938 = vsel %vm60, %v3864, 0
    %v3941 = vsel %vm60, %v3865, 0
    %v3944 = vsel %vm60, %v3866, 0
    %v3947 = vsel %vm60, %v3867, 0
    %v3950 = vsel %vm60, %v3868, 0
    %v3953 = vsel %vm60, %v3869, 0
    %v3956 = vsel %vm60, %v3870, 0
    %v3959 = vsel %vm60, %v3871, 0
    %3961 = vmatpush.msra.mxu0 0.0
    %3962 = vmatpush.msra.mxu0 0.0
    %3963 = vmatpush.msra.mxu0 0.0
    %3964 = vmatpush.msra.mxu0 0.0
    %3965 = vmatpush.msra.mxu0 0.0
    %3966 = vmatpush.msra.mxu0 0.0
    %3967 = vmatpush.msra.mxu0 0.0
    %3968 = vmatpush.msra.mxu0 0.0
    %3969 = vmatpush.msra.mxu0 0.0
    %3970 = vmatpush.msra.mxu0 0.0
    %3971 = vmatpush.msra.mxu0 0.0
    %3972 = vmatpush.msra.mxu0 0.0
    %3973 = vmatpush.msra.mxu0 %v3929
    %3974 = vmatpush.msra.mxu0 %v3927
    %3975 = vmatpush.msra.mxu0 %v3925
    %3976 = vmatpush.msra.mxu0 %v3923
    %3977 = vmatmul.f32.gmra.mxu0 %v3938
    %v3978 = vpop.f32.mrf.mxu0
    %v3979 = vadd.f32 %v3935, %v3978
    %3980 = vmatmul.f32.gmra.mxu0 %v3941
    %v3981 = vpop.f32.mrf.mxu0
    %v3982 = vadd.f32 %v3935, %v3981
    %3983 = vmatmul.f32.gmra.mxu0 %v3944
    %v3984 = vpop.f32.mrf.mxu0
    %v3985 = vadd.f32 %v3935, %v3984
    %3986 = vmatmul.f32.gmra.mxu0 %v3947
    %v3987 = vpop.f32.mrf.mxu0
    %v3988 = vadd.f32 %v3935, %v3987
    %3989 = vmatmul.f32.gmra.mxu0 %v3950
    %v3990 = vpop.f32.mrf.mxu0
    %v3991 = vadd.f32 %v3935, %v3990
    %3992 = vmatmul.f32.gmra.mxu0 %v3953
    %v3993 = vpop.f32.mrf.mxu0
    %v3994 = vadd.f32 %v3935, %v3993
    %3995 = vmatmul.f32.gmra.mxu0 %v3956
    %v3996 = vpop.f32.mrf.mxu0
    %v3997 = vadd.f32 %v3935, %v3996
    %3998 = vmatmul.f32.gmra.mxu0 %v3959
    %v3999 = vpop.f32.mrf.mxu0
    %v4000 = vadd.f32 %v3935, %v3999
    %4001 = vdwg.mxu0
    %4002 = vrot.lane.b32.xlu0 %v3772, 64
    %v4003 = vpop.permute.xlu0 %4002
    %4004 = vrot.lane.b32.xlu0 %v3773, 64
    %v4005 = vpop.permute.xlu0 %4004
    %4006 = vrot.lane.b32.xlu0 %v3774, 64
    %v4007 = vpop.permute.xlu0 %4006
    %4008 = vrot.lane.b32.xlu0 %v3775, 64
    %v4009 = vpop.permute.xlu0 %4008
    %4014 = vrot.lane.b32.xlu0 %v3855, 32
    %v4015 = vpop.permute.xlu0 %4014
    %v4018 = vsel %vm60, %v3231, 0
    %v4021 = vsel %vm60, %v3232, 0
    %v4024 = vsel %vm60, %v3233, 0
    %v4027 = vsel %vm60, %v3234, 0
    %v4030 = vsel %vm60, %v3235, 0
    %v4033 = vsel %vm60, %v3236, 0
    %v4036 = vsel %vm60, %v3237, 0
    %v4039 = vsel %vm60, %v3238, 0
    %4041 = vmatpush.msra.mxu0 0.0
    %4042 = vmatpush.msra.mxu0 0.0
    %4043 = vmatpush.msra.mxu0 0.0
    %4044 = vmatpush.msra.mxu0 0.0
    %4045 = vmatpush.msra.mxu0 0.0
    %4046 = vmatpush.msra.mxu0 0.0
    %4047 = vmatpush.msra.mxu0 0.0
    %4048 = vmatpush.msra.mxu0 0.0
    %4049 = vmatpush.msra.mxu0 0.0
    %4050 = vmatpush.msra.mxu0 0.0
    %4051 = vmatpush.msra.mxu0 0.0
    %4052 = vmatpush.msra.mxu0 0.0
    %4053 = vmatpush.msra.mxu0 %v4009
    %4054 = vmatpush.msra.mxu0 %v4007
    %4055 = vmatpush.msra.mxu0 %v4005
    %4056 = vmatpush.msra.mxu0 %v4003
    %4057 = vmatmul.f32.gmra.mxu0 %v4018
    %v4058 = vpop.f32.mrf.mxu0
    %v4059 = vadd.f32 %v4015, %v4058
    %4060 = vmatmul.f32.gmra.mxu0 %v4021
    %v4061 = vpop.f32.mrf.mxu0
    %v4062 = vadd.f32 %v4015, %v4061
    %4063 = vmatmul.f32.gmra.mxu0 %v4024
    %v4064 = vpop.f32.mrf.mxu0
    %v4065 = vadd.f32 %v4015, %v4064
    %4066 = vmatmul.f32.gmra.mxu0 %v4027
    %v4067 = vpop.f32.mrf.mxu0
    %v4068 = vadd.f32 %v4015, %v4067
    %4069 = vmatmul.f32.gmra.mxu0 %v4030
    %v4070 = vpop.f32.mrf.mxu0
    %v4071 = vadd.f32 %v4015, %v4070
    %4072 = vmatmul.f32.gmra.mxu0 %v4033
    %v4073 = vpop.f32.mrf.mxu0
    %v4074 = vadd.f32 %v4015, %v4073
    %4075 = vmatmul.f32.gmra.mxu0 %v4036
    %v4076 = vpop.f32.mrf.mxu0
    %v4077 = vadd.f32 %v4015, %v4076
    %4078 = vmatmul.f32.gmra.mxu0 %v4039
    %v4079 = vpop.f32.mrf.mxu0
    %v4080 = vadd.f32 %v4015, %v4079
    %4081 = vdwg.mxu0
    %v4083 = vsel %vm912, %v3917, 0
    %v4086 = vsel %vm912, %v3920, 0
    %v4089 = vsel %vm912, %v3979, 0
    %v4092 = vsel %vm912, %v3982, 0
    %v4095 = vsel %vm912, %v3985, 0
    %v4098 = vsel %vm912, %v3988, 0
    %v4101 = vsel %vm912, %v3991, 0
    %v4104 = vsel %vm912, %v3994, 0
    %v4107 = vsel %vm912, %v3997, 0
    %v4110 = vsel %vm912, %v4000, 0
    %4112 = vmatpush.xpose.msra.mxu0 0.0
    %4113 = vmatpush.xpose.msra.mxu0 0.0
    %4114 = vmatpush.xpose.msra.mxu0 0.0
    %4115 = vmatpush.xpose.msra.mxu0 0.0
    %4116 = vmatpush.xpose.msra.mxu0 0.0
    %4117 = vmatpush.xpose.msra.mxu0 0.0
    %4118 = vmatpush.xpose.msra.mxu0 0.0
    %4119 = vmatpush.xpose.msra.mxu0 0.0
    %4120 = vmatpush.xpose.msra.mxu0 %v4110
    %4121 = vmatpush.xpose.msra.mxu0 %v4107
    %4122 = vmatpush.xpose.msra.mxu0 %v4104
    %4123 = vmatpush.xpose.msra.mxu0 %v4101
    %4124 = vmatpush.xpose.msra.mxu0 %v4098
    %4125 = vmatpush.xpose.msra.mxu0 %v4095
    %4126 = vmatpush.xpose.msra.mxu0 %v4092
    %4127 = vmatpush.xpose.msra.mxu0 %v4089
    %4128 = vmatmul.f32.gmra.mxu0 %v4083
    %v4129 = vpop.f32.mrf.mxu0
    %v4130 = vadd.f32 0.0, %v4129
    %4131 = vmatmul.f32.gmra.mxu0 %v4086
    %v4132 = vpop.f32.mrf.mxu0
    %v4133 = vadd.f32 0.0, %v4132
    %4134 = vdwg.mxu0
    %v4135 = vmul.f32 %v4130, 0.5
    %v4136 = vmul.f32 %v4133, 0.5
    %v4137 = vsel %vm968, %v4135, -inf
    %4138 = vmax.xlane.f32.xlu0 %v4137
    %v4139 = vpop.xlane.xlu0 %4138
    %v4140 = vsel %vm972, %v4136, -inf
    %4141 = vmax.xlane.f32.xlu0 %v4140
    %v4142 = vpop.xlane.xlu0 %4141
    %v4143 = vsub.f32 %v4135, %v4139
    %v4144 = vsub.f32 %v4136, %v4142
    %v4145 = vmul.f32 %v4143, 1.442695
    %v4146 = vpow.pop %v4145
    %v4147 = vmul.f32 %v4144, 1.442695
    %v4148 = vpow.pop %v4147
    %v4149 = vsel %vm968, %v4146, 0.0
    %4150 = vadd.xlane.f32.xlu0 %v4149
    %v4151 = vpop.xlane.xlu0 %4150
    %v4152 = vsel %vm972, %v4148, 0.0
    %4153 = vadd.xlane.f32.xlu0 %v4152
    %v4154 = vpop.xlane.xlu0 %4153
    %v4155 = vrcp.pop %v4151
    %v4156 = vrcp.pop %v4154
    %v4157 = vmul.f32 %v4146, %v4155
    %v4158 = vmul.f32 %v4148, %v4156
    %v4160 = vsel %vm968, %v4157, 0
    %v4163 = vsel %vm968, %v4158, 0
    %4165 = vmatpush.msra.mxu0 0.0
    %4166 = vmatpush.msra.mxu0 0.0
    %4167 = vmatpush.msra.mxu0 0.0
    %4168 = vmatpush.msra.mxu0 0.0
    %4169 = vmatpush.msra.mxu0 0.0
    %4170 = vmatpush.msra.mxu0 0.0
    %4171 = vmatpush.msra.mxu0 0.0
    %4172 = vmatpush.msra.mxu0 0.0
    %4173 = vmatpush.msra.mxu0 %v4080
    %4174 = vmatpush.msra.mxu0 %v4077
    %4175 = vmatpush.msra.mxu0 %v4074
    %4176 = vmatpush.msra.mxu0 %v4071
    %4177 = vmatpush.msra.mxu0 %v4068
    %4178 = vmatpush.msra.mxu0 %v4065
    %4179 = vmatpush.msra.mxu0 %v4062
    %4180 = vmatpush.msra.mxu0 %v4059
    %4181 = vmatmul.f32.gmra.mxu0 %v4160
    %v4182 = vpop.f32.mrf.mxu0
    %v4183 = vadd.f32 0.0, %v4182
    %4184 = vmatmul.f32.gmra.mxu0 %v4163
    %v4185 = vpop.f32.mrf.mxu0
    %v4186 = vadd.f32 0.0, %v4185
    %4187 = vdwg.mxu0
    %4188 = vrot.lane.b32.xlu0 %v3917, 124
    %v4189 = vpop.permute.xlu0 %4188
    %4190 = vrot.lane.b32.xlu0 %v3920, 124
    %v4191 = vpop.permute.xlu0 %4190
    %4192 = vrot.lane.b32.xlu0 %v3979, 124
    %v4193 = vpop.permute.xlu0 %4192
    %4194 = vrot.lane.b32.xlu0 %v3982, 124
    %v4195 = vpop.permute.xlu0 %4194
    %4196 = vrot.lane.b32.xlu0 %v3985, 124
    %v4197 = vpop.permute.xlu0 %4196
    %4198 = vrot.lane.b32.xlu0 %v3988, 124
    %v4199 = vpop.permute.xlu0 %4198
    %4200 = vrot.lane.b32.xlu0 %v3991, 124
    %v4201 = vpop.permute.xlu0 %4200
    %4202 = vrot.lane.b32.xlu0 %v3994, 124
    %v4203 = vpop.permute.xlu0 %4202
    %4204 = vrot.lane.b32.xlu0 %v3997, 124
    %v4205 = vpop.permute.xlu0 %4204
    %4206 = vrot.lane.b32.xlu0 %v4000, 124
    %v4207 = vpop.permute.xlu0 %4206
    %v4208 = vsel %vm912, %v4189, 0
    %v4210 = vsel %vm912, %v4191, 0
    %v4212 = vsel %vm912, %v4193, 0
    %v4214 = vsel %vm912, %v4195, 0
    %v4216 = vsel %vm912, %v4197, 0
    %v4218 = vsel %vm912, %v4199, 0
    %v4220 = vsel %vm912, %v4201, 0
    %v4222 = vsel %vm912, %v4203, 0
    %v4224 = vsel %vm912, %v4205, 0
    %v4226 = vsel %vm912, %v4207, 0
    %4228 = vmatpush.xpose.msra.mxu0 0.0
    %4229 = vmatpush.xpose.msra.mxu0 0.0
    %4230 = vmatpush.xpose.msra.mxu0 0.0
    %4231 = vmatpush.xpose.msra.mxu0 0.0
    %4232 = vmatpush.xpose.msra.mxu0 0.0
    %4233 = vmatpush.xpose.msra.mxu0 0.0
    %4234 = vmatpush.xpose.msra.mxu0 0.0
    %4235 = vmatpush.xpose.msra.mxu0 0.0
    %4236 = vmatpush.xpose.msra.mxu0 %v4226
    %4237 = vmatpush.xpose.msra.mxu0 %v4224
    %4238 = vmatpush.xpose.msra.mxu0 %v4222
    %4239 = vmatpush.xpose.msra.mxu0 %v4220
    %4240 = vmatpush.xpose.msra.mxu0 %v4218
    %4241 = vmatpush.xpose.msra.mxu0 %v4216
    %4242 = vmatpush.xpose.msra.mxu0 %v4214
    %4243 = vmatpush.xpose.msra.mxu0 %v4212
    %4244 = vmatmul.f32.gmra.mxu0 %v4208
    %v4245 = vpop.f32.mrf.mxu0
    %v4246 = vadd.f32 0.0, %v4245
    %4247 = vmatmul.f32.gmra.mxu0 %v4210
    %v4248 = vpop.f32.mrf.mxu0
    %v4249 = vadd.f32 0.0, %v4248
    %4250 = vdwg.mxu0
    %v4251 = vmul.f32 %v4246, 0.5
    %v4252 = vmul.f32 %v4249, 0.5
    %v4253 = vsel %vm968, %v4251, -inf
    %4254 = vmax.xlane.f32.xlu0 %v4253
    %v4255 = vpop.xlane.xlu0 %4254
    %v4256 = vsel %vm972, %v4252, -inf
    %4257 = vmax.xlane.f32.xlu0 %v4256
    %v4258 = vpop.xlane.xlu0 %4257
    %v4259 = vsub.f32 %v4251, %v4255
    %v4260 = vsub.f32 %v4252, %v4258
    %v4261 = vmul.f32 %v4259, 1.442695
    %v4262 = vpow.pop %v4261
    %v4263 = vmul.f32 %v4260, 1.442695
    %v4264 = vpow.pop %v4263
    %v4265 = vsel %vm968, %v4262, 0.0
    %4266 = vadd.xlane.f32.xlu0 %v4265
    %v4267 = vpop.xlane.xlu0 %4266
    %v4268 = vsel %vm972, %v4264, 0.0
    %4269 = vadd.xlane.f32.xlu0 %v4268
    %v4270 = vpop.xlane.xlu0 %4269
    %v4271 = vrcp.pop %v4267
    %v4272 = vrcp.pop %v4270
    %v4273 = vmul.f32 %v4262, %v4271
    %v4274 = vmul.f32 %v4264, %v4272
    %4283 = vrot.lane.b32.xlu0 %v4059, 124
    %v4284 = vpop.permute.xlu0 %4283
    %4285 = vrot.lane.b32.xlu0 %v4062, 124
    %v4286 = vpop.permute.xlu0 %4285
    %4287 = vrot.lane.b32.xlu0 %v4065, 124
    %v4288 = vpop.permute.xlu0 %4287
    %4289 = vrot.lane.b32.xlu0 %v4068, 124
    %v4290 = vpop.permute.xlu0 %4289
    %4291 = vrot.lane.b32.xlu0 %v4071, 124
    %v4292 = vpop.permute.xlu0 %4291
    %4293 = vrot.lane.b32.xlu0 %v4074, 124
    %v4294 = vpop.permute.xlu0 %4293
    %4295 = vrot.lane.b32.xlu0 %v4077, 124
    %v4296 = vpop.permute.xlu0 %4295
    %4297 = vrot.lane.b32.xlu0 %v4080, 124
    %v4298 = vpop.permute.xlu0 %4297
    %v4308 = vsel %vm968, %v4273, 0
    %v4311 = vsel %vm968, %v4274, 0
    %4313 = vmatpush.msra.mxu0 0.0
    %4314 = vmatpush.msra.mxu0 0.0
    %4315 = vmatpush.msra.mxu0 0.0
    %4316 = vmatpush.msra.mxu0 0.0
    %4317 = vmatpush.msra.mxu0 0.0
    %4318 = vmatpush.msra.mxu0 0.0
    %4319 = vmatpush.msra.mxu0 0.0
    %4320 = vmatpush.msra.mxu0 0.0
    %4321 = vmatpush.msra.mxu0 %v4298
    %4322 = vmatpush.msra.mxu0 %v4296
    %4323 = vmatpush.msra.mxu0 %v4294
    %4324 = vmatpush.msra.mxu0 %v4292
    %4325 = vmatpush.msra.mxu0 %v4290
    %4326 = vmatpush.msra.mxu0 %v4288
    %4327 = vmatpush.msra.mxu0 %v4286
    %4328 = vmatpush.msra.mxu0 %v4284
    %4329 = vmatmul.f32.gmra.mxu0 %v4308
    %v4330 = vpop.f32.mrf.mxu0
    %v4331 = vadd.f32 0.0, %v4330
    %4332 = vmatmul.f32.gmra.mxu0 %v4311
    %v4333 = vpop.f32.mrf.mxu0
    %v4334 = vadd.f32 0.0, %v4333
    %4335 = vdwg.mxu0
    %4336 = vrot.lane.b32.xlu0 %v3917, 120
    %v4337 = vpop.permute.xlu0 %4336
    %4338 = vrot.lane.b32.xlu0 %v3920, 120
    %v4339 = vpop.permute.xlu0 %4338
    %4340 = vrot.lane.b32.xlu0 %v3979, 120
    %v4341 = vpop.permute.xlu0 %4340
    %4342 = vrot.lane.b32.xlu0 %v3982, 120
    %v4343 = vpop.permute.xlu0 %4342
    %4344 = vrot.lane.b32.xlu0 %v3985, 120
    %v4345 = vpop.permute.xlu0 %4344
    %4346 = vrot.lane.b32.xlu0 %v3988, 120
    %v4347 = vpop.permute.xlu0 %4346
    %4348 = vrot.lane.b32.xlu0 %v3991, 120
    %v4349 = vpop.permute.xlu0 %4348
    %4350 = vrot.lane.b32.xlu0 %v3994, 120
    %v4351 = vpop.permute.xlu0 %4350
    %4352 = vrot.lane.b32.xlu0 %v3997, 120
    %v4353 = vpop.permute.xlu0 %4352
    %4354 = vrot.lane.b32.xlu0 %v4000, 120
    %v4355 = vpop.permute.xlu0 %4354
    %v4356 = vsel %vm912, %v4337, 0
    %v4358 = vsel %vm912, %v4339, 0
    %v4360 = vsel %vm912, %v4341, 0
    %v4362 = vsel %vm912, %v4343, 0
    %v4364 = vsel %vm912, %v4345, 0
    %v4366 = vsel %vm912, %v4347, 0
    %v4368 = vsel %vm912, %v4349, 0
    %v4370 = vsel %vm912, %v4351, 0
    %v4372 = vsel %vm912, %v4353, 0
    %v4374 = vsel %vm912, %v4355, 0
    %4376 = vmatpush.xpose.msra.mxu0 0.0
    %4377 = vmatpush.xpose.msra.mxu0 0.0
    %4378 = vmatpush.xpose.msra.mxu0 0.0
    %4379 = vmatpush.xpose.msra.mxu0 0.0
    %4380 = vmatpush.xpose.msra.mxu0 0.0
    %4381 = vmatpush.xpose.msra.mxu0 0.0
    %4382 = vmatpush.xpose.msra.mxu0 0.0
    %4383 = vmatpush.xpose.msra.mxu0 0.0
    %4384 = vmatpush.xpose.msra.mxu0 %v4374
    %4385 = vmatpush.xpose.msra.mxu0 %v4372
    %4386 = vmatpush.xpose.msra.mxu0 %v4370
    %4387 = vmatpush.xpose.msra.mxu0 %v4368
    %4388 = vmatpush.xpose.msra.mxu0 %v4366
    %4389 = vmatpush.xpose.msra.mxu0 %v4364
    %4390 = vmatpush.xpose.msra.mxu0 %v4362
    %4391 = vmatpush.xpose.msra.mxu0 %v4360
    %4392 = vmatmul.f32.gmra.mxu0 %v4356
    %v4393 = vpop.f32.mrf.mxu0
    %v4394 = vadd.f32 0.0, %v4393
    %4395 = vmatmul.f32.gmra.mxu0 %v4358
    %v4396 = vpop.f32.mrf.mxu0
    %v4397 = vadd.f32 0.0, %v4396
    %4398 = vdwg.mxu0
    %v4399 = vmul.f32 %v4394, 0.5
    %v4400 = vmul.f32 %v4397, 0.5
    %v4401 = vsel %vm968, %v4399, -inf
    %4402 = vmax.xlane.f32.xlu0 %v4401
    %v4403 = vpop.xlane.xlu0 %4402
    %v4404 = vsel %vm972, %v4400, -inf
    %4405 = vmax.xlane.f32.xlu0 %v4404
    %v4406 = vpop.xlane.xlu0 %4405
    %v4407 = vsub.f32 %v4399, %v4403
    %v4408 = vsub.f32 %v4400, %v4406
    %v4409 = vmul.f32 %v4407, 1.442695
    %v4410 = vpow.pop %v4409
    %v4411 = vmul.f32 %v4408, 1.442695
    %v4412 = vpow.pop %v4411
    %v4413 = vsel %vm968, %v4410, 0.0
    %4414 = vadd.xlane.f32.xlu0 %v4413
    %v4415 = vpop.xlane.xlu0 %4414
    %v4416 = vsel %vm972, %v4412, 0.0
    %4417 = vadd.xlane.f32.xlu0 %v4416
    %v4418 = vpop.xlane.xlu0 %4417
    %v4419 = vrcp.pop %v4415
    %v4420 = vrcp.pop %v4418
    %v4421 = vmul.f32 %v4410, %v4419
    %v4422 = vmul.f32 %v4412, %v4420
    %4423 = vrot.lane.b32.xlu0 %v4059, 120
    %v4424 = vpop.permute.xlu0 %4423
    %4425 = vrot.lane.b32.xlu0 %v4062, 120
    %v4426 = vpop.permute.xlu0 %4425
    %4427 = vrot.lane.b32.xlu0 %v4065, 120
    %v4428 = vpop.permute.xlu0 %4427
    %4429 = vrot.lane.b32.xlu0 %v4068, 120
    %v4430 = vpop.permute.xlu0 %4429
    %4431 = vrot.lane.b32.xlu0 %v4071, 120
    %v4432 = vpop.permute.xlu0 %4431
    %4433 = vrot.lane.b32.xlu0 %v4074, 120
    %v4434 = vpop.permute.xlu0 %4433
    %4435 = vrot.lane.b32.xlu0 %v4077, 120
    %v4436 = vpop.permute.xlu0 %4435
    %4437 = vrot.lane.b32.xlu0 %v4080, 120
    %v4438 = vpop.permute.xlu0 %4437
    %v4448 = vsel %vm968, %v4421, 0
    %v4451 = vsel %vm968, %v4422, 0
    %4453 = vmatpush.msra.mxu0 0.0
    %4454 = vmatpush.msra.mxu0 0.0
    %4455 = vmatpush.msra.mxu0 0.0
    %4456 = vmatpush.msra.mxu0 0.0
    %4457 = vmatpush.msra.mxu0 0.0
    %4458 = vmatpush.msra.mxu0 0.0
    %4459 = vmatpush.msra.mxu0 0.0
    %4460 = vmatpush.msra.mxu0 0.0
    %4461 = vmatpush.msra.mxu0 %v4438
    %4462 = vmatpush.msra.mxu0 %v4436
    %4463 = vmatpush.msra.mxu0 %v4434
    %4464 = vmatpush.msra.mxu0 %v4432
    %4465 = vmatpush.msra.mxu0 %v4430
    %4466 = vmatpush.msra.mxu0 %v4428
    %4467 = vmatpush.msra.mxu0 %v4426
    %4468 = vmatpush.msra.mxu0 %v4424
    %4469 = vmatmul.f32.gmra.mxu0 %v4448
    %v4470 = vpop.f32.mrf.mxu0
    %v4471 = vadd.f32 0.0, %v4470
    %4472 = vmatmul.f32.gmra.mxu0 %v4451
    %v4473 = vpop.f32.mrf.mxu0
    %v4474 = vadd.f32 0.0, %v4473
    %4475 = vdwg.mxu0
    %4476 = vrot.lane.b32.xlu0 %v3917, 116
    %v4477 = vpop.permute.xlu0 %4476
    %4478 = vrot.lane.b32.xlu0 %v3920, 116
    %v4479 = vpop.permute.xlu0 %4478
    %4480 = vrot.lane.b32.xlu0 %v3979, 116
    %v4481 = vpop.permute.xlu0 %4480
    %4482 = vrot.lane.b32.xlu0 %v3982, 116
    %v4483 = vpop.permute.xlu0 %4482
    %4484 = vrot.lane.b32.xlu0 %v3985, 116
    %v4485 = vpop.permute.xlu0 %4484
    %4486 = vrot.lane.b32.xlu0 %v3988, 116
    %v4487 = vpop.permute.xlu0 %4486
    %4488 = vrot.lane.b32.xlu0 %v3991, 116
    %v4489 = vpop.permute.xlu0 %4488
    %4490 = vrot.lane.b32.xlu0 %v3994, 116
    %v4491 = vpop.permute.xlu0 %4490
    %4492 = vrot.lane.b32.xlu0 %v3997, 116
    %v4493 = vpop.permute.xlu0 %4492
    %4494 = vrot.lane.b32.xlu0 %v4000, 116
    %v4495 = vpop.permute.xlu0 %4494
    %v4496 = vsel %vm912, %v4477, 0
    %v4498 = vsel %vm912, %v4479, 0
    %v4500 = vsel %vm912, %v4481, 0
    %v4502 = vsel %vm912, %v4483, 0
    %v4504 = vsel %vm912, %v4485, 0
    %v4506 = vsel %vm912, %v4487, 0
    %v4508 = vsel %vm912, %v4489, 0
    %v4510 = vsel %vm912, %v4491, 0
    %v4512 = vsel %vm912, %v4493, 0
    %v4514 = vsel %vm912, %v4495, 0
    %4516 = vmatpush.xpose.msra.mxu0 0.0
    %4517 = vmatpush.xpose.msra.mxu0 0.0
    %4518 = vmatpush.xpose.msra.mxu0 0.0
    %4519 = vmatpush.xpose.msra.mxu0 0.0
    %4520 = vmatpush.xpose.msra.mxu0 0.0
    %4521 = vmatpush.xpose.msra.mxu0 0.0
    %4522 = vmatpush.xpose.msra.mxu0 0.0
    %4523 = vmatpush.xpose.msra.mxu0 0.0
    %4524 = vmatpush.xpose.msra.mxu0 %v4514
    %4525 = vmatpush.xpose.msra.mxu0 %v4512
    %4526 = vmatpush.xpose.msra.mxu0 %v4510
    %4527 = vmatpush.xpose.msra.mxu0 %v4508
    %4528 = vmatpush.xpose.msra.mxu0 %v4506
    %4529 = vmatpush.xpose.msra.mxu0 %v4504
    %4530 = vmatpush.xpose.msra.mxu0 %v4502
    %4531 = vmatpush.xpose.msra.mxu0 %v4500
    %4532 = vmatmul.f32.gmra.mxu0 %v4496
    %v4533 = vpop.f32.mrf.mxu0
    %v4534 = vadd.f32 0.0, %v4533
    %4535 = vmatmul.f32.gmra.mxu0 %v4498
    %v4536 = vpop.f32.mrf.mxu0
    %v4537 = vadd.f32 0.0, %v4536
    %4538 = vdwg.mxu0
    %v4539 = vmul.f32 %v4534, 0.5
    %v4540 = vmul.f32 %v4537, 0.5
    %v4541 = vsel %vm968, %v4539, -inf
    %4542 = vmax.xlane.f32.xlu0 %v4541
    %v4543 = vpop.xlane.xlu0 %4542
    %v4544 = vsel %vm972, %v4540, -inf
    %4545 = vmax.xlane.f32.xlu0 %v4544
    %v4546 = vpop.xlane.xlu0 %4545
    %v4547 = vsub.f32 %v4539, %v4543
    %v4548 = vsub.f32 %v4540, %v4546
    %v4549 = vmul.f32 %v4547, 1.442695
    %v4550 = vpow.pop %v4549
    %v4551 = vmul.f32 %v4548, 1.442695
    %v4552 = vpow.pop %v4551
    %v4553 = vsel %vm968, %v4550, 0.0
    %4554 = vadd.xlane.f32.xlu0 %v4553
    %v4555 = vpop.xlane.xlu0 %4554
    %v4556 = vsel %vm972, %v4552, 0.0
    %4557 = vadd.xlane.f32.xlu0 %v4556
    %v4558 = vpop.xlane.xlu0 %4557
    %v4559 = vrcp.pop %v4555
    %v4560 = vrcp.pop %v4558
    %v4561 = vmul.f32 %v4550, %v4559
    %v4562 = vmul.f32 %v4552, %v4560
    %4563 = vrot.lane.b32.xlu0 %v4059, 116
    %v4564 = vpop.permute.xlu0 %4563
    %4565 = vrot.lane.b32.xlu0 %v4062, 116
    %v4566 = vpop.permute.xlu0 %4565
    %4567 = vrot.lane.b32.xlu0 %v4065, 116
    %v4568 = vpop.permute.xlu0 %4567
    %4569 = vrot.lane.b32.xlu0 %v4068, 116
    %v4570 = vpop.permute.xlu0 %4569
    %4571 = vrot.lane.b32.xlu0 %v4071, 116
    %v4572 = vpop.permute.xlu0 %4571
    %4573 = vrot.lane.b32.xlu0 %v4074, 116
    %v4574 = vpop.permute.xlu0 %4573
    %4575 = vrot.lane.b32.xlu0 %v4077, 116
    %v4576 = vpop.permute.xlu0 %4575
    %4577 = vrot.lane.b32.xlu0 %v4080, 116
    %v4578 = vpop.permute.xlu0 %4577
    %v4588 = vsel %vm968, %v4561, 0
    %v4591 = vsel %vm968, %v4562, 0
    %4593 = vmatpush.msra.mxu0 0.0
    %4594 = vmatpush.msra.mxu0 0.0
    %4595 = vmatpush.msra.mxu0 0.0
    %4596 = vmatpush.msra.mxu0 0.0
    %4597 = vmatpush.msra.mxu0 0.0
    %4598 = vmatpush.msra.mxu0 0.0
    %4599 = vmatpush.msra.mxu0 0.0
    %4600 = vmatpush.msra.mxu0 0.0
    %4601 = vmatpush.msra.mxu0 %v4578
    %4602 = vmatpush.msra.mxu0 %v4576
    %4603 = vmatpush.msra.mxu0 %v4574
    %4604 = vmatpush.msra.mxu0 %v4572
    %4605 = vmatpush.msra.mxu0 %v4570
    %4606 = vmatpush.msra.mxu0 %v4568
    %4607 = vmatpush.msra.mxu0 %v4566
    %4608 = vmatpush.msra.mxu0 %v4564
    %4609 = vmatmul.f32.gmra.mxu0 %v4588
    %v4610 = vpop.f32.mrf.mxu0
    %v4611 = vadd.f32 0.0, %v4610
    %4612 = vmatmul.f32.gmra.mxu0 %v4591
    %v4613 = vpop.f32.mrf.mxu0
    %v4614 = vadd.f32 0.0, %v4613
    %4615 = vdwg.mxu0
    %4618 = vrot.lane.b32.xlu0 %v4331, 4
    %v4619 = vpop.permute.xlu0 %4618
    %4620 = vrot.lane.b32.xlu0 %v4334, 4
    %v4621 = vpop.permute.xlu0 %4620
    %4626 = vrot.lane.b32.xlu0 %v4471, 8
    %v4627 = vpop.permute.xlu0 %4626
    %4628 = vrot.lane.b32.xlu0 %v4474, 8
    %v4629 = vpop.permute.xlu0 %4628
    %4634 = vrot.lane.b32.xlu0 %v4611, 12
    %v4635 = vpop.permute.xlu0 %4634
    %4636 = vrot.lane.b32.xlu0 %v4614, 12
    %v4637 = vpop.permute.xlu0 %4636
    %v4640 = vsel %vm912, %v4183, %v4619
    %v4641 = vsel %vm912, %v4186, %v4621
    %v4642 = vsel %vm171, %v4640, %v4627
    %v4643 = vsel %vm171, %v4641, %v4629
    %v4644 = vsel %vm1477, %v4642, %v4635
    %v4645 = vsel %vm1477, %v4643, %v4637
    %v4646 = vld [vmem:[#allocation2 + $0x2f8] sm:$0x1]
    %v4647 = vperm.slane %v4646, 0
    %4648 = vrot.lane.b32.xlu0 %v1480, 64
    %v4649 = vpop.permute.xlu0 %4648
    %4650 = vrot.lane.b32.xlu0 %v1481, 64
    %v4651 = vpop.permute.xlu0 %4650
    %v4655 = vsel %vm590, %v4644, 0
    %v4658 = vsel %vm590, %v4645, 0
    %4660 = vmatpush.msra.mxu0 0.0
    %4661 = vmatpush.msra.mxu0 0.0
    %4662 = vmatpush.msra.mxu0 0.0
    %4663 = vmatpush.msra.mxu0 0.0
    %4664 = vmatpush.msra.mxu0 0.0
    %4665 = vmatpush.msra.mxu0 0.0
    %4666 = vmatpush.msra.mxu0 0.0
    %4667 = vmatpush.msra.mxu0 0.0
    %4668 = vmatpush.msra.mxu0 0.0
    %4669 = vmatpush.msra.mxu0 0.0
    %4670 = vmatpush.msra.mxu0 0.0
    %4671 = vmatpush.msra.mxu0 0.0
    %4672 = vmatpush.msra.mxu0 0.0
    %4673 = vmatpush.msra.mxu0 0.0
    %4674 = vmatpush.msra.mxu0 %v4651
    %4675 = vmatpush.msra.mxu0 %v4649
    %4676 = vmatmul.f32.gmra.mxu0 %v4655
    %v4677 = vpop.f32.mrf.mxu0
    %v4678 = vadd.f32 %v4647, %v4677
    %4679 = vmatmul.f32.gmra.mxu0 %v4658
    %v4680 = vpop.f32.mrf.mxu0
    %v4681 = vadd.f32 %v4647, %v4680
    %4682 = vdwg.mxu0
    %v4683 = vadd.f32 %v3862, %v4678
    %v4684 = vadd.f32 %v3863, %v4681
    %v4685 = vsel %vm60, %v4683, 0.0
    %4686 = vadd.xlane.f32.xlu0 %v4685
    %v4687 = vpop.xlane.xlu0 %4686
    %v4688 = vsel %vm643, %v4684, 0.0
    %4689 = vadd.xlane.f32.xlu0 %v4688
    %v4690 = vpop.xlane.xlu0 %4689
    %v4691 = vmul.f32 %v4687, %v653
    %v4692 = vmul.f32 %v4690, %v653
    %v4693 = vsub.f32 %v4683, %v4691
    %v4694 = vsub.f32 %v4684, %v4692
    %v4695 = vmul.f32 %v4693, %v4693
    %v4696 = vmul.f32 %v4694, %v4694
    %v4697 = vsel %vm60, %v4695, 0.0
    %4698 = vadd.xlane.f32.xlu0 %v4697
    %v4699 = vpop.xlane.xlu0 %4698
    %v4700 = vsel %vm643, %v4696, 0.0
    %4701 = vadd.xlane.f32.xlu0 %v4700
    %v4702 = vpop.xlane.xlu0 %4701
    %v4703 = vmul.f32 %v4699, %v653
    %v4704 = vmul.f32 %v4702, %v653
    %v4705 = vadd.f32 %v4703, 1e-05
    %v4706 = vadd.f32 %v4704, 1e-05
    %v4707 = vrsqrt.pop %v4705
    %v4708 = vmul.f32 %v4707, %v4705
    %v4709 = vmul.f32 %v4708, %v4707
    %v4710 = vmul.f32 0.5, %v4709
    %v4711 = vsub.f32 1.5, %v4710
    %v4712 = vmul.f32 %v4707, %v4711
    %vm4713 = vweird.f32 %v4705
    %vm4714 = vweird.f32 %v4707
    %vm4715 = vmor %vm4713, %vm4714
    %v4716 = vsel %vm4715, %v4707, %v4712
    %v4717 = vrsqrt.pop %v4706
    %v4718 = vmul.f32 %v4717, %v4706
    %v4719 = vmul.f32 %v4718, %v4717
    %v4720 = vmul.f32 0.5, %v4719
    %v4721 = vsub.f32 1.5, %v4720
    %v4722 = vmul.f32 %v4717, %v4721
    %vm4723 = vweird.f32 %v4706
    %vm4724 = vweird.f32 %v4717
    %vm4725 = vmor %vm4723, %vm4724
    %v4726 = vsel %vm4725, %v4717, %v4722
    %v4727 = vmul.f32 %v4693, %v4716
    %v4728 = vmul.f32 %v4694, %v4726
    %4730 = vrot.lane.b32.xlu0 %v4647, 96
    %v4731 = vpop.permute.xlu0 %4730
    %v4733 = vmul.f32 %v4727, %v4731
    %v4734 = vmul.f32 %v4728, %v4731
    %4735 = vrot.lane.b32.xlu0 %v4647, 64
    %v4736 = vpop.permute.xlu0 %4735
    %v4738 = vadd.f32 %v4733, %v4736
    %v4739 = vadd.f32 %v4734, %v4736
    %v4740 = vld [vmem:[#allocation2 + $0xd0] sm:$0xff]
    %v4741 = vld [vmem:[#allocation2 + $0xd8] sm:$0xff]
    %v4742 = vld [vmem:[#allocation2 + $0xe0] sm:$0xff]
    %v4743 = vld [vmem:[#allocation2 + $0xe8] sm:$0xff]
    %v4744 = vld [vmem:[#allocation2 + $0x300] sm:$0x1]
    %v4745 = vperm.slane %v4744, 0
    %v4747 = vsel %vm60, %v4738, 0
    %v4750 = vsel %vm60, %v4739, 0
    %4752 = vmatpush.msra.mxu0 0.0
    %4753 = vmatpush.msra.mxu0 0.0
    %4754 = vmatpush.msra.mxu0 0.0
    %4755 = vmatpush.msra.mxu0 0.0
    %4756 = vmatpush.msra.mxu0 0.0
    %4757 = vmatpush.msra.mxu0 0.0
    %4758 = vmatpush.msra.mxu0 0.0
    %4759 = vmatpush.msra.mxu0 0.0
    %4760 = vmatpush.msra.mxu0 0.0
    %4761 = vmatpush.msra.mxu0 0.0
    %4762 = vmatpush.msra.mxu0 0.0
    %4763 = vmatpush.msra.mxu0 0.0
    %4764 = vmatpush.msra.mxu0 %v4743
    %4765 = vmatpush.msra.mxu0 %v4742
    %4766 = vmatpush.msra.mxu0 %v4741
    %4767 = vmatpush.msra.mxu0 %v4740
    %4768 = vmatmul.f32.gmra.mxu0 %v4747
    %v4769 = vpop.f32.mrf.mxu0
    %v4770 = vadd.f32 %v4745, %v4769
    %4771 = vmatmul.f32.gmra.mxu0 %v4750
    %v4772 = vpop.f32.mrf.mxu0
    %v4773 = vadd.f32 %v4745, %v4772
    %4774 = vdwg.mxu0
    %v4775 = vmax.f32 %v4770, 0.0
    %v4776 = vmax.f32 %v4773, 0.0
    %4785 = vrot.lane.b32.xlu0 %v1615, 96
    %v4786 = vpop.permute.xlu0 %4785
    %4787 = vrot.lane.b32.xlu0 %v1616, 96
    %v4788 = vpop.permute.xlu0 %4787
    %4789 = vrot.lane.b32.xlu0 %v1617, 96
    %v4790 = vpop.permute.xlu0 %4789
    %4791 = vrot.lane.b32.xlu0 %v1618, 96
    %v4792 = vpop.permute.xlu0 %4791
    %4793 = vrot.lane.b32.xlu0 %v1619, 96
    %v4794 = vpop.permute.xlu0 %4793
    %4795 = vrot.lane.b32.xlu0 %v1620, 96
    %v4796 = vpop.permute.xlu0 %4795
    %4797 = vrot.lane.b32.xlu0 %v1621, 96
    %v4798 = vpop.permute.xlu0 %4797
    %4799 = vrot.lane.b32.xlu0 %v1622, 96
    %v4800 = vpop.permute.xlu0 %4799
    %4809 = vrot.lane.b32.xlu0 %v4647, 32
    %v4810 = vpop.permute.xlu0 %4809
    %v4813 = vsel %vm968, %v4775, 0
    %v4816 = vsel %vm968, %v4776, 0
    %4818 = vmatpush.msra.mxu0 0.0
    %4819 = vmatpush.msra.mxu0 0.0
    %4820 = vmatpush.msra.mxu0 0.0
    %4821 = vmatpush.msra.mxu0 0.0
    %4822 = vmatpush.msra.mxu0 0.0
    %4823 = vmatpush.msra.mxu0 0.0
    %4824 = vmatpush.msra.mxu0 0.0
    %4825 = vmatpush.msra.mxu0 0.0
    %4826 = vmatpush.msra.mxu0 %v4800
    %4827 = vmatpush.msra.mxu0 %v4798
    %4828 = vmatpush.msra.mxu0 %v4796
    %4829 = vmatpush.msra.mxu0 %v4794
    %4830 = vmatpush.msra.mxu0 %v4792
    %4831 = vmatpush.msra.mxu0 %v4790
    %4832 = vmatpush.msra.mxu0 %v4788
    %4833 = vmatpush.msra.mxu0 %v4786
    %4834 = vmatmul.f32.gmra.mxu0 %v4813
    %v4835 = vpop.f32.mrf.mxu0
    %v4836 = vadd.f32 %v4810, %v4835
    %4837 = vmatmul.f32.gmra.mxu0 %v4816
    %v4838 = vpop.f32.mrf.mxu0
    %v4839 = vadd.f32 %v4810, %v4838
    %4840 = vdwg.mxu0
    %v4841 = vadd.f32 %v4738, %v4836
    %v4842 = vadd.f32 %v4739, %v4839
    %v4843 = vsel %vm60, %v4841, 0.0
    %4844 = vadd.xlane.f32.xlu0 %v4843
    %v4845 = vpop.xlane.xlu0 %4844
    %v4846 = vsel %vm643, %v4842, 0.0
    %4847 = vadd.xlane.f32.xlu0 %v4846
    %v4848 = vpop.xlane.xlu0 %4847
    %v4849 = vmul.f32 %v4845, %v653
    %v4850 = vmul.f32 %v4848, %v653
    %v4851 = vsub.f32 %v4841, %v4849
    %v4852 = vsub.f32 %v4842, %v4850
    %v4853 = vmul.f32 %v4851, %v4851
    %v4854 = vmul.f32 %v4852, %v4852
    %v4855 = vsel %vm60, %v4853, 0.0
    %4856 = vadd.xlane.f32.xlu0 %v4855
    %v4857 = vpop.xlane.xlu0 %4856
    %v4858 = vsel %vm643, %v4854, 0.0
    %4859 = vadd.xlane.f32.xlu0 %v4858
    %v4860 = vpop.xlane.xlu0 %4859
    %v4861 = vmul.f32 %v4857, %v653
    %v4862 = vmul.f32 %v4860, %v653
    %v4863 = vadd.f32 %v4861, 1e-05
    %v4864 = vadd.f32 %v4862, 1e-05
    %v4865 = vrsqrt.pop %v4863
    %v4866 = vmul.f32 %v4865, %v4863
    %v4867 = vmul.f32 %v4866, %v4865
    %v4868 = vmul.f32 0.5, %v4867
    %v4869 = vsub.f32 1.5, %v4868
    %v4870 = vmul.f32 %v4865, %v4869
    %vm4871 = vweird.f32 %v4863
    %vm4872 = vweird.f32 %v4865
    %vm4873 = vmor %vm4871, %vm4872
    %v4874 = vsel %vm4873, %v4865, %v4870
    %v4875 = vrsqrt.pop %v4864
    %v4876 = vmul.f32 %v4875, %v4864
    %v4877 = vmul.f32 %v4876, %v4875
    %v4878 = vmul.f32 0.5, %v4877
    %v4879 = vsub.f32 1.5, %v4878
    %v4880 = vmul.f32 %v4875, %v4879
    %vm4881 = vweird.f32 %v4864
    %vm4882 = vweird.f32 %v4875
    %vm4883 = vmor %vm4881, %vm4882
    %v4884 = vsel %vm4883, %v4875, %v4880
    %v4885 = vmul.f32 %v4851, %v4874
    %v4886 = vmul.f32 %v4852, %v4884
    %4888 = vrot.lane.b32.xlu0 %v4745, 64
    %v4889 = vpop.permute.xlu0 %4888
    %v4891 = vmul.f32 %v4885, %v4889
    %v4892 = vmul.f32 %v4886, %v4889
    %4893 = vrot.lane.b32.xlu0 %v4745, 32
    %v4894 = vpop.permute.xlu0 %4893
    %v4896 = vadd.f32 %v4891, %v4894
    %v4897 = vadd.f32 %v4892, %v4894
    %v4898 = vadd.f32 %v4896, %v36
    %v4899 = vadd.f32 %v4897, %v37
    %4900 = vrot.lane.b32.xlu0 %v3772, 48
    %v4901 = vpop.permute.xlu0 %4900
    %4902 = vrot.lane.b32.xlu0 %v3773, 48
    %v4903 = vpop.permute.xlu0 %4902
    %4904 = vrot.lane.b32.xlu0 %v3774, 48
    %v4905 = vpop.permute.xlu0 %4904
    %4906 = vrot.lane.b32.xlu0 %v3775, 48
    %v4907 = vpop.permute.xlu0 %4906
    %4912 = vrot.lane.b32.xlu0 %v3855, 16
    %v4913 = vpop.permute.xlu0 %4912
    %4915 = vmatpush.msra.mxu0 0.0
    %4916 = vmatpush.msra.mxu0 0.0
    %4917 = vmatpush.msra.mxu0 0.0
    %4918 = vmatpush.msra.mxu0 0.0
    %4919 = vmatpush.msra.mxu0 0.0
    %4920 = vmatpush.msra.mxu0 0.0
    %4921 = vmatpush.msra.mxu0 0.0
    %4922 = vmatpush.msra.mxu0 0.0
    %4923 = vmatpush.msra.mxu0 0.0
    %4924 = vmatpush.msra.mxu0 0.0
    %4925 = vmatpush.msra.mxu0 0.0
    %4926 = vmatpush.msra.mxu0 0.0
    %4927 = vmatpush.msra.mxu0 %v4907
    %4928 = vmatpush.msra.mxu0 %v4905
    %4929 = vmatpush.msra.mxu0 %v4903
    %4930 = vmatpush.msra.mxu0 %v4901
    %4931 = vmatmul.f32.gmra.mxu0 %v3938
    %v4932 = vpop.f32.mrf.mxu0
    %v4933 = vadd.f32 %v4913, %v4932
    %4934 = vmatmul.f32.gmra.mxu0 %v3941
    %v4935 = vpop.f32.mrf.mxu0
    %v4936 = vadd.f32 %v4913, %v4935
    %4937 = vmatmul.f32.gmra.mxu0 %v3944
    %v4938 = vpop.f32.mrf.mxu0
    %v4939 = vadd.f32 %v4913, %v4938
    %4940 = vmatmul.f32.gmra.mxu0 %v3947
    %v4941 = vpop.f32.mrf.mxu0
    %v4942 = vadd.f32 %v4913, %v4941
    %4943 = vmatmul.f32.gmra.mxu0 %v3950
    %v4944 = vpop.f32.mrf.mxu0
    %v4945 = vadd.f32 %v4913, %v4944
    %4946 = vmatmul.f32.gmra.mxu0 %v3953
    %v4947 = vpop.f32.mrf.mxu0
    %v4948 = vadd.f32 %v4913, %v4947
    %4949 = vmatmul.f32.gmra.mxu0 %v3956
    %v4950 = vpop.f32.mrf.mxu0
    %v4951 = vadd.f32 %v4913, %v4950
    %4952 = vmatmul.f32.gmra.mxu0 %v3959
    %v4953 = vpop.f32.mrf.mxu0
    %v4954 = vadd.f32 %v4913, %v4953
    %4955 = vdwg.mxu0
    %v4956 = vld [vmem:[#allocation2 + $0x308] sm:$0x1]
    %v4957 = vperm.slane %v4956, 0
    %4958 = vrot.lane.b32.xlu0 %v3772, 32
    %v4959 = vpop.permute.xlu0 %4958
    %4960 = vrot.lane.b32.xlu0 %v3773, 32
    %v4961 = vpop.permute.xlu0 %4960
    %4962 = vrot.lane.b32.xlu0 %v3774, 32
    %v4963 = vpop.permute.xlu0 %4962
    %4964 = vrot.lane.b32.xlu0 %v3775, 32
    %v4965 = vpop.permute.xlu0 %4964
    %v4971 = vsel %vm60, %v4898, 0
    %v4974 = vsel %vm60, %v4899, 0
    %4976 = vmatpush.msra.mxu0 0.0
    %4977 = vmatpush.msra.mxu0 0.0
    %4978 = vmatpush.msra.mxu0 0.0
    %4979 = vmatpush.msra.mxu0 0.0
    %4980 = vmatpush.msra.mxu0 0.0
    %4981 = vmatpush.msra.mxu0 0.0
    %4982 = vmatpush.msra.mxu0 0.0
    %4983 = vmatpush.msra.mxu0 0.0
    %4984 = vmatpush.msra.mxu0 0.0
    %4985 = vmatpush.msra.mxu0 0.0
    %4986 = vmatpush.msra.mxu0 0.0
    %4987 = vmatpush.msra.mxu0 0.0
    %4988 = vmatpush.msra.mxu0 %v4965
    %4989 = vmatpush.msra.mxu0 %v4963
    %4990 = vmatpush.msra.mxu0 %v4961
    %4991 = vmatpush.msra.mxu0 %v4959
    %4992 = vmatmul.f32.gmra.mxu0 %v4971
    %v4993 = vpop.f32.mrf.mxu0
    %v4994 = vadd.f32 %v4957, %v4993
    %4995 = vmatmul.f32.gmra.mxu0 %v4974
    %v4996 = vpop.f32.mrf.mxu0
    %v4997 = vadd.f32 %v4957, %v4996
    %4998 = vdwg.mxu0
    %4999 = vrot.lane.b32.xlu0 %v3772, 16
    %v5000 = vpop.permute.xlu0 %4999
    %5001 = vrot.lane.b32.xlu0 %v3773, 16
    %v5002 = vpop.permute.xlu0 %5001
    %5003 = vrot.lane.b32.xlu0 %v3774, 16
    %v5004 = vpop.permute.xlu0 %5003
    %5005 = vrot.lane.b32.xlu0 %v3775, 16
    %v5006 = vpop.permute.xlu0 %5005
    %5012 = vrot.lane.b32.xlu0 %v4957, 112
    %v5013 = vpop.permute.xlu0 %5012
    %v5016 = vsel %vm60, %v4896, 0
    %v5019 = vsel %vm60, %v4897, 0
    %5021 = vmatpush.msra.mxu0 0.0
    %5022 = vmatpush.msra.mxu0 0.0
    %5023 = vmatpush.msra.mxu0 0.0
    %5024 = vmatpush.msra.mxu0 0.0
    %5025 = vmatpush.msra.mxu0 0.0
    %5026 = vmatpush.msra.mxu0 0.0
    %5027 = vmatpush.msra.mxu0 0.0
    %5028 = vmatpush.msra.mxu0 0.0
    %5029 = vmatpush.msra.mxu0 0.0
    %5030 = vmatpush.msra.mxu0 0.0
    %5031 = vmatpush.msra.mxu0 0.0
    %5032 = vmatpush.msra.mxu0 0.0
    %5033 = vmatpush.msra.mxu0 %v5006
    %5034 = vmatpush.msra.mxu0 %v5004
    %5035 = vmatpush.msra.mxu0 %v5002
    %5036 = vmatpush.msra.mxu0 %v5000
    %5037 = vmatmul.f32.gmra.mxu0 %v5016
    %v5038 = vpop.f32.mrf.mxu0
    %v5039 = vadd.f32 %v5013, %v5038
    %5040 = vmatmul.f32.gmra.mxu0 %v5019
    %v5041 = vpop.f32.mrf.mxu0
    %v5042 = vadd.f32 %v5013, %v5041
    %5043 = vdwg.mxu0
    %v5045 = vsel %vm912, %v4933, 0
    %v5048 = vsel %vm912, %v4936, 0
    %v5051 = vsel %vm912, %v4939, 0
    %v5054 = vsel %vm912, %v4942, 0
    %v5057 = vsel %vm912, %v4945, 0
    %v5060 = vsel %vm912, %v4948, 0
    %v5063 = vsel %vm912, %v4951, 0
    %v5066 = vsel %vm912, %v4954, 0
    %v5069 = vsel %vm912, %v4994, 0
    %v5072 = vsel %vm912, %v4997, 0
    %5074 = vmatpush.xpose.msra.mxu0 0.0
    %5075 = vmatpush.xpose.msra.mxu0 0.0
    %5076 = vmatpush.xpose.msra.mxu0 0.0
    %5077 = vmatpush.xpose.msra.mxu0 0.0
    %5078 = vmatpush.xpose.msra.mxu0 0.0
    %5079 = vmatpush.xpose.msra.mxu0 0.0
    %5080 = vmatpush.xpose.msra.mxu0 0.0
    %5081 = vmatpush.xpose.msra.mxu0 0.0
    %5082 = vmatpush.xpose.msra.mxu0 0.0
    %5083 = vmatpush.xpose.msra.mxu0 0.0
    %5084 = vmatpush.xpose.msra.mxu0 0.0
    %5085 = vmatpush.xpose.msra.mxu0 0.0
    %5086 = vmatpush.xpose.msra.mxu0 0.0
    %5087 = vmatpush.xpose.msra.mxu0 0.0
    %5088 = vmatpush.xpose.msra.mxu0 %v5072
    %5089 = vmatpush.xpose.msra.mxu0 %v5069
    %5090 = vmatmul.f32.gmra.mxu0 %v5045
    %v5091 = vpop.f32.mrf.mxu0
    %v5092 = vadd.f32 0.0, %v5091
    %5093 = vmatmul.f32.gmra.mxu0 %v5048
    %v5094 = vpop.f32.mrf.mxu0
    %v5095 = vadd.f32 0.0, %v5094
    %5096 = vmatmul.f32.gmra.mxu0 %v5051
    %v5097 = vpop.f32.mrf.mxu0
    %v5098 = vadd.f32 0.0, %v5097
    %5099 = vmatmul.f32.gmra.mxu0 %v5054
    %v5100 = vpop.f32.mrf.mxu0
    %v5101 = vadd.f32 0.0, %v5100
    %5102 = vmatmul.f32.gmra.mxu0 %v5057
    %v5103 = vpop.f32.mrf.mxu0
    %v5104 = vadd.f32 0.0, %v5103
    %5105 = vmatmul.f32.gmra.mxu0 %v5060
    %v5106 = vpop.f32.mrf.mxu0
    %v5107 = vadd.f32 0.0, %v5106
    %5108 = vmatmul.f32.gmra.mxu0 %v5063
    %v5109 = vpop.f32.mrf.mxu0
    %v5110 = vadd.f32 0.0, %v5109
    %5111 = vmatmul.f32.gmra.mxu0 %v5066
    %v5112 = vpop.f32.mrf.mxu0
    %v5113 = vadd.f32 0.0, %v5112
    %5114 = vdwg.mxu0
    %v5115 = vmul.f32 %v5092, 0.5
    %v5116 = vmul.f32 %v5095, 0.5
    %v5117 = vmul.f32 %v5098, 0.5
    %v5118 = vmul.f32 %v5101, 0.5
    %v5119 = vmul.f32 %v5104, 0.5
    %v5120 = vmul.f32 %v5107, 0.5
    %v5121 = vmul.f32 %v5110, 0.5
    %v5122 = vmul.f32 %v5113, 0.5
    %v5123 = vsel %vm209, %v5115, -inf
    %5124 = vmax.xlane.f32.xlu0 %v5123
    %v5125 = vpop.xlane.xlu0 %5124
    %v5126 = vsel %vm209, %v5116, -inf
    %5127 = vmax.xlane.f32.xlu0 %v5126
    %v5128 = vpop.xlane.xlu0 %5127
    %v5129 = vsel %vm209, %v5117, -inf
    %5130 = vmax.xlane.f32.xlu0 %v5129
    %v5131 = vpop.xlane.xlu0 %5130
    %v5132 = vsel %vm209, %v5118, -inf
    %5133 = vmax.xlane.f32.xlu0 %v5132
    %v5134 = vpop.xlane.xlu0 %5133
    %v5135 = vsel %vm209, %v5119, -inf
    %5136 = vmax.xlane.f32.xlu0 %v5135
    %v5137 = vpop.xlane.xlu0 %5136
    %v5138 = vsel %vm209, %v5120, -inf
    %5139 = vmax.xlane.f32.xlu0 %v5138
    %v5140 = vpop.xlane.xlu0 %5139
    %v5141 = vsel %vm209, %v5121, -inf
    %5142 = vmax.xlane.f32.xlu0 %v5141
    %v5143 = vpop.xlane.xlu0 %5142
    %v5144 = vsel %vm209, %v5122, -inf
    %5145 = vmax.xlane.f32.xlu0 %v5144
    %v5146 = vpop.xlane.xlu0 %5145
    %v5147 = vsub.f32 %v5115, %v5125
    %v5148 = vsub.f32 %v5116, %v5128
    %v5149 = vsub.f32 %v5117, %v5131
    %v5150 = vsub.f32 %v5118, %v5134
    %v5151 = vsub.f32 %v5119, %v5137
    %v5152 = vsub.f32 %v5120, %v5140
    %v5153 = vsub.f32 %v5121, %v5143
    %v5154 = vsub.f32 %v5122, %v5146
    %v5155 = vmul.f32 %v5147, 1.442695
    %v5156 = vpow.pop %v5155
    %v5157 = vmul.f32 %v5148, 1.442695
    %v5158 = vpow.pop %v5157
    %v5159 = vmul.f32 %v5149, 1.442695
    %v5160 = vpow.pop %v5159
    %v5161 = vmul.f32 %v5150, 1.442695
    %v5162 = vpow.pop %v5161
    %v5163 = vmul.f32 %v5151, 1.442695
    %v5164 = vpow.pop %v5163
    %v5165 = vmul.f32 %v5152, 1.442695
    %v5166 = vpow.pop %v5165
    %v5167 = vmul.f32 %v5153, 1.442695
    %v5168 = vpow.pop %v5167
    %v5169 = vmul.f32 %v5154, 1.442695
    %v5170 = vpow.pop %v5169
    %v5171 = vsel %vm209, %v5156, 0.0
    %5172 = vadd.xlane.f32.xlu0 %v5171
    %v5173 = vpop.xlane.xlu0 %5172
    %v5174 = vsel %vm209, %v5158, 0.0
    %5175 = vadd.xlane.f32.xlu0 %v5174
    %v5176 = vpop.xlane.xlu0 %5175
    %v5177 = vsel %vm209, %v5160, 0.0
    %5178 = vadd.xlane.f32.xlu0 %v5177
    %v5179 = vpop.xlane.xlu0 %5178
    %v5180 = vsel %vm209, %v5162, 0.0
    %5181 = vadd.xlane.f32.xlu0 %v5180
    %v5182 = vpop.xlane.xlu0 %5181
    %v5183 = vsel %vm209, %v5164, 0.0
    %5184 = vadd.xlane.f32.xlu0 %v5183
    %v5185 = vpop.xlane.xlu0 %5184
    %v5186 = vsel %vm209, %v5166, 0.0
    %5187 = vadd.xlane.f32.xlu0 %v5186
    %v5188 = vpop.xlane.xlu0 %5187
    %v5189 = vsel %vm209, %v5168, 0.0
    %5190 = vadd.xlane.f32.xlu0 %v5189
    %v5191 = vpop.xlane.xlu0 %5190
    %v5192 = vsel %vm209, %v5170, 0.0
    %5193 = vadd.xlane.f32.xlu0 %v5192
    %v5194 = vpop.xlane.xlu0 %5193
    %v5195 = vrcp.pop %v5173
    %v5196 = vrcp.pop %v5176
    %v5197 = vrcp.pop %v5179
    %v5198 = vrcp.pop %v5182
    %v5199 = vrcp.pop %v5185
    %v5200 = vrcp.pop %v5188
    %v5201 = vrcp.pop %v5191
    %v5202 = vrcp.pop %v5194
    %v5203 = vmul.f32 %v5156, %v5195
    %v5204 = vmul.f32 %v5158, %v5196
    %v5205 = vmul.f32 %v5160, %v5197
    %v5206 = vmul.f32 %v5162, %v5198
    %v5207 = vmul.f32 %v5164, %v5199
    %v5208 = vmul.f32 %v5166, %v5200
    %v5209 = vmul.f32 %v5168, %v5201
    %v5210 = vmul.f32 %v5170, %v5202
    %v5212 = vsel %vm209, %v5203, 0
    %v5215 = vsel %vm209, %v5204, 0
    %v5218 = vsel %vm209, %v5205, 0
    %v5221 = vsel %vm209, %v5206, 0
    %v5224 = vsel %vm209, %v5207, 0
    %v5227 = vsel %vm209, %v5208, 0
    %v5230 = vsel %vm209, %v5209, 0
    %v5233 = vsel %vm209, %v5210, 0
    %v5236 = vsel %vm239, %v5042, 0
    %5238 = vmatpush.msra.mxu0 0.0
    %5239 = vmatpush.msra.mxu0 0.0
    %5240 = vmatpush.msra.mxu0 0.0
    %5241 = vmatpush.msra.mxu0 0.0
    %5242 = vmatpush.msra.mxu0 0.0
    %5243 = vmatpush.msra.mxu0 0.0
    %5244 = vmatpush.msra.mxu0 0.0
    %5245 = vmatpush.msra.mxu0 0.0
    %5246 = vmatpush.msra.mxu0 0.0
    %5247 = vmatpush.msra.mxu0 0.0
    %5248 = vmatpush.msra.mxu0 0.0
    %5249 = vmatpush.msra.mxu0 0.0
    %5250 = vmatpush.msra.mxu0 0.0
    %5251 = vmatpush.msra.mxu0 0.0
    %5252 = vmatpush.msra.mxu0 %v5236
    %5253 = vmatpush.msra.mxu0 %v5039
    %5254 = vmatmul.f32.gmra.mxu0 %v5212
    %v5255 = vpop.f32.mrf.mxu0
    %v5256 = vadd.f32 0.0, %v5255
    %5257 = vmatmul.f32.gmra.mxu0 %v5215
    %v5258 = vpop.f32.mrf.mxu0
    %v5259 = vadd.f32 0.0, %v5258
    %5260 = vmatmul.f32.gmra.mxu0 %v5218
    %v5261 = vpop.f32.mrf.mxu0
    %v5262 = vadd.f32 0.0, %v5261
    %5263 = vmatmul.f32.gmra.mxu0 %v5221
    %v5264 = vpop.f32.mrf.mxu0
    %v5265 = vadd.f32 0.0, %v5264
    %5266 = vmatmul.f32.gmra.mxu0 %v5224
    %v5267 = vpop.f32.mrf.mxu0
    %v5268 = vadd.f32 0.0, %v5267
    %5269 = vmatmul.f32.gmra.mxu0 %v5227
    %v5270 = vpop.f32.mrf.mxu0
    %v5271 = vadd.f32 0.0, %v5270
    %5272 = vmatmul.f32.gmra.mxu0 %v5230
    %v5273 = vpop.f32.mrf.mxu0
    %v5274 = vadd.f32 0.0, %v5273
    %5275 = vmatmul.f32.gmra.mxu0 %v5233
    %v5276 = vpop.f32.mrf.mxu0
    %v5277 = vadd.f32 0.0, %v5276
    %5278 = vdwg.mxu0
    %5279 = vrot.lane.b32.xlu0 %v4933, 124
    %v5280 = vpop.permute.xlu0 %5279
    %5281 = vrot.lane.b32.xlu0 %v4936, 124
    %v5282 = vpop.permute.xlu0 %5281
    %5283 = vrot.lane.b32.xlu0 %v4939, 124
    %v5284 = vpop.permute.xlu0 %5283
    %5285 = vrot.lane.b32.xlu0 %v4942, 124
    %v5286 = vpop.permute.xlu0 %5285
    %5287 = vrot.lane.b32.xlu0 %v4945, 124
    %v5288 = vpop.permute.xlu0 %5287
    %5289 = vrot.lane.b32.xlu0 %v4948, 124
    %v5290 = vpop.permute.xlu0 %5289
    %5291 = vrot.lane.b32.xlu0 %v4951, 124
    %v5292 = vpop.permute.xlu0 %5291
    %5293 = vrot.lane.b32.xlu0 %v4954, 124
    %v5294 = vpop.permute.xlu0 %5293
    %5295 = vrot.lane.b32.xlu0 %v4994, 124
    %v5296 = vpop.permute.xlu0 %5295
    %5297 = vrot.lane.b32.xlu0 %v4997, 124
    %v5298 = vpop.permute.xlu0 %5297
    %v5299 = vsel %vm912, %v5280, 0
    %v5301 = vsel %vm912, %v5282, 0
    %v5303 = vsel %vm912, %v5284, 0
    %v5305 = vsel %vm912, %v5286, 0
    %v5307 = vsel %vm912, %v5288, 0
    %v5309 = vsel %vm912, %v5290, 0
    %v5311 = vsel %vm912, %v5292, 0
    %v5313 = vsel %vm912, %v5294, 0
    %v5315 = vsel %vm912, %v5296, 0
    %v5317 = vsel %vm912, %v5298, 0
    %5319 = vmatpush.xpose.msra.mxu0 0.0
    %5320 = vmatpush.xpose.msra.mxu0 0.0
    %5321 = vmatpush.xpose.msra.mxu0 0.0
    %5322 = vmatpush.xpose.msra.mxu0 0.0
    %5323 = vmatpush.xpose.msra.mxu0 0.0
    %5324 = vmatpush.xpose.msra.mxu0 0.0
    %5325 = vmatpush.xpose.msra.mxu0 0.0
    %5326 = vmatpush.xpose.msra.mxu0 0.0
    %5327 = vmatpush.xpose.msra.mxu0 0.0
    %5328 = vmatpush.xpose.msra.mxu0 0.0
    %5329 = vmatpush.xpose.msra.mxu0 0.0
    %5330 = vmatpush.xpose.msra.mxu0 0.0
    %5331 = vmatpush.xpose.msra.mxu0 0.0
    %5332 = vmatpush.xpose.msra.mxu0 0.0
    %5333 = vmatpush.xpose.msra.mxu0 %v5317
    %5334 = vmatpush.xpose.msra.mxu0 %v5315
    %5335 = vmatmul.f32.gmra.mxu0 %v5299
    %v5336 = vpop.f32.mrf.mxu0
    %v5337 = vadd.f32 0.0, %v5336
    %5338 = vmatmul.f32.gmra.mxu0 %v5301
    %v5339 = vpop.f32.mrf.mxu0
    %v5340 = vadd.f32 0.0, %v5339
    %5341 = vmatmul.f32.gmra.mxu0 %v5303
    %v5342 = vpop.f32.mrf.mxu0
    %v5343 = vadd.f32 0.0, %v5342
    %5344 = vmatmul.f32.gmra.mxu0 %v5305
    %v5345 = vpop.f32.mrf.mxu0
    %v5346 = vadd.f32 0.0, %v5345
    %5347 = vmatmul.f32.gmra.mxu0 %v5307
    %v5348 = vpop.f32.mrf.mxu0
    %v5349 = vadd.f32 0.0, %v5348
    %5350 = vmatmul.f32.gmra.mxu0 %v5309
    %v5351 = vpop.f32.mrf.mxu0
    %v5352 = vadd.f32 0.0, %v5351
    %5353 = vmatmul.f32.gmra.mxu0 %v5311
    %v5354 = vpop.f32.mrf.mxu0
    %v5355 = vadd.f32 0.0, %v5354
    %5356 = vmatmul.f32.gmra.mxu0 %v5313
    %v5357 = vpop.f32.mrf.mxu0
    %v5358 = vadd.f32 0.0, %v5357
    %5359 = vdwg.mxu0
    %v5360 = vmul.f32 %v5337, 0.5
    %v5361 = vmul.f32 %v5340, 0.5
    %v5362 = vmul.f32 %v5343, 0.5
    %v5363 = vmul.f32 %v5346, 0.5
    %v5364 = vmul.f32 %v5349, 0.5
    %v5365 = vmul.f32 %v5352, 0.5
    %v5366 = vmul.f32 %v5355, 0.5
    %v5367 = vmul.f32 %v5358, 0.5
    %v5368 = vsel %vm209, %v5360, -inf
    %5369 = vmax.xlane.f32.xlu0 %v5368
    %v5370 = vpop.xlane.xlu0 %5369
    %v5371 = vsel %vm209, %v5361, -inf
    %5372 = vmax.xlane.f32.xlu0 %v5371
    %v5373 = vpop.xlane.xlu0 %5372
    %v5374 = vsel %vm209, %v5362, -inf
    %5375 = vmax.xlane.f32.xlu0 %v5374
    %v5376 = vpop.xlane.xlu0 %5375
    %v5377 = vsel %vm209, %v5363, -inf
    %5378 = vmax.xlane.f32.xlu0 %v5377
    %v5379 = vpop.xlane.xlu0 %5378
    %v5380 = vsel %vm209, %v5364, -inf
    %5381 = vmax.xlane.f32.xlu0 %v5380
    %v5382 = vpop.xlane.xlu0 %5381
    %v5383 = vsel %vm209, %v5365, -inf
    %5384 = vmax.xlane.f32.xlu0 %v5383
    %v5385 = vpop.xlane.xlu0 %5384
    %v5386 = vsel %vm209, %v5366, -inf
    %5387 = vmax.xlane.f32.xlu0 %v5386
    %v5388 = vpop.xlane.xlu0 %5387
    %v5389 = vsel %vm209, %v5367, -inf
    %5390 = vmax.xlane.f32.xlu0 %v5389
    %v5391 = vpop.xlane.xlu0 %5390
    %v5392 = vsub.f32 %v5360, %v5370
    %v5393 = vsub.f32 %v5361, %v5373
    %v5394 = vsub.f32 %v5362, %v5376
    %v5395 = vsub.f32 %v5363, %v5379
    %v5396 = vsub.f32 %v5364, %v5382
    %v5397 = vsub.f32 %v5365, %v5385
    %v5398 = vsub.f32 %v5366, %v5388
    %v5399 = vsub.f32 %v5367, %v5391
    %v5400 = vmul.f32 %v5392, 1.442695
    %v5401 = vpow.pop %v5400
    %v5402 = vmul.f32 %v5393, 1.442695
    %v5403 = vpow.pop %v5402
    %v5404 = vmul.f32 %v5394, 1.442695
    %v5405 = vpow.pop %v5404
    %v5406 = vmul.f32 %v5395, 1.442695
    %v5407 = vpow.pop %v5406
    %v5408 = vmul.f32 %v5396, 1.442695
    %v5409 = vpow.pop %v5408
    %v5410 = vmul.f32 %v5397, 1.442695
    %v5411 = vpow.pop %v5410
    %v5412 = vmul.f32 %v5398, 1.442695
    %v5413 = vpow.pop %v5412
    %v5414 = vmul.f32 %v5399, 1.442695
    %v5415 = vpow.pop %v5414
    %v5416 = vsel %vm209, %v5401, 0.0
    %5417 = vadd.xlane.f32.xlu0 %v5416
    %v5418 = vpop.xlane.xlu0 %5417
    %v5419 = vsel %vm209, %v5403, 0.0
    %5420 = vadd.xlane.f32.xlu0 %v5419
    %v5421 = vpop.xlane.xlu0 %5420
    %v5422 = vsel %vm209, %v5405, 0.0
    %5423 = vadd.xlane.f32.xlu0 %v5422
    %v5424 = vpop.xlane.xlu0 %5423
    %v5425 = vsel %vm209, %v5407, 0.0
    %5426 = vadd.xlane.f32.xlu0 %v5425
    %v5427 = vpop.xlane.xlu0 %5426
    %v5428 = vsel %vm209, %v5409, 0.0
    %5429 = vadd.xlane.f32.xlu0 %v5428
    %v5430 = vpop.xlane.xlu0 %5429
    %v5431 = vsel %vm209, %v5411, 0.0
    %5432 = vadd.xlane.f32.xlu0 %v5431
    %v5433 = vpop.xlane.xlu0 %5432
    %v5434 = vsel %vm209, %v5413, 0.0
    %5435 = vadd.xlane.f32.xlu0 %v5434
    %v5436 = vpop.xlane.xlu0 %5435
    %v5437 = vsel %vm209, %v5415, 0.0
    %5438 = vadd.xlane.f32.xlu0 %v5437
    %v5439 = vpop.xlane.xlu0 %5438
    %v5440 = vrcp.pop %v5418
    %v5441 = vrcp.pop %v5421
    %v5442 = vrcp.pop %v5424
    %v5443 = vrcp.pop %v5427
    %v5444 = vrcp.pop %v5430
    %v5445 = vrcp.pop %v5433
    %v5446 = vrcp.pop %v5436
    %v5447 = vrcp.pop %v5439
    %v5448 = vmul.f32 %v5401, %v5440
    %v5449 = vmul.f32 %v5403, %v5441
    %v5450 = vmul.f32 %v5405, %v5442
    %v5451 = vmul.f32 %v5407, %v5443
    %v5452 = vmul.f32 %v5409, %v5444
    %v5453 = vmul.f32 %v5411, %v5445
    %v5454 = vmul.f32 %v5413, %v5446
    %v5455 = vmul.f32 %v5415, %v5447
    %5457 = vrot.lane.b32.xlu0 %v5039, 124
    %v5458 = vpop.permute.xlu0 %5457
    %5459 = vrot.lane.b32.xlu0 %v5042, 124
    %v5460 = vpop.permute.xlu0 %5459
    %v5463 = vsel %vm209, %v5448, 0
    %v5466 = vsel %vm209, %v5449, 0
    %v5469 = vsel %vm209, %v5450, 0
    %v5472 = vsel %vm209, %v5451, 0
    %v5475 = vsel %vm209, %v5452, 0
    %v5478 = vsel %vm209, %v5453, 0
    %v5481 = vsel %vm209, %v5454, 0
    %v5484 = vsel %vm209, %v5455, 0
    %v5486 = vsel %vm239, %v5460, 0
    %5488 = vmatpush.msra.mxu0 0.0
    %5489 = vmatpush.msra.mxu0 0.0
    %5490 = vmatpush.msra.mxu0 0.0
    %5491 = vmatpush.msra.mxu0 0.0
    %5492 = vmatpush.msra.mxu0 0.0
    %5493 = vmatpush.msra.mxu0 0.0
    %5494 = vmatpush.msra.mxu0 0.0
    %5495 = vmatpush.msra.mxu0 0.0
    %5496 = vmatpush.msra.mxu0 0.0
    %5497 = vmatpush.msra.mxu0 0.0
    %5498 = vmatpush.msra.mxu0 0.0
    %5499 = vmatpush.msra.mxu0 0.0
    %5500 = vmatpush.msra.mxu0 0.0
    %5501 = vmatpush.msra.mxu0 0.0
    %5502 = vmatpush.msra.mxu0 %v5486
    %5503 = vmatpush.msra.mxu0 %v5458
    %5504 = vmatmul.f32.gmra.mxu0 %v5463
    %v5505 = vpop.f32.mrf.mxu0
    %v5506 = vadd.f32 0.0, %v5505
    %5507 = vmatmul.f32.gmra.mxu0 %v5466
    %v5508 = vpop.f32.mrf.mxu0
    %v5509 = vadd.f32 0.0, %v5508
    %5510 = vmatmul.f32.gmra.mxu0 %v5469
    %v5511 = vpop.f32.mrf.mxu0
    %v5512 = vadd.f32 0.0, %v5511
    %5513 = vmatmul.f32.gmra.mxu0 %v5472
    %v5514 = vpop.f32.mrf.mxu0
    %v5515 = vadd.f32 0.0, %v5514
    %5516 = vmatmul.f32.gmra.mxu0 %v5475
    %v5517 = vpop.f32.mrf.mxu0
    %v5518 = vadd.f32 0.0, %v5517
    %5519 = vmatmul.f32.gmra.mxu0 %v5478
    %v5520 = vpop.f32.mrf.mxu0
    %v5521 = vadd.f32 0.0, %v5520
    %5522 = vmatmul.f32.gmra.mxu0 %v5481
    %v5523 = vpop.f32.mrf.mxu0
    %v5524 = vadd.f32 0.0, %v5523
    %5525 = vmatmul.f32.gmra.mxu0 %v5484
    %v5526 = vpop.f32.mrf.mxu0
    %v5527 = vadd.f32 0.0, %v5526
    %5528 = vdwg.mxu0
    %5529 = vrot.lane.b32.xlu0 %v4933, 120
    %v5530 = vpop.permute.xlu0 %5529
    %5531 = vrot.lane.b32.xlu0 %v4936, 120
    %v5532 = vpop.permute.xlu0 %5531
    %5533 = vrot.lane.b32.xlu0 %v4939, 120
    %v5534 = vpop.permute.xlu0 %5533
    %5535 = vrot.lane.b32.xlu0 %v4942, 120
    %v5536 = vpop.permute.xlu0 %5535
    %5537 = vrot.lane.b32.xlu0 %v4945, 120
    %v5538 = vpop.permute.xlu0 %5537
    %5539 = vrot.lane.b32.xlu0 %v4948, 120
    %v5540 = vpop.permute.xlu0 %5539
    %5541 = vrot.lane.b32.xlu0 %v4951, 120
    %v5542 = vpop.permute.xlu0 %5541
    %5543 = vrot.lane.b32.xlu0 %v4954, 120
    %v5544 = vpop.permute.xlu0 %5543
    %5545 = vrot.lane.b32.xlu0 %v4994, 120
    %v5546 = vpop.permute.xlu0 %5545
    %5547 = vrot.lane.b32.xlu0 %v4997, 120
    %v5548 = vpop.permute.xlu0 %5547
    %v5549 = vsel %vm912, %v5530, 0
    %v5551 = vsel %vm912, %v5532, 0
    %v5553 = vsel %vm912, %v5534, 0
    %v5555 = vsel %vm912, %v5536, 0
    %v5557 = vsel %vm912, %v5538, 0
    %v5559 = vsel %vm912, %v5540, 0
    %v5561 = vsel %vm912, %v5542, 0
    %v5563 = vsel %vm912, %v5544, 0
    %v5565 = vsel %vm912, %v5546, 0
    %v5567 = vsel %vm912, %v5548, 0
    %5569 = vmatpush.xpose.msra.mxu0 0.0
    %5570 = vmatpush.xpose.msra.mxu0 0.0
    %5571 = vmatpush.xpose.msra.mxu0 0.0
    %5572 = vmatpush.xpose.msra.mxu0 0.0
    %5573 = vmatpush.xpose.msra.mxu0 0.0
    %5574 = vmatpush.xpose.msra.mxu0 0.0
    %5575 = vmatpush.xpose.msra.mxu0 0.0
    %5576 = vmatpush.xpose.msra.mxu0 0.0
    %5577 = vmatpush.xpose.msra.mxu0 0.0
    %5578 = vmatpush.xpose.msra.mxu0 0.0
    %5579 = vmatpush.xpose.msra.mxu0 0.0
    %5580 = vmatpush.xpose.msra.mxu0 0.0
    %5581 = vmatpush.xpose.msra.mxu0 0.0
    %5582 = vmatpush.xpose.msra.mxu0 0.0
    %5583 = vmatpush.xpose.msra.mxu0 %v5567
    %5584 = vmatpush.xpose.msra.mxu0 %v5565
    %5585 = vmatmul.f32.gmra.mxu0 %v5549
    %v5586 = vpop.f32.mrf.mxu0
    %v5587 = vadd.f32 0.0, %v5586
    %5588 = vmatmul.f32.gmra.mxu0 %v5551
    %v5589 = vpop.f32.mrf.mxu0
    %v5590 = vadd.f32 0.0, %v5589
    %5591 = vmatmul.f32.gmra.mxu0 %v5553
    %v5592 = vpop.f32.mrf.mxu0
    %v5593 = vadd.f32 0.0, %v5592
    %5594 = vmatmul.f32.gmra.mxu0 %v5555
    %v5595 = vpop.f32.mrf.mxu0
    %v5596 = vadd.f32 0.0, %v5595
    %5597 = vmatmul.f32.gmra.mxu0 %v5557
    %v5598 = vpop.f32.mrf.mxu0
    %v5599 = vadd.f32 0.0, %v5598
    %5600 = vmatmul.f32.gmra.mxu0 %v5559
    %v5601 = vpop.f32.mrf.mxu0
    %v5602 = vadd.f32 0.0, %v5601
    %5603 = vmatmul.f32.gmra.mxu0 %v5561
    %v5604 = vpop.f32.mrf.mxu0
    %v5605 = vadd.f32 0.0, %v5604
    %5606 = vmatmul.f32.gmra.mxu0 %v5563
    %v5607 = vpop.f32.mrf.mxu0
    %v5608 = vadd.f32 0.0, %v5607
    %5609 = vdwg.mxu0
    %v5610 = vmul.f32 %v5587, 0.5
    %v5611 = vmul.f32 %v5590, 0.5
    %v5612 = vmul.f32 %v5593, 0.5
    %v5613 = vmul.f32 %v5596, 0.5
    %v5614 = vmul.f32 %v5599, 0.5
    %v5615 = vmul.f32 %v5602, 0.5
    %v5616 = vmul.f32 %v5605, 0.5
    %v5617 = vmul.f32 %v5608, 0.5
    %v5618 = vsel %vm209, %v5610, -inf
    %5619 = vmax.xlane.f32.xlu0 %v5618
    %v5620 = vpop.xlane.xlu0 %5619
    %v5621 = vsel %vm209, %v5611, -inf
    %5622 = vmax.xlane.f32.xlu0 %v5621
    %v5623 = vpop.xlane.xlu0 %5622
    %v5624 = vsel %vm209, %v5612, -inf
    %5625 = vmax.xlane.f32.xlu0 %v5624
    %v5626 = vpop.xlane.xlu0 %5625
    %v5627 = vsel %vm209, %v5613, -inf
    %5628 = vmax.xlane.f32.xlu0 %v5627
    %v5629 = vpop.xlane.xlu0 %5628
    %v5630 = vsel %vm209, %v5614, -inf
    %5631 = vmax.xlane.f32.xlu0 %v5630
    %v5632 = vpop.xlane.xlu0 %5631
    %v5633 = vsel %vm209, %v5615, -inf
    %5634 = vmax.xlane.f32.xlu0 %v5633
    %v5635 = vpop.xlane.xlu0 %5634
    %v5636 = vsel %vm209, %v5616, -inf
    %5637 = vmax.xlane.f32.xlu0 %v5636
    %v5638 = vpop.xlane.xlu0 %5637
    %v5639 = vsel %vm209, %v5617, -inf
    %5640 = vmax.xlane.f32.xlu0 %v5639
    %v5641 = vpop.xlane.xlu0 %5640
    %v5642 = vsub.f32 %v5610, %v5620
    %v5643 = vsub.f32 %v5611, %v5623
    %v5644 = vsub.f32 %v5612, %v5626
    %v5645 = vsub.f32 %v5613, %v5629
    %v5646 = vsub.f32 %v5614, %v5632
    %v5647 = vsub.f32 %v5615, %v5635
    %v5648 = vsub.f32 %v5616, %v5638
    %v5649 = vsub.f32 %v5617, %v5641
    %v5650 = vmul.f32 %v5642, 1.442695
    %v5651 = vpow.pop %v5650
    %v5652 = vmul.f32 %v5643, 1.442695
    %v5653 = vpow.pop %v5652
    %v5654 = vmul.f32 %v5644, 1.442695
    %v5655 = vpow.pop %v5654
    %v5656 = vmul.f32 %v5645, 1.442695
    %v5657 = vpow.pop %v5656
    %v5658 = vmul.f32 %v5646, 1.442695
    %v5659 = vpow.pop %v5658
    %v5660 = vmul.f32 %v5647, 1.442695
    %v5661 = vpow.pop %v5660
    %v5662 = vmul.f32 %v5648, 1.442695
    %v5663 = vpow.pop %v5662
    %v5664 = vmul.f32 %v5649, 1.442695
    %v5665 = vpow.pop %v5664
    %v5666 = vsel %vm209, %v5651, 0.0
    %5667 = vadd.xlane.f32.xlu0 %v5666
    %v5668 = vpop.xlane.xlu0 %5667
    %v5669 = vsel %vm209, %v5653, 0.0
    %5670 = vadd.xlane.f32.xlu0 %v5669
    %v5671 = vpop.xlane.xlu0 %5670
    %v5672 = vsel %vm209, %v5655, 0.0
    %5673 = vadd.xlane.f32.xlu0 %v5672
    %v5674 = vpop.xlane.xlu0 %5673
    %v5675 = vsel %vm209, %v5657, 0.0
    %5676 = vadd.xlane.f32.xlu0 %v5675
    %v5677 = vpop.xlane.xlu0 %5676
    %v5678 = vsel %vm209, %v5659, 0.0
    %5679 = vadd.xlane.f32.xlu0 %v5678
    %v5680 = vpop.xlane.xlu0 %5679
    %v5681 = vsel %vm209, %v5661, 0.0
    %5682 = vadd.xlane.f32.xlu0 %v5681
    %v5683 = vpop.xlane.xlu0 %5682
    %v5684 = vsel %vm209, %v5663, 0.0
    %5685 = vadd.xlane.f32.xlu0 %v5684
    %v5686 = vpop.xlane.xlu0 %5685
    %v5687 = vsel %vm209, %v5665, 0.0
    %5688 = vadd.xlane.f32.xlu0 %v5687
    %v5689 = vpop.xlane.xlu0 %5688
    %v5690 = vrcp.pop %v5668
    %v5691 = vrcp.pop %v5671
    %v5692 = vrcp.pop %v5674
    %v5693 = vrcp.pop %v5677
    %v5694 = vrcp.pop %v5680
    %v5695 = vrcp.pop %v5683
    %v5696 = vrcp.pop %v5686
    %v5697 = vrcp.pop %v5689
    %v5698 = vmul.f32 %v5651, %v5690
    %v5699 = vmul.f32 %v5653, %v5691
    %v5700 = vmul.f32 %v5655, %v5692
    %v5701 = vmul.f32 %v5657, %v5693
    %v5702 = vmul.f32 %v5659, %v5694
    %v5703 = vmul.f32 %v5661, %v5695
    %v5704 = vmul.f32 %v5663, %v5696
    %v5705 = vmul.f32 %v5665, %v5697
    %5706 = vrot.lane.b32.xlu0 %v5039, 120
    %v5707 = vpop.permute.xlu0 %5706
    %5708 = vrot.lane.b32.xlu0 %v5042, 120
    %v5709 = vpop.permute.xlu0 %5708
    %v5712 = vsel %vm209, %v5698, 0
    %v5715 = vsel %vm209, %v5699, 0
    %v5718 = vsel %vm209, %v5700, 0
    %v5721 = vsel %vm209, %v5701, 0
    %v5724 = vsel %vm209, %v5702, 0
    %v5727 = vsel %vm209, %v5703, 0
    %v5730 = vsel %vm209, %v5704, 0
    %v5733 = vsel %vm209, %v5705, 0
    %v5735 = vsel %vm239, %v5709, 0
    %5737 = vmatpush.msra.mxu0 0.0
    %5738 = vmatpush.msra.mxu0 0.0
    %5739 = vmatpush.msra.mxu0 0.0
    %5740 = vmatpush.msra.mxu0 0.0
    %5741 = vmatpush.msra.mxu0 0.0
    %5742 = vmatpush.msra.mxu0 0.0
    %5743 = vmatpush.msra.mxu0 0.0
    %5744 = vmatpush.msra.mxu0 0.0
    %5745 = vmatpush.msra.mxu0 0.0
    %5746 = vmatpush.msra.mxu0 0.0
    %5747 = vmatpush.msra.mxu0 0.0
    %5748 = vmatpush.msra.mxu0 0.0
    %5749 = vmatpush.msra.mxu0 0.0
    %5750 = vmatpush.msra.mxu0 0.0
    %5751 = vmatpush.msra.mxu0 %v5735
    %5752 = vmatpush.msra.mxu0 %v5707
    %5753 = vmatmul.f32.gmra.mxu0 %v5712
    %v5754 = vpop.f32.mrf.mxu0
    %v5755 = vadd.f32 0.0, %v5754
    %5756 = vmatmul.f32.gmra.mxu0 %v5715
    %v5757 = vpop.f32.mrf.mxu0
    %v5758 = vadd.f32 0.0, %v5757
    %5759 = vmatmul.f32.gmra.mxu0 %v5718
    %v5760 = vpop.f32.mrf.mxu0
    %v5761 = vadd.f32 0.0, %v5760
    %5762 = vmatmul.f32.gmra.mxu0 %v5721
    %v5763 = vpop.f32.mrf.mxu0
    %v5764 = vadd.f32 0.0, %v5763
    %5765 = vmatmul.f32.gmra.mxu0 %v5724
    %v5766 = vpop.f32.mrf.mxu0
    %v5767 = vadd.f32 0.0, %v5766
    %5768 = vmatmul.f32.gmra.mxu0 %v5727
    %v5769 = vpop.f32.mrf.mxu0
    %v5770 = vadd.f32 0.0, %v5769
    %5771 = vmatmul.f32.gmra.mxu0 %v5730
    %v5772 = vpop.f32.mrf.mxu0
    %v5773 = vadd.f32 0.0, %v5772
    %5774 = vmatmul.f32.gmra.mxu0 %v5733
    %v5775 = vpop.f32.mrf.mxu0
    %v5776 = vadd.f32 0.0, %v5775
    %5777 = vdwg.mxu0
    %5778 = vrot.lane.b32.xlu0 %v4933, 116
    %v5779 = vpop.permute.xlu0 %5778
    %5780 = vrot.lane.b32.xlu0 %v4936, 116
    %v5781 = vpop.permute.xlu0 %5780
    %5782 = vrot.lane.b32.xlu0 %v4939, 116
    %v5783 = vpop.permute.xlu0 %5782
    %5784 = vrot.lane.b32.xlu0 %v4942, 116
    %v5785 = vpop.permute.xlu0 %5784
    %5786 = vrot.lane.b32.xlu0 %v4945, 116
    %v5787 = vpop.permute.xlu0 %5786
    %5788 = vrot.lane.b32.xlu0 %v4948, 116
    %v5789 = vpop.permute.xlu0 %5788
    %5790 = vrot.lane.b32.xlu0 %v4951, 116
    %v5791 = vpop.permute.xlu0 %5790
    %5792 = vrot.lane.b32.xlu0 %v4954, 116
    %v5793 = vpop.permute.xlu0 %5792
    %5794 = vrot.lane.b32.xlu0 %v4994, 116
    %v5795 = vpop.permute.xlu0 %5794
    %5796 = vrot.lane.b32.xlu0 %v4997, 116
    %v5797 = vpop.permute.xlu0 %5796
    %v5798 = vsel %vm912, %v5779, 0
    %v5800 = vsel %vm912, %v5781, 0
    %v5802 = vsel %vm912, %v5783, 0
    %v5804 = vsel %vm912, %v5785, 0
    %v5806 = vsel %vm912, %v5787, 0
    %v5808 = vsel %vm912, %v5789, 0
    %v5810 = vsel %vm912, %v5791, 0
    %v5812 = vsel %vm912, %v5793, 0
    %v5814 = vsel %vm912, %v5795, 0
    %v5816 = vsel %vm912, %v5797, 0
    %5818 = vmatpush.xpose.msra.mxu0 0.0
    %5819 = vmatpush.xpose.msra.mxu0 0.0
    %5820 = vmatpush.xpose.msra.mxu0 0.0
    %5821 = vmatpush.xpose.msra.mxu0 0.0
    %5822 = vmatpush.xpose.msra.mxu0 0.0
    %5823 = vmatpush.xpose.msra.mxu0 0.0
    %5824 = vmatpush.xpose.msra.mxu0 0.0
    %5825 = vmatpush.xpose.msra.mxu0 0.0
    %5826 = vmatpush.xpose.msra.mxu0 0.0
    %5827 = vmatpush.xpose.msra.mxu0 0.0
    %5828 = vmatpush.xpose.msra.mxu0 0.0
    %5829 = vmatpush.xpose.msra.mxu0 0.0
    %5830 = vmatpush.xpose.msra.mxu0 0.0
    %5831 = vmatpush.xpose.msra.mxu0 0.0
    %5832 = vmatpush.xpose.msra.mxu0 %v5816
    %5833 = vmatpush.xpose.msra.mxu0 %v5814
    %5834 = vmatmul.f32.gmra.mxu0 %v5798
    %v5835 = vpop.f32.mrf.mxu0
    %v5836 = vadd.f32 0.0, %v5835
    %5837 = vmatmul.f32.gmra.mxu0 %v5800
    %v5838 = vpop.f32.mrf.mxu0
    %v5839 = vadd.f32 0.0, %v5838
    %5840 = vmatmul.f32.gmra.mxu0 %v5802
    %v5841 = vpop.f32.mrf.mxu0
    %v5842 = vadd.f32 0.0, %v5841
    %5843 = vmatmul.f32.gmra.mxu0 %v5804
    %v5844 = vpop.f32.mrf.mxu0
    %v5845 = vadd.f32 0.0, %v5844
    %5846 = vmatmul.f32.gmra.mxu0 %v5806
    %v5847 = vpop.f32.mrf.mxu0
    %v5848 = vadd.f32 0.0, %v5847
    %5849 = vmatmul.f32.gmra.mxu0 %v5808
    %v5850 = vpop.f32.mrf.mxu0
    %v5851 = vadd.f32 0.0, %v5850
    %5852 = vmatmul.f32.gmra.mxu0 %v5810
    %v5853 = vpop.f32.mrf.mxu0
    %v5854 = vadd.f32 0.0, %v5853
    %5855 = vmatmul.f32.gmra.mxu0 %v5812
    %v5856 = vpop.f32.mrf.mxu0
    %v5857 = vadd.f32 0.0, %v5856
    %5858 = vdwg.mxu0
    %v5859 = vmul.f32 %v5836, 0.5
    %v5860 = vmul.f32 %v5839, 0.5
    %v5861 = vmul.f32 %v5842, 0.5
    %v5862 = vmul.f32 %v5845, 0.5
    %v5863 = vmul.f32 %v5848, 0.5
    %v5864 = vmul.f32 %v5851, 0.5
    %v5865 = vmul.f32 %v5854, 0.5
    %v5866 = vmul.f32 %v5857, 0.5
    %v5867 = vsel %vm209, %v5859, -inf
    %5868 = vmax.xlane.f32.xlu0 %v5867
    %v5869 = vpop.xlane.xlu0 %5868
    %v5870 = vsel %vm209, %v5860, -inf
    %5871 = vmax.xlane.f32.xlu0 %v5870
    %v5872 = vpop.xlane.xlu0 %5871
    %v5873 = vsel %vm209, %v5861, -inf
    %5874 = vmax.xlane.f32.xlu0 %v5873
    %v5875 = vpop.xlane.xlu0 %5874
    %v5876 = vsel %vm209, %v5862, -inf
    %5877 = vmax.xlane.f32.xlu0 %v5876
    %v5878 = vpop.xlane.xlu0 %5877
    %v5879 = vsel %vm209, %v5863, -inf
    %5880 = vmax.xlane.f32.xlu0 %v5879
    %v5881 = vpop.xlane.xlu0 %5880
    %v5882 = vsel %vm209, %v5864, -inf
    %5883 = vmax.xlane.f32.xlu0 %v5882
    %v5884 = vpop.xlane.xlu0 %5883
    %v5885 = vsel %vm209, %v5865, -inf
    %5886 = vmax.xlane.f32.xlu0 %v5885
    %v5887 = vpop.xlane.xlu0 %5886
    %v5888 = vsel %vm209, %v5866, -inf
    %5889 = vmax.xlane.f32.xlu0 %v5888
    %v5890 = vpop.xlane.xlu0 %5889
    %v5891 = vsub.f32 %v5859, %v5869
    %v5892 = vsub.f32 %v5860, %v5872
    %v5893 = vsub.f32 %v5861, %v5875
    %v5894 = vsub.f32 %v5862, %v5878
    %v5895 = vsub.f32 %v5863, %v5881
    %v5896 = vsub.f32 %v5864, %v5884
    %v5897 = vsub.f32 %v5865, %v5887
    %v5898 = vsub.f32 %v5866, %v5890
    %v5899 = vmul.f32 %v5891, 1.442695
    %v5900 = vpow.pop %v5899
    %v5901 = vmul.f32 %v5892, 1.442695
    %v5902 = vpow.pop %v5901
    %v5903 = vmul.f32 %v5893, 1.442695
    %v5904 = vpow.pop %v5903
    %v5905 = vmul.f32 %v5894, 1.442695
    %v5906 = vpow.pop %v5905
    %v5907 = vmul.f32 %v5895, 1.442695
    %v5908 = vpow.pop %v5907
    %v5909 = vmul.f32 %v5896, 1.442695
    %v5910 = vpow.pop %v5909
    %v5911 = vmul.f32 %v5897, 1.442695
    %v5912 = vpow.pop %v5911
    %v5913 = vmul.f32 %v5898, 1.442695
    %v5914 = vpow.pop %v5913
    %v5915 = vsel %vm209, %v5900, 0.0
    %5916 = vadd.xlane.f32.xlu0 %v5915
    %v5917 = vpop.xlane.xlu0 %5916
    %v5918 = vsel %vm209, %v5902, 0.0
    %5919 = vadd.xlane.f32.xlu0 %v5918
    %v5920 = vpop.xlane.xlu0 %5919
    %v5921 = vsel %vm209, %v5904, 0.0
    %5922 = vadd.xlane.f32.xlu0 %v5921
    %v5923 = vpop.xlane.xlu0 %5922
    %v5924 = vsel %vm209, %v5906, 0.0
    %5925 = vadd.xlane.f32.xlu0 %v5924
    %v5926 = vpop.xlane.xlu0 %5925
    %v5927 = vsel %vm209, %v5908, 0.0
    %5928 = vadd.xlane.f32.xlu0 %v5927
    %v5929 = vpop.xlane.xlu0 %5928
    %v5930 = vsel %vm209, %v5910, 0.0
    %5931 = vadd.xlane.f32.xlu0 %v5930
    %v5932 = vpop.xlane.xlu0 %5931
    %v5933 = vsel %vm209, %v5912, 0.0
    %5934 = vadd.xlane.f32.xlu0 %v5933
    %v5935 = vpop.xlane.xlu0 %5934
    %v5936 = vsel %vm209, %v5914, 0.0
    %5937 = vadd.xlane.f32.xlu0 %v5936
    %v5938 = vpop.xlane.xlu0 %5937
    %v5939 = vrcp.pop %v5917
    %v5940 = vrcp.pop %v5920
    %v5941 = vrcp.pop %v5923
    %v5942 = vrcp.pop %v5926
    %v5943 = vrcp.pop %v5929
    %v5944 = vrcp.pop %v5932
    %v5945 = vrcp.pop %v5935
    %v5946 = vrcp.pop %v5938
    %v5947 = vmul.f32 %v5900, %v5939
    %v5948 = vmul.f32 %v5902, %v5940
    %v5949 = vmul.f32 %v5904, %v5941
    %v5950 = vmul.f32 %v5906, %v5942
    %v5951 = vmul.f32 %v5908, %v5943
    %v5952 = vmul.f32 %v5910, %v5944
    %v5953 = vmul.f32 %v5912, %v5945
    %v5954 = vmul.f32 %v5914, %v5946
    %5955 = vrot.lane.b32.xlu0 %v5039, 116
    %v5956 = vpop.permute.xlu0 %5955
    %5957 = vrot.lane.b32.xlu0 %v5042, 116
    %v5958 = vpop.permute.xlu0 %5957
    %v5961 = vsel %vm209, %v5947, 0
    %v5964 = vsel %vm209, %v5948, 0
    %v5967 = vsel %vm209, %v5949, 0
    %v5970 = vsel %vm209, %v5950, 0
    %v5973 = vsel %vm209, %v5951, 0
    %v5976 = vsel %vm209, %v5952, 0
    %v5979 = vsel %vm209, %v5953, 0
    %v5982 = vsel %vm209, %v5954, 0
    %v5984 = vsel %vm239, %v5958, 0
    %5986 = vmatpush.msra.mxu0 0.0
    %5987 = vmatpush.msra.mxu0 0.0
    %5988 = vmatpush.msra.mxu0 0.0
    %5989 = vmatpush.msra.mxu0 0.0
    %5990 = vmatpush.msra.mxu0 0.0
    %5991 = vmatpush.msra.mxu0 0.0
    %5992 = vmatpush.msra.mxu0 0.0
    %5993 = vmatpush.msra.mxu0 0.0
    %5994 = vmatpush.msra.mxu0 0.0
    %5995 = vmatpush.msra.mxu0 0.0
    %5996 = vmatpush.msra.mxu0 0.0
    %5997 = vmatpush.msra.mxu0 0.0
    %5998 = vmatpush.msra.mxu0 0.0
    %5999 = vmatpush.msra.mxu0 0.0
    %6000 = vmatpush.msra.mxu0 %v5984
    %6001 = vmatpush.msra.mxu0 %v5956
    %6002 = vmatmul.f32.gmra.mxu0 %v5961
    %v6003 = vpop.f32.mrf.mxu0
    %v6004 = vadd.f32 0.0, %v6003
    %6005 = vmatmul.f32.gmra.mxu0 %v5964
    %v6006 = vpop.f32.mrf.mxu0
    %v6007 = vadd.f32 0.0, %v6006
    %6008 = vmatmul.f32.gmra.mxu0 %v5967
    %v6009 = vpop.f32.mrf.mxu0
    %v6010 = vadd.f32 0.0, %v6009
    %6011 = vmatmul.f32.gmra.mxu0 %v5970
    %v6012 = vpop.f32.mrf.mxu0
    %v6013 = vadd.f32 0.0, %v6012
    %6014 = vmatmul.f32.gmra.mxu0 %v5973
    %v6015 = vpop.f32.mrf.mxu0
    %v6016 = vadd.f32 0.0, %v6015
    %6017 = vmatmul.f32.gmra.mxu0 %v5976
    %v6018 = vpop.f32.mrf.mxu0
    %v6019 = vadd.f32 0.0, %v6018
    %6020 = vmatmul.f32.gmra.mxu0 %v5979
    %v6021 = vpop.f32.mrf.mxu0
    %v6022 = vadd.f32 0.0, %v6021
    %6023 = vmatmul.f32.gmra.mxu0 %v5982
    %v6024 = vpop.f32.mrf.mxu0
    %v6025 = vadd.f32 0.0, %v6024
    %6026 = vdwg.mxu0
    %6035 = vrot.lane.b32.xlu0 %v5506, 4
    %v6036 = vpop.permute.xlu0 %6035
    %6037 = vrot.lane.b32.xlu0 %v5509, 4
    %v6038 = vpop.permute.xlu0 %6037
    %6039 = vrot.lane.b32.xlu0 %v5512, 4
    %v6040 = vpop.permute.xlu0 %6039
    %6041 = vrot.lane.b32.xlu0 %v5515, 4
    %v6042 = vpop.permute.xlu0 %6041
    %6043 = vrot.lane.b32.xlu0 %v5518, 4
    %v6044 = vpop.permute.xlu0 %6043
    %6045 = vrot.lane.b32.xlu0 %v5521, 4
    %v6046 = vpop.permute.xlu0 %6045
    %6047 = vrot.lane.b32.xlu0 %v5524, 4
    %v6048 = vpop.permute.xlu0 %6047
    %6049 = vrot.lane.b32.xlu0 %v5527, 4
    %v6050 = vpop.permute.xlu0 %6049
    %6067 = vrot.lane.b32.xlu0 %v5755, 8
    %v6068 = vpop.permute.xlu0 %6067
    %6069 = vrot.lane.b32.xlu0 %v5758, 8
    %v6070 = vpop.permute.xlu0 %6069
    %6071 = vrot.lane.b32.xlu0 %v5761, 8
    %v6072 = vpop.permute.xlu0 %6071
    %6073 = vrot.lane.b32.xlu0 %v5764, 8
    %v6074 = vpop.permute.xlu0 %6073
    %6075 = vrot.lane.b32.xlu0 %v5767, 8
    %v6076 = vpop.permute.xlu0 %6075
    %6077 = vrot.lane.b32.xlu0 %v5770, 8
    %v6078 = vpop.permute.xlu0 %6077
    %6079 = vrot.lane.b32.xlu0 %v5773, 8
    %v6080 = vpop.permute.xlu0 %6079
    %6081 = vrot.lane.b32.xlu0 %v5776, 8
    %v6082 = vpop.permute.xlu0 %6081
    %6099 = vrot.lane.b32.xlu0 %v6004, 12
    %v6100 = vpop.permute.xlu0 %6099
    %6101 = vrot.lane.b32.xlu0 %v6007, 12
    %v6102 = vpop.permute.xlu0 %6101
    %6103 = vrot.lane.b32.xlu0 %v6010, 12
    %v6104 = vpop.permute.xlu0 %6103
    %6105 = vrot.lane.b32.xlu0 %v6013, 12
    %v6106 = vpop.permute.xlu0 %6105
    %6107 = vrot.lane.b32.xlu0 %v6016, 12
    %v6108 = vpop.permute.xlu0 %6107
    %6109 = vrot.lane.b32.xlu0 %v6019, 12
    %v6110 = vpop.permute.xlu0 %6109
    %6111 = vrot.lane.b32.xlu0 %v6022, 12
    %v6112 = vpop.permute.xlu0 %6111
    %6113 = vrot.lane.b32.xlu0 %v6025, 12
    %v6114 = vpop.permute.xlu0 %6113
    %v6123 = vsel %vm912, %v5256, %v6036
    %v6124 = vsel %vm912, %v5259, %v6038
    %v6125 = vsel %vm912, %v5262, %v6040
    %v6126 = vsel %vm912, %v5265, %v6042
    %v6127 = vsel %vm912, %v5268, %v6044
    %v6128 = vsel %vm912, %v5271, %v6046
    %v6129 = vsel %vm912, %v5274, %v6048
    %v6130 = vsel %vm912, %v5277, %v6050
    %v6131 = vsel %vm171, %v6123, %v6068
    %v6132 = vsel %vm171, %v6124, %v6070
    %v6133 = vsel %vm171, %v6125, %v6072
    %v6134 = vsel %vm171, %v6126, %v6074
    %v6135 = vsel %vm171, %v6127, %v6076
    %v6136 = vsel %vm171, %v6128, %v6078
    %v6137 = vsel %vm171, %v6129, %v6080
    %v6138 = vsel %vm171, %v6130, %v6082
    %v6139 = vsel %vm1477, %v6131, %v6100
    %v6140 = vsel %vm1477, %v6132, %v6102
    %v6141 = vsel %vm1477, %v6133, %v6104
    %v6142 = vsel %vm1477, %v6134, %v6106
    %v6143 = vsel %vm1477, %v6135, %v6108
    %v6144 = vsel %vm1477, %v6136, %v6110
    %v6145 = vsel %vm1477, %v6137, %v6112
    %v6146 = vsel %vm1477, %v6138, %v6114
    %6147 = vrot.lane.b32.xlu0 %v1480, 32
    %v6148 = vpop.permute.xlu0 %6147
    %6149 = vrot.lane.b32.xlu0 %v1481, 32
    %v6150 = vpop.permute.xlu0 %6149
    %6153 = vrot.lane.b32.xlu0 %v4957, 96
    %v6154 = vpop.permute.xlu0 %6153
    %v6157 = vsel %vm590, %v6139, 0
    %v6160 = vsel %vm590, %v6140, 0
    %v6163 = vsel %vm590, %v6141, 0
    %v6166 = vsel %vm590, %v6142, 0
    %v6169 = vsel %vm590, %v6143, 0
    %v6172 = vsel %vm590, %v6144, 0
    %v6175 = vsel %vm590, %v6145, 0
    %v6178 = vsel %vm590, %v6146, 0
    %6180 = vmatpush.msra.mxu0 0.0
    %6181 = vmatpush.msra.mxu0 0.0
    %6182 = vmatpush.msra.mxu0 0.0
    %6183 = vmatpush.msra.mxu0 0.0
    %6184 = vmatpush.msra.mxu0 0.0
    %6185 = vmatpush.msra.mxu0 0.0
    %6186 = vmatpush.msra.mxu0 0.0
    %6187 = vmatpush.msra.mxu0 0.0
    %6188 = vmatpush.msra.mxu0 0.0
    %6189 = vmatpush.msra.mxu0 0.0
    %6190 = vmatpush.msra.mxu0 0.0
    %6191 = vmatpush.msra.mxu0 0.0
    %6192 = vmatpush.msra.mxu0 0.0
    %6193 = vmatpush.msra.mxu0 0.0
    %6194 = vmatpush.msra.mxu0 %v6150
    %6195 = vmatpush.msra.mxu0 %v6148
    %6196 = vmatmul.f32.gmra.mxu0 %v6157
    %v6197 = vpop.f32.mrf.mxu0
    %v6198 = vadd.f32 %v6154, %v6197
    %6199 = vmatmul.f32.gmra.mxu0 %v6160
    %v6200 = vpop.f32.mrf.mxu0
    %v6201 = vadd.f32 %v6154, %v6200
    %6202 = vmatmul.f32.gmra.mxu0 %v6163
    %v6203 = vpop.f32.mrf.mxu0
    %v6204 = vadd.f32 %v6154, %v6203
    %6205 = vmatmul.f32.gmra.mxu0 %v6166
    %v6206 = vpop.f32.mrf.mxu0
    %v6207 = vadd.f32 %v6154, %v6206
    %6208 = vmatmul.f32.gmra.mxu0 %v6169
    %v6209 = vpop.f32.mrf.mxu0
    %v6210 = vadd.f32 %v6154, %v6209
    %6211 = vmatmul.f32.gmra.mxu0 %v6172
    %v6212 = vpop.f32.mrf.mxu0
    %v6213 = vadd.f32 %v6154, %v6212
    %6214 = vmatmul.f32.gmra.mxu0 %v6175
    %v6215 = vpop.f32.mrf.mxu0
    %v6216 = vadd.f32 %v6154, %v6215
    %6217 = vmatmul.f32.gmra.mxu0 %v6178
    %v6218 = vpop.f32.mrf.mxu0
    %v6219 = vadd.f32 %v6154, %v6218
    %6220 = vdwg.mxu0
    %v6221 = vadd.f32 %v3231, %v6198
    %v6222 = vadd.f32 %v3232, %v6201
    %v6223 = vadd.f32 %v3233, %v6204
    %v6224 = vadd.f32 %v3234, %v6207
    %v6225 = vadd.f32 %v3235, %v6210
    %v6226 = vadd.f32 %v3236, %v6213
    %v6227 = vadd.f32 %v3237, %v6216
    %v6228 = vadd.f32 %v3238, %v6219
    %v6229 = vsel %vm60, %v6221, 0.0
    %6230 = vadd.xlane.f32.xlu0 %v6229
    %v6231 = vpop.xlane.xlu0 %6230
    %v6232 = vsel %vm60, %v6222, 0.0
    %6233 = vadd.xlane.f32.xlu0 %v6232
    %v6234 = vpop.xlane.xlu0 %6233
    %v6235 = vsel %vm60, %v6223, 0.0
    %6236 = vadd.xlane.f32.xlu0 %v6235
    %v6237 = vpop.xlane.xlu0 %6236
    %v6238 = vsel %vm60, %v6224, 0.0
    %6239 = vadd.xlane.f32.xlu0 %v6238
    %v6240 = vpop.xlane.xlu0 %6239
    %v6241 = vsel %vm60, %v6225, 0.0
    %6242 = vadd.xlane.f32.xlu0 %v6241
    %v6243 = vpop.xlane.xlu0 %6242
    %v6244 = vsel %vm60, %v6226, 0.0
    %6245 = vadd.xlane.f32.xlu0 %v6244
    %v6246 = vpop.xlane.xlu0 %6245
    %v6247 = vsel %vm60, %v6227, 0.0
    %6248 = vadd.xlane.f32.xlu0 %v6247
    %v6249 = vpop.xlane.xlu0 %6248
    %v6250 = vsel %vm60, %v6228, 0.0
    %6251 = vadd.xlane.f32.xlu0 %v6250
    %v6252 = vpop.xlane.xlu0 %6251
    %v6253 = vmul.f32 %v6231, %v653
    %v6254 = vmul.f32 %v6234, %v653
    %v6255 = vmul.f32 %v6237, %v653
    %v6256 = vmul.f32 %v6240, %v653
    %v6257 = vmul.f32 %v6243, %v653
    %v6258 = vmul.f32 %v6246, %v653
    %v6259 = vmul.f32 %v6249, %v653
    %v6260 = vmul.f32 %v6252, %v653
    %v6261 = vsub.f32 %v6221, %v6253
    %v6262 = vsub.f32 %v6222, %v6254
    %v6263 = vsub.f32 %v6223, %v6255
    %v6264 = vsub.f32 %v6224, %v6256
    %v6265 = vsub.f32 %v6225, %v6257
    %v6266 = vsub.f32 %v6226, %v6258
    %v6267 = vsub.f32 %v6227, %v6259
    %v6268 = vsub.f32 %v6228, %v6260
    %v6269 = vmul.f32 %v6261, %v6261
    %v6270 = vmul.f32 %v6262, %v6262
    %v6271 = vmul.f32 %v6263, %v6263
    %v6272 = vmul.f32 %v6264, %v6264
    %v6273 = vmul.f32 %v6265, %v6265
    %v6274 = vmul.f32 %v6266, %v6266
    %v6275 = vmul.f32 %v6267, %v6267
    %v6276 = vmul.f32 %v6268, %v6268
    %v6277 = vsel %vm60, %v6269, 0.0
    %6278 = vadd.xlane.f32.xlu0 %v6277
    %v6279 = vpop.xlane.xlu0 %6278
    %v6280 = vsel %vm60, %v6270, 0.0
    %6281 = vadd.xlane.f32.xlu0 %v6280
    %v6282 = vpop.xlane.xlu0 %6281
    %v6283 = vsel %vm60, %v6271, 0.0
    %6284 = vadd.xlane.f32.xlu0 %v6283
    %v6285 = vpop.xlane.xlu0 %6284
    %v6286 = vsel %vm60, %v6272, 0.0
    %6287 = vadd.xlane.f32.xlu0 %v6286
    %v6288 = vpop.xlane.xlu0 %6287
    %v6289 = vsel %vm60, %v6273, 0.0
    %6290 = vadd.xlane.f32.xlu0 %v6289
    %v6291 = vpop.xlane.xlu0 %6290
    %v6292 = vsel %vm60, %v6274, 0.0
    %6293 = vadd.xlane.f32.xlu0 %v6292
    %v6294 = vpop.xlane.xlu0 %6293
    %v6295 = vsel %vm60, %v6275, 0.0
    %6296 = vadd.xlane.f32.xlu0 %v6295
    %v6297 = vpop.xlane.xlu0 %6296
    %v6298 = vsel %vm60, %v6276, 0.0
    %6299 = vadd.xlane.f32.xlu0 %v6298
    %v6300 = vpop.xlane.xlu0 %6299
    %v6301 = vmul.f32 %v6279, %v653
    %v6302 = vmul.f32 %v6282, %v653
    %v6303 = vmul.f32 %v6285, %v653
    %v6304 = vmul.f32 %v6288, %v653
    %v6305 = vmul.f32 %v6291, %v653
    %v6306 = vmul.f32 %v6294, %v653
    %v6307 = vmul.f32 %v6297, %v653
    %v6308 = vmul.f32 %v6300, %v653
    %v6309 = vadd.f32 %v6301, 1e-05
    %v6310 = vadd.f32 %v6302, 1e-05
    %v6311 = vadd.f32 %v6303, 1e-05
    %v6312 = vadd.f32 %v6304, 1e-05
    %v6313 = vadd.f32 %v6305, 1e-05
    %v6314 = vadd.f32 %v6306, 1e-05
    %v6315 = vadd.f32 %v6307, 1e-05
    %v6316 = vadd.f32 %v6308, 1e-05
    %v6317 = vrsqrt.pop %v6309
    %v6318 = vmul.f32 %v6317, %v6309
    %v6319 = vmul.f32 %v6318, %v6317
    %v6320 = vmul.f32 0.5, %v6319
    %v6321 = vsub.f32 1.5, %v6320
    %v6322 = vmul.f32 %v6317, %v6321
    %vm6323 = vweird.f32 %v6309
    %vm6324 = vweird.f32 %v6317
    %vm6325 = vmor %vm6323, %vm6324
    %v6326 = vsel %vm6325, %v6317, %v6322
    %v6327 = vrsqrt.pop %v6310
    %v6328 = vmul.f32 %v6327, %v6310
    %v6329 = vmul.f32 %v6328, %v6327
    %v6330 = vmul.f32 0.5, %v6329
    %v6331 = vsub.f32 1.5, %v6330
    %v6332 = vmul.f32 %v6327, %v6331
    %vm6333 = vweird.f32 %v6310
    %vm6334 = vweird.f32 %v6327
    %vm6335 = vmor %vm6333, %vm6334
    %v6336 = vsel %vm6335, %v6327, %v6332
    %v6337 = vrsqrt.pop %v6311
    %v6338 = vmul.f32 %v6337, %v6311
    %v6339 = vmul.f32 %v6338, %v6337
    %v6340 = vmul.f32 0.5, %v6339
    %v6341 = vsub.f32 1.5, %v6340
    %v6342 = vmul.f32 %v6337, %v6341
    %vm6343 = vweird.f32 %v6311
    %vm6344 = vweird.f32 %v6337
    %vm6345 = vmor %vm6343, %vm6344
    %v6346 = vsel %vm6345, %v6337, %v6342
    %v6347 = vrsqrt.pop %v6312
    %v6348 = vmul.f32 %v6347, %v6312
    %v6349 = vmul.f32 %v6348, %v6347
    %v6350 = vmul.f32 0.5, %v6349
    %v6351 = vsub.f32 1.5, %v6350
    %v6352 = vmul.f32 %v6347, %v6351
    %vm6353 = vweird.f32 %v6312
    %vm6354 = vweird.f32 %v6347
    %vm6355 = vmor %vm6353, %vm6354
    %v6356 = vsel %vm6355, %v6347, %v6352
    %v6357 = vrsqrt.pop %v6313
    %v6358 = vmul.f32 %v6357, %v6313
    %v6359 = vmul.f32 %v6358, %v6357
    %v6360 = vmul.f32 0.5, %v6359
    %v6361 = vsub.f32 1.5, %v6360
    %v6362 = vmul.f32 %v6357, %v6361
    %vm6363 = vweird.f32 %v6313
    %vm6364 = vweird.f32 %v6357
    %vm6365 = vmor %vm6363, %vm6364
    %v6366 = vsel %vm6365, %v6357, %v6362
    %v6367 = vrsqrt.pop %v6314
    %v6368 = vmul.f32 %v6367, %v6314
    %v6369 = vmul.f32 %v6368, %v6367
    %v6370 = vmul.f32 0.5, %v6369
    %v6371 = vsub.f32 1.5, %v6370
    %v6372 = vmul.f32 %v6367, %v6371
    %vm6373 = vweird.f32 %v6314
    %vm6374 = vweird.f32 %v6367
    %vm6375 = vmor %vm6373, %vm6374
    %v6376 = vsel %vm6375, %v6367, %v6372
    %v6377 = vrsqrt.pop %v6315
    %v6378 = vmul.f32 %v6377, %v6315
    %v6379 = vmul.f32 %v6378, %v6377
    %v6380 = vmul.f32 0.5, %v6379
    %v6381 = vsub.f32 1.5, %v6380
    %v6382 = vmul.f32 %v6377, %v6381
    %vm6383 = vweird.f32 %v6315
    %vm6384 = vweird.f32 %v6377
    %vm6385 = vmor %vm6383, %vm6384
    %v6386 = vsel %vm6385, %v6377, %v6382
    %v6387 = vrsqrt.pop %v6316
    %v6388 = vmul.f32 %v6387, %v6316
    %v6389 = vmul.f32 %v6388, %v6387
    %v6390 = vmul.f32 0.5, %v6389
    %v6391 = vsub.f32 1.5, %v6390
    %v6392 = vmul.f32 %v6387, %v6391
    %vm6393 = vweird.f32 %v6316
    %vm6394 = vweird.f32 %v6387
    %vm6395 = vmor %vm6393, %vm6394
    %v6396 = vsel %vm6395, %v6387, %v6392
    %v6397 = vmul.f32 %v6261, %v6326
    %v6398 = vmul.f32 %v6262, %v6336
    %v6399 = vmul.f32 %v6263, %v6346
    %v6400 = vmul.f32 %v6264, %v6356
    %v6401 = vmul.f32 %v6265, %v6366
    %v6402 = vmul.f32 %v6266, %v6376
    %v6403 = vmul.f32 %v6267, %v6386
    %v6404 = vmul.f32 %v6268, %v6396
    %6405 = vrot.lane.b32.xlu0 %v4957, 64
    %v6406 = vpop.permute.xlu0 %6405
    %v6408 = vmul.f32 %v6397, %v6406
    %v6409 = vmul.f32 %v6398, %v6406
    %v6410 = vmul.f32 %v6399, %v6406
    %v6411 = vmul.f32 %v6400, %v6406
    %v6412 = vmul.f32 %v6401, %v6406
    %v6413 = vmul.f32 %v6402, %v6406
    %v6414 = vmul.f32 %v6403, %v6406
    %v6415 = vmul.f32 %v6404, %v6406
    %6416 = vrot.lane.b32.xlu0 %v4957, 32
    %v6417 = vpop.permute.xlu0 %6416
    %v6419 = vadd.f32 %v6408, %v6417
    %v6420 = vadd.f32 %v6409, %v6417
    %v6421 = vadd.f32 %v6410, %v6417
    %v6422 = vadd.f32 %v6411, %v6417
    %v6423 = vadd.f32 %v6412, %v6417
    %v6424 = vadd.f32 %v6413, %v6417
    %v6425 = vadd.f32 %v6414, %v6417
    %v6426 = vadd.f32 %v6415, %v6417
    %v6427 = vadd.f32 %v6419, %v46
    %v6428 = vadd.f32 %v6420, %v47
    %v6429 = vadd.f32 %v6421, %v48
    %v6430 = vadd.f32 %v6422, %v49
    %v6431 = vadd.f32 %v6423, %v50
    %v6432 = vadd.f32 %v6424, %v51
    %v6433 = vadd.f32 %v6425, %v52
    %v6434 = vadd.f32 %v6426, %v53
    %v6435 = vld [vmem:[#allocation2 + $0x310] sm:$0x1]
    %v6436 = vperm.slane %v6435, 0
    %6441 = vrot.lane.b32.xlu0 %v4740, 64
    %v6442 = vpop.permute.xlu0 %6441
    %6443 = vrot.lane.b32.xlu0 %v4741, 64
    %v6444 = vpop.permute.xlu0 %6443
    %6445 = vrot.lane.b32.xlu0 %v4742, 64
    %v6446 = vpop.permute.xlu0 %6445
    %6447 = vrot.lane.b32.xlu0 %v4743, 64
    %v6448 = vpop.permute.xlu0 %6447
    %6453 = vmatpush.msra.mxu0 0.0
    %6454 = vmatpush.msra.mxu0 0.0
    %6455 = vmatpush.msra.mxu0 0.0
    %6456 = vmatpush.msra.mxu0 0.0
    %6457 = vmatpush.msra.mxu0 0.0
    %6458 = vmatpush.msra.mxu0 0.0
    %6459 = vmatpush.msra.mxu0 0.0
    %6460 = vmatpush.msra.mxu0 0.0
    %6461 = vmatpush.msra.mxu0 0.0
    %6462 = vmatpush.msra.mxu0 0.0
    %6463 = vmatpush.msra.mxu0 0.0
    %6464 = vmatpush.msra.mxu0 0.0
    %6465 = vmatpush.msra.mxu0 %v6448
    %6466 = vmatpush.msra.mxu0 %v6446
    %6467 = vmatpush.msra.mxu0 %v6444
    %6468 = vmatpush.msra.mxu0 %v6442
    %6469 = vmatmul.f32.gmra.mxu0 %v4971
    %v6470 = vpop.f32.mrf.mxu0
    %v6471 = vadd.f32 %v6436, %v6470
    %6472 = vmatmul.f32.gmra.mxu0 %v4974
    %v6473 = vpop.f32.mrf.mxu0
    %v6474 = vadd.f32 %v6436, %v6473
    %6475 = vdwg.mxu0
    %6476 = vrot.lane.b32.xlu0 %v4740, 48
    %v6477 = vpop.permute.xlu0 %6476
    %6478 = vrot.lane.b32.xlu0 %v4741, 48
    %v6479 = vpop.permute.xlu0 %6478
    %6480 = vrot.lane.b32.xlu0 %v4742, 48
    %v6481 = vpop.permute.xlu0 %6480
    %6482 = vrot.lane.b32.xlu0 %v4743, 48
    %v6483 = vpop.permute.xlu0 %6482
    %6489 = vrot.lane.b32.xlu0 %v6436, 112
    %v6490 = vpop.permute.xlu0 %6489
    %v6493 = vsel %vm60, %v6427, 0
    %v6496 = vsel %vm60, %v6428, 0
    %v6499 = vsel %vm60, %v6429, 0
    %v6502 = vsel %vm60, %v6430, 0
    %v6505 = vsel %vm60, %v6431, 0
    %v6508 = vsel %vm60, %v6432, 0
    %v6511 = vsel %vm60, %v6433, 0
    %v6514 = vsel %vm60, %v6434, 0
    %6516 = vmatpush.msra.mxu0 0.0
    %6517 = vmatpush.msra.mxu0 0.0
    %6518 = vmatpush.msra.mxu0 0.0
    %6519 = vmatpush.msra.mxu0 0.0
    %6520 = vmatpush.msra.mxu0 0.0
    %6521 = vmatpush.msra.mxu0 0.0
    %6522 = vmatpush.msra.mxu0 0.0
    %6523 = vmatpush.msra.mxu0 0.0
    %6524 = vmatpush.msra.mxu0 0.0
    %6525 = vmatpush.msra.mxu0 0.0
    %6526 = vmatpush.msra.mxu0 0.0
    %6527 = vmatpush.msra.mxu0 0.0
    %6528 = vmatpush.msra.mxu0 %v6483
    %6529 = vmatpush.msra.mxu0 %v6481
    %6530 = vmatpush.msra.mxu0 %v6479
    %6531 = vmatpush.msra.mxu0 %v6477
    %6532 = vmatmul.f32.gmra.mxu0 %v6493
    %v6533 = vpop.f32.mrf.mxu0
    %v6534 = vadd.f32 %v6490, %v6533
    %6535 = vmatmul.f32.gmra.mxu0 %v6496
    %v6536 = vpop.f32.mrf.mxu0
    %v6537 = vadd.f32 %v6490, %v6536
    %6538 = vmatmul.f32.gmra.mxu0 %v6499
    %v6539 = vpop.f32.mrf.mxu0
    %v6540 = vadd.f32 %v6490, %v6539
    %6541 = vmatmul.f32.gmra.mxu0 %v6502
    %v6542 = vpop.f32.mrf.mxu0
    %v6543 = vadd.f32 %v6490, %v6542
    %6544 = vmatmul.f32.gmra.mxu0 %v6505
    %v6545 = vpop.f32.mrf.mxu0
    %v6546 = vadd.f32 %v6490, %v6545
    %6547 = vmatmul.f32.gmra.mxu0 %v6508
    %v6548 = vpop.f32.mrf.mxu0
    %v6549 = vadd.f32 %v6490, %v6548
    %6550 = vmatmul.f32.gmra.mxu0 %v6511
    %v6551 = vpop.f32.mrf.mxu0
    %v6552 = vadd.f32 %v6490, %v6551
    %6553 = vmatmul.f32.gmra.mxu0 %v6514
    %v6554 = vpop.f32.mrf.mxu0
    %v6555 = vadd.f32 %v6490, %v6554
    %6556 = vdwg.mxu0
    %6557 = vrot.lane.b32.xlu0 %v4740, 32
    %v6558 = vpop.permute.xlu0 %6557
    %6559 = vrot.lane.b32.xlu0 %v4741, 32
    %v6560 = vpop.permute.xlu0 %6559
    %6561 = vrot.lane.b32.xlu0 %v4742, 32
    %v6562 = vpop.permute.xlu0 %6561
    %6563 = vrot.lane.b32.xlu0 %v4743, 32
    %v6564 = vpop.permute.xlu0 %6563
    %6569 = vrot.lane.b32.xlu0 %v6436, 96
    %v6570 = vpop.permute.xlu0 %6569
    %v6573 = vsel %vm60, %v6419, 0
    %v6576 = vsel %vm60, %v6420, 0
    %v6579 = vsel %vm60, %v6421, 0
    %v6582 = vsel %vm60, %v6422, 0
    %v6585 = vsel %vm60, %v6423, 0
    %v6588 = vsel %vm60, %v6424, 0
    %v6591 = vsel %vm60, %v6425, 0
    %v6594 = vsel %vm60, %v6426, 0
    %6596 = vmatpush.msra.mxu0 0.0
    %6597 = vmatpush.msra.mxu0 0.0
    %6598 = vmatpush.msra.mxu0 0.0
    %6599 = vmatpush.msra.mxu0 0.0
    %6600 = vmatpush.msra.mxu0 0.0
    %6601 = vmatpush.msra.mxu0 0.0
    %6602 = vmatpush.msra.mxu0 0.0
    %6603 = vmatpush.msra.mxu0 0.0
    %6604 = vmatpush.msra.mxu0 0.0
    %6605 = vmatpush.msra.mxu0 0.0
    %6606 = vmatpush.msra.mxu0 0.0
    %6607 = vmatpush.msra.mxu0 0.0
    %6608 = vmatpush.msra.mxu0 %v6564
    %6609 = vmatpush.msra.mxu0 %v6562
    %6610 = vmatpush.msra.mxu0 %v6560
    %6611 = vmatpush.msra.mxu0 %v6558
    %6612 = vmatmul.f32.gmra.mxu0 %v6573
    %v6613 = vpop.f32.mrf.mxu0
    %v6614 = vadd.f32 %v6570, %v6613
    %6615 = vmatmul.f32.gmra.mxu0 %v6576
    %v6616 = vpop.f32.mrf.mxu0
    %v6617 = vadd.f32 %v6570, %v6616
    %6618 = vmatmul.f32.gmra.mxu0 %v6579
    %v6619 = vpop.f32.mrf.mxu0
    %v6620 = vadd.f32 %v6570, %v6619
    %6621 = vmatmul.f32.gmra.mxu0 %v6582
    %v6622 = vpop.f32.mrf.mxu0
    %v6623 = vadd.f32 %v6570, %v6622
    %6624 = vmatmul.f32.gmra.mxu0 %v6585
    %v6625 = vpop.f32.mrf.mxu0
    %v6626 = vadd.f32 %v6570, %v6625
    %6627 = vmatmul.f32.gmra.mxu0 %v6588
    %v6628 = vpop.f32.mrf.mxu0
    %v6629 = vadd.f32 %v6570, %v6628
    %6630 = vmatmul.f32.gmra.mxu0 %v6591
    %v6631 = vpop.f32.mrf.mxu0
    %v6632 = vadd.f32 %v6570, %v6631
    %6633 = vmatmul.f32.gmra.mxu0 %v6594
    %v6634 = vpop.f32.mrf.mxu0
    %v6635 = vadd.f32 %v6570, %v6634
    %6636 = vdwg.mxu0
    %v6638 = vsel %vm912, %v6471, 0
    %v6641 = vsel %vm912, %v6474, 0
    %v6644 = vsel %vm912, %v6534, 0
    %v6647 = vsel %vm912, %v6537, 0
    %v6650 = vsel %vm912, %v6540, 0
    %v6653 = vsel %vm912, %v6543, 0
    %v6656 = vsel %vm912, %v6546, 0
    %v6659 = vsel %vm912, %v6549, 0
    %v6662 = vsel %vm912, %v6552, 0
    %v6665 = vsel %vm912, %v6555, 0
    %6667 = vmatpush.xpose.msra.mxu0 0.0
    %6668 = vmatpush.xpose.msra.mxu0 0.0
    %6669 = vmatpush.xpose.msra.mxu0 0.0
    %6670 = vmatpush.xpose.msra.mxu0 0.0
    %6671 = vmatpush.xpose.msra.mxu0 0.0
    %6672 = vmatpush.xpose.msra.mxu0 0.0
    %6673 = vmatpush.xpose.msra.mxu0 0.0
    %6674 = vmatpush.xpose.msra.mxu0 0.0
    %6675 = vmatpush.xpose.msra.mxu0 %v6665
    %6676 = vmatpush.xpose.msra.mxu0 %v6662
    %6677 = vmatpush.xpose.msra.mxu0 %v6659
    %6678 = vmatpush.xpose.msra.mxu0 %v6656
    %6679 = vmatpush.xpose.msra.mxu0 %v6653
    %6680 = vmatpush.xpose.msra.mxu0 %v6650
    %6681 = vmatpush.xpose.msra.mxu0 %v6647
    %6682 = vmatpush.xpose.msra.mxu0 %v6644
    %6683 = vmatmul.f32.gmra.mxu0 %v6638
    %v6684 = vpop.f32.mrf.mxu0
    %v6685 = vadd.f32 0.0, %v6684
    %6686 = vmatmul.f32.gmra.mxu0 %v6641
    %v6687 = vpop.f32.mrf.mxu0
    %v6688 = vadd.f32 0.0, %v6687
    %6689 = vdwg.mxu0
    %v6690 = vmul.f32 %v6685, 0.5
    %v6691 = vmul.f32 %v6688, 0.5
    %v6692 = vsel %vm968, %v6690, -inf
    %6693 = vmax.xlane.f32.xlu0 %v6692
    %v6694 = vpop.xlane.xlu0 %6693
    %v6695 = vsel %vm972, %v6691, -inf
    %6696 = vmax.xlane.f32.xlu0 %v6695
    %v6697 = vpop.xlane.xlu0 %6696
    %v6698 = vsub.f32 %v6690, %v6694
    %v6699 = vsub.f32 %v6691, %v6697
    %v6700 = vmul.f32 %v6698, 1.442695
    %v6701 = vpow.pop %v6700
    %v6702 = vmul.f32 %v6699, 1.442695
    %v6703 = vpow.pop %v6702
    %v6704 = vsel %vm968, %v6701, 0.0
    %6705 = vadd.xlane.f32.xlu0 %v6704
    %v6706 = vpop.xlane.xlu0 %6705
    %v6707 = vsel %vm972, %v6703, 0.0
    %6708 = vadd.xlane.f32.xlu0 %v6707
    %v6709 = vpop.xlane.xlu0 %6708
    %v6710 = vrcp.pop %v6706
    %v6711 = vrcp.pop %v6709
    %v6712 = vmul.f32 %v6701, %v6710
    %v6713 = vmul.f32 %v6703, %v6711
    %v6715 = vsel %vm968, %v6712, 0
    %v6718 = vsel %vm968, %v6713, 0
    %6720 = vmatpush.msra.mxu0 0.0
    %6721 = vmatpush.msra.mxu0 0.0
    %6722 = vmatpush.msra.mxu0 0.0
    %6723 = vmatpush.msra.mxu0 0.0
    %6724 = vmatpush.msra.mxu0 0.0
    %6725 = vmatpush.msra.mxu0 0.0
    %6726 = vmatpush.msra.mxu0 0.0
    %6727 = vmatpush.msra.mxu0 0.0
    %6728 = vmatpush.msra.mxu0 %v6635
    %6729 = vmatpush.msra.mxu0 %v6632
    %6730 = vmatpush.msra.mxu0 %v6629
    %6731 = vmatpush.msra.mxu0 %v6626
    %6732 = vmatpush.msra.mxu0 %v6623
    %6733 = vmatpush.msra.mxu0 %v6620
    %6734 = vmatpush.msra.mxu0 %v6617
    %6735 = vmatpush.msra.mxu0 %v6614
    %6736 = vmatmul.f32.gmra.mxu0 %v6715
    %v6737 = vpop.f32.mrf.mxu0
    %v6738 = vadd.f32 0.0, %v6737
    %6739 = vmatmul.f32.gmra.mxu0 %v6718
    %v6740 = vpop.f32.mrf.mxu0
    %v6741 = vadd.f32 0.0, %v6740
    %6742 = vdwg.mxu0
    %6743 = vrot.lane.b32.xlu0 %v6471, 124
    %v6744 = vpop.permute.xlu0 %6743
    %6745 = vrot.lane.b32.xlu0 %v6474, 124
    %v6746 = vpop.permute.xlu0 %6745
    %6747 = vrot.lane.b32.xlu0 %v6534, 124
    %v6748 = vpop.permute.xlu0 %6747
    %6749 = vrot.lane.b32.xlu0 %v6537, 124
    %v6750 = vpop.permute.xlu0 %6749
    %6751 = vrot.lane.b32.xlu0 %v6540, 124
    %v6752 = vpop.permute.xlu0 %6751
    %6753 = vrot.lane.b32.xlu0 %v6543, 124
    %v6754 = vpop.permute.xlu0 %6753
    %6755 = vrot.lane.b32.xlu0 %v6546, 124
    %v6756 = vpop.permute.xlu0 %6755
    %6757 = vrot.lane.b32.xlu0 %v6549, 124
    %v6758 = vpop.permute.xlu0 %6757
    %6759 = vrot.lane.b32.xlu0 %v6552, 124
    %v6760 = vpop.permute.xlu0 %6759
    %6761 = vrot.lane.b32.xlu0 %v6555, 124
    %v6762 = vpop.permute.xlu0 %6761
    %v6763 = vsel %vm912, %v6744, 0
    %v6765 = vsel %vm912, %v6746, 0
    %v6767 = vsel %vm912, %v6748, 0
    %v6769 = vsel %vm912, %v6750, 0
    %v6771 = vsel %vm912, %v6752, 0
    %v6773 = vsel %vm912, %v6754, 0
    %v6775 = vsel %vm912, %v6756, 0
    %v6777 = vsel %vm912, %v6758, 0
    %v6779 = vsel %vm912, %v6760, 0
    %v6781 = vsel %vm912, %v6762, 0
    %6783 = vmatpush.xpose.msra.mxu0 0.0
    %6784 = vmatpush.xpose.msra.mxu0 0.0
    %6785 = vmatpush.xpose.msra.mxu0 0.0
    %6786 = vmatpush.xpose.msra.mxu0 0.0
    %6787 = vmatpush.xpose.msra.mxu0 0.0
    %6788 = vmatpush.xpose.msra.mxu0 0.0
    %6789 = vmatpush.xpose.msra.mxu0 0.0
    %6790 = vmatpush.xpose.msra.mxu0 0.0
    %6791 = vmatpush.xpose.msra.mxu0 %v6781
    %6792 = vmatpush.xpose.msra.mxu0 %v6779
    %6793 = vmatpush.xpose.msra.mxu0 %v6777
    %6794 = vmatpush.xpose.msra.mxu0 %v6775
    %6795 = vmatpush.xpose.msra.mxu0 %v6773
    %6796 = vmatpush.xpose.msra.mxu0 %v6771
    %6797 = vmatpush.xpose.msra.mxu0 %v6769
    %6798 = vmatpush.xpose.msra.mxu0 %v6767
    %6799 = vmatmul.f32.gmra.mxu0 %v6763
    %v6800 = vpop.f32.mrf.mxu0
    %v6801 = vadd.f32 0.0, %v6800
    %6802 = vmatmul.f32.gmra.mxu0 %v6765
    %v6803 = vpop.f32.mrf.mxu0
    %v6804 = vadd.f32 0.0, %v6803
    %6805 = vdwg.mxu0
    %v6806 = vmul.f32 %v6801, 0.5
    %v6807 = vmul.f32 %v6804, 0.5
    %v6808 = vsel %vm968, %v6806, -inf
    %6809 = vmax.xlane.f32.xlu0 %v6808
    %v6810 = vpop.xlane.xlu0 %6809
    %v6811 = vsel %vm972, %v6807, -inf
    %6812 = vmax.xlane.f32.xlu0 %v6811
    %v6813 = vpop.xlane.xlu0 %6812
    %v6814 = vsub.f32 %v6806, %v6810
    %v6815 = vsub.f32 %v6807, %v6813
    %v6816 = vmul.f32 %v6814, 1.442695
    %v6817 = vpow.pop %v6816
    %v6818 = vmul.f32 %v6815, 1.442695
    %v6819 = vpow.pop %v6818
    %v6820 = vsel %vm968, %v6817, 0.0
    %6821 = vadd.xlane.f32.xlu0 %v6820
    %v6822 = vpop.xlane.xlu0 %6821
    %v6823 = vsel %vm972, %v6819, 0.0
    %6824 = vadd.xlane.f32.xlu0 %v6823
    %v6825 = vpop.xlane.xlu0 %6824
    %v6826 = vrcp.pop %v6822
    %v6827 = vrcp.pop %v6825
    %v6828 = vmul.f32 %v6817, %v6826
    %v6829 = vmul.f32 %v6819, %v6827
    %6838 = vrot.lane.b32.xlu0 %v6614, 124
    %v6839 = vpop.permute.xlu0 %6838
    %6840 = vrot.lane.b32.xlu0 %v6617, 124
    %v6841 = vpop.permute.xlu0 %6840
    %6842 = vrot.lane.b32.xlu0 %v6620, 124
    %v6843 = vpop.permute.xlu0 %6842
    %6844 = vrot.lane.b32.xlu0 %v6623, 124
    %v6845 = vpop.permute.xlu0 %6844
    %6846 = vrot.lane.b32.xlu0 %v6626, 124
    %v6847 = vpop.permute.xlu0 %6846
    %6848 = vrot.lane.b32.xlu0 %v6629, 124
    %v6849 = vpop.permute.xlu0 %6848
    %6850 = vrot.lane.b32.xlu0 %v6632, 124
    %v6851 = vpop.permute.xlu0 %6850
    %6852 = vrot.lane.b32.xlu0 %v6635, 124
    %v6853 = vpop.permute.xlu0 %6852
    %v6863 = vsel %vm968, %v6828, 0
    %v6866 = vsel %vm968, %v6829, 0
    %6868 = vmatpush.msra.mxu0 0.0
    %6869 = vmatpush.msra.mxu0 0.0
    %6870 = vmatpush.msra.mxu0 0.0
    %6871 = vmatpush.msra.mxu0 0.0
    %6872 = vmatpush.msra.mxu0 0.0
    %6873 = vmatpush.msra.mxu0 0.0
    %6874 = vmatpush.msra.mxu0 0.0
    %6875 = vmatpush.msra.mxu0 0.0
    %6876 = vmatpush.msra.mxu0 %v6853
    %6877 = vmatpush.msra.mxu0 %v6851
    %6878 = vmatpush.msra.mxu0 %v6849
    %6879 = vmatpush.msra.mxu0 %v6847
    %6880 = vmatpush.msra.mxu0 %v6845
    %6881 = vmatpush.msra.mxu0 %v6843
    %6882 = vmatpush.msra.mxu0 %v6841
    %6883 = vmatpush.msra.mxu0 %v6839
    %6884 = vmatmul.f32.gmra.mxu0 %v6863
    %v6885 = vpop.f32.mrf.mxu0
    %v6886 = vadd.f32 0.0, %v6885
    %6887 = vmatmul.f32.gmra.mxu0 %v6866
    %v6888 = vpop.f32.mrf.mxu0
    %v6889 = vadd.f32 0.0, %v6888
    %6890 = vdwg.mxu0
    %6891 = vrot.lane.b32.xlu0 %v6471, 120
    %v6892 = vpop.permute.xlu0 %6891
    %6893 = vrot.lane.b32.xlu0 %v6474, 120
    %v6894 = vpop.permute.xlu0 %6893
    %6895 = vrot.lane.b32.xlu0 %v6534, 120
    %v6896 = vpop.permute.xlu0 %6895
    %6897 = vrot.lane.b32.xlu0 %v6537, 120
    %v6898 = vpop.permute.xlu0 %6897
    %6899 = vrot.lane.b32.xlu0 %v6540, 120
    %v6900 = vpop.permute.xlu0 %6899
    %6901 = vrot.lane.b32.xlu0 %v6543, 120
    %v6902 = vpop.permute.xlu0 %6901
    %6903 = vrot.lane.b32.xlu0 %v6546, 120
    %v6904 = vpop.permute.xlu0 %6903
    %6905 = vrot.lane.b32.xlu0 %v6549, 120
    %v6906 = vpop.permute.xlu0 %6905
    %6907 = vrot.lane.b32.xlu0 %v6552, 120
    %v6908 = vpop.permute.xlu0 %6907
    %6909 = vrot.lane.b32.xlu0 %v6555, 120
    %v6910 = vpop.permute.xlu0 %6909
    %v6911 = vsel %vm912, %v6892, 0
    %v6913 = vsel %vm912, %v6894, 0
    %v6915 = vsel %vm912, %v6896, 0
    %v6917 = vsel %vm912, %v6898, 0
    %v6919 = vsel %vm912, %v6900, 0
    %v6921 = vsel %vm912, %v6902, 0
    %v6923 = vsel %vm912, %v6904, 0
    %v6925 = vsel %vm912, %v6906, 0
    %v6927 = vsel %vm912, %v6908, 0
    %v6929 = vsel %vm912, %v6910, 0
    %6931 = vmatpush.xpose.msra.mxu0 0.0
    %6932 = vmatpush.xpose.msra.mxu0 0.0
    %6933 = vmatpush.xpose.msra.mxu0 0.0
    %6934 = vmatpush.xpose.msra.mxu0 0.0
    %6935 = vmatpush.xpose.msra.mxu0 0.0
    %6936 = vmatpush.xpose.msra.mxu0 0.0
    %6937 = vmatpush.xpose.msra.mxu0 0.0
    %6938 = vmatpush.xpose.msra.mxu0 0.0
    %6939 = vmatpush.xpose.msra.mxu0 %v6929
    %6940 = vmatpush.xpose.msra.mxu0 %v6927
    %6941 = vmatpush.xpose.msra.mxu0 %v6925
    %6942 = vmatpush.xpose.msra.mxu0 %v6923
    %6943 = vmatpush.xpose.msra.mxu0 %v6921
    %6944 = vmatpush.xpose.msra.mxu0 %v6919
    %6945 = vmatpush.xpose.msra.mxu0 %v6917
    %6946 = vmatpush.xpose.msra.mxu0 %v6915
    %6947 = vmatmul.f32.gmra.mxu0 %v6911
    %v6948 = vpop.f32.mrf.mxu0
    %v6949 = vadd.f32 0.0, %v6948
    %6950 = vmatmul.f32.gmra.mxu0 %v6913
    %v6951 = vpop.f32.mrf.mxu0
    %v6952 = vadd.f32 0.0, %v6951
    %6953 = vdwg.mxu0
    %v6954 = vmul.f32 %v6949, 0.5
    %v6955 = vmul.f32 %v6952, 0.5
    %v6956 = vsel %vm968, %v6954, -inf
    %6957 = vmax.xlane.f32.xlu0 %v6956
    %v6958 = vpop.xlane.xlu0 %6957
    %v6959 = vsel %vm972, %v6955, -inf
    %6960 = vmax.xlane.f32.xlu0 %v6959
    %v6961 = vpop.xlane.xlu0 %6960
    %v6962 = vsub.f32 %v6954, %v6958
    %v6963 = vsub.f32 %v6955, %v6961
    %v6964 = vmul.f32 %v6962, 1.442695
    %v6965 = vpow.pop %v6964
    %v6966 = vmul.f32 %v6963, 1.442695
    %v6967 = vpow.pop %v6966
    %v6968 = vsel %vm968, %v6965, 0.0
    %6969 = vadd.xlane.f32.xlu0 %v6968
    %v6970 = vpop.xlane.xlu0 %6969
    %v6971 = vsel %vm972, %v6967, 0.0
    %6972 = vadd.xlane.f32.xlu0 %v6971
    %v6973 = vpop.xlane.xlu0 %6972
    %v6974 = vrcp.pop %v6970
    %v6975 = vrcp.pop %v6973
    %v6976 = vmul.f32 %v6965, %v6974
    %v6977 = vmul.f32 %v6967, %v6975
    %6978 = vrot.lane.b32.xlu0 %v6614, 120
    %v6979 = vpop.permute.xlu0 %6978
    %6980 = vrot.lane.b32.xlu0 %v6617, 120
    %v6981 = vpop.permute.xlu0 %6980
    %6982 = vrot.lane.b32.xlu0 %v6620, 120
    %v6983 = vpop.permute.xlu0 %6982
    %6984 = vrot.lane.b32.xlu0 %v6623, 120
    %v6985 = vpop.permute.xlu0 %6984
    %6986 = vrot.lane.b32.xlu0 %v6626, 120
    %v6987 = vpop.permute.xlu0 %6986
    %6988 = vrot.lane.b32.xlu0 %v6629, 120
    %v6989 = vpop.permute.xlu0 %6988
    %6990 = vrot.lane.b32.xlu0 %v6632, 120
    %v6991 = vpop.permute.xlu0 %6990
    %6992 = vrot.lane.b32.xlu0 %v6635, 120
    %v6993 = vpop.permute.xlu0 %6992
    %v7003 = vsel %vm968, %v6976, 0
    %v7006 = vsel %vm968, %v6977, 0
    %7008 = vmatpush.msra.mxu0 0.0
    %7009 = vmatpush.msra.mxu0 0.0
    %7010 = vmatpush.msra.mxu0 0.0
    %7011 = vmatpush.msra.mxu0 0.0
    %7012 = vmatpush.msra.mxu0 0.0
    %7013 = vmatpush.msra.mxu0 0.0
    %7014 = vmatpush.msra.mxu0 0.0
    %7015 = vmatpush.msra.mxu0 0.0
    %7016 = vmatpush.msra.mxu0 %v6993
    %7017 = vmatpush.msra.mxu0 %v6991
    %7018 = vmatpush.msra.mxu0 %v6989
    %7019 = vmatpush.msra.mxu0 %v6987
    %7020 = vmatpush.msra.mxu0 %v6985
    %7021 = vmatpush.msra.mxu0 %v6983
    %7022 = vmatpush.msra.mxu0 %v6981
    %7023 = vmatpush.msra.mxu0 %v6979
    %7024 = vmatmul.f32.gmra.mxu0 %v7003
    %v7025 = vpop.f32.mrf.mxu0
    %v7026 = vadd.f32 0.0, %v7025
    %7027 = vmatmul.f32.gmra.mxu0 %v7006
    %v7028 = vpop.f32.mrf.mxu0
    %v7029 = vadd.f32 0.0, %v7028
    %7030 = vdwg.mxu0
    %7031 = vrot.lane.b32.xlu0 %v6471, 116
    %v7032 = vpop.permute.xlu0 %7031
    %7033 = vrot.lane.b32.xlu0 %v6474, 116
    %v7034 = vpop.permute.xlu0 %7033
    %7035 = vrot.lane.b32.xlu0 %v6534, 116
    %v7036 = vpop.permute.xlu0 %7035
    %7037 = vrot.lane.b32.xlu0 %v6537, 116
    %v7038 = vpop.permute.xlu0 %7037
    %7039 = vrot.lane.b32.xlu0 %v6540, 116
    %v7040 = vpop.permute.xlu0 %7039
    %7041 = vrot.lane.b32.xlu0 %v6543, 116
    %v7042 = vpop.permute.xlu0 %7041
    %7043 = vrot.lane.b32.xlu0 %v6546, 116
    %v7044 = vpop.permute.xlu0 %7043
    %7045 = vrot.lane.b32.xlu0 %v6549, 116
    %v7046 = vpop.permute.xlu0 %7045
    %7047 = vrot.lane.b32.xlu0 %v6552, 116
    %v7048 = vpop.permute.xlu0 %7047
    %7049 = vrot.lane.b32.xlu0 %v6555, 116
    %v7050 = vpop.permute.xlu0 %7049
    %v7051 = vsel %vm912, %v7032, 0
    %v7053 = vsel %vm912, %v7034, 0
    %v7055 = vsel %vm912, %v7036, 0
    %v7057 = vsel %vm912, %v7038, 0
    %v7059 = vsel %vm912, %v7040, 0
    %v7061 = vsel %vm912, %v7042, 0
    %v7063 = vsel %vm912, %v7044, 0
    %v7065 = vsel %vm912, %v7046, 0
    %v7067 = vsel %vm912, %v7048, 0
    %v7069 = vsel %vm912, %v7050, 0
    %7071 = vmatpush.xpose.msra.mxu0 0.0
    %7072 = vmatpush.xpose.msra.mxu0 0.0
    %7073 = vmatpush.xpose.msra.mxu0 0.0
    %7074 = vmatpush.xpose.msra.mxu0 0.0
    %7075 = vmatpush.xpose.msra.mxu0 0.0
    %7076 = vmatpush.xpose.msra.mxu0 0.0
    %7077 = vmatpush.xpose.msra.mxu0 0.0
    %7078 = vmatpush.xpose.msra.mxu0 0.0
    %7079 = vmatpush.xpose.msra.mxu0 %v7069
    %7080 = vmatpush.xpose.msra.mxu0 %v7067
    %7081 = vmatpush.xpose.msra.mxu0 %v7065
    %7082 = vmatpush.xpose.msra.mxu0 %v7063
    %7083 = vmatpush.xpose.msra.mxu0 %v7061
    %7084 = vmatpush.xpose.msra.mxu0 %v7059
    %7085 = vmatpush.xpose.msra.mxu0 %v7057
    %7086 = vmatpush.xpose.msra.mxu0 %v7055
    %7087 = vmatmul.f32.gmra.mxu0 %v7051
    %v7088 = vpop.f32.mrf.mxu0
    %v7089 = vadd.f32 0.0, %v7088
    %7090 = vmatmul.f32.gmra.mxu0 %v7053
    %v7091 = vpop.f32.mrf.mxu0
    %v7092 = vadd.f32 0.0, %v7091
    %7093 = vdwg.mxu0
    %v7094 = vmul.f32 %v7089, 0.5
    %v7095 = vmul.f32 %v7092, 0.5
    %v7096 = vsel %vm968, %v7094, -inf
    %7097 = vmax.xlane.f32.xlu0 %v7096
    %v7098 = vpop.xlane.xlu0 %7097
    %v7099 = vsel %vm972, %v7095, -inf
    %7100 = vmax.xlane.f32.xlu0 %v7099
    %v7101 = vpop.xlane.xlu0 %7100
    %v7102 = vsub.f32 %v7094, %v7098
    %v7103 = vsub.f32 %v7095, %v7101
    %v7104 = vmul.f32 %v7102, 1.442695
    %v7105 = vpow.pop %v7104
    %v7106 = vmul.f32 %v7103, 1.442695
    %v7107 = vpow.pop %v7106
    %v7108 = vsel %vm968, %v7105, 0.0
    %7109 = vadd.xlane.f32.xlu0 %v7108
    %v7110 = vpop.xlane.xlu0 %7109
    %v7111 = vsel %vm972, %v7107, 0.0
    %7112 = vadd.xlane.f32.xlu0 %v7111
    %v7113 = vpop.xlane.xlu0 %7112
    %v7114 = vrcp.pop %v7110
    %v7115 = vrcp.pop %v7113
    %v7116 = vmul.f32 %v7105, %v7114
    %v7117 = vmul.f32 %v7107, %v7115
    %7118 = vrot.lane.b32.xlu0 %v6614, 116
    %v7119 = vpop.permute.xlu0 %7118
    %7120 = vrot.lane.b32.xlu0 %v6617, 116
    %v7121 = vpop.permute.xlu0 %7120
    %7122 = vrot.lane.b32.xlu0 %v6620, 116
    %v7123 = vpop.permute.xlu0 %7122
    %7124 = vrot.lane.b32.xlu0 %v6623, 116
    %v7125 = vpop.permute.xlu0 %7124
    %7126 = vrot.lane.b32.xlu0 %v6626, 116
    %v7127 = vpop.permute.xlu0 %7126
    %7128 = vrot.lane.b32.xlu0 %v6629, 116
    %v7129 = vpop.permute.xlu0 %7128
    %7130 = vrot.lane.b32.xlu0 %v6632, 116
    %v7131 = vpop.permute.xlu0 %7130
    %7132 = vrot.lane.b32.xlu0 %v6635, 116
    %v7133 = vpop.permute.xlu0 %7132
    %v7143 = vsel %vm968, %v7116, 0
    %v7146 = vsel %vm968, %v7117, 0
    %7148 = vmatpush.msra.mxu0 0.0
    %7149 = vmatpush.msra.mxu0 0.0
    %7150 = vmatpush.msra.mxu0 0.0
    %7151 = vmatpush.msra.mxu0 0.0
    %7152 = vmatpush.msra.mxu0 0.0
    %7153 = vmatpush.msra.mxu0 0.0
    %7154 = vmatpush.msra.mxu0 0.0
    %7155 = vmatpush.msra.mxu0 0.0
    %7156 = vmatpush.msra.mxu0 %v7133
    %7157 = vmatpush.msra.mxu0 %v7131
    %7158 = vmatpush.msra.mxu0 %v7129
    %7159 = vmatpush.msra.mxu0 %v7127
    %7160 = vmatpush.msra.mxu0 %v7125
    %7161 = vmatpush.msra.mxu0 %v7123
    %7162 = vmatpush.msra.mxu0 %v7121
    %7163 = vmatpush.msra.mxu0 %v7119
    %7164 = vmatmul.f32.gmra.mxu0 %v7143
    %v7165 = vpop.f32.mrf.mxu0
    %v7166 = vadd.f32 0.0, %v7165
    %7167 = vmatmul.f32.gmra.mxu0 %v7146
    %v7168 = vpop.f32.mrf.mxu0
    %v7169 = vadd.f32 0.0, %v7168
    %7170 = vdwg.mxu0
    %7173 = vrot.lane.b32.xlu0 %v6886, 4
    %v7174 = vpop.permute.xlu0 %7173
    %7175 = vrot.lane.b32.xlu0 %v6889, 4
    %v7176 = vpop.permute.xlu0 %7175
    %7181 = vrot.lane.b32.xlu0 %v7026, 8
    %v7182 = vpop.permute.xlu0 %7181
    %7183 = vrot.lane.b32.xlu0 %v7029, 8
    %v7184 = vpop.permute.xlu0 %7183
    %7189 = vrot.lane.b32.xlu0 %v7166, 12
    %v7190 = vpop.permute.xlu0 %7189
    %7191 = vrot.lane.b32.xlu0 %v7169, 12
    %v7192 = vpop.permute.xlu0 %7191
    %v7195 = vsel %vm912, %v6738, %v7174
    %v7196 = vsel %vm912, %v6741, %v7176
    %v7197 = vsel %vm171, %v7195, %v7182
    %v7198 = vsel %vm171, %v7196, %v7184
    %v7199 = vsel %vm1477, %v7197, %v7190
    %v7200 = vsel %vm1477, %v7198, %v7192
    %v7201 = vld [vmem:[#allocation2 + $0xf0] sm:$0xff]
    %v7202 = vld [vmem:[#allocation2 + $0xf8] sm:$0xff]
    %7203 = vrot.lane.b32.xlu0 %v6436, 80
    %v7204 = vpop.permute.xlu0 %7203
    %v7207 = vsel %vm590, %v7199, 0
    %v7210 = vsel %vm590, %v7200, 0
    %7212 = vmatpush.msra.mxu0 0.0
    %7213 = vmatpush.msra.mxu0 0.0
    %7214 = vmatpush.msra.mxu0 0.0
    %7215 = vmatpush.msra.mxu0 0.0
    %7216 = vmatpush.msra.mxu0 0.0
    %7217 = vmatpush.msra.mxu0 0.0
    %7218 = vmatpush.msra.mxu0 0.0
    %7219 = vmatpush.msra.mxu0 0.0
    %7220 = vmatpush.msra.mxu0 0.0
    %7221 = vmatpush.msra.mxu0 0.0
    %7222 = vmatpush.msra.mxu0 0.0
    %7223 = vmatpush.msra.mxu0 0.0
    %7224 = vmatpush.msra.mxu0 0.0
    %7225 = vmatpush.msra.mxu0 0.0
    %7226 = vmatpush.msra.mxu0 %v7202
    %7227 = vmatpush.msra.mxu0 %v7201
    %7228 = vmatmul.f32.gmra.mxu0 %v7207
    %v7229 = vpop.f32.mrf.mxu0
    %v7230 = vadd.f32 %v7204, %v7229
    %7231 = vmatmul.f32.gmra.mxu0 %v7210
    %v7232 = vpop.f32.mrf.mxu0
    %7233 = vdwg.mxu0
    %v7234 = vadd.f32 %v4896, %v7230
    %v7235 = vsel %vm60, %v7234, 0.0
    %7236 = vadd.xlane.f32.xlu0 %v7235
    %v7237 = vpop.xlane.xlu0 %7236
    %v7238 = vmul.f32 %v7237, %v653
    %v7239 = vsub.f32 %v7234, %v7238
    %v7240 = vmul.f32 %v7239, %v7239
    %v7241 = vsel %vm60, %v7240, 0.0
    %7242 = vadd.xlane.f32.xlu0 %v7241
    %v7243 = vpop.xlane.xlu0 %7242
    %v7244 = vmul.f32 %v7243, %v653
    %v7245 = vadd.f32 %v7244, 1e-05
    %v7246 = vrsqrt.pop %v7245
    %v7247 = vmul.f32 %v7246, %v7245
    %v7248 = vmul.f32 %v7247, %v7246
    %v7249 = vmul.f32 0.5, %v7248
    %v7250 = vsub.f32 1.5, %v7249
    %v7251 = vmul.f32 %v7246, %v7250
    %vm7252 = vweird.f32 %v7245
    %vm7253 = vweird.f32 %v7246
    %vm7254 = vmor %vm7252, %vm7253
    %v7255 = vsel %vm7254, %v7246, %v7251
    %v7256 = vmul.f32 %v7239, %v7255
    %7257 = vrot.lane.b32.xlu0 %v6436, 48
    %v7258 = vpop.permute.xlu0 %7257
    %v7260 = vmul.f32 %v7256, %v7258
    %v7261 = vld [vmem:[#allocation2 + $0x318] sm:$0x1]
    %v7262 = vperm.slane %v7261, 0
    %v7263 = vadd.f32 %v7260, %v7262
    %v7264 = vld [vmem:[#allocation2 + $0x100] sm:$0xff]
    %v7265 = vld [vmem:[#allocation2 + $0x108] sm:$0xff]
    %v7266 = vld [vmem:[#allocation2 + $0x110] sm:$0xff]
    %v7267 = vld [vmem:[#allocation2 + $0x118] sm:$0xff]
    %7269 = vrot.lane.b32.xlu0 %v7262, 96
    %v7270 = vpop.permute.xlu0 %7269
    %7272 = vmatpush.msra.mxu0 0.0
    %7273 = vmatpush.msra.mxu0 0.0
    %7274 = vmatpush.msra.mxu0 0.0
    %7275 = vmatpush.msra.mxu0 0.0
    %7276 = vmatpush.msra.mxu0 0.0
    %7277 = vmatpush.msra.mxu0 0.0
    %7278 = vmatpush.msra.mxu0 0.0
    %7279 = vmatpush.msra.mxu0 0.0
    %7280 = vmatpush.msra.mxu0 0.0
    %7281 = vmatpush.msra.mxu0 0.0
    %7282 = vmatpush.msra.mxu0 0.0
    %7283 = vmatpush.msra.mxu0 0.0
    %7284 = vmatpush.msra.mxu0 %v7267
    %7285 = vmatpush.msra.mxu0 %v7266
    %7286 = vmatpush.msra.mxu0 %v7265
    %7287 = vmatpush.msra.mxu0 %v7264
    %7288 = vmatmul.f32.gmra.mxu0 %v6573
    %v7289 = vpop.f32.mrf.mxu0
    %v7290 = vadd.f32 %v7270, %v7289
    %7291 = vmatmul.f32.gmra.mxu0 %v6576
    %v7292 = vpop.f32.mrf.mxu0
    %v7293 = vadd.f32 %v7270, %v7292
    %7294 = vmatmul.f32.gmra.mxu0 %v6579
    %v7295 = vpop.f32.mrf.mxu0
    %v7296 = vadd.f32 %v7270, %v7295
    %7297 = vmatmul.f32.gmra.mxu0 %v6582
    %v7298 = vpop.f32.mrf.mxu0
    %v7299 = vadd.f32 %v7270, %v7298
    %7300 = vmatmul.f32.gmra.mxu0 %v6585
    %v7301 = vpop.f32.mrf.mxu0
    %v7302 = vadd.f32 %v7270, %v7301
    %7303 = vmatmul.f32.gmra.mxu0 %v6588
    %v7304 = vpop.f32.mrf.mxu0
    %v7305 = vadd.f32 %v7270, %v7304
    %7306 = vmatmul.f32.gmra.mxu0 %v6591
    %v7307 = vpop.f32.mrf.mxu0
    %v7308 = vadd.f32 %v7270, %v7307
    %7309 = vmatmul.f32.gmra.mxu0 %v6594
    %v7310 = vpop.f32.mrf.mxu0
    %v7311 = vadd.f32 %v7270, %v7310
    %7312 = vdwg.mxu0
    %7313 = vrot.lane.b32.xlu0 %v4740, 16
    %v7314 = vpop.permute.xlu0 %7313
    %7315 = vrot.lane.b32.xlu0 %v4741, 16
    %v7316 = vpop.permute.xlu0 %7315
    %7317 = vrot.lane.b32.xlu0 %v4742, 16
    %v7318 = vpop.permute.xlu0 %7317
    %7319 = vrot.lane.b32.xlu0 %v4743, 16
    %v7320 = vpop.permute.xlu0 %7319
    %v7326 = vsel %vm60, %v7290, 0
    %v7329 = vsel %vm60, %v7293, 0
    %v7332 = vsel %vm60, %v7296, 0
    %v7335 = vsel %vm60, %v7299, 0
    %v7338 = vsel %vm60, %v7302, 0
    %v7341 = vsel %vm60, %v7305, 0
    %v7344 = vsel %vm60, %v7308, 0
    %v7347 = vsel %vm60, %v7311, 0
    %7349 = vmatpush.msra.mxu0 0.0
    %7350 = vmatpush.msra.mxu0 0.0
    %7351 = vmatpush.msra.mxu0 0.0
    %7352 = vmatpush.msra.mxu0 0.0
    %7353 = vmatpush.msra.mxu0 0.0
    %7354 = vmatpush.msra.mxu0 0.0
    %7355 = vmatpush.msra.mxu0 0.0
    %7356 = vmatpush.msra.mxu0 0.0
    %7357 = vmatpush.msra.mxu0 0.0
    %7358 = vmatpush.msra.mxu0 0.0
    %7359 = vmatpush.msra.mxu0 0.0
    %7360 = vmatpush.msra.mxu0 0.0
    %7361 = vmatpush.msra.mxu0 %v7320
    %7362 = vmatpush.msra.mxu0 %v7318
    %7363 = vmatpush.msra.mxu0 %v7316
    %7364 = vmatpush.msra.mxu0 %v7314
    %7365 = vmatmul.f32.gmra.mxu0 %v7326
    %v7366 = vpop.f32.mrf.mxu0
    %v7367 = vadd.f32 0.0, %v7366
    %7368 = vmatmul.f32.gmra.mxu0 %v7329
    %v7369 = vpop.f32.mrf.mxu0
    %v7370 = vadd.f32 0.0, %v7369
    %7371 = vmatmul.f32.gmra.mxu0 %v7332
    %v7372 = vpop.f32.mrf.mxu0
    %v7373 = vadd.f32 0.0, %v7372
    %7374 = vmatmul.f32.gmra.mxu0 %v7335
    %v7375 = vpop.f32.mrf.mxu0
    %v7376 = vadd.f32 0.0, %v7375
    %7377 = vmatmul.f32.gmra.mxu0 %v7338
    %v7378 = vpop.f32.mrf.mxu0
    %v7379 = vadd.f32 0.0, %v7378
    %7380 = vmatmul.f32.gmra.mxu0 %v7341
    %v7381 = vpop.f32.mrf.mxu0
    %v7382 = vadd.f32 0.0, %v7381
    %7383 = vmatmul.f32.gmra.mxu0 %v7344
    %v7384 = vpop.f32.mrf.mxu0
    %v7385 = vadd.f32 0.0, %v7384
    %7386 = vmatmul.f32.gmra.mxu0 %v7347
    %v7387 = vpop.f32.mrf.mxu0
    %v7388 = vadd.f32 0.0, %v7387
    %7389 = vdwg.mxu0
    %v7390 = vmul.f32 %v7290, %v7290
    %v7391 = vmul.f32 %v7293, %v7293
    %v7392 = vmul.f32 %v7296, %v7296
    %v7393 = vmul.f32 %v7299, %v7299
    %v7394 = vmul.f32 %v7302, %v7302
    %v7395 = vmul.f32 %v7305, %v7305
    %v7396 = vmul.f32 %v7308, %v7308
    %v7397 = vmul.f32 %v7311, %v7311
    %v7399 = vsel %vm60, %v7390, 0
    %v7402 = vsel %vm60, %v7391, 0
    %v7405 = vsel %vm60, %v7392, 0
    %v7408 = vsel %vm60, %v7393, 0
    %v7411 = vsel %vm60, %v7394, 0
    %v7414 = vsel %vm60, %v7395, 0
    %v7417 = vsel %vm60, %v7396, 0
    %v7420 = vsel %vm60, %v7397, 0
    %7422 = vmatpush.msra.mxu0 0.0
    %7423 = vmatpush.msra.mxu0 0.0
    %7424 = vmatpush.msra.mxu0 0.0
    %7425 = vmatpush.msra.mxu0 0.0
    %7426 = vmatpush.msra.mxu0 0.0
    %7427 = vmatpush.msra.mxu0 0.0
    %7428 = vmatpush.msra.mxu0 0.0
    %7429 = vmatpush.msra.mxu0 0.0
    %7430 = vmatpush.msra.mxu0 0.0
    %7431 = vmatpush.msra.mxu0 0.0
    %7432 = vmatpush.msra.mxu0 0.0
    %7433 = vmatpush.msra.mxu0 0.0
    %7434 = vmatpush.msra.mxu0 %v7320
    %7435 = vmatpush.msra.mxu0 %v7318
    %7436 = vmatpush.msra.mxu0 %v7316
    %7437 = vmatpush.msra.mxu0 %v7314
    %7438 = vmatmul.f32.gmra.mxu0 %v7399
    %v7439 = vpop.f32.mrf.mxu0
    %v7440 = vadd.f32 0.0, %v7439
    %7441 = vmatmul.f32.gmra.mxu0 %v7402
    %v7442 = vpop.f32.mrf.mxu0
    %v7443 = vadd.f32 0.0, %v7442
    %7444 = vmatmul.f32.gmra.mxu0 %v7405
    %v7445 = vpop.f32.mrf.mxu0
    %v7446 = vadd.f32 0.0, %v7445
    %7447 = vmatmul.f32.gmra.mxu0 %v7408
    %v7448 = vpop.f32.mrf.mxu0
    %v7449 = vadd.f32 0.0, %v7448
    %7450 = vmatmul.f32.gmra.mxu0 %v7411
    %v7451 = vpop.f32.mrf.mxu0
    %v7452 = vadd.f32 0.0, %v7451
    %7453 = vmatmul.f32.gmra.mxu0 %v7414
    %v7454 = vpop.f32.mrf.mxu0
    %v7455 = vadd.f32 0.0, %v7454
    %7456 = vmatmul.f32.gmra.mxu0 %v7417
    %v7457 = vpop.f32.mrf.mxu0
    %v7458 = vadd.f32 0.0, %v7457
    %7459 = vmatmul.f32.gmra.mxu0 %v7420
    %v7460 = vpop.f32.mrf.mxu0
    %v7461 = vadd.f32 0.0, %v7460
    %7462 = vdwg.mxu0
    %v7463 = vmul.f32 %v7367, %v7367
    %v7464 = vmul.f32 %v7370, %v7370
    %v7465 = vmul.f32 %v7373, %v7373
    %v7466 = vmul.f32 %v7376, %v7376
    %v7467 = vmul.f32 %v7379, %v7379
    %v7468 = vmul.f32 %v7382, %v7382
    %v7469 = vmul.f32 %v7385, %v7385
    %v7470 = vmul.f32 %v7388, %v7388
    %v7471 = vsub.f32 %v7440, %v7463
    %v7472 = vsub.f32 %v7443, %v7464
    %v7473 = vsub.f32 %v7446, %v7465
    %v7474 = vsub.f32 %v7449, %v7466
    %v7475 = vsub.f32 %v7452, %v7467
    %v7476 = vsub.f32 %v7455, %v7468
    %v7477 = vsub.f32 %v7458, %v7469
    %v7478 = vsub.f32 %v7461, %v7470
    %v7479 = vadd.f32 %v7471, 1e-06
    %v7480 = vadd.f32 %v7472, 1e-06
    %v7481 = vadd.f32 %v7473, 1e-06
    %v7482 = vadd.f32 %v7474, 1e-06
    %v7483 = vadd.f32 %v7475, 1e-06
    %v7484 = vadd.f32 %v7476, 1e-06
    %v7485 = vadd.f32 %v7477, 1e-06
    %v7486 = vadd.f32 %v7478, 1e-06
    %v7487 = vrsqrt.pop %v7479
    %v7488 = vmul.f32 %v7487, %v7479
    %v7489 = vmul.f32 %v7488, %v7487
    %v7490 = vmul.f32 0.5, %v7489
    %v7491 = vsub.f32 1.5, %v7490
    %v7492 = vmul.f32 %v7487, %v7491
    %vm7493 = vweird.f32 %v7479
    %vm7494 = vweird.f32 %v7487
    %vm7495 = vmor %vm7493, %vm7494
    %v7496 = vsel %vm7495, %v7487, %v7492
    %v7497 = vrsqrt.pop %v7480
    %v7498 = vmul.f32 %v7497, %v7480
    %v7499 = vmul.f32 %v7498, %v7497
    %v7500 = vmul.f32 0.5, %v7499
    %v7501 = vsub.f32 1.5, %v7500
    %v7502 = vmul.f32 %v7497, %v7501
    %vm7503 = vweird.f32 %v7480
    %vm7504 = vweird.f32 %v7497
    %vm7505 = vmor %vm7503, %vm7504
    %v7506 = vsel %vm7505, %v7497, %v7502
    %v7507 = vrsqrt.pop %v7481
    %v7508 = vmul.f32 %v7507, %v7481
    %v7509 = vmul.f32 %v7508, %v7507
    %v7510 = vmul.f32 0.5, %v7509
    %v7511 = vsub.f32 1.5, %v7510
    %v7512 = vmul.f32 %v7507, %v7511
    %vm7513 = vweird.f32 %v7481
    %vm7514 = vweird.f32 %v7507
    %vm7515 = vmor %vm7513, %vm7514
    %v7516 = vsel %vm7515, %v7507, %v7512
    %v7517 = vrsqrt.pop %v7482
    %v7518 = vmul.f32 %v7517, %v7482
    %v7519 = vmul.f32 %v7518, %v7517
    %v7520 = vmul.f32 0.5, %v7519
    %v7521 = vsub.f32 1.5, %v7520
    %v7522 = vmul.f32 %v7517, %v7521
    %vm7523 = vweird.f32 %v7482
    %vm7524 = vweird.f32 %v7517
    %vm7525 = vmor %vm7523, %vm7524
    %v7526 = vsel %vm7525, %v7517, %v7522
    %v7527 = vrsqrt.pop %v7483
    %v7528 = vmul.f32 %v7527, %v7483
    %v7529 = vmul.f32 %v7528, %v7527
    %v7530 = vmul.f32 0.5, %v7529
    %v7531 = vsub.f32 1.5, %v7530
    %v7532 = vmul.f32 %v7527, %v7531
    %vm7533 = vweird.f32 %v7483
    %vm7534 = vweird.f32 %v7527
    %vm7535 = vmor %vm7533, %vm7534
    %v7536 = vsel %vm7535, %v7527, %v7532
    %v7537 = vrsqrt.pop %v7484
    %v7538 = vmul.f32 %v7537, %v7484
    %v7539 = vmul.f32 %v7538, %v7537
    %v7540 = vmul.f32 0.5, %v7539
    %v7541 = vsub.f32 1.5, %v7540
    %v7542 = vmul.f32 %v7537, %v7541
    %vm7543 = vweird.f32 %v7484
    %vm7544 = vweird.f32 %v7537
    %vm7545 = vmor %vm7543, %vm7544
    %v7546 = vsel %vm7545, %v7537, %v7542
    %v7547 = vrsqrt.pop %v7485
    %v7548 = vmul.f32 %v7547, %v7485
    %v7549 = vmul.f32 %v7548, %v7547
    %v7550 = vmul.f32 0.5, %v7549
    %v7551 = vsub.f32 1.5, %v7550
    %v7552 = vmul.f32 %v7547, %v7551
    %vm7553 = vweird.f32 %v7485
    %vm7554 = vweird.f32 %v7547
    %vm7555 = vmor %vm7553, %vm7554
    %v7556 = vsel %vm7555, %v7547, %v7552
    %v7557 = vrsqrt.pop %v7486
    %v7558 = vmul.f32 %v7557, %v7486
    %v7559 = vmul.f32 %v7558, %v7557
    %v7560 = vmul.f32 0.5, %v7559
    %v7561 = vsub.f32 1.5, %v7560
    %v7562 = vmul.f32 %v7557, %v7561
    %vm7563 = vweird.f32 %v7486
    %vm7564 = vweird.f32 %v7557
    %vm7565 = vmor %vm7563, %vm7564
    %v7566 = vsel %vm7565, %v7557, %v7562
    %v7567 = vld [vmem:[#allocation2 + $0x320] sm:$0xf]
    %v7569 = vsel %vm912, %v7367, 0
    %v7572 = vsel %vm912, %v7370, 0
    %v7575 = vsel %vm912, %v7373, 0
    %v7578 = vsel %vm912, %v7376, 0
    %v7581 = vsel %vm912, %v7379, 0
    %v7584 = vsel %vm912, %v7382, 0
    %v7587 = vsel %vm912, %v7385, 0
    %v7590 = vsel %vm912, %v7388, 0
    %vm7592 = vcmask 1043456
    %v7594 = vsel %vm7592, %v7567, 0
    %7596 = vmatpush.msra.mxu0 0.0
    %7597 = vmatpush.msra.mxu0 0.0
    %7598 = vmatpush.msra.mxu0 0.0
    %7599 = vmatpush.msra.mxu0 0.0
    %7600 = vmatpush.msra.mxu0 0.0
    %7601 = vmatpush.msra.mxu0 0.0
    %7602 = vmatpush.msra.mxu0 0.0
    %7603 = vmatpush.msra.mxu0 0.0
    %7604 = vmatpush.msra.mxu0 0.0
    %7605 = vmatpush.msra.mxu0 0.0
    %7606 = vmatpush.msra.mxu0 0.0
    %7607 = vmatpush.msra.mxu0 0.0
    %7608 = vmatpush.msra.mxu0 0.0
    %7609 = vmatpush.msra.mxu0 0.0
    %7610 = vmatpush.msra.mxu0 0.0
    %7611 = vmatpush.msra.mxu0 %v7594
    %7612 = vmatmul.f32.gmra.mxu0 %v7569
    %v7613 = vpop.f32.mrf.mxu0
    %v7614 = vadd.f32 0.0, %v7613
    %7615 = vmatmul.f32.gmra.mxu0 %v7572
    %v7616 = vpop.f32.mrf.mxu0
    %v7617 = vadd.f32 0.0, %v7616
    %7618 = vmatmul.f32.gmra.mxu0 %v7575
    %v7619 = vpop.f32.mrf.mxu0
    %v7620 = vadd.f32 0.0, %v7619
    %7621 = vmatmul.f32.gmra.mxu0 %v7578
    %v7622 = vpop.f32.mrf.mxu0
    %v7623 = vadd.f32 0.0, %v7622
    %7624 = vmatmul.f32.gmra.mxu0 %v7581
    %v7625 = vpop.f32.mrf.mxu0
    %v7626 = vadd.f32 0.0, %v7625
    %7627 = vmatmul.f32.gmra.mxu0 %v7584
    %v7628 = vpop.f32.mrf.mxu0
    %v7629 = vadd.f32 0.0, %v7628
    %7630 = vmatmul.f32.gmra.mxu0 %v7587
    %v7631 = vpop.f32.mrf.mxu0
    %v7632 = vadd.f32 0.0, %v7631
    %7633 = vmatmul.f32.gmra.mxu0 %v7590
    %v7634 = vpop.f32.mrf.mxu0
    %v7635 = vadd.f32 0.0, %v7634
    %7636 = vdwg.mxu0
    %v7638 = vsel %vm912, %v7496, 0
    %v7641 = vsel %vm912, %v7506, 0
    %v7644 = vsel %vm912, %v7516, 0
    %v7647 = vsel %vm912, %v7526, 0
    %v7650 = vsel %vm912, %v7536, 0
    %v7653 = vsel %vm912, %v7546, 0
    %v7656 = vsel %vm912, %v7556, 0
    %v7659 = vsel %vm912, %v7566, 0
    %7661 = vmatpush.msra.mxu0 0.0
    %7662 = vmatpush.msra.mxu0 0.0
    %7663 = vmatpush.msra.mxu0 0.0
    %7664 = vmatpush.msra.mxu0 0.0
    %7665 = vmatpush.msra.mxu0 0.0
    %7666 = vmatpush.msra.mxu0 0.0
    %7667 = vmatpush.msra.mxu0 0.0
    %7668 = vmatpush.msra.mxu0 0.0
    %7669 = vmatpush.msra.mxu0 0.0
    %7670 = vmatpush.msra.mxu0 0.0
    %7671 = vmatpush.msra.mxu0 0.0
    %7672 = vmatpush.msra.mxu0 0.0
    %7673 = vmatpush.msra.mxu0 0.0
    %7674 = vmatpush.msra.mxu0 0.0
    %7675 = vmatpush.msra.mxu0 0.0
    %7676 = vmatpush.msra.mxu0 %v7594
    %7677 = vmatmul.f32.gmra.mxu0 %v7638
    %v7678 = vpop.f32.mrf.mxu0
    %v7679 = vadd.f32 0.0, %v7678
    %7680 = vmatmul.f32.gmra.mxu0 %v7641
    %v7681 = vpop.f32.mrf.mxu0
    %v7682 = vadd.f32 0.0, %v7681
    %7683 = vmatmul.f32.gmra.mxu0 %v7644
    %v7684 = vpop.f32.mrf.mxu0
    %v7685 = vadd.f32 0.0, %v7684
    %7686 = vmatmul.f32.gmra.mxu0 %v7647
    %v7687 = vpop.f32.mrf.mxu0
    %v7688 = vadd.f32 0.0, %v7687
    %7689 = vmatmul.f32.gmra.mxu0 %v7650
    %v7690 = vpop.f32.mrf.mxu0
    %v7691 = vadd.f32 0.0, %v7690
    %7692 = vmatmul.f32.gmra.mxu0 %v7653
    %v7693 = vpop.f32.mrf.mxu0
    %v7694 = vadd.f32 0.0, %v7693
    %7695 = vmatmul.f32.gmra.mxu0 %v7656
    %v7696 = vpop.f32.mrf.mxu0
    %v7697 = vadd.f32 0.0, %v7696
    %7698 = vmatmul.f32.gmra.mxu0 %v7659
    %v7699 = vpop.f32.mrf.mxu0
    %v7700 = vadd.f32 0.0, %v7699
    %7701 = vdwg.mxu0
    %v7702 = vsub.f32 %v7290, %v7614
    %v7703 = vsub.f32 %v7293, %v7617
    %v7704 = vsub.f32 %v7296, %v7620
    %v7705 = vsub.f32 %v7299, %v7623
    %v7706 = vsub.f32 %v7302, %v7626
    %v7707 = vsub.f32 %v7305, %v7629
    %v7708 = vsub.f32 %v7308, %v7632
    %v7709 = vsub.f32 %v7311, %v7635
    %v7710 = vmul.f32 %v7702, %v7679
    %v7711 = vmul.f32 %v7703, %v7682
    %v7712 = vmul.f32 %v7704, %v7685
    %v7713 = vmul.f32 %v7705, %v7688
    %v7714 = vmul.f32 %v7706, %v7691
    %v7715 = vmul.f32 %v7707, %v7694
    %v7716 = vmul.f32 %v7708, %v7697
    %v7717 = vmul.f32 %v7709, %v7700
    %7718 = vrot.lane.b32.xlu0 %v7262, 64
    %v7719 = vpop.permute.xlu0 %7718
    %v7721 = vmul.f32 %v7710, %v7719
    %v7722 = vmul.f32 %v7711, %v7719
    %v7723 = vmul.f32 %v7712, %v7719
    %v7724 = vmul.f32 %v7713, %v7719
    %v7725 = vmul.f32 %v7714, %v7719
    %v7726 = vmul.f32 %v7715, %v7719
    %v7727 = vmul.f32 %v7716, %v7719
    %v7728 = vmul.f32 %v7717, %v7719
    %7729 = vrot.lane.b32.xlu0 %v7262, 32
    %v7730 = vpop.permute.xlu0 %7729
    %v7732 = vadd.f32 %v7721, %v7730
    %v7733 = vadd.f32 %v7722, %v7730
    %v7734 = vadd.f32 %v7723, %v7730
    %v7735 = vadd.f32 %v7724, %v7730
    %v7736 = vadd.f32 %v7725, %v7730
    %v7737 = vadd.f32 %v7726, %v7730
    %v7738 = vadd.f32 %v7727, %v7730
    %v7739 = vadd.f32 %v7728, %v7730
    %v7740 = vmul.f32 %v7732, 0.5
    %v7741 = vmul.f32 %v7733, 0.5
    %v7742 = vmul.f32 %v7734, 0.5
    %v7743 = vmul.f32 %v7735, 0.5
    %v7744 = vmul.f32 %v7736, 0.5
    %v7745 = vmul.f32 %v7737, 0.5
    %v7746 = vmul.f32 %v7738, 0.5
    %v7747 = vmul.f32 %v7739, 0.5
    %v7748 = vmul.f32 %v7732, %v7732
    %v7749 = vmul.f32 %v7733, %v7733
    %v7750 = vmul.f32 %v7734, %v7734
    %v7751 = vmul.f32 %v7735, %v7735
    %v7752 = vmul.f32 %v7736, %v7736
    %v7753 = vmul.f32 %v7737, %v7737
    %v7754 = vmul.f32 %v7738, %v7738
    %v7755 = vmul.f32 %v7739, %v7739
    %v7756 = vmul.f32 %v7748, %v7732
    %v7757 = vmul.f32 %v7749, %v7733
    %v7758 = vmul.f32 %v7750, %v7734
    %v7759 = vmul.f32 %v7751, %v7735
    %v7760 = vmul.f32 %v7752, %v7736
    %v7761 = vmul.f32 %v7753, %v7737
    %v7762 = vmul.f32 %v7754, %v7738
    %v7763 = vmul.f32 %v7755, %v7739
    %v7764 = vmul.f32 %v7756, 0.044715
    %v7765 = vmul.f32 %v7757, 0.044715
    %v7766 = vmul.f32 %v7758, 0.044715
    %v7767 = vmul.f32 %v7759, 0.044715
    %v7768 = vmul.f32 %v7760, 0.044715
    %v7769 = vmul.f32 %v7761, 0.044715
    %v7770 = vmul.f32 %v7762, 0.044715
    %v7771 = vmul.f32 %v7763, 0.044715
    %v7772 = vadd.f32 %v7732, %v7764
    %v7773 = vadd.f32 %v7733, %v7765
    %v7774 = vadd.f32 %v7734, %v7766
    %v7775 = vadd.f32 %v7735, %v7767
    %v7776 = vadd.f32 %v7736, %v7768
    %v7777 = vadd.f32 %v7737, %v7769
    %v7778 = vadd.f32 %v7738, %v7770
    %v7779 = vadd.f32 %v7739, %v7771
    %v7780 = vmul.f32 %v7772, 0.7978846
    %v7781 = vmul.f32 %v7773, 0.7978846
    %v7782 = vmul.f32 %v7774, 0.7978846
    %v7783 = vmul.f32 %v7775, 0.7978846
    %v7784 = vmul.f32 %v7776, 0.7978846
    %v7785 = vmul.f32 %v7777, 0.7978846
    %v7786 = vmul.f32 %v7778, 0.7978846
    %v7787 = vmul.f32 %v7779, 0.7978846
    %v7788 = vtanh.pop %v7780
    %v7789 = vtanh.pop %v7781
    %v7790 = vtanh.pop %v7782
    %v7791 = vtanh.pop %v7783
    %v7792 = vtanh.pop %v7784
    %v7793 = vtanh.pop %v7785
    %v7794 = vtanh.pop %v7786
    %v7795 = vtanh.pop %v7787
    %v7796 = vadd.f32 %v7788, 1.0
    %v7797 = vadd.f32 %v7789, 1.0
    %v7798 = vadd.f32 %v7790, 1.0
    %v7799 = vadd.f32 %v7791, 1.0
    %v7800 = vadd.f32 %v7792, 1.0
    %v7801 = vadd.f32 %v7793, 1.0
    %v7802 = vadd.f32 %v7794, 1.0
    %v7803 = vadd.f32 %v7795, 1.0
    %v7804 = vmul.f32 %v7740, %v7796
    %v7805 = vmul.f32 %v7741, %v7797
    %v7806 = vmul.f32 %v7742, %v7798
    %v7807 = vmul.f32 %v7743, %v7799
    %v7808 = vmul.f32 %v7744, %v7800
    %v7809 = vmul.f32 %v7745, %v7801
    %v7810 = vmul.f32 %v7746, %v7802
    %v7811 = vmul.f32 %v7747, %v7803
    %v7812 = vld [vmem:[#allocation2 + $0x328] sm:$0x1]
    %v7813 = vperm.slane %v7812, 0
    %7818 = vrot.lane.b32.xlu0 %v7264, 96
    %v7819 = vpop.permute.xlu0 %7818
    %7820 = vrot.lane.b32.xlu0 %v7265, 96
    %v7821 = vpop.permute.xlu0 %7820
    %7822 = vrot.lane.b32.xlu0 %v7266, 96
    %v7823 = vpop.permute.xlu0 %7822
    %7824 = vrot.lane.b32.xlu0 %v7267, 96
    %v7825 = vpop.permute.xlu0 %7824
    %v7831 = vsel %vm60, %v7804, 0
    %v7834 = vsel %vm60, %v7805, 0
    %v7837 = vsel %vm60, %v7806, 0
    %v7840 = vsel %vm60, %v7807, 0
    %v7843 = vsel %vm60, %v7808, 0
    %v7846 = vsel %vm60, %v7809, 0
    %v7849 = vsel %vm60, %v7810, 0
    %v7852 = vsel %vm60, %v7811, 0
    %7854 = vmatpush.msra.mxu0 0.0
    %7855 = vmatpush.msra.mxu0 0.0
    %7856 = vmatpush.msra.mxu0 0.0
    %7857 = vmatpush.msra.mxu0 0.0
    %7858 = vmatpush.msra.mxu0 0.0
    %7859 = vmatpush.msra.mxu0 0.0
    %7860 = vmatpush.msra.mxu0 0.0
    %7861 = vmatpush.msra.mxu0 0.0
    %7862 = vmatpush.msra.mxu0 0.0
    %7863 = vmatpush.msra.mxu0 0.0
    %7864 = vmatpush.msra.mxu0 0.0
    %7865 = vmatpush.msra.mxu0 0.0
    %7866 = vmatpush.msra.mxu0 %v7825
    %7867 = vmatpush.msra.mxu0 %v7823
    %7868 = vmatpush.msra.mxu0 %v7821
    %7869 = vmatpush.msra.mxu0 %v7819
    %7870 = vmatmul.f32.gmra.mxu0 %v7831
    %v7871 = vpop.f32.mrf.mxu0
    %v7872 = vadd.f32 %v7813, %v7871
    %7873 = vmatmul.f32.gmra.mxu0 %v7834
    %v7874 = vpop.f32.mrf.mxu0
    %v7875 = vadd.f32 %v7813, %v7874
    %7876 = vmatmul.f32.gmra.mxu0 %v7837
    %v7877 = vpop.f32.mrf.mxu0
    %v7878 = vadd.f32 %v7813, %v7877
    %7879 = vmatmul.f32.gmra.mxu0 %v7840
    %v7880 = vpop.f32.mrf.mxu0
    %v7881 = vadd.f32 %v7813, %v7880
    %7882 = vmatmul.f32.gmra.mxu0 %v7843
    %v7883 = vpop.f32.mrf.mxu0
    %v7884 = vadd.f32 %v7813, %v7883
    %7885 = vmatmul.f32.gmra.mxu0 %v7846
    %v7886 = vpop.f32.mrf.mxu0
    %v7887 = vadd.f32 %v7813, %v7886
    %7888 = vmatmul.f32.gmra.mxu0 %v7849
    %v7889 = vpop.f32.mrf.mxu0
    %v7890 = vadd.f32 %v7813, %v7889
    %7891 = vmatmul.f32.gmra.mxu0 %v7852
    %v7892 = vpop.f32.mrf.mxu0
    %v7893 = vadd.f32 %v7813, %v7892
    %7894 = vdwg.mxu0
    %v7895 = vmul.f32 %v7872, 0.5
    %v7896 = vmul.f32 %v7875, 0.5
    %v7897 = vmul.f32 %v7878, 0.5
    %v7898 = vmul.f32 %v7881, 0.5
    %v7899 = vmul.f32 %v7884, 0.5
    %v7900 = vmul.f32 %v7887, 0.5
    %v7901 = vmul.f32 %v7890, 0.5
    %v7902 = vmul.f32 %v7893, 0.5
    %v7903 = vmul.f32 %v7872, %v7872
    %v7904 = vmul.f32 %v7875, %v7875
    %v7905 = vmul.f32 %v7878, %v7878
    %v7906 = vmul.f32 %v7881, %v7881
    %v7907 = vmul.f32 %v7884, %v7884
    %v7908 = vmul.f32 %v7887, %v7887
    %v7909 = vmul.f32 %v7890, %v7890
    %v7910 = vmul.f32 %v7893, %v7893
    %v7911 = vmul.f32 %v7903, %v7872
    %v7912 = vmul.f32 %v7904, %v7875
    %v7913 = vmul.f32 %v7905, %v7878
    %v7914 = vmul.f32 %v7906, %v7881
    %v7915 = vmul.f32 %v7907, %v7884
    %v7916 = vmul.f32 %v7908, %v7887
    %v7917 = vmul.f32 %v7909, %v7890
    %v7918 = vmul.f32 %v7910, %v7893
    %v7919 = vmul.f32 %v7911, 0.044715
    %v7920 = vmul.f32 %v7912, 0.044715
    %v7921 = vmul.f32 %v7913, 0.044715
    %v7922 = vmul.f32 %v7914, 0.044715
    %v7923 = vmul.f32 %v7915, 0.044715
    %v7924 = vmul.f32 %v7916, 0.044715
    %v7925 = vmul.f32 %v7917, 0.044715
    %v7926 = vmul.f32 %v7918, 0.044715
    %v7927 = vadd.f32 %v7872, %v7919
    %v7928 = vadd.f32 %v7875, %v7920
    %v7929 = vadd.f32 %v7878, %v7921
    %v7930 = vadd.f32 %v7881, %v7922
    %v7931 = vadd.f32 %v7884, %v7923
    %v7932 = vadd.f32 %v7887, %v7924
    %v7933 = vadd.f32 %v7890, %v7925
    %v7934 = vadd.f32 %v7893, %v7926
    %v7935 = vmul.f32 %v7927, 0.7978846
    %v7936 = vmul.f32 %v7928, 0.7978846
    %v7937 = vmul.f32 %v7929, 0.7978846
    %v7938 = vmul.f32 %v7930, 0.7978846
    %v7939 = vmul.f32 %v7931, 0.7978846
    %v7940 = vmul.f32 %v7932, 0.7978846
    %v7941 = vmul.f32 %v7933, 0.7978846
    %v7942 = vmul.f32 %v7934, 0.7978846
    %v7943 = vtanh.pop %v7935
    %v7944 = vtanh.pop %v7936
    %v7945 = vtanh.pop %v7937
    %v7946 = vtanh.pop %v7938
    %v7947 = vtanh.pop %v7939
    %v7948 = vtanh.pop %v7940
    %v7949 = vtanh.pop %v7941
    %v7950 = vtanh.pop %v7942
    %v7951 = vadd.f32 %v7943, 1.0
    %v7952 = vadd.f32 %v7944, 1.0
    %v7953 = vadd.f32 %v7945, 1.0
    %v7954 = vadd.f32 %v7946, 1.0
    %v7955 = vadd.f32 %v7947, 1.0
    %v7956 = vadd.f32 %v7948, 1.0
    %v7957 = vadd.f32 %v7949, 1.0
    %v7958 = vadd.f32 %v7950, 1.0
    %v7959 = vmul.f32 %v7895, %v7951
    %v7960 = vmul.f32 %v7896, %v7952
    %v7961 = vmul.f32 %v7897, %v7953
    %v7962 = vmul.f32 %v7898, %v7954
    %v7963 = vmul.f32 %v7899, %v7955
    %v7964 = vmul.f32 %v7900, %v7956
    %v7965 = vmul.f32 %v7901, %v7957
    %v7966 = vmul.f32 %v7902, %v7958
    %v7968 = vrot.slane %v7263, 1
    %7969 = vrot.lane.b32.xlu0 %v7968, 32
    %v7970 = vpop.permute.xlu0 %7969
    %v7972 = vrot.slane %v7263, 2
    %7973 = vrot.lane.b32.xlu0 %v7972, 64
    %v7974 = vpop.permute.xlu0 %7973
    %v7976 = vrot.slane %v7263, 3
    %7977 = vrot.lane.b32.xlu0 %v7976, 96
    %v7978 = vpop.permute.xlu0 %7977
    %v7980 = vsel %vm60, %v7263, %v7970
    %v7981 = vsel %vm968, %v7980, %v7974
    %vm7982 = vcmask 785408
    %v7983 = vsel %vm7982, %v7981, %v7978
    %v7984 = vld [vmem:[#allocation2 + $0x120] sm:$0xff]
    %v7985 = vld [vmem:[#allocation2 + $0x128] sm:$0xff]
    %v7986 = vld [vmem:[#allocation2 + $0x130] sm:$0xff]
    %v7987 = vld [vmem:[#allocation2 + $0x138] sm:$0xff]
    %v7988 = vld [vmem:[#allocation2 + $0x140] sm:$0xff]
    %v7989 = vld [vmem:[#allocation2 + $0x148] sm:$0xff]
    %v7990 = vld [vmem:[#allocation2 + $0x150] sm:$0xff]
    %v7991 = vld [vmem:[#allocation2 + $0x158] sm:$0xff]
    %v7992 = vld [vmem:[#allocation2 + $0x160] sm:$0xff]
    %v7993 = vld [vmem:[#allocation2 + $0x168] sm:$0xff]
    %v7994 = vld [vmem:[#allocation2 + $0x170] sm:$0xff]
    %v7995 = vld [vmem:[#allocation2 + $0x178] sm:$0xff]
    %v7996 = vld [vmem:[#allocation2 + $0x180] sm:$0xff]
    %v7997 = vld [vmem:[#allocation2 + $0x188] sm:$0xff]
    %v7998 = vld [vmem:[#allocation2 + $0x190] sm:$0xff]
    %v7999 = vld [vmem:[#allocation2 + $0x198] sm:$0xff]
    %v8000 = vld [vmem:[#allocation2 + $0x330] sm:$0x1]
    %v8002 = vrot.slane %v7983, 1
    %8004 = vmatpush.msra.mxu0 %v7999
    %8005 = vmatpush.msra.mxu0 %v7998
    %8006 = vmatpush.msra.mxu0 %v7997
    %8007 = vmatpush.msra.mxu0 %v7996
    %8008 = vmatpush.msra.mxu0 %v7995
    %8009 = vmatpush.msra.mxu0 %v7994
    %8010 = vmatpush.msra.mxu0 %v7993
    %8011 = vmatpush.msra.mxu0 %v7992
    %8012 = vmatpush.msra.mxu0 %v7991
    %8013 = vmatpush.msra.mxu0 %v7990
    %8014 = vmatpush.msra.mxu0 %v7989
    %8015 = vmatpush.msra.mxu0 %v7988
    %8016 = vmatpush.msra.mxu0 %v7987
    %8017 = vmatpush.msra.mxu0 %v7986
    %8018 = vmatpush.msra.mxu0 %v7985
    %8019 = vmatpush.msra.mxu0 %v7984
    %8020 = vmatmul.f32.gmra.mxu0 %v8002
    %v8021 = vpop.f32.mrf.mxu0
    %v8022 = vadd.f32 %v8000, %v8021
    %8023 = vdwg.mxu0
    %v8024 = vmax.f32 %v8022, 0.0
    %v8025 = vld [vmem:[#allocation2 + $0x1a0] sm:$0xff]
    %v8026 = vld [vmem:[#allocation2 + $0x1a8] sm:$0xff]
    %v8027 = vld [vmem:[#allocation2 + $0x1b0] sm:$0xff]
    %v8028 = vld [vmem:[#allocation2 + $0x1b8] sm:$0xff]
    %v8029 = vld [vmem:[#allocation2 + $0x1c0] sm:$0xff]
    %v8030 = vld [vmem:[#allocation2 + $0x1c8] sm:$0xff]
    %v8031 = vld [vmem:[#allocation2 + $0x1d0] sm:$0xff]
    %v8032 = vld [vmem:[#allocation2 + $0x1d8] sm:$0xff]
    %v8033 = vld [vmem:[#allocation2 + $0x1e0] sm:$0xff]
    %v8034 = vld [vmem:[#allocation2 + $0x1e8] sm:$0xff]
    %v8035 = vld [vmem:[#allocation2 + $0x1f0] sm:$0xff]
    %v8036 = vld [vmem:[#allocation2 + $0x1f8] sm:$0xff]
    %v8037 = vld [vmem:[#allocation2 + $0x200] sm:$0xff]
    %v8038 = vld [vmem:[#allocation2 + $0x208] sm:$0xff]
    %v8039 = vld [vmem:[#allocation2 + $0x210] sm:$0xff]
    %v8040 = vld [vmem:[#allocation2 + $0x218] sm:$0xff]
    %v8041 = vld [vmem:[#allocation2 + $0x338] sm:$0x1]
    %8042 = vmatpush.msra.mxu0 %v8040
    %8043 = vmatpush.msra.mxu0 %v8039
    %8044 = vmatpush.msra.mxu0 %v8038
    %8045 = vmatpush.msra.mxu0 %v8037
    %8046 = vmatpush.msra.mxu0 %v8036
    %8047 = vmatpush.msra.mxu0 %v8035
    %8048 = vmatpush.msra.mxu0 %v8034
    %8049 = vmatpush.msra.mxu0 %v8033
    %8050 = vmatpush.msra.mxu0 %v8032
    %8051 = vmatpush.msra.mxu0 %v8031
    %8052 = vmatpush.msra.mxu0 %v8030
    %8053 = vmatpush.msra.mxu0 %v8029
    %8054 = vmatpush.msra.mxu0 %v8028
    %8055 = vmatpush.msra.mxu0 %v8027
    %8056 = vmatpush.msra.mxu0 %v8026
    %8057 = vmatpush.msra.mxu0 %v8025
    %8058 = vmatmul.f32.gmra.mxu0 %v8024
    %v8059 = vpop.f32.mrf.mxu0
    %v8060 = vadd.f32 %v8041, %v8059
    %8061 = vdwg.mxu0
    %v8062 = vmax.f32 %v8060, 0.0
    %v8063 = vld [vmem:[#allocation2 + $0x220] sm:$0xff]
    %v8064 = vld [vmem:[#allocation2 + $0x228] sm:$0xff]
    %v8065 = vld [vmem:[#allocation2 + $0x230] sm:$0xff]
    %v8066 = vld [vmem:[#allocation2 + $0x238] sm:$0xff]
    %v8067 = vld [vmem:[#allocation2 + $0x240] sm:$0xff]
    %v8068 = vld [vmem:[#allocation2 + $0x248] sm:$0xff]
    %v8069 = vld [vmem:[#allocation2 + $0x250] sm:$0xff]
    %v8070 = vld [vmem:[#allocation2 + $0x258] sm:$0xff]
    %v8071 = vld [vmem:[#allocation2 + $0x260] sm:$0xff]
    %v8072 = vld [vmem:[#allocation2 + $0x268] sm:$0xff]
    %v8073 = vld [vmem:[#allocation2 + $0x270] sm:$0xff]
    %v8074 = vld [vmem:[#allocation2 + $0x278] sm:$0xff]
    %v8075 = vld [vmem:[#allocation2 + $0x280] sm:$0xff]
    %v8076 = vld [vmem:[#allocation2 + $0x288] sm:$0xff]
    %v8077 = vld [vmem:[#allocation2 + $0x290] sm:$0xff]
    %v8078 = vld [vmem:[#allocation2 + $0x298] sm:$0xff]
    %8080 = vrot.lane.b32.xlu0 %v6435, 16
    %v8081 = vpop.permute.xlu0 %8080
    %8083 = vmatpush.msra.mxu0 %v8078
    %8084 = vmatpush.msra.mxu0 %v8077
    %8085 = vmatpush.msra.mxu0 %v8076
    %8086 = vmatpush.msra.mxu0 %v8075
    %8087 = vmatpush.msra.mxu0 %v8074
    %8088 = vmatpush.msra.mxu0 %v8073
    %8089 = vmatpush.msra.mxu0 %v8072
    %8090 = vmatpush.msra.mxu0 %v8071
    %8091 = vmatpush.msra.mxu0 %v8070
    %8092 = vmatpush.msra.mxu0 %v8069
    %8093 = vmatpush.msra.mxu0 %v8068
    %8094 = vmatpush.msra.mxu0 %v8067
    %8095 = vmatpush.msra.mxu0 %v8066
    %8096 = vmatpush.msra.mxu0 %v8065
    %8097 = vmatpush.msra.mxu0 %v8064
    %8098 = vmatpush.msra.mxu0 %v8063
    %8099 = vmatmul.f32.gmra.mxu0 %v8062
    %v8100 = vpop.f32.mrf.mxu0
    %v8101 = vadd.f32 %v8081, %v8100
    %8102 = vdwg.mxu0
    %v8104 = vrot.slane %v8101, 7
    %8105 = vrot.lane.b32.xlu0 %v8104, 124
    %v8106 = vpop.permute.xlu0 %8105
    %v8108 = vrot.slane %v8101, 6
    %8109 = vrot.lane.b32.xlu0 %v8108, 120
    %v8110 = vpop.permute.xlu0 %8109
    %v8112 = vrot.slane %v8101, 5
    %8113 = vrot.lane.b32.xlu0 %v8112, 116
    %v8114 = vpop.permute.xlu0 %8113
    %v8116 = vsel %vm239, %v8101, %v8106
    %vm8117 = vcmask 1041408
    %v8118 = vsel %vm8117, %v8116, %v8110
    %vm8119 = vcmask 1042432
    %v8120 = vsel %vm8119, %v8118, %v8114
    %v8122 = vsel %vm912, %v8120, 0
    %v8125 = vsel %vm912, %v7959, 0
    %v8128 = vsel %vm912, %v7960, 0
    %v8131 = vsel %vm912, %v7961, 0
    %v8134 = vsel %vm912, %v7962, 0
    %v8137 = vsel %vm912, %v7963, 0
    %v8140 = vsel %vm912, %v7964, 0
    %v8143 = vsel %vm912, %v7965, 0
    %v8146 = vsel %vm912, %v7966, 0
    %8148 = vmatpush.xpose.msra.mxu0 0.0
    %8149 = vmatpush.xpose.msra.mxu0 0.0
    %8150 = vmatpush.xpose.msra.mxu0 0.0
    %8151 = vmatpush.xpose.msra.mxu0 0.0
    %8152 = vmatpush.xpose.msra.mxu0 0.0
    %8153 = vmatpush.xpose.msra.mxu0 0.0
    %8154 = vmatpush.xpose.msra.mxu0 0.0
    %8155 = vmatpush.xpose.msra.mxu0 0.0
    %8156 = vmatpush.xpose.msra.mxu0 %v8146
    %8157 = vmatpush.xpose.msra.mxu0 %v8143
    %8158 = vmatpush.xpose.msra.mxu0 %v8140
    %8159 = vmatpush.xpose.msra.mxu0 %v8137
    %8160 = vmatpush.xpose.msra.mxu0 %v8134
    %8161 = vmatpush.xpose.msra.mxu0 %v8131
    %8162 = vmatpush.xpose.msra.mxu0 %v8128
    %8163 = vmatpush.xpose.msra.mxu0 %v8125
    %8164 = vmatmul.f32.gmra.mxu0 %v8122
    %v8165 = vpop.f32.mrf.mxu0
    %v8166 = vadd.f32 0.0, %v8165
    %8167 = vdwg.mxu0
    %8168 = vrot.lane.b32.xlu0 %v7959, 124
    %v8169 = vpop.permute.xlu0 %8168
    %8170 = vrot.lane.b32.xlu0 %v7960, 124
    %v8171 = vpop.permute.xlu0 %8170
    %8172 = vrot.lane.b32.xlu0 %v7961, 124
    %v8173 = vpop.permute.xlu0 %8172
    %8174 = vrot.lane.b32.xlu0 %v7962, 124
    %v8175 = vpop.permute.xlu0 %8174
    %8176 = vrot.lane.b32.xlu0 %v7963, 124
    %v8177 = vpop.permute.xlu0 %8176
    %8178 = vrot.lane.b32.xlu0 %v7964, 124
    %v8179 = vpop.permute.xlu0 %8178
    %8180 = vrot.lane.b32.xlu0 %v7965, 124
    %v8181 = vpop.permute.xlu0 %8180
    %8182 = vrot.lane.b32.xlu0 %v7966, 124
    %v8183 = vpop.permute.xlu0 %8182
    %v8184 = vsel %vm912, %v8169, 0
    %v8186 = vsel %vm912, %v8171, 0
    %v8188 = vsel %vm912, %v8173, 0
    %v8190 = vsel %vm912, %v8175, 0
    %v8192 = vsel %vm912, %v8177, 0
    %v8194 = vsel %vm912, %v8179, 0
    %v8196 = vsel %vm912, %v8181, 0
    %v8198 = vsel %vm912, %v8183, 0
    %8200 = vmatpush.xpose.msra.mxu0 0.0
    %8201 = vmatpush.xpose.msra.mxu0 0.0
    %8202 = vmatpush.xpose.msra.mxu0 0.0
    %8203 = vmatpush.xpose.msra.mxu0 0.0
    %8204 = vmatpush.xpose.msra.mxu0 0.0
    %8205 = vmatpush.xpose.msra.mxu0 0.0
    %8206 = vmatpush.xpose.msra.mxu0 0.0
    %8207 = vmatpush.xpose.msra.mxu0 0.0
    %8208 = vmatpush.xpose.msra.mxu0 %v8198
    %8209 = vmatpush.xpose.msra.mxu0 %v8196
    %8210 = vmatpush.xpose.msra.mxu0 %v8194
    %8211 = vmatpush.xpose.msra.mxu0 %v8192
    %8212 = vmatpush.xpose.msra.mxu0 %v8190
    %8213 = vmatpush.xpose.msra.mxu0 %v8188
    %8214 = vmatpush.xpose.msra.mxu0 %v8186
    %8215 = vmatpush.xpose.msra.mxu0 %v8184
    %8216 = vmatmul.f32.gmra.mxu0 %v8122
    %v8217 = vpop.f32.mrf.mxu0
    %v8218 = vadd.f32 0.0, %v8217
    %8219 = vdwg.mxu0
    %8220 = vrot.lane.b32.xlu0 %v7959, 120
    %v8221 = vpop.permute.xlu0 %8220
    %8222 = vrot.lane.b32.xlu0 %v7960, 120
    %v8223 = vpop.permute.xlu0 %8222
    %8224 = vrot.lane.b32.xlu0 %v7961, 120
    %v8225 = vpop.permute.xlu0 %8224
    %8226 = vrot.lane.b32.xlu0 %v7962, 120
    %v8227 = vpop.permute.xlu0 %8226
    %8228 = vrot.lane.b32.xlu0 %v7963, 120
    %v8229 = vpop.permute.xlu0 %8228
    %8230 = vrot.lane.b32.xlu0 %v7964, 120
    %v8231 = vpop.permute.xlu0 %8230
    %8232 = vrot.lane.b32.xlu0 %v7965, 120
    %v8233 = vpop.permute.xlu0 %8232
    %8234 = vrot.lane.b32.xlu0 %v7966, 120
    %v8235 = vpop.permute.xlu0 %8234
    %v8236 = vsel %vm912, %v8221, 0
    %v8238 = vsel %vm912, %v8223, 0
    %v8240 = vsel %vm912, %v8225, 0
    %v8242 = vsel %vm912, %v8227, 0
    %v8244 = vsel %vm912, %v8229, 0
    %v8246 = vsel %vm912, %v8231, 0
    %v8248 = vsel %vm912, %v8233, 0
    %v8250 = vsel %vm912, %v8235, 0
    %8252 = vmatpush.xpose.msra.mxu0 0.0
    %8253 = vmatpush.xpose.msra.mxu0 0.0
    %8254 = vmatpush.xpose.msra.mxu0 0.0
    %8255 = vmatpush.xpose.msra.mxu0 0.0
    %8256 = vmatpush.xpose.msra.mxu0 0.0
    %8257 = vmatpush.xpose.msra.mxu0 0.0
    %8258 = vmatpush.xpose.msra.mxu0 0.0
    %8259 = vmatpush.xpose.msra.mxu0 0.0
    %8260 = vmatpush.xpose.msra.mxu0 %v8250
    %8261 = vmatpush.xpose.msra.mxu0 %v8248
    %8262 = vmatpush.xpose.msra.mxu0 %v8246
    %8263 = vmatpush.xpose.msra.mxu0 %v8244
    %8264 = vmatpush.xpose.msra.mxu0 %v8242
    %8265 = vmatpush.xpose.msra.mxu0 %v8240
    %8266 = vmatpush.xpose.msra.mxu0 %v8238
    %8267 = vmatpush.xpose.msra.mxu0 %v8236
    %8268 = vmatmul.f32.gmra.mxu0 %v8122
    %v8269 = vpop.f32.mrf.mxu0
    %v8270 = vadd.f32 0.0, %v8269
    %8271 = vdwg.mxu0
    %8272 = vrot.lane.b32.xlu0 %v7959, 116
    %v8273 = vpop.permute.xlu0 %8272
    %8274 = vrot.lane.b32.xlu0 %v7960, 116
    %v8275 = vpop.permute.xlu0 %8274
    %8276 = vrot.lane.b32.xlu0 %v7961, 116
    %v8277 = vpop.permute.xlu0 %8276
    %8278 = vrot.lane.b32.xlu0 %v7962, 116
    %v8279 = vpop.permute.xlu0 %8278
    %8280 = vrot.lane.b32.xlu0 %v7963, 116
    %v8281 = vpop.permute.xlu0 %8280
    %8282 = vrot.lane.b32.xlu0 %v7964, 116
    %v8283 = vpop.permute.xlu0 %8282
    %8284 = vrot.lane.b32.xlu0 %v7965, 116
    %v8285 = vpop.permute.xlu0 %8284
    %8286 = vrot.lane.b32.xlu0 %v7966, 116
    %v8287 = vpop.permute.xlu0 %8286
    %v8288 = vsel %vm912, %v8273, 0
    %v8290 = vsel %vm912, %v8275, 0
    %v8292 = vsel %vm912, %v8277, 0
    %v8294 = vsel %vm912, %v8279, 0
    %v8296 = vsel %vm912, %v8281, 0
    %v8298 = vsel %vm912, %v8283, 0
    %v8300 = vsel %vm912, %v8285, 0
    %v8302 = vsel %vm912, %v8287, 0
    %8304 = vmatpush.xpose.msra.mxu0 0.0
    %8305 = vmatpush.xpose.msra.mxu0 0.0
    %8306 = vmatpush.xpose.msra.mxu0 0.0
    %8307 = vmatpush.xpose.msra.mxu0 0.0
    %8308 = vmatpush.xpose.msra.mxu0 0.0
    %8309 = vmatpush.xpose.msra.mxu0 0.0
    %8310 = vmatpush.xpose.msra.mxu0 0.0
    %8311 = vmatpush.xpose.msra.mxu0 0.0
    %8312 = vmatpush.xpose.msra.mxu0 %v8302
    %8313 = vmatpush.xpose.msra.mxu0 %v8300
    %8314 = vmatpush.xpose.msra.mxu0 %v8298
    %8315 = vmatpush.xpose.msra.mxu0 %v8296
    %8316 = vmatpush.xpose.msra.mxu0 %v8294
    %8317 = vmatpush.xpose.msra.mxu0 %v8292
    %8318 = vmatpush.xpose.msra.mxu0 %v8290
    %8319 = vmatpush.xpose.msra.mxu0 %v8288
    %8320 = vmatmul.f32.gmra.mxu0 %v8122
    %v8321 = vpop.f32.mrf.mxu0
    %v8322 = vadd.f32 0.0, %v8321
    %8323 = vdwg.mxu0
    %8324 = vrot.lane.b32.xlu0 %v7959, 112
    %v8325 = vpop.permute.xlu0 %8324
    %8326 = vrot.lane.b32.xlu0 %v7960, 112
    %v8327 = vpop.permute.xlu0 %8326
    %8328 = vrot.lane.b32.xlu0 %v7961, 112
    %v8329 = vpop.permute.xlu0 %8328
    %8330 = vrot.lane.b32.xlu0 %v7962, 112
    %v8331 = vpop.permute.xlu0 %8330
    %8332 = vrot.lane.b32.xlu0 %v7963, 112
    %v8333 = vpop.permute.xlu0 %8332
    %8334 = vrot.lane.b32.xlu0 %v7964, 112
    %v8335 = vpop.permute.xlu0 %8334
    %8336 = vrot.lane.b32.xlu0 %v7965, 112
    %v8337 = vpop.permute.xlu0 %8336
    %8338 = vrot.lane.b32.xlu0 %v7966, 112
    %v8339 = vpop.permute.xlu0 %8338
    %v8340 = vsel %vm912, %v8325, 0
    %v8342 = vsel %vm912, %v8327, 0
    %v8344 = vsel %vm912, %v8329, 0
    %v8346 = vsel %vm912, %v8331, 0
    %v8348 = vsel %vm912, %v8333, 0
    %v8350 = vsel %vm912, %v8335, 0
    %v8352 = vsel %vm912, %v8337, 0
    %v8354 = vsel %vm912, %v8339, 0
    %8356 = vmatpush.xpose.msra.mxu0 0.0
    %8357 = vmatpush.xpose.msra.mxu0 0.0
    %8358 = vmatpush.xpose.msra.mxu0 0.0
    %8359 = vmatpush.xpose.msra.mxu0 0.0
    %8360 = vmatpush.xpose.msra.mxu0 0.0
    %8361 = vmatpush.xpose.msra.mxu0 0.0
    %8362 = vmatpush.xpose.msra.mxu0 0.0
    %8363 = vmatpush.xpose.msra.mxu0 0.0
    %8364 = vmatpush.xpose.msra.mxu0 %v8354
    %8365 = vmatpush.xpose.msra.mxu0 %v8352
    %8366 = vmatpush.xpose.msra.mxu0 %v8350
    %8367 = vmatpush.xpose.msra.mxu0 %v8348
    %8368 = vmatpush.xpose.msra.mxu0 %v8346
    %8369 = vmatpush.xpose.msra.mxu0 %v8344
    %8370 = vmatpush.xpose.msra.mxu0 %v8342
    %8371 = vmatpush.xpose.msra.mxu0 %v8340
    %8372 = vmatmul.f32.gmra.mxu0 %v8122
    %v8373 = vpop.f32.mrf.mxu0
    %v8374 = vadd.f32 0.0, %v8373
    %8375 = vdwg.mxu0
    %8376 = vrot.lane.b32.xlu0 %v7959, 108
    %v8377 = vpop.permute.xlu0 %8376
    %8378 = vrot.lane.b32.xlu0 %v7960, 108
    %v8379 = vpop.permute.xlu0 %8378
    %8380 = vrot.lane.b32.xlu0 %v7961, 108
    %v8381 = vpop.permute.xlu0 %8380
    %8382 = vrot.lane.b32.xlu0 %v7962, 108
    %v8383 = vpop.permute.xlu0 %8382
    %8384 = vrot.lane.b32.xlu0 %v7963, 108
    %v8385 = vpop.permute.xlu0 %8384
    %8386 = vrot.lane.b32.xlu0 %v7964, 108
    %v8387 = vpop.permute.xlu0 %8386
    %8388 = vrot.lane.b32.xlu0 %v7965, 108
    %v8389 = vpop.permute.xlu0 %8388
    %8390 = vrot.lane.b32.xlu0 %v7966, 108
    %v8391 = vpop.permute.xlu0 %8390
    %v8392 = vsel %vm912, %v8377, 0
    %v8394 = vsel %vm912, %v8379, 0
    %v8396 = vsel %vm912, %v8381, 0
    %v8398 = vsel %vm912, %v8383, 0
    %v8400 = vsel %vm912, %v8385, 0
    %v8402 = vsel %vm912, %v8387, 0
    %v8404 = vsel %vm912, %v8389, 0
    %v8406 = vsel %vm912, %v8391, 0
    %8408 = vmatpush.xpose.msra.mxu0 0.0
    %8409 = vmatpush.xpose.msra.mxu0 0.0
    %8410 = vmatpush.xpose.msra.mxu0 0.0
    %8411 = vmatpush.xpose.msra.mxu0 0.0
    %8412 = vmatpush.xpose.msra.mxu0 0.0
    %8413 = vmatpush.xpose.msra.mxu0 0.0
    %8414 = vmatpush.xpose.msra.mxu0 0.0
    %8415 = vmatpush.xpose.msra.mxu0 0.0
    %8416 = vmatpush.xpose.msra.mxu0 %v8406
    %8417 = vmatpush.xpose.msra.mxu0 %v8404
    %8418 = vmatpush.xpose.msra.mxu0 %v8402
    %8419 = vmatpush.xpose.msra.mxu0 %v8400
    %8420 = vmatpush.xpose.msra.mxu0 %v8398
    %8421 = vmatpush.xpose.msra.mxu0 %v8396
    %8422 = vmatpush.xpose.msra.mxu0 %v8394
    %8423 = vmatpush.xpose.msra.mxu0 %v8392
    %8424 = vmatmul.f32.gmra.mxu0 %v8122
    %v8425 = vpop.f32.mrf.mxu0
    %v8426 = vadd.f32 0.0, %v8425
    %8427 = vdwg.mxu0
    %8428 = vrot.lane.b32.xlu0 %v7959, 104
    %v8429 = vpop.permute.xlu0 %8428
    %8430 = vrot.lane.b32.xlu0 %v7960, 104
    %v8431 = vpop.permute.xlu0 %8430
    %8432 = vrot.lane.b32.xlu0 %v7961, 104
    %v8433 = vpop.permute.xlu0 %8432
    %8434 = vrot.lane.b32.xlu0 %v7962, 104
    %v8435 = vpop.permute.xlu0 %8434
    %8436 = vrot.lane.b32.xlu0 %v7963, 104
    %v8437 = vpop.permute.xlu0 %8436
    %8438 = vrot.lane.b32.xlu0 %v7964, 104
    %v8439 = vpop.permute.xlu0 %8438
    %8440 = vrot.lane.b32.xlu0 %v7965, 104
    %v8441 = vpop.permute.xlu0 %8440
    %8442 = vrot.lane.b32.xlu0 %v7966, 104
    %v8443 = vpop.permute.xlu0 %8442
    %v8444 = vsel %vm912, %v8429, 0
    %v8446 = vsel %vm912, %v8431, 0
    %v8448 = vsel %vm912, %v8433, 0
    %v8450 = vsel %vm912, %v8435, 0
    %v8452 = vsel %vm912, %v8437, 0
    %v8454 = vsel %vm912, %v8439, 0
    %v8456 = vsel %vm912, %v8441, 0
    %v8458 = vsel %vm912, %v8443, 0
    %8460 = vmatpush.xpose.msra.mxu0 0.0
    %8461 = vmatpush.xpose.msra.mxu0 0.0
    %8462 = vmatpush.xpose.msra.mxu0 0.0
    %8463 = vmatpush.xpose.msra.mxu0 0.0
    %8464 = vmatpush.xpose.msra.mxu0 0.0
    %8465 = vmatpush.xpose.msra.mxu0 0.0
    %8466 = vmatpush.xpose.msra.mxu0 0.0
    %8467 = vmatpush.xpose.msra.mxu0 0.0
    %8468 = vmatpush.xpose.msra.mxu0 %v8458
    %8469 = vmatpush.xpose.msra.mxu0 %v8456
    %8470 = vmatpush.xpose.msra.mxu0 %v8454
    %8471 = vmatpush.xpose.msra.mxu0 %v8452
    %8472 = vmatpush.xpose.msra.mxu0 %v8450
    %8473 = vmatpush.xpose.msra.mxu0 %v8448
    %8474 = vmatpush.xpose.msra.mxu0 %v8446
    %8475 = vmatpush.xpose.msra.mxu0 %v8444
    %8476 = vmatmul.f32.gmra.mxu0 %v8122
    %v8477 = vpop.f32.mrf.mxu0
    %v8478 = vadd.f32 0.0, %v8477
    %8479 = vdwg.mxu0
    %8480 = vrot.lane.b32.xlu0 %v7959, 100
    %v8481 = vpop.permute.xlu0 %8480
    %8482 = vrot.lane.b32.xlu0 %v7960, 100
    %v8483 = vpop.permute.xlu0 %8482
    %8484 = vrot.lane.b32.xlu0 %v7961, 100
    %v8485 = vpop.permute.xlu0 %8484
    %8486 = vrot.lane.b32.xlu0 %v7962, 100
    %v8487 = vpop.permute.xlu0 %8486
    %8488 = vrot.lane.b32.xlu0 %v7963, 100
    %v8489 = vpop.permute.xlu0 %8488
    %8490 = vrot.lane.b32.xlu0 %v7964, 100
    %v8491 = vpop.permute.xlu0 %8490
    %8492 = vrot.lane.b32.xlu0 %v7965, 100
    %v8493 = vpop.permute.xlu0 %8492
    %8494 = vrot.lane.b32.xlu0 %v7966, 100
    %v8495 = vpop.permute.xlu0 %8494
    %v8496 = vsel %vm912, %v8481, 0
    %v8498 = vsel %vm912, %v8483, 0
    %v8500 = vsel %vm912, %v8485, 0
    %v8502 = vsel %vm912, %v8487, 0
    %v8504 = vsel %vm912, %v8489, 0
    %v8506 = vsel %vm912, %v8491, 0
    %v8508 = vsel %vm912, %v8493, 0
    %v8510 = vsel %vm912, %v8495, 0
    %8512 = vmatpush.xpose.msra.mxu0 0.0
    %8513 = vmatpush.xpose.msra.mxu0 0.0
    %8514 = vmatpush.xpose.msra.mxu0 0.0
    %8515 = vmatpush.xpose.msra.mxu0 0.0
    %8516 = vmatpush.xpose.msra.mxu0 0.0
    %8517 = vmatpush.xpose.msra.mxu0 0.0
    %8518 = vmatpush.xpose.msra.mxu0 0.0
    %8519 = vmatpush.xpose.msra.mxu0 0.0
    %8520 = vmatpush.xpose.msra.mxu0 %v8510
    %8521 = vmatpush.xpose.msra.mxu0 %v8508
    %8522 = vmatpush.xpose.msra.mxu0 %v8506
    %8523 = vmatpush.xpose.msra.mxu0 %v8504
    %8524 = vmatpush.xpose.msra.mxu0 %v8502
    %8525 = vmatpush.xpose.msra.mxu0 %v8500
    %8526 = vmatpush.xpose.msra.mxu0 %v8498
    %8527 = vmatpush.xpose.msra.mxu0 %v8496
    %8528 = vmatmul.f32.gmra.mxu0 %v8122
    %v8529 = vpop.f32.mrf.mxu0
    %v8530 = vadd.f32 0.0, %v8529
    %8531 = vdwg.mxu0
    %8532 = vrot.lane.b32.xlu0 %v7959, 96
    %v8533 = vpop.permute.xlu0 %8532
    %8534 = vrot.lane.b32.xlu0 %v7960, 96
    %v8535 = vpop.permute.xlu0 %8534
    %8536 = vrot.lane.b32.xlu0 %v7961, 96
    %v8537 = vpop.permute.xlu0 %8536
    %8538 = vrot.lane.b32.xlu0 %v7962, 96
    %v8539 = vpop.permute.xlu0 %8538
    %8540 = vrot.lane.b32.xlu0 %v7963, 96
    %v8541 = vpop.permute.xlu0 %8540
    %8542 = vrot.lane.b32.xlu0 %v7964, 96
    %v8543 = vpop.permute.xlu0 %8542
    %8544 = vrot.lane.b32.xlu0 %v7965, 96
    %v8545 = vpop.permute.xlu0 %8544
    %8546 = vrot.lane.b32.xlu0 %v7966, 96
    %v8547 = vpop.permute.xlu0 %8546
    %v8548 = vsel %vm912, %v8533, 0
    %v8550 = vsel %vm912, %v8535, 0
    %v8552 = vsel %vm912, %v8537, 0
    %v8554 = vsel %vm912, %v8539, 0
    %v8556 = vsel %vm912, %v8541, 0
    %v8558 = vsel %vm912, %v8543, 0
    %v8560 = vsel %vm912, %v8545, 0
    %v8562 = vsel %vm912, %v8547, 0
    %8564 = vmatpush.xpose.msra.mxu0 0.0
    %8565 = vmatpush.xpose.msra.mxu0 0.0
    %8566 = vmatpush.xpose.msra.mxu0 0.0
    %8567 = vmatpush.xpose.msra.mxu0 0.0
    %8568 = vmatpush.xpose.msra.mxu0 0.0
    %8569 = vmatpush.xpose.msra.mxu0 0.0
    %8570 = vmatpush.xpose.msra.mxu0 0.0
    %8571 = vmatpush.xpose.msra.mxu0 0.0
    %8572 = vmatpush.xpose.msra.mxu0 %v8562
    %8573 = vmatpush.xpose.msra.mxu0 %v8560
    %8574 = vmatpush.xpose.msra.mxu0 %v8558
    %8575 = vmatpush.xpose.msra.mxu0 %v8556
    %8576 = vmatpush.xpose.msra.mxu0 %v8554
    %8577 = vmatpush.xpose.msra.mxu0 %v8552
    %8578 = vmatpush.xpose.msra.mxu0 %v8550
    %8579 = vmatpush.xpose.msra.mxu0 %v8548
    %8580 = vmatmul.f32.gmra.mxu0 %v8122
    %v8581 = vpop.f32.mrf.mxu0
    %v8582 = vadd.f32 0.0, %v8581
    %8583 = vdwg.mxu0
    %8584 = vrot.lane.b32.xlu0 %v7959, 92
    %v8585 = vpop.permute.xlu0 %8584
    %8586 = vrot.lane.b32.xlu0 %v7960, 92
    %v8587 = vpop.permute.xlu0 %8586
    %8588 = vrot.lane.b32.xlu0 %v7961, 92
    %v8589 = vpop.permute.xlu0 %8588
    %8590 = vrot.lane.b32.xlu0 %v7962, 92
    %v8591 = vpop.permute.xlu0 %8590
    %8592 = vrot.lane.b32.xlu0 %v7963, 92
    %v8593 = vpop.permute.xlu0 %8592
    %8594 = vrot.lane.b32.xlu0 %v7964, 92
    %v8595 = vpop.permute.xlu0 %8594
    %8596 = vrot.lane.b32.xlu0 %v7965, 92
    %v8597 = vpop.permute.xlu0 %8596
    %8598 = vrot.lane.b32.xlu0 %v7966, 92
    %v8599 = vpop.permute.xlu0 %8598
    %v8600 = vsel %vm912, %v8585, 0
    %v8602 = vsel %vm912, %v8587, 0
    %v8604 = vsel %vm912, %v8589, 0
    %v8606 = vsel %vm912, %v8591, 0
    %v8608 = vsel %vm912, %v8593, 0
    %v8610 = vsel %vm912, %v8595, 0
    %v8612 = vsel %vm912, %v8597, 0
    %v8614 = vsel %vm912, %v8599, 0
    %8616 = vmatpush.xpose.msra.mxu0 0.0
    %8617 = vmatpush.xpose.msra.mxu0 0.0
    %8618 = vmatpush.xpose.msra.mxu0 0.0
    %8619 = vmatpush.xpose.msra.mxu0 0.0
    %8620 = vmatpush.xpose.msra.mxu0 0.0
    %8621 = vmatpush.xpose.msra.mxu0 0.0
    %8622 = vmatpush.xpose.msra.mxu0 0.0
    %8623 = vmatpush.xpose.msra.mxu0 0.0
    %8624 = vmatpush.xpose.msra.mxu0 %v8614
    %8625 = vmatpush.xpose.msra.mxu0 %v8612
    %8626 = vmatpush.xpose.msra.mxu0 %v8610
    %8627 = vmatpush.xpose.msra.mxu0 %v8608
    %8628 = vmatpush.xpose.msra.mxu0 %v8606
    %8629 = vmatpush.xpose.msra.mxu0 %v8604
    %8630 = vmatpush.xpose.msra.mxu0 %v8602
    %8631 = vmatpush.xpose.msra.mxu0 %v8600
    %8632 = vmatmul.f32.gmra.mxu0 %v8122
    %v8633 = vpop.f32.mrf.mxu0
    %v8634 = vadd.f32 0.0, %v8633
    %8635 = vdwg.mxu0
    %8636 = vrot.lane.b32.xlu0 %v7959, 88
    %v8637 = vpop.permute.xlu0 %8636
    %8638 = vrot.lane.b32.xlu0 %v7960, 88
    %v8639 = vpop.permute.xlu0 %8638
    %8640 = vrot.lane.b32.xlu0 %v7961, 88
    %v8641 = vpop.permute.xlu0 %8640
    %8642 = vrot.lane.b32.xlu0 %v7962, 88
    %v8643 = vpop.permute.xlu0 %8642
    %8644 = vrot.lane.b32.xlu0 %v7963, 88
    %v8645 = vpop.permute.xlu0 %8644
    %8646 = vrot.lane.b32.xlu0 %v7964, 88
    %v8647 = vpop.permute.xlu0 %8646
    %8648 = vrot.lane.b32.xlu0 %v7965, 88
    %v8649 = vpop.permute.xlu0 %8648
    %8650 = vrot.lane.b32.xlu0 %v7966, 88
    %v8651 = vpop.permute.xlu0 %8650
    %v8652 = vsel %vm912, %v8637, 0
    %v8654 = vsel %vm912, %v8639, 0
    %v8656 = vsel %vm912, %v8641, 0
    %v8658 = vsel %vm912, %v8643, 0
    %v8660 = vsel %vm912, %v8645, 0
    %v8662 = vsel %vm912, %v8647, 0
    %v8664 = vsel %vm912, %v8649, 0
    %v8666 = vsel %vm912, %v8651, 0
    %8668 = vmatpush.xpose.msra.mxu0 0.0
    %8669 = vmatpush.xpose.msra.mxu0 0.0
    %8670 = vmatpush.xpose.msra.mxu0 0.0
    %8671 = vmatpush.xpose.msra.mxu0 0.0
    %8672 = vmatpush.xpose.msra.mxu0 0.0
    %8673 = vmatpush.xpose.msra.mxu0 0.0
    %8674 = vmatpush.xpose.msra.mxu0 0.0
    %8675 = vmatpush.xpose.msra.mxu0 0.0
    %8676 = vmatpush.xpose.msra.mxu0 %v8666
    %8677 = vmatpush.xpose.msra.mxu0 %v8664
    %8678 = vmatpush.xpose.msra.mxu0 %v8662
    %8679 = vmatpush.xpose.msra.mxu0 %v8660
    %8680 = vmatpush.xpose.msra.mxu0 %v8658
    %8681 = vmatpush.xpose.msra.mxu0 %v8656
    %8682 = vmatpush.xpose.msra.mxu0 %v8654
    %8683 = vmatpush.xpose.msra.mxu0 %v8652
    %8684 = vmatmul.f32.gmra.mxu0 %v8122
    %v8685 = vpop.f32.mrf.mxu0
    %v8686 = vadd.f32 0.0, %v8685
    %8687 = vdwg.mxu0
    %8688 = vrot.lane.b32.xlu0 %v7959, 84
    %v8689 = vpop.permute.xlu0 %8688
    %8690 = vrot.lane.b32.xlu0 %v7960, 84
    %v8691 = vpop.permute.xlu0 %8690
    %8692 = vrot.lane.b32.xlu0 %v7961, 84
    %v8693 = vpop.permute.xlu0 %8692
    %8694 = vrot.lane.b32.xlu0 %v7962, 84
    %v8695 = vpop.permute.xlu0 %8694
    %8696 = vrot.lane.b32.xlu0 %v7963, 84
    %v8697 = vpop.permute.xlu0 %8696
    %8698 = vrot.lane.b32.xlu0 %v7964, 84
    %v8699 = vpop.permute.xlu0 %8698
    %8700 = vrot.lane.b32.xlu0 %v7965, 84
    %v8701 = vpop.permute.xlu0 %8700
    %8702 = vrot.lane.b32.xlu0 %v7966, 84
    %v8703 = vpop.permute.xlu0 %8702
    %v8704 = vsel %vm912, %v8689, 0
    %v8706 = vsel %vm912, %v8691, 0
    %v8708 = vsel %vm912, %v8693, 0
    %v8710 = vsel %vm912, %v8695, 0
    %v8712 = vsel %vm912, %v8697, 0
    %v8714 = vsel %vm912, %v8699, 0
    %v8716 = vsel %vm912, %v8701, 0
    %v8718 = vsel %vm912, %v8703, 0
    %8720 = vmatpush.xpose.msra.mxu0 0.0
    %8721 = vmatpush.xpose.msra.mxu0 0.0
    %8722 = vmatpush.xpose.msra.mxu0 0.0
    %8723 = vmatpush.xpose.msra.mxu0 0.0
    %8724 = vmatpush.xpose.msra.mxu0 0.0
    %8725 = vmatpush.xpose.msra.mxu0 0.0
    %8726 = vmatpush.xpose.msra.mxu0 0.0
    %8727 = vmatpush.xpose.msra.mxu0 0.0
    %8728 = vmatpush.xpose.msra.mxu0 %v8718
    %8729 = vmatpush.xpose.msra.mxu0 %v8716
    %8730 = vmatpush.xpose.msra.mxu0 %v8714
    %8731 = vmatpush.xpose.msra.mxu0 %v8712
    %8732 = vmatpush.xpose.msra.mxu0 %v8710
    %8733 = vmatpush.xpose.msra.mxu0 %v8708
    %8734 = vmatpush.xpose.msra.mxu0 %v8706
    %8735 = vmatpush.xpose.msra.mxu0 %v8704
    %8736 = vmatmul.f32.gmra.mxu0 %v8122
    %v8737 = vpop.f32.mrf.mxu0
    %v8738 = vadd.f32 0.0, %v8737
    %8739 = vdwg.mxu0
    %8740 = vrot.lane.b32.xlu0 %v7959, 80
    %v8741 = vpop.permute.xlu0 %8740
    %8742 = vrot.lane.b32.xlu0 %v7960, 80
    %v8743 = vpop.permute.xlu0 %8742
    %8744 = vrot.lane.b32.xlu0 %v7961, 80
    %v8745 = vpop.permute.xlu0 %8744
    %8746 = vrot.lane.b32.xlu0 %v7962, 80
    %v8747 = vpop.permute.xlu0 %8746
    %8748 = vrot.lane.b32.xlu0 %v7963, 80
    %v8749 = vpop.permute.xlu0 %8748
    %8750 = vrot.lane.b32.xlu0 %v7964, 80
    %v8751 = vpop.permute.xlu0 %8750
    %8752 = vrot.lane.b32.xlu0 %v7965, 80
    %v8753 = vpop.permute.xlu0 %8752
    %8754 = vrot.lane.b32.xlu0 %v7966, 80
    %v8755 = vpop.permute.xlu0 %8754
    %v8756 = vsel %vm912, %v8741, 0
    %v8758 = vsel %vm912, %v8743, 0
    %v8760 = vsel %vm912, %v8745, 0
    %v8762 = vsel %vm912, %v8747, 0
    %v8764 = vsel %vm912, %v8749, 0
    %v8766 = vsel %vm912, %v8751, 0
    %v8768 = vsel %vm912, %v8753, 0
    %v8770 = vsel %vm912, %v8755, 0
    %8772 = vmatpush.xpose.msra.mxu0 0.0
    %8773 = vmatpush.xpose.msra.mxu0 0.0
    %8774 = vmatpush.xpose.msra.mxu0 0.0
    %8775 = vmatpush.xpose.msra.mxu0 0.0
    %8776 = vmatpush.xpose.msra.mxu0 0.0
    %8777 = vmatpush.xpose.msra.mxu0 0.0
    %8778 = vmatpush.xpose.msra.mxu0 0.0
    %8779 = vmatpush.xpose.msra.mxu0 0.0
    %8780 = vmatpush.xpose.msra.mxu0 %v8770
    %8781 = vmatpush.xpose.msra.mxu0 %v8768
    %8782 = vmatpush.xpose.msra.mxu0 %v8766
    %8783 = vmatpush.xpose.msra.mxu0 %v8764
    %8784 = vmatpush.xpose.msra.mxu0 %v8762
    %8785 = vmatpush.xpose.msra.mxu0 %v8760
    %8786 = vmatpush.xpose.msra.mxu0 %v8758
    %8787 = vmatpush.xpose.msra.mxu0 %v8756
    %8788 = vmatmul.f32.gmra.mxu0 %v8122
    %v8789 = vpop.f32.mrf.mxu0
    %v8790 = vadd.f32 0.0, %v8789
    %8791 = vdwg.mxu0
    %8792 = vrot.lane.b32.xlu0 %v7959, 76
    %v8793 = vpop.permute.xlu0 %8792
    %8794 = vrot.lane.b32.xlu0 %v7960, 76
    %v8795 = vpop.permute.xlu0 %8794
    %8796 = vrot.lane.b32.xlu0 %v7961, 76
    %v8797 = vpop.permute.xlu0 %8796
    %8798 = vrot.lane.b32.xlu0 %v7962, 76
    %v8799 = vpop.permute.xlu0 %8798
    %8800 = vrot.lane.b32.xlu0 %v7963, 76
    %v8801 = vpop.permute.xlu0 %8800
    %8802 = vrot.lane.b32.xlu0 %v7964, 76
    %v8803 = vpop.permute.xlu0 %8802
    %8804 = vrot.lane.b32.xlu0 %v7965, 76
    %v8805 = vpop.permute.xlu0 %8804
    %8806 = vrot.lane.b32.xlu0 %v7966, 76
    %v8807 = vpop.permute.xlu0 %8806
    %v8808 = vsel %vm912, %v8793, 0
    %v8810 = vsel %vm912, %v8795, 0
    %v8812 = vsel %vm912, %v8797, 0
    %v8814 = vsel %vm912, %v8799, 0
    %v8816 = vsel %vm912, %v8801, 0
    %v8818 = vsel %vm912, %v8803, 0
    %v8820 = vsel %vm912, %v8805, 0
    %v8822 = vsel %vm912, %v8807, 0
    %8824 = vmatpush.xpose.msra.mxu0 0.0
    %8825 = vmatpush.xpose.msra.mxu0 0.0
    %8826 = vmatpush.xpose.msra.mxu0 0.0
    %8827 = vmatpush.xpose.msra.mxu0 0.0
    %8828 = vmatpush.xpose.msra.mxu0 0.0
    %8829 = vmatpush.xpose.msra.mxu0 0.0
    %8830 = vmatpush.xpose.msra.mxu0 0.0
    %8831 = vmatpush.xpose.msra.mxu0 0.0
    %8832 = vmatpush.xpose.msra.mxu0 %v8822
    %8833 = vmatpush.xpose.msra.mxu0 %v8820
    %8834 = vmatpush.xpose.msra.mxu0 %v8818
    %8835 = vmatpush.xpose.msra.mxu0 %v8816
    %8836 = vmatpush.xpose.msra.mxu0 %v8814
    %8837 = vmatpush.xpose.msra.mxu0 %v8812
    %8838 = vmatpush.xpose.msra.mxu0 %v8810
    %8839 = vmatpush.xpose.msra.mxu0 %v8808
    %8840 = vmatmul.f32.gmra.mxu0 %v8122
    %v8841 = vpop.f32.mrf.mxu0
    %v8842 = vadd.f32 0.0, %v8841
    %8843 = vdwg.mxu0
    %8844 = vrot.lane.b32.xlu0 %v7959, 72
    %v8845 = vpop.permute.xlu0 %8844
    %8846 = vrot.lane.b32.xlu0 %v7960, 72
    %v8847 = vpop.permute.xlu0 %8846
    %8848 = vrot.lane.b32.xlu0 %v7961, 72
    %v8849 = vpop.permute.xlu0 %8848
    %8850 = vrot.lane.b32.xlu0 %v7962, 72
    %v8851 = vpop.permute.xlu0 %8850
    %8852 = vrot.lane.b32.xlu0 %v7963, 72
    %v8853 = vpop.permute.xlu0 %8852
    %8854 = vrot.lane.b32.xlu0 %v7964, 72
    %v8855 = vpop.permute.xlu0 %8854
    %8856 = vrot.lane.b32.xlu0 %v7965, 72
    %v8857 = vpop.permute.xlu0 %8856
    %8858 = vrot.lane.b32.xlu0 %v7966, 72
    %v8859 = vpop.permute.xlu0 %8858
    %v8860 = vsel %vm912, %v8845, 0
    %v8862 = vsel %vm912, %v8847, 0
    %v8864 = vsel %vm912, %v8849, 0
    %v8866 = vsel %vm912, %v8851, 0
    %v8868 = vsel %vm912, %v8853, 0
    %v8870 = vsel %vm912, %v8855, 0
    %v8872 = vsel %vm912, %v8857, 0
    %v8874 = vsel %vm912, %v8859, 0
    %8876 = vmatpush.xpose.msra.mxu0 0.0
    %8877 = vmatpush.xpose.msra.mxu0 0.0
    %8878 = vmatpush.xpose.msra.mxu0 0.0
    %8879 = vmatpush.xpose.msra.mxu0 0.0
    %8880 = vmatpush.xpose.msra.mxu0 0.0
    %8881 = vmatpush.xpose.msra.mxu0 0.0
    %8882 = vmatpush.xpose.msra.mxu0 0.0
    %8883 = vmatpush.xpose.msra.mxu0 0.0
    %8884 = vmatpush.xpose.msra.mxu0 %v8874
    %8885 = vmatpush.xpose.msra.mxu0 %v8872
    %8886 = vmatpush.xpose.msra.mxu0 %v8870
    %8887 = vmatpush.xpose.msra.mxu0 %v8868
    %8888 = vmatpush.xpose.msra.mxu0 %v8866
    %8889 = vmatpush.xpose.msra.mxu0 %v8864
    %8890 = vmatpush.xpose.msra.mxu0 %v8862
    %8891 = vmatpush.xpose.msra.mxu0 %v8860
    %8892 = vmatmul.f32.gmra.mxu0 %v8122
    %v8893 = vpop.f32.mrf.mxu0
    %v8894 = vadd.f32 0.0, %v8893
    %8895 = vdwg.mxu0
    %8896 = vrot.lane.b32.xlu0 %v7959, 68
    %v8897 = vpop.permute.xlu0 %8896
    %8898 = vrot.lane.b32.xlu0 %v7960, 68
    %v8899 = vpop.permute.xlu0 %8898
    %8900 = vrot.lane.b32.xlu0 %v7961, 68
    %v8901 = vpop.permute.xlu0 %8900
    %8902 = vrot.lane.b32.xlu0 %v7962, 68
    %v8903 = vpop.permute.xlu0 %8902
    %8904 = vrot.lane.b32.xlu0 %v7963, 68
    %v8905 = vpop.permute.xlu0 %8904
    %8906 = vrot.lane.b32.xlu0 %v7964, 68
    %v8907 = vpop.permute.xlu0 %8906
    %8908 = vrot.lane.b32.xlu0 %v7965, 68
    %v8909 = vpop.permute.xlu0 %8908
    %8910 = vrot.lane.b32.xlu0 %v7966, 68
    %v8911 = vpop.permute.xlu0 %8910
    %v8912 = vsel %vm912, %v8897, 0
    %v8914 = vsel %vm912, %v8899, 0
    %v8916 = vsel %vm912, %v8901, 0
    %v8918 = vsel %vm912, %v8903, 0
    %v8920 = vsel %vm912, %v8905, 0
    %v8922 = vsel %vm912, %v8907, 0
    %v8924 = vsel %vm912, %v8909, 0
    %v8926 = vsel %vm912, %v8911, 0
    %8928 = vmatpush.xpose.msra.mxu0 0.0
    %8929 = vmatpush.xpose.msra.mxu0 0.0
    %8930 = vmatpush.xpose.msra.mxu0 0.0
    %8931 = vmatpush.xpose.msra.mxu0 0.0
    %8932 = vmatpush.xpose.msra.mxu0 0.0
    %8933 = vmatpush.xpose.msra.mxu0 0.0
    %8934 = vmatpush.xpose.msra.mxu0 0.0
    %8935 = vmatpush.xpose.msra.mxu0 0.0
    %8936 = vmatpush.xpose.msra.mxu0 %v8926
    %8937 = vmatpush.xpose.msra.mxu0 %v8924
    %8938 = vmatpush.xpose.msra.mxu0 %v8922
    %8939 = vmatpush.xpose.msra.mxu0 %v8920
    %8940 = vmatpush.xpose.msra.mxu0 %v8918
    %8941 = vmatpush.xpose.msra.mxu0 %v8916
    %8942 = vmatpush.xpose.msra.mxu0 %v8914
    %8943 = vmatpush.xpose.msra.mxu0 %v8912
    %8944 = vmatmul.f32.gmra.mxu0 %v8122
    %v8945 = vpop.f32.mrf.mxu0
    %v8946 = vadd.f32 0.0, %v8945
    %8947 = vdwg.mxu0
    %8949 = vrot.lane.b32.xlu0 %v8218, 64
    %v8950 = vpop.permute.xlu0 %8949
    %8953 = vrot.lane.b32.xlu0 %v8322, 64
    %v8954 = vpop.permute.xlu0 %8953
    %8957 = vrot.lane.b32.xlu0 %v8426, 64
    %v8958 = vpop.permute.xlu0 %8957
    %8961 = vrot.lane.b32.xlu0 %v8530, 64
    %v8962 = vpop.permute.xlu0 %8961
    %8965 = vrot.lane.b32.xlu0 %v8634, 64
    %v8966 = vpop.permute.xlu0 %8965
    %8969 = vrot.lane.b32.xlu0 %v8738, 64
    %v8970 = vpop.permute.xlu0 %8969
    %8973 = vrot.lane.b32.xlu0 %v8842, 64
    %v8974 = vpop.permute.xlu0 %8973
    %8977 = vrot.lane.b32.xlu0 %v8946, 64
    %v8978 = vpop.permute.xlu0 %8977
    %v8980 = vsel %vm968, %v8166, %v8950
    %v8981 = vsel %vm968, %v8270, %v8954
    %v8982 = vsel %vm968, %v8374, %v8958
    %v8983 = vsel %vm968, %v8478, %v8962
    %v8984 = vsel %vm968, %v8582, %v8966
    %v8985 = vsel %vm968, %v8686, %v8970
    %v8986 = vsel %vm968, %v8790, %v8974
    %v8987 = vsel %vm968, %v8894, %v8978
    %v8996 = vrot.slane %v8981, 4
    %v8997 = vrot.slane %v8983, 4
    %v8998 = vrot.slane %v8985, 4
    %v8999 = vrot.slane %v8987, 4
    %v9000 = vsel %vm7592, %v8980, %v8996
    %v9001 = vsel %vm7592, %v8982, %v8997
    %v9002 = vsel %vm7592, %v8984, %v8998
    %v9003 = vsel %vm7592, %v8986, %v8999
    %9008 = vst [vmem:[%s4] sm:$0xff] %v9000
    %9009 = vst [vmem:[%s4 + $0x8] sm:$0xff] %v9001
    %9010 = vst [vmem:[%s4 + $0x10] sm:$0xff] %v9002
    %9011 = vst [vmem:[%s4 + $0x18] sm:$0xff] %v9003
    %v9012 = vld [vmem:[#allocation2 + $0x100] sm:$0xff]
    %v9013 = vld [vmem:[#allocation2 + $0x108] sm:$0xff]
    %v9014 = vld [vmem:[#allocation2 + $0x110] sm:$0xff]
    %v9015 = vld [vmem:[#allocation2 + $0x118] sm:$0xff]
    %v9016 = vld [vmem:[#allocation2 + $0x328] sm:$0x1]
    %9021 = vrot.lane.b32.xlu0 %v9012, 32
    %v9022 = vpop.permute.xlu0 %9021
    %9023 = vrot.lane.b32.xlu0 %v9013, 32
    %v9024 = vpop.permute.xlu0 %9023
    %9025 = vrot.lane.b32.xlu0 %v9014, 32
    %v9026 = vpop.permute.xlu0 %9025
    %9027 = vrot.lane.b32.xlu0 %v9015, 32
    %v9028 = vpop.permute.xlu0 %9027
    %9034 = vrot.lane.b32.xlu0 %v9016, 64
    %v9035 = vpop.permute.xlu0 %9034
    %v9037 = vsel %vm60, %v7263, 0
    %9039 = vmatpush.msra.mxu0 0.0
    %9040 = vmatpush.msra.mxu0 0.0
    %9041 = vmatpush.msra.mxu0 0.0
    %9042 = vmatpush.msra.mxu0 0.0
    %9043 = vmatpush.msra.mxu0 0.0
    %9044 = vmatpush.msra.mxu0 0.0
    %9045 = vmatpush.msra.mxu0 0.0
    %9046 = vmatpush.msra.mxu0 0.0
    %9047 = vmatpush.msra.mxu0 0.0
    %9048 = vmatpush.msra.mxu0 0.0
    %9049 = vmatpush.msra.mxu0 0.0
    %9050 = vmatpush.msra.mxu0 0.0
    %9051 = vmatpush.msra.mxu0 %v9028
    %9052 = vmatpush.msra.mxu0 %v9026
    %9053 = vmatpush.msra.mxu0 %v9024
    %9054 = vmatpush.msra.mxu0 %v9022
    %9055 = vmatmul.f32.gmra.mxu0 %v9037
    %v9056 = vpop.f32.mrf.mxu0
    %v9057 = vadd.f32 %v9035, %v9056
    %9058 = vdwg.mxu0
    %v9059 = vmax.f32 %v9057, 0.0
    %v9060 = vld [vmem:[#allocation2 + $0x2a0] sm:$0xff]
    %v9061 = vld [vmem:[#allocation2 + $0x2a8] sm:$0xff]
    %v9062 = vld [vmem:[#allocation2 + $0x2b0] sm:$0xff]
    %v9063 = vld [vmem:[#allocation2 + $0x2b8] sm:$0xff]
    %9064 = vrot.lane.b32.xlu0 %v9016, 32
    %v9065 = vpop.permute.xlu0 %9064
    %v9068 = vsel %vm60, %v9059, 0
    %9070 = vmatpush.msra.mxu0 0.0
    %9071 = vmatpush.msra.mxu0 0.0
    %9072 = vmatpush.msra.mxu0 0.0
    %9073 = vmatpush.msra.mxu0 0.0
    %9074 = vmatpush.msra.mxu0 0.0
    %9075 = vmatpush.msra.mxu0 0.0
    %9076 = vmatpush.msra.mxu0 0.0
    %9077 = vmatpush.msra.mxu0 0.0
    %9078 = vmatpush.msra.mxu0 0.0
    %9079 = vmatpush.msra.mxu0 0.0
    %9080 = vmatpush.msra.mxu0 0.0
    %9081 = vmatpush.msra.mxu0 0.0
    %9082 = vmatpush.msra.mxu0 %v9063
    %9083 = vmatpush.msra.mxu0 %v9062
    %9084 = vmatpush.msra.mxu0 %v9061
    %9085 = vmatpush.msra.mxu0 %v9060
    %9086 = vmatmul.f32.gmra.mxu0 %v9068
    %v9087 = vpop.f32.mrf.mxu0
    %v9088 = vadd.f32 %v9065, %v9087
    %9089 = vdwg.mxu0
    %v9090 = vmax.f32 %v9088, 0.0
    %v9091 = vld [vmem:[#allocation2 + $0xd0] sm:$0xff]
    %v9092 = vld [vmem:[#allocation2 + $0xd8] sm:$0xff]
    %v9093 = vld [vmem:[#allocation2 + $0xe0] sm:$0xff]
    %v9094 = vld [vmem:[#allocation2 + $0xe8] sm:$0xff]
    %v9095 = vld [vmem:[#allocation2 + $0x340] sm:$0x1]
    %9100 = vrot.lane.b32.xlu0 %v9091, 12
    %v9101 = vpop.permute.xlu0 %9100
    %9102 = vrot.lane.b32.xlu0 %v9092, 12
    %v9103 = vpop.permute.xlu0 %9102
    %9104 = vrot.lane.b32.xlu0 %v9093, 12
    %v9105 = vpop.permute.xlu0 %9104
    %9106 = vrot.lane.b32.xlu0 %v9094, 12
    %v9107 = vpop.permute.xlu0 %9106
    %v9113 = vsel %vm60, %v9090, 0
    %9115 = vmatpush.msra.mxu0 0.0
    %9116 = vmatpush.msra.mxu0 0.0
    %9117 = vmatpush.msra.mxu0 0.0
    %9118 = vmatpush.msra.mxu0 0.0
    %9119 = vmatpush.msra.mxu0 0.0
    %9120 = vmatpush.msra.mxu0 0.0
    %9121 = vmatpush.msra.mxu0 0.0
    %9122 = vmatpush.msra.mxu0 0.0
    %9123 = vmatpush.msra.mxu0 0.0
    %9124 = vmatpush.msra.mxu0 0.0
    %9125 = vmatpush.msra.mxu0 0.0
    %9126 = vmatpush.msra.mxu0 0.0
    %9127 = vmatpush.msra.mxu0 %v9107
    %9128 = vmatpush.msra.mxu0 %v9105
    %9129 = vmatpush.msra.mxu0 %v9103
    %9130 = vmatpush.msra.mxu0 %v9101
    %9131 = vmatmul.f32.gmra.mxu0 %v9113
    %v9132 = vpop.f32.mrf.mxu0
    %v9133 = vadd.f32 %v9095, %v9132
    %9134 = vdwg.mxu0
    %vm9135 = vcmask 24576
    %9136 = vst.msk [vmem:[#allocation5] sm:$0x1] %vm9135, %v9133
    // Predicated region
    $region22: #{sam_coreml_forward.1} parent=1 // pred_check
      _
    $region23: #{sam_coreml_forward.1} parent=1 // pred_check_branch
      %9138 = sbr.rel (0) target = $region25
    $region24: #{sam_coreml_forward.1} parent=1 // pred_region
      _
    $region25: #{sam_coreml_forward.1} parent=1 // pred_fallthru
      _
    // Predicated region
    $region26: #{sam_coreml_forward.1} parent=1 // pred_check
      _
    $region27: #{sam_coreml_forward.1} parent=1 // pred_check_branch
      %9140 = sbr.rel (0) target = $region29
    $region28: #{sam_coreml_forward.1} parent=1 // pred_region
      %9142 = vsyncadd [#allocation4], 0
      %s9144 = sshll.u32 [#allocation5], 4
      %s9145 = int_to_ptr.vmem [resolvable:$true] %s9144
      %s9146 = sshll.u32 %s5, 4
      %s9147 = int_to_ptr.hbm [resolvable:$true] %s9146
      %9149 = dma.vmem_to_hbm [thread:$0]  %s9145, 16, %s9147, [#allocation4]
    $region29: #{sam_coreml_forward.1} parent=1 // pred_fallthru
      _
    // Predicated region
    $region30: #{sam_coreml_forward.1} parent=1 // pred_check
      _
    $region31: #{sam_coreml_forward.1} parent=1 // pred_check_branch
      %9151 = sbr.rel (0) target = $region33
    $region32: #{sam_coreml_forward.1} parent=1 // pred_region
      _
    $region33: #{sam_coreml_forward.1} parent=1 // pred_fallthru
      _
    // Predicated region
    $region34: #{sam_coreml_forward.1} parent=1 // pred_check
      _
    $region35: #{sam_coreml_forward.1} parent=1 // pred_check_branch
      %9153 = sbr.rel (0) target = $region37
    $region36: #{sam_coreml_forward.1} parent=1 // pred_region
      %9155 = dma.done [#allocation4], 16
    $region37: #{sam_coreml_forward.1} parent=1 // pred_fallthru
      _
    %9156 = vsyncpa [#allocation3], 1
    %9157 = vsyncpa [#allocation4], 1

</llo_original>
